<compile_context>
chip_gen: v6e
topology: v6e:2x2x1
jax: 0.10.0
libtpu: 0.0.40
codegen_flags: <defaults>
</compile_context>

<pallas_src>
import numpy as np
import jax
import jax.numpy as jnp
from jax import lax
from jax.scipy.linalg import block_diag
from jax.experimental import pallas as pl
from jax.experimental.pallas import tpu as pltpu

# ----------------------------- config ---------------------------------------
# Reduced sizes (original UNISURF: W=256, D=8, multires=6) for a small demo.
# TODO(synk): exact ImplicitSurface/RadianceNet configs (skips, geometric init,
# weight norm) not provided; plain MLPs with softplus(beta=100) / ReLU used.
SURF_D = 4            # surface MLP depth
SURF_W = 64           # surface MLP width
W_GEO = 64            # geometry feature width (W_geo_feat = -1 -> W)
RAD_W = 64            # radiance MLP width
MULTIRES_X = 2        # positional-encoding freqs for points
MULTIRES_VIEW = 1     # positional-encoding freqs for view dirs
E_X = 3 + 3 * 2 * MULTIRES_X          # 15
E_V = 3 + 3 * 2 * MULTIRES_VIEW       # 9
RAD_IN = E_X + E_V + 3 + W_GEO        # 91
PACK_IN = 4 * E_X + E_V               # 69 : [emb(x)|emb(v)|jx|jy|jz]
HEAD_W = W_GEO + 4                    # 68 : [feat | nab_x | nab_y | nab_z | occ]
DEFAULT_TM = 1024     # row tile for MLP kernels; a few MiB VMEM even on v7x (64 MiB phys)
DEFAULT_TN = 128      # ray tile for the compositing kernel
PACK_W = 8            # packed lane-dense output width: occ(1)+nablas(3)+rgb(3)+pad(1)


def _round_up(x, m):
    return int(np.ceil(x / m) * m)


def _choose_tile_and_pad(m, tile_max, row_align=128):
    """Pick (tile, padded_rows) so the 1-D grid has an EVEN step count whenever
    the problem spans more than one aligned tile (keeps both v7x TensorCores
    busy under dimension_semantics=('parallel',)), with <= ~1 tile of padding.
    Neutral on v5e/v6e (single TC)."""
    m = int(m)
    mp = _round_up(m, row_align)
    steps = max(1, int(np.ceil(mp / tile_max)))
    if steps % 2 == 1 and mp > row_align:
        steps += 1
    tile = _round_up(int(np.ceil(mp / steps)), row_align)
    return tile, steps * tile


# --------------------------- embedding (glue) --------------------------------
def embed(x, n_freqs):
    outs = [x]
    for i in range(n_freqs):
        f = 2.0 ** i
        outs.append(jnp.sin(f * x))
        outs.append(jnp.cos(f * x))
    return jnp.concatenate(outs, axis=-1)


def embed_with_jac(x, n_freqs):
    """Returns (embed(x) [M,E], d embed / d x [M,E,3])."""
    eye = jnp.eye(3, dtype=x.dtype)
    feats = [x]
    jacs = [jnp.broadcast_to(eye, (x.shape[0], 3, 3))]
    for i in range(n_freqs):
        f = 2.0 ** i
        s = jnp.sin(f * x)
        c = jnp.cos(f * x)
        feats += [s, c]
        jacs.append((f * c)[..., None] * eye)    # d sin(f x_j)/d x_k
        jacs.append((-f * s)[..., None] * eye)   # d cos(f x_j)/d x_k
    return jnp.concatenate(feats, -1), jnp.concatenate(jacs, 1)


# ------------------------ in-kernel math helpers ------------------------------
def _softplus_and_deriv(pre, beta=100.0):
    """Shared-exp softplus(beta) and its derivative sigmoid(beta*pre).
    Underflow-safe (max(z,0)+log(1+e)) form; derivative uses an EXACT
    reciprocal since it drives the analytic nablas."""
    z = beta * pre
    e = jnp.exp(-jnp.abs(z))
    soft = (jnp.maximum(z, 0.0) + jnp.log(1.0 + e)) * (1.0 / beta)
    dact = jnp.where(z >= 0.0, 1.0, e) / (1.0 + e)
    return soft, dact


def _softplus_stable(pre, beta=100.0):
    z = beta * pre
    e = jnp.exp(-jnp.abs(z))
    return (jnp.maximum(z, 0.0) + jnp.log(1.0 + e)) * (1.0 / beta)


def _sigmoid_approx(x):
    """Numerically stable logistic; approx reciprocal on the (idle) EUP.
    Only used for output colors / depth normalization, not for gradients."""
    e = jnp.exp(-jnp.abs(x))
    return jnp.where(x >= 0.0, 1.0, e) * pl.reciprocal(1.0 + e, approx=True)


# --------------------------- Pallas kernels ----------------------------------
def _fused_kernel(xin_ref,
                  w0_ref, b0_ref, w1_ref, b1_ref, w2_ref, b2_ref, w3_ref, b3_ref,
                  wh_ref, bh_ref,
                  rw0_ref, rb0_ref, rw1_ref, rb1_ref, rwo_ref, rbo_ref,
                  out_ref):
    """Surface MLP (softplus beta=100) + analytic nablas + fused radiance MLP.

    The value stream and the three tangent streams are folded along the LANE
    axis: each hidden layer is one (TM, 4K) @ (4K, 4W) matmul against a
    block-diagonal bf16 weight (tangent blocks share the layer weight, no bias).
    Head + nablas are one (TM, 4W) @ (4W, W_GEO+4) matmul.  The radiance first
    layer is a single K=91 matmul.  Output is one lane-packed (TM, 8) f32
    block: [occ | nab_xyz | rgb | pad]."""
    W = SURF_W
    xin = xin_ref[...]                                   # bf16 (TM, 69)

    # hidden layers: layer-0 folded weight already matches the packed input
    # lane layout [emb(x)|emb(v)|jx|jy|jz] (emb(v) rows are zero).
    h = xin
    for w_ref, b_ref in ((w0_ref, b0_ref), (w1_ref, b1_ref),
                         (w2_ref, b2_ref), (w3_ref, b3_ref)):
        z = jnp.dot(h, w_ref[...], preferred_element_type=jnp.float32)   # (TM, 4W)
        pre = z[:, :W] + b_ref[...]                       # bias only on value block
        soft, dact = _softplus_and_deriv(pre)
        h = jnp.concatenate(
            [soft,
             z[:, W:2 * W] * dact,
             z[:, 2 * W:3 * W] * dact,
             z[:, 3 * W:4 * W] * dact], axis=-1).astype(jnp.bfloat16)    # (TM, 4W)

    # fused surface/feature/nabla head: one matmul (nabla columns have no bias)
    head = jnp.dot(h, wh_ref[...], preferred_element_type=jnp.float32) + bh_ref[...]
    feat = head[:, :W_GEO]                                # (TM, W_GEO)
    nab = head[:, W_GEO:W_GEO + 3]                        # (TM, 3)
    occ = head[:, W_GEO + 3:W_GEO + 4]                    # (TM, 1)
    nsq = jnp.sum(nab * nab, axis=-1, keepdims=True)
    normals = nab * lax.rsqrt(jnp.maximum(nsq, 1e-24))    # F.normalize(nablas)

    # radiance MLP: rad_in = [embed(x) | embed(v) | normals | feat] -> one K=91 matmul
    rad_in = jnp.concatenate(
        [xin[:, :E_X + E_V], normals.astype(jnp.bfloat16), feat.astype(jnp.bfloat16)],
        axis=-1)                                          # bf16 (TM, 91)
    r = jnp.maximum(jnp.dot(rad_in, rw0_ref[...],
                            preferred_element_type=jnp.float32) + rb0_ref[...], 0.0)
    r = jnp.maximum(jnp.dot(r.astype(jnp.bfloat16), rw1_ref[...],
                            preferred_element_type=jnp.float32) + rb1_ref[...], 0.0)
    rgb_logit = jnp.dot(r.astype(jnp.bfloat16), rwo_ref[...],
                        preferred_element_type=jnp.float32) + rbo_ref[...]
    rgb = _sigmoid_approx(rgb_logit)

    out_ref[...] = jnp.concatenate([occ, nab, rgb, jnp.zeros_like(occ)], axis=-1)


def _occ_kernel(h0_ref, w0_ref, b0_ref, w1_ref, b1_ref, w2_ref, b2_ref, w3_ref, b3_ref,
                woc_ref, boc_ref, occ_ref):
    """Occlusion-only surface MLP for the coarse root-finding pass (no Jacobian)."""
    h = h0_ref[...]                                       # bf16 (TM, E_X)
    for w_ref, b_ref in ((w0_ref, b0_ref), (w1_ref, b1_ref),
                         (w2_ref, b2_ref), (w3_ref, b3_ref)):
        pre = jnp.dot(h, w_ref[...], preferred_element_type=jnp.float32) + b_ref[...]
        h = _softplus_stable(pre).astype(jnp.bfloat16)
    # TODO(synk): (TM, 1) output is a lane-masked store; widening to a per-ray
    # (rays, n_coarse) layout is a profile-guided follow-up (minor vs MXU work).
    occ_ref[...] = jnp.dot(h, woc_ref[...], preferred_element_type=jnp.float32) + boc_ref[...]


def _render_kernel(packed_ref, strict_ref, out_ref, w_ref):
    """Opacity (stable exact sigmoid), exclusive cumprod via strict lower-tri
    matmul (mask precomputed host-side), rgb/depth/acc reductions.
    Input is one lane-dense (TN, 5*S) block [logits|r|g|b|d]; output is a
    lane-packed (TN, 8) block: rgb | depth | acc | pad."""
    S = strict_ref.shape[0]
    packed = packed_ref[...]                       # f32 (TN, 5S)
    logits = packed[:, 0:S]
    rr = packed[:, S:2 * S]
    rg = packed[:, 2 * S:3 * S]
    rb = packed[:, 3 * S:4 * S]
    d = packed[:, 4 * S:5 * S]
    # alpha = sigmoid(-logits), exact (get_opacity_from_surface)
    e = jnp.exp(-jnp.abs(logits))
    alpha = jnp.where(logits <= 0.0, 1.0, e) / (1.0 + e)
    t = 1.0 - alpha + 1e-10
    logt = jnp.log(t)
    cumlog = jnp.dot(logt, strict_ref[...], preferred_element_type=jnp.float32)
    w = alpha * jnp.exp(cumlog)                    # visibility weights
    w_ref[...] = w
    rgb_r = jnp.sum(w * rr, axis=-1, keepdims=True)
    rgb_g = jnp.sum(w * rg, axis=-1, keepdims=True)
    rgb_b = jnp.sum(w * rb, axis=-1, keepdims=True)
    wsum = jnp.sum(w, axis=-1, keepdims=True)
    inv_wsum = pl.reciprocal(wsum + 1e-10, approx=True)
    depth = jnp.sum(w * d, axis=-1, keepdims=True) * inv_wsum
    pad = jnp.zeros((packed.shape[0], 3), jnp.float32)
    out_ref[...] = jnp.concatenate([rgb_r, rgb_g, rgb_b, depth, wsum, pad], axis=-1)


# ------------------------- kernel wrappers (glue) -----------------------------
def _mlp_compiler_params():
    # Row tiles are independent -> "parallel" (shards across TCs on v7x megacore;
    # grid step count is padded to be even in _choose_tile_and_pad).
    # 32 MiB scoped VMEM leaves headroom on v7x (64 MiB physical); at TM=1024 the
    # fused kernel uses only a few MiB.
    return pltpu.CompilerParams(dimension_semantics=("parallel",),
                                vmem_limit_bytes=int(32 * 1024 * 1024))


def surface_occ_forward(kp, x, tm=DEFAULT_TM):
    """x: [M,3] -> occ [M,1]. Coarse pass: no Jacobian / nablas / feature head."""
    M = x.shape[0]
    tile, Mpad = _choose_tile_and_pad(M, tm)
    xp = jnp.pad(x.astype(jnp.float32), ((0, Mpad - M), (0, 0)))
    h0 = embed(xp, MULTIRES_X).astype(jnp.bfloat16)
    (w0, b0), (w1, b1), (w2, b2), (w3, b3) = kp['sw']
    woc, boc = kp['swo_occ'], kp['sbo_occ']
    weight_args = (w0, b0, w1, b1, w2, b2, w3, b3, woc, boc)
    row = lambda i: (i, 0)
    full = lambda i: (0, 0)   # grid-invariant blocks: Pallas skips re-DMA across steps
    occ = pl.pallas_call(
        _occ_kernel,
        out_shape=jax.ShapeDtypeStruct((Mpad, 1), jnp.float32),
        grid_spec=pltpu.PrefetchScalarGridSpec(
            num_scalar_prefetch=0, grid=(Mpad // tile,),
            in_specs=[pl.BlockSpec((tile, E_X), row)]
                     + [pl.BlockSpec(a.shape, full) for a in weight_args],
            out_specs=pl.BlockSpec((tile, 1), row)),
        compiler_params=_mlp_compiler_params(),
    )(h0, *weight_args)
    return occ[:M]


def unisurf_fused_forward(kp, x, v, tm=DEFAULT_TM):
    """x, v: [M,3] -> rgb [M,3], occ [M,1], nablas [M,3] (single fused pallas_call)."""
    M = x.shape[0]
    tile, Mpad = _choose_tile_and_pad(M, tm)
    xp = jnp.pad(x.astype(jnp.float32), ((0, Mpad - M), (0, 0)))
    vp = jnp.pad(v.astype(jnp.float32), ((0, Mpad - M), (0, 0)))
    h0, J = embed_with_jac(xp, MULTIRES_X)
    vemb = embed(vp, MULTIRES_VIEW)
    # one lane-dense packed input per point: [emb(x)|emb(v)|jx|jy|jz]
    xin = jnp.concatenate([h0, vemb, J[..., 0], J[..., 1], J[..., 2]],
                          axis=-1).astype(jnp.bfloat16)               # (Mpad, 69)

    weight_args = (kp['w0f'], kp['b0'], kp['w1f'], kp['b1'], kp['w2f'], kp['b2'],
                   kp['w3f'], kp['b3'], kp['wh'], kp['bh'],
                   kp['rw0'], kp['rb0'], kp['rw1'], kp['rb1'], kp['rwo'], kp['rbo'])
    row = lambda i: (i, 0)
    full = lambda i: (0, 0)
    packed = pl.pallas_call(
        _fused_kernel,
        out_shape=jax.ShapeDtypeStruct((Mpad, PACK_W), jnp.float32),
        grid_spec=pltpu.PrefetchScalarGridSpec(
            num_scalar_prefetch=0, grid=(Mpad // tile,),
            in_specs=[pl.BlockSpec((tile, PACK_IN), row)]
                     + [pl.BlockSpec(a.shape, full) for a in weight_args],
            out_specs=pl.BlockSpec((tile, PACK_W), row)),
        compiler_params=_mlp_compiler_params(),
    )(xin, *weight_args)
    packed = packed[:M]
    rgb = packed[:, 4:7]
    occ = packed[:, 0:1]
    nablas = packed[:, 1:4]
    return rgb, occ, nablas


def volume_render_composite(logits, radiances, d_all, tn=DEFAULT_TN):
    """logits [N,S], radiances [N,S,3], d_all [N,S]
       -> rgb [N,3], depth [N], acc [N], weights [N,S]."""
    N, S = logits.shape
    tile, Npad = _choose_tile_and_pad(N, tn, row_align=8)
    pad = Npad - N
    packed = jnp.concatenate([logits, radiances[..., 0], radiances[..., 1],
                              radiances[..., 2], d_all], axis=-1).astype(jnp.float32)
    packed = jnp.pad(packed, ((0, pad), (0, 0)))
    # strict lower-triangular mask (grid-invariant), built once host-side
    rows = lax.broadcasted_iota(jnp.int32, (S, S), 0)
    cols = lax.broadcasted_iota(jnp.int32, (S, S), 1)
    strict = (rows < cols).astype(jnp.float32)
    row = lambda i: (i, 0)
    full = lambda i: (0, 0)
    out, w = pl.pallas_call(
        _render_kernel,
        out_shape=(jax.ShapeDtypeStruct((Npad, PACK_W), jnp.float32),
                   jax.ShapeDtypeStruct((Npad, S), jnp.float32)),
        grid_spec=pltpu.PrefetchScalarGridSpec(
            num_scalar_prefetch=0, grid=(Npad // tile,),
            in_specs=[pl.BlockSpec((tile, 5 * S), row),
                      pl.BlockSpec((S, S), full)],
            out_specs=[pl.BlockSpec((tile, PACK_W), row),
                       pl.BlockSpec((tile, S), row)]),
        compiler_params=pltpu.CompilerParams(dimension_semantics=("parallel",)),
    )(packed, strict)
    rgb = out[:N, 0:3]
    depth = out[:N, 3]
    acc = out[:N, 4]
    return rgb, depth, acc, w[:N]


# ----------------------------- UNISURF renderer -------------------------------
def near_far_from_sphere(rays_o, rays_d, r=1.0):
    # TODO(synk): rend_util.near_far_from_sphere source not provided; using the
    # standard sphere mid-point formulation with a small positive near clamp.
    mid = -jnp.sum(rays_o * rays_d, axis=-1)
    near = jnp.maximum(mid - r, 0.1)
    far = mid + r
    return near, far


def root_finding_surface_points(kp, rays_o, rays_d, near, far,
                                logit_tau=0.0, n_coarse=32, tm=DEFAULT_TM):
    # TODO(synk): root_finding_surface_points source not provided; approximated
    # with coarse sampling + a single secant step on the surface logits.
    N = rays_o.shape[0]
    t = jnp.linspace(0.0, 1.0, n_coarse)
    d_coarse = near[:, None] * (1.0 - t) + far[:, None] * t          # [N, C]
    pts = rays_o[:, None, :] + rays_d[:, None, :] * d_coarse[..., None]
    occ = surface_occ_forward(kp, pts.reshape(-1, 3), tm=tm)
    f = occ.reshape(N, n_coarse) - logit_tau
    f_lo, f_hi = f[:, :-1], f[:, 1:]
    d_lo, d_hi = d_coarse[:, :-1], d_coarse[:, 1:]
    cross = (f_lo > 0.0) & (f_hi <= 0.0)
    mask_sign_change = jnp.any(cross, axis=-1)
    idx = jnp.argmax(cross.astype(jnp.int32), axis=-1)
    take = lambda a: jnp.take_along_axis(a, idx[:, None], axis=-1)[:, 0]
    fl, fh, dl, dh = take(f_lo), take(f_hi), take(d_lo), take(d_hi)
    denom = fh - fl
    denom = jnp.where(denom >= 0.0, denom + 1e-12, denom - 1e-12)    # sign-aware guard
    d_secant = dl - fl * (dh - dl) / denom
    d_pred = jnp.where(mask_sign_change, d_secant, far)
    pt_pred = rays_o + rays_d * d_pred[:, None]
    mask = mask_sign_change
    return d_pred, pt_pred, mask, mask_sign_change


def volume_render(rays_o, rays_d, kernel_params, *, logit_tau=0.0, use_view_dirs=True,
                  radius_of_interest=4.0, interval=1.0, too_close_threshold=0.1,
                  N_query=16, N_freespace=8, white_bkgd=False, calc_normal=False,
                  tm=DEFAULT_TM, **dummy_kwargs):
    rays_o = jnp.reshape(rays_o, (-1, 3)).astype(jnp.float32)
    rays_d = jnp.reshape(rays_d, (-1, 3)).astype(jnp.float32)
    rays_d = rays_d / jnp.maximum(jnp.linalg.norm(rays_d, axis=-1, keepdims=True), 1e-12)
    N = rays_o.shape[0]

    near, far = near_far_from_sphere(rays_o, rays_d, r=radius_of_interest)
    d_threshold = near + (far - near) * too_close_threshold
    view_dirs = rays_d if use_view_dirs else rays_d  # view dirs always needed downstream

    d_pred_out, pt_pred, mask, mask_sign_change = root_finding_surface_points(
        kernel_params, rays_o, rays_d, near, far, logit_tau=logit_tau, tm=tm)
    d_pred_out = jnp.clip(d_pred_out, near, far)
    d_upper = jnp.minimum(d_pred_out + interval, far)
    d_lower = jnp.maximum(d_pred_out - interval, near)

    t = jnp.linspace(0.0, 1.0, N_query)
    d_samples_interval = d_lower[:, None] * (1.0 - t) + d_upper[:, None] * t

    d_lower = jnp.maximum(d_lower, d_threshold)
    d_lower = jnp.where(mask_sign_change, d_lower, far)
    d_lower = jnp.where(d_lower < 1e-10, far, d_lower)

    t = jnp.linspace(0.0, 1.0, N_freespace)
    d_samples_freespace = near[:, None] * (1.0 - t) + d_lower[:, None] * t

    d_all = jnp.sort(jnp.concatenate([d_samples_freespace, d_samples_interval], axis=-1),
                     axis=-1)                                            # [N, S]
    S = N_query + N_freespace
    pts = rays_o[:, None, :] + rays_d[:, None, :] * d_all[..., None]     # [N, S, 3]
    vdirs = jnp.broadcast_to(view_dirs[:, None, :], pts.shape)

    rgb_pts, occ, nablas = unisurf_fused_forward(
        kernel_params, pts.reshape(-1, 3), vdirs.reshape(-1, 3), tm=tm)
    radiances = rgb_pts.reshape(N, S, 3)
    logits = occ.reshape(N, S, 1)
    nablas = nablas.reshape(N, S, 3)

    rgb_map, depth_map, acc_map, weights = volume_render_composite(
        logits[..., 0], radiances, d_all)
    if white_bkgd:
        rgb_map = rgb_map + (1.0 - acc_map[:, None])

    opacity_alpha = jax.nn.sigmoid(-logits[..., 0])   # stable get_opacity_from_surface
    ret = {
        'rgb': rgb_map, 'depth_volume': depth_map, 'mask_volume': acc_map,
        'surface_points': pt_pred, 'mask_surface': mask, 'depth_surface': d_pred_out,
        'radiance': radiances, 'implicit_surface': logits, 'implicit_nablas': nablas,
        'alpha': opacity_alpha, 'visibility_weights': weights,
    }
    if calc_normal:
        normals_map = nablas / jnp.maximum(
            jnp.linalg.norm(nablas, axis=-1, keepdims=True), 1e-12)
        ret['normals_volume'] = jnp.sum(normals_map * weights[..., None], axis=-2)
    return ret['rgb'], ret['depth_volume'], ret


class SingleRenderer:
    def __init__(self, params):
        self.params = params
        self.kernel_params = prepare_params(params)

    def __call__(self, rays_o, rays_d, **kwargs):
        return volume_render(rays_o, rays_d, self.kernel_params, **kwargs)


# ----------------------------- parameters -------------------------------------
def init_params(key):
    def lin(k, fin, fout):
        k1, k2 = jax.random.split(k)
        w = jax.random.normal(k1, (fin, fout), jnp.float32) / jnp.sqrt(float(fin))
        b = 0.01 * jax.random.normal(k2, (1, fout), jnp.float32)
        return w, b

    keys = jax.random.split(key, 12)
    dims = [E_X] + [SURF_W] * SURF_D
    surf_layers = tuple(lin(keys[i], dims[i], dims[i + 1]) for i in range(SURF_D))
    surf_out = lin(keys[SURF_D], SURF_W, 1 + W_GEO)
    rad_layers = (lin(keys[6], RAD_IN, RAD_W), lin(keys[7], RAD_W, RAD_W))
    rad_out = lin(keys[8], RAD_W, 3)
    return {'surf_layers': surf_layers, 'surf_out': surf_out,
            'rad_layers': rad_layers, 'rad_out': rad_out}


def prepare_params(params):
    """Build the lane-folded bf16 weights (f32 accumulation on MXU):
      * layer-0 folded weight matching the packed input lanes
        [emb(x)|emb(v)|jx|jy|jz] (emb(v) rows are zero),
      * block-diagonal folded hidden-layer weights (value + 3 tangent streams),
      * one fused head weight producing [feat | nab_x | nab_y | nab_z | occ]
        (nabla columns carry no bias),
      * full merged radiance first-layer weight (K=91),
      * plain (unfolded) surface weights + occ column for the coarse pass.
    Biases stay f32.
    NOTE: inter-layer activations are bf16; validate surface-depth sensitivity
    near the softplus(beta=100) zero crossing against an f32 reference."""
    bf = lambda a: a.astype(jnp.bfloat16)
    f32 = lambda a: a.astype(jnp.float32)
    (w0, b0), (w1, b1), (w2, b2), (w3, b3) = params['surf_layers']
    wo, bo = params['surf_out']
    (rw0, rb0), (rw1, rb1) = params['rad_layers']
    rwo, rbo = params['rad_out']
    Wd = SURF_W

    # layer 0: (PACK_IN, 4W) matching packed input lanes
    w0f = jnp.zeros((PACK_IN, 4 * Wd), jnp.float32)
    w0f = w0f.at[0:E_X, 0:Wd].set(w0)
    off = E_X + E_V
    for k in range(3):
        w0f = w0f.at[off + k * E_X: off + (k + 1) * E_X,
                     (k + 1) * Wd:(k + 2) * Wd].set(w0)

    bd4 = lambda w: block_diag(w, w, w, w)

    # fused head: columns [feat(W_GEO) | nab_x | nab_y | nab_z | occ]
    wh = jnp.zeros((4 * Wd, HEAD_W), jnp.float32)
    wh = wh.at[0:Wd, 0:W_GEO].set(wo[:, 1:])
    for k in range(3):
        wh = wh.at[(k + 1) * Wd:(k + 2) * Wd, W_GEO + k].set(wo[:, 0])
    wh = wh.at[0:Wd, W_GEO + 3].set(wo[:, 0])
    bh = jnp.zeros((1, HEAD_W), jnp.float32)
    bh = bh.at[0, 0:W_GEO].set(bo[0, 1:])
    bh = bh.at[0, W_GEO + 3].set(bo[0, 0])

    return {
        # fused (fine) pass
        'w0f': bf(w0f), 'b0': f32(b0),
        'w1f': bf(bd4(w1)), 'b1': f32(b1),
        'w2f': bf(bd4(w2)), 'b2': f32(b2),
        'w3f': bf(bd4(w3)), 'b3': f32(b3),
        'wh': bf(wh), 'bh': bh,
        'rw0': bf(rw0), 'rb0': f32(rb0),
        'rw1': bf(rw1), 'rb1': f32(rb1),
        'rwo': bf(rwo), 'rbo': f32(rbo),
        # coarse (occ-only) pass
        'sw': ((bf(w0), f32(b0)), (bf(w1), f32(b1)),
               (bf(w2), f32(b2)), (bf(w3), f32(b3))),
        'swo_occ': bf(wo[:, :1]), 'sbo_occ': f32(bo[:, :1]),
    }


# ----------------------------------- main --------------------------------------
if __name__ == "__main__":
    key = jax.random.PRNGKey(0)
    pkey, okey, dkey = jax.random.split(key, 3)
    params = init_params(pkey)
    renderer = SingleRenderer(params)

    N_rays = 8
    # camera origins on a sphere of radius 3, rays pointing roughly toward the origin
    rays_o = jax.random.normal(okey, (N_rays, 3), jnp.float32)
    rays_o = 3.0 * rays_o / jnp.linalg.norm(rays_o, axis=-1, keepdims=True)
    rays_d = -rays_o + 0.1 * jax.random.normal(dkey, (N_rays, 3), jnp.float32)

    @jax.jit
    def run(ro, rd):
        return renderer(ro, rd, N_query=16, N_freespace=8)

    rgb, depth, ret = run(rays_o, rays_d)
    jax.block_until_ready((rgb, depth, ret['mask_volume']))

    assert rgb.shape == (N_rays, 3)
    assert depth.shape == (N_rays,)
    assert ret['mask_volume'].shape == (N_rays,)
    assert ret['visibility_weights'].shape == (N_rays, 24)
    assert ret['implicit_nablas'].shape == (N_rays, 24, 3)
    assert bool(jnp.all(jnp.isfinite(rgb)))
    assert bool(jnp.all(jnp.isfinite(depth)))
    assert bool(jnp.all(jnp.isfinite(ret['implicit_nablas'])))
    print("KERNEL_OK")
</pallas_src>

<mosaic_0001>
module attributes {stable_mosaic.version = 11 : i64} {
  func.func @_occ_kernel(%arg0: i32, %arg1: memref<128x15xbf16, #tpu.memory_space<vmem>>, %arg2: memref<15x64xbf16, #tpu.memory_space<vmem>>, %arg3: memref<1x64xf32, #tpu.memory_space<vmem>>, %arg4: memref<64x64xbf16, #tpu.memory_space<vmem>>, %arg5: memref<1x64xf32, #tpu.memory_space<vmem>>, %arg6: memref<64x64xbf16, #tpu.memory_space<vmem>>, %arg7: memref<1x64xf32, #tpu.memory_space<vmem>>, %arg8: memref<64x64xbf16, #tpu.memory_space<vmem>>, %arg9: memref<1x64xf32, #tpu.memory_space<vmem>>, %arg10: memref<64x1xbf16, #tpu.memory_space<vmem>>, %arg11: memref<1x1xf32, #tpu.memory_space<vmem>>, %arg12: memref<128x1xf32, #tpu.memory_space<vmem>>) attributes {dimension_semantics = [#tpu.dimension_semantics<parallel>], iteration_bounds = array<i64: 2>, scalar_prefetch = 0 : i64, scratch_operands = 0 : i64, tpu.core_type = #tpu.core_type<tc>, window_params = [{transform_indices = @transform_0, window_bounds = array<i64: 128, 15>}, {pipeline_mode = #tpu.pipeline_mode<synchronous>, transform_indices = @transform_1, window_bounds = array<i64: 15, 64>}, {pipeline_mode = #tpu.pipeline_mode<synchronous>, transform_indices = @transform_2, window_bounds = array<i64: 1, 64>}, {pipeline_mode = #tpu.pipeline_mode<synchronous>, transform_indices = @transform_3, window_bounds = array<i64: 64, 64>}, {pipeline_mode = #tpu.pipeline_mode<synchronous>, transform_indices = @transform_4, window_bounds = array<i64: 1, 64>}, {pipeline_mode = #tpu.pipeline_mode<synchronous>, transform_indices = @transform_5, window_bounds = array<i64: 64, 64>}, {pipeline_mode = #tpu.pipeline_mode<synchronous>, transform_indices = @transform_6, window_bounds = array<i64: 1, 64>}, {pipeline_mode = #tpu.pipeline_mode<synchronous>, transform_indices = @transform_7, window_bounds = array<i64: 64, 64>}, {pipeline_mode = #tpu.pipeline_mode<synchronous>, transform_indices = @transform_8, window_bounds = array<i64: 1, 64>}, {pipeline_mode = #tpu.pipeline_mode<synchronous>, transform_indices = @transform_9, window_bounds = array<i64: 64, 1>}, {pipeline_mode = #tpu.pipeline_mode<synchronous>, transform_indices = @transform_10, window_bounds = array<i64: 1, 1>}, {transform_indices = @transform_11, window_bounds = array<i64: 128, 1>}]} {
    %c0 = arith.constant 0 : index
    %c0_0 = arith.constant 0 : index
    %0 = vector.load %arg1[%c0, %c0_0] : memref<128x15xbf16, #tpu.memory_space<vmem>>, vector<128x15xbf16>
    %c0_1 = arith.constant 0 : index
    %c0_2 = arith.constant 0 : index
    %1 = vector.load %arg2[%c0_1, %c0_2] : memref<15x64xbf16, #tpu.memory_space<vmem>>, vector<15x64xbf16>
    %cst = arith.constant dense<0.000000e+00> : vector<128x64xf32>
    %2 = tpu.matmul %0, %1, %cst {dimension_numbers = #tpu.dot_dimension_numbers<[1], [0], [0], [1], [0, 0, 1, 1], [], []>} : vector<128x15xbf16>, vector<15x64xbf16>, vector<128x64xf32> -> vector<128x64xf32>
    %c0_3 = arith.constant 0 : index
    %c0_4 = arith.constant 0 : index
    %3 = vector.load %arg3[%c0_3, %c0_4] : memref<1x64xf32, #tpu.memory_space<vmem>>, vector<1x64xf32>
    %4 = vector.broadcast %3 : vector<1x64xf32> to vector<128x64xf32>
    %5 = arith.addf %2, %4 : vector<128x64xf32>
    %cst_5 = arith.constant 1.000000e+02 : f32
    %6 = vector.broadcast %cst_5 : f32 to vector<128x64xf32>
    %7 = arith.mulf %6, %5 : vector<128x64xf32>
    %8 = math.absf %7 : vector<128x64xf32>
    %cst_6 = arith.constant 0.000000e+00 : f32
    %9 = vector.broadcast %cst_6 : f32 to vector<128x64xf32>
    %10 = arith.subf %9, %8 : vector<128x64xf32>
    %11 = math.exp %10 : vector<128x64xf32>
    %cst_7 = arith.constant 0.000000e+00 : f32
    %12 = vector.broadcast %cst_7 : f32 to vector<128x64xf32>
    %13 = arith.maximumf %7, %12 : vector<128x64xf32>
    %cst_8 = arith.constant 1.000000e+00 : f32
    %14 = vector.broadcast %cst_8 : f32 to vector<128x64xf32>
    %15 = arith.addf %14, %11 : vector<128x64xf32>
    %16 = math.log %15 : vector<128x64xf32>
    %17 = arith.addf %13, %16 : vector<128x64xf32>
    %cst_9 = arith.constant 0.00999999977 : f32
    %18 = vector.broadcast %cst_9 : f32 to vector<128x64xf32>
    %19 = arith.mulf %17, %18 : vector<128x64xf32>
    %20 = arith.truncf %19 : vector<128x64xf32> to vector<128x64xbf16>
    %c0_10 = arith.constant 0 : index
    %c0_11 = arith.constant 0 : index
    %21 = vector.load %arg4[%c0_10, %c0_11] : memref<64x64xbf16, #tpu.memory_space<vmem>>, vector<64x64xbf16>
    %cst_12 = arith.constant dense<0.000000e+00> : vector<128x64xf32>
    %22 = tpu.matmul %20, %21, %cst_12 {dimension_numbers = #tpu.dot_dimension_numbers<[1], [0], [0], [1], [0, 0, 1, 1], [], []>} : vector<128x64xbf16>, vector<64x64xbf16>, vector<128x64xf32> -> vector<128x64xf32>
    %c0_13 = arith.constant 0 : index
    %c0_14 = arith.constant 0 : index
    %23 = vector.load %arg5[%c0_13, %c0_14] : memref<1x64xf32, #tpu.memory_space<vmem>>, vector<1x64xf32>
    %24 = vector.broadcast %23 : vector<1x64xf32> to vector<128x64xf32>
    %25 = arith.addf %22, %24 : vector<128x64xf32>
    %cst_15 = arith.constant 1.000000e+02 : f32
    %26 = vector.broadcast %cst_15 : f32 to vector<128x64xf32>
    %27 = arith.mulf %26, %25 : vector<128x64xf32>
    %28 = math.absf %27 : vector<128x64xf32>
    %cst_16 = arith.constant 0.000000e+00 : f32
    %29 = vector.broadcast %cst_16 : f32 to vector<128x64xf32>
    %30 = arith.subf %29, %28 : vector<128x64xf32>
    %31 = math.exp %30 : vector<128x64xf32>
    %cst_17 = arith.constant 0.000000e+00 : f32
    %32 = vector.broadcast %cst_17 : f32 to vector<128x64xf32>
    %33 = arith.maximumf %27, %32 : vector<128x64xf32>
    %cst_18 = arith.constant 1.000000e+00 : f32
    %34 = vector.broadcast %cst_18 : f32 to vector<128x64xf32>
    %35 = arith.addf %34, %31 : vector<128x64xf32>
    %36 = math.log %35 : vector<128x64xf32>
    %37 = arith.addf %33, %36 : vector<128x64xf32>
    %cst_19 = arith.constant 0.00999999977 : f32
    %38 = vector.broadcast %cst_19 : f32 to vector<128x64xf32>
    %39 = arith.mulf %37, %38 : vector<128x64xf32>
    %40 = arith.truncf %39 : vector<128x64xf32> to vector<128x64xbf16>
    %c0_20 = arith.constant 0 : index
    %c0_21 = arith.constant 0 : index
    %41 = vector.load %arg6[%c0_20, %c0_21] : memref<64x64xbf16, #tpu.memory_space<vmem>>, vector<64x64xbf16>
    %cst_22 = arith.constant dense<0.000000e+00> : vector<128x64xf32>
    %42 = tpu.matmul %40, %41, %cst_22 {dimension_numbers = #tpu.dot_dimension_numbers<[1], [0], [0], [1], [0, 0, 1, 1], [], []>} : vector<128x64xbf16>, vector<64x64xbf16>, vector<128x64xf32> -> vector<128x64xf32>
    %c0_23 = arith.constant 0 : index
    %c0_24 = arith.constant 0 : index
    %43 = vector.load %arg7[%c0_23, %c0_24] : memref<1x64xf32, #tpu.memory_space<vmem>>, vector<1x64xf32>
    %44 = vector.broadcast %43 : vector<1x64xf32> to vector<128x64xf32>
    %45 = arith.addf %42, %44 : vector<128x64xf32>
    %cst_25 = arith.constant 1.000000e+02 : f32
    %46 = vector.broadcast %cst_25 : f32 to vector<128x64xf32>
    %47 = arith.mulf %46, %45 : vector<128x64xf32>
    %48 = math.absf %47 : vector<128x64xf32>
    %cst_26 = arith.constant 0.000000e+00 : f32
    %49 = vector.broadcast %cst_26 : f32 to vector<128x64xf32>
    %50 = arith.subf %49, %48 : vector<128x64xf32>
    %51 = math.exp %50 : vector<128x64xf32>
    %cst_27 = arith.constant 0.000000e+00 : f32
    %52 = vector.broadcast %cst_27 : f32 to vector<128x64xf32>
    %53 = arith.maximumf %47, %52 : vector<128x64xf32>
    %cst_28 = arith.constant 1.000000e+00 : f32
    %54 = vector.broadcast %cst_28 : f32 to vector<128x64xf32>
    %55 = arith.addf %54, %51 : vector<128x64xf32>
    %56 = math.log %55 : vector<128x64xf32>
    %57 = arith.addf %53, %56 : vector<128x64xf32>
    %cst_29 = arith.constant 0.00999999977 : f32
    %58 = vector.broadcast %cst_29 : f32 to vector<128x64xf32>
    %59 = arith.mulf %57, %58 : vector<128x64xf32>
    %60 = arith.truncf %59 : vector<128x64xf32> to vector<128x64xbf16>
    %c0_30 = arith.constant 0 : index
    %c0_31 = arith.constant 0 : index
    %61 = vector.load %arg8[%c0_30, %c0_31] : memref<64x64xbf16, #tpu.memory_space<vmem>>, vector<64x64xbf16>
    %cst_32 = arith.constant dense<0.000000e+00> : vector<128x64xf32>
    %62 = tpu.matmul %60, %61, %cst_32 {dimension_numbers = #tpu.dot_dimension_numbers<[1], [0], [0], [1], [0, 0, 1, 1], [], []>} : vector<128x64xbf16>, vector<64x64xbf16>, vector<128x64xf32> -> vector<128x64xf32>
    %c0_33 = arith.constant 0 : index
    %c0_34 = arith.constant 0 : index
    %63 = vector.load %arg9[%c0_33, %c0_34] : memref<1x64xf32, #tpu.memory_space<vmem>>, vector<1x64xf32>
    %64 = vector.broadcast %63 : vector<1x64xf32> to vector<128x64xf32>
    %65 = arith.addf %62, %64 : vector<128x64xf32>
    %cst_35 = arith.constant 1.000000e+02 : f32
    %66 = vector.broadcast %cst_35 : f32 to vector<128x64xf32>
    %67 = arith.mulf %66, %65 : vector<128x64xf32>
    %68 = math.absf %67 : vector<128x64xf32>
    %cst_36 = arith.constant 0.000000e+00 : f32
    %69 = vector.broadcast %cst_36 : f32 to vector<128x64xf32>
    %70 = arith.subf %69, %68 : vector<128x64xf32>
    %71 = math.exp %70 : vector<128x64xf32>
    %cst_37 = arith.constant 0.000000e+00 : f32
    %72 = vector.broadcast %cst_37 : f32 to vector<128x64xf32>
    %73 = arith.maximumf %67, %72 : vector<128x64xf32>
    %cst_38 = arith.constant 1.000000e+00 : f32
    %74 = vector.broadcast %cst_38 : f32 to vector<128x64xf32>
    %75 = arith.addf %74, %71 : vector<128x64xf32>
    %76 = math.log %75 : vector<128x64xf32>
    %77 = arith.addf %73, %76 : vector<128x64xf32>
    %cst_39 = arith.constant 0.00999999977 : f32
    %78 = vector.broadcast %cst_39 : f32 to vector<128x64xf32>
    %79 = arith.mulf %77, %78 : vector<128x64xf32>
    %80 = arith.truncf %79 : vector<128x64xf32> to vector<128x64xbf16>
    %c0_40 = arith.constant 0 : index
    %c0_41 = arith.constant 0 : index
    %81 = vector.load %arg10[%c0_40, %c0_41] : memref<64x1xbf16, #tpu.memory_space<vmem>>, vector<64x1xbf16>
    %cst_42 = arith.constant dense<0.000000e+00> : vector<128x1xf32>
    %82 = tpu.matmul %80, %81, %cst_42 {dimension_numbers = #tpu.dot_dimension_numbers<[1], [0], [0], [1], [0, 0, 1, 1], [], []>} : vector<128x64xbf16>, vector<64x1xbf16>, vector<128x1xf32> -> vector<128x1xf32>
    %c0_43 = arith.constant 0 : index
    %c0_44 = arith.constant 0 : index
    %83 = vector.load %arg11[%c0_43, %c0_44] : memref<1x1xf32, #tpu.memory_space<vmem>>, vector<1x1xf32>
    %84 = vector.broadcast %83 : vector<1x1xf32> to vector<128x1xf32>
    %85 = arith.addf %82, %84 : vector<128x1xf32>
    %c0_45 = arith.constant 0 : index
    %c0_46 = arith.constant 0 : index
    %86 = vector.load %arg12[%c0_45, %c0_46] : memref<128x1xf32, #tpu.memory_space<vmem>>, vector<128x1xf32>
    tpu.vector_store %arg12[%c0_45, %c0_46], %85 {strides = array<i32>} : memref<128x1xf32, #tpu.memory_space<vmem>>, vector<128x1xf32>,
    return
  }
  func.func @transform_0(%arg0: i32) -> (i32, i32) {
    %c0_i32 = arith.constant 0 : i32
    %c0_i32_0 = arith.constant 0 : i32
    return %arg0, %c0_i32 : i32, i32
  }
  func.func @transform_1(%arg0: i32) -> (i32, i32) {
    %c0_i32 = arith.constant 0 : i32
    %c0_i32_0 = arith.constant 0 : i32
    %c0_i32_1 = arith.constant 0 : i32
    return %c0_i32, %c0_i32_0 : i32, i32
  }
  func.func @transform_2(%arg0: i32) -> (i32, i32) {
    %c0_i32 = arith.constant 0 : i32
    %c0_i32_0 = arith.constant 0 : i32
    %c0_i32_1 = arith.constant 0 : i32
    return %c0_i32, %c0_i32_0 : i32, i32
  }
  func.func @transform_3(%arg0: i32) -> (i32, i32) {
    %c0_i32 = arith.constant 0 : i32
    %c0_i32_0 = arith.constant 0 : i32
    %c0_i32_1 = arith.constant 0 : i32
    return %c0_i32, %c0_i32_0 : i32, i32
  }
  func.func @transform_4(%arg0: i32) -> (i32, i32) {
    %c0_i32 = arith.constant 0 : i32
    %c0_i32_0 = arith.constant 0 : i32
    %c0_i32_1 = arith.constant 0 : i32
    return %c0_i32, %c0_i32_0 : i32, i32
  }
  func.func @transform_5(%arg0: i32) -> (i32, i32) {
    %c0_i32 = arith.constant 0 : i32
    %c0_i32_0 = arith.constant 0 : i32
    %c0_i32_1 = arith.constant 0 : i32
    return %c0_i32, %c0_i32_0 : i32, i32
  }
  func.func @transform_6(%arg0: i32) -> (i32, i32) {
    %c0_i32 = arith.constant 0 : i32
    %c0_i32_0 = arith.constant 0 : i32
    %c0_i32_1 = arith.constant 0 : i32
    return %c0_i32, %c0_i32_0 : i32, i32
  }
  func.func @transform_7(%arg0: i32) -> (i32, i32) {
    %c0_i32 = arith.constant 0 : i32
    %c0_i32_0 = arith.constant 0 : i32
    %c0_i32_1 = arith.constant 0 : i32
    return %c0_i32, %c0_i32_0 : i32, i32
  }
  func.func @transform_8(%arg0: i32) -> (i32, i32) {
    %c0_i32 = arith.constant 0 : i32
    %c0_i32_0 = arith.constant 0 : i32
    %c0_i32_1 = arith.constant 0 : i32
    return %c0_i32, %c0_i32_0 : i32, i32
  }
  func.func @transform_9(%arg0: i32) -> (i32, i32) {
    %c0_i32 = arith.constant 0 : i32
    %c0_i32_0 = arith.constant 0 : i32
    %c0_i32_1 = arith.constant 0 : i32
    return %c0_i32, %c0_i32_0 : i32, i32
  }
  func.func @transform_10(%arg0: i32) -> (i32, i32) {
    %c0_i32 = arith.constant 0 : i32
    %c0_i32_0 = arith.constant 0 : i32
    %c0_i32_1 = arith.constant 0 : i32
    return %c0_i32, %c0_i32_0 : i32, i32
  }
  func.func @transform_11(%arg0: i32) -> (i32, i32) {
    %c0_i32 = arith.constant 0 : i32
    %c0_i32_0 = arith.constant 0 : i32
    return %arg0, %c0_i32 : i32, i32
  }
}

module attributes {stable_mosaic.version = 11 : i64} {
  func.func @_fused_kernel(%arg0: i32, %arg1: memref<128x69xbf16, #tpu.memory_space<vmem>>, %arg2: memref<69x256xbf16, #tpu.memory_space<vmem>>, %arg3: memref<1x64xf32, #tpu.memory_space<vmem>>, %arg4: memref<256x256xbf16, #tpu.memory_space<vmem>>, %arg5: memref<1x64xf32, #tpu.memory_space<vmem>>, %arg6: memref<256x256xbf16, #tpu.memory_space<vmem>>, %arg7: memref<1x64xf32, #tpu.memory_space<vmem>>, %arg8: memref<256x256xbf16, #tpu.memory_space<vmem>>, %arg9: memref<1x64xf32, #tpu.memory_space<vmem>>, %arg10: memref<256x68xbf16, #tpu.memory_space<vmem>>, %arg11: memref<1x68xf32, #tpu.memory_space<vmem>>, %arg12: memref<91x64xbf16, #tpu.memory_space<vmem>>, %arg13: memref<1x64xf32, #tpu.memory_space<vmem>>, %arg14: memref<64x64xbf16, #tpu.memory_space<vmem>>, %arg15: memref<1x64xf32, #tpu.memory_space<vmem>>, %arg16: memref<64x3xbf16, #tpu.memory_space<vmem>>, %arg17: memref<1x3xf32, #tpu.memory_space<vmem>>, %arg18: memref<128x8xf32, #tpu.memory_space<vmem>>) attributes {dimension_semantics = [#tpu.dimension_semantics<parallel>], iteration_bounds = array<i64: 2>, scalar_prefetch = 0 : i64, scratch_operands = 0 : i64, tpu.core_type = #tpu.core_type<tc>, window_params = [{transform_indices = @transform_0, window_bounds = array<i64: 128, 69>}, {pipeline_mode = #tpu.pipeline_mode<synchronous>, transform_indices = @transform_1, window_bounds = array<i64: 69, 256>}, {pipeline_mode = #tpu.pipeline_mode<synchronous>, transform_indices = @transform_2, window_bounds = array<i64: 1, 64>}, {pipeline_mode = #tpu.pipeline_mode<synchronous>, transform_indices = @transform_3, window_bounds = array<i64: 256, 256>}, {pipeline_mode = #tpu.pipeline_mode<synchronous>, transform_indices = @transform_4, window_bounds = array<i64: 1, 64>}, {pipeline_mode = #tpu.pipeline_mode<synchronous>, transform_indices = @transform_5, window_bounds = array<i64: 256, 256>}, {pipeline_mode = #tpu.pipeline_mode<synchronous>, transform_indices = @transform_6, window_bounds = array<i64: 1, 64>}, {pipeline_mode = #tpu.pipeline_mode<synchronous>, transform_indices = @transform_7, window_bounds = array<i64: 256, 256>}, {pipeline_mode = #tpu.pipeline_mode<synchronous>, transform_indices = @transform_8, window_bounds = array<i64: 1, 64>}, {pipeline_mode = #tpu.pipeline_mode<synchronous>, transform_indices = @transform_9, window_bounds = array<i64: 256, 68>}, {pipeline_mode = #tpu.pipeline_mode<synchronous>, transform_indices = @transform_10, window_bounds = array<i64: 1, 68>}, {pipeline_mode = #tpu.pipeline_mode<synchronous>, transform_indices = @transform_11, window_bounds = array<i64: 91, 64>}, {pipeline_mode = #tpu.pipeline_mode<synchronous>, transform_indices = @transform_12, window_bounds = array<i64: 1, 64>}, {pipeline_mode = #tpu.pipeline_mode<synchronous>, transform_indices = @transform_13, window_bounds = array<i64: 64, 64>}, {pipeline_mode = #tpu.pipeline_mode<synchronous>, transform_indices = @transform_14, window_bounds = array<i64: 1, 64>}, {pipeline_mode = #tpu.pipeline_mode<synchronous>, transform_indices = @transform_15, window_bounds = array<i64: 64, 3>}, {pipeline_mode = #tpu.pipeline_mode<synchronous>, transform_indices = @transform_16, window_bounds = array<i64: 1, 3>}, {transform_indices = @transform_17, window_bounds = array<i64: 128, 8>}]} {
    %c0 = arith.constant 0 : index
    %c0_0 = arith.constant 0 : index
    %0 = vector.load %arg1[%c0, %c0_0] : memref<128x69xbf16, #tpu.memory_space<vmem>>, vector<128x69xbf16>
    %c0_1 = arith.constant 0 : index
    %c0_2 = arith.constant 0 : index
    %1 = vector.load %arg2[%c0_1, %c0_2] : memref<69x256xbf16, #tpu.memory_space<vmem>>, vector<69x256xbf16>
    %cst = arith.constant dense<0.000000e+00> : vector<128x256xf32>
    %2 = tpu.matmul %0, %1, %cst {dimension_numbers = #tpu.dot_dimension_numbers<[1], [0], [0], [1], [0, 0, 1, 1], [], []>} : vector<128x69xbf16>, vector<69x256xbf16>, vector<128x256xf32> -> vector<128x256xf32>
    %3 = vector.extract_strided_slice %2 {offsets = [0, 0], sizes = [128, 64], strides = [1, 1]} : vector<128x256xf32> to vector<128x64xf32>
    %c0_3 = arith.constant 0 : index
    %c0_4 = arith.constant 0 : index
    %4 = vector.load %arg3[%c0_3, %c0_4] : memref<1x64xf32, #tpu.memory_space<vmem>>, vector<1x64xf32>
    %5 = vector.broadcast %4 : vector<1x64xf32> to vector<128x64xf32>
    %6 = arith.addf %3, %5 : vector<128x64xf32>
    %cst_5 = arith.constant 1.000000e+02 : f32
    %7 = vector.broadcast %cst_5 : f32 to vector<128x64xf32>
    %8 = arith.mulf %7, %6 : vector<128x64xf32>
    %9 = math.absf %8 : vector<128x64xf32>
    %cst_6 = arith.constant 0.000000e+00 : f32
    %10 = vector.broadcast %cst_6 : f32 to vector<128x64xf32>
    %11 = arith.subf %10, %9 : vector<128x64xf32>
    %12 = math.exp %11 : vector<128x64xf32>
    %cst_7 = arith.constant 0.000000e+00 : f32
    %13 = vector.broadcast %cst_7 : f32 to vector<128x64xf32>
    %14 = arith.maximumf %8, %13 : vector<128x64xf32>
    %cst_8 = arith.constant 1.000000e+00 : f32
    %15 = vector.broadcast %cst_8 : f32 to vector<128x64xf32>
    %16 = arith.addf %15, %12 : vector<128x64xf32>
    %17 = math.log %16 : vector<128x64xf32>
    %18 = arith.addf %14, %17 : vector<128x64xf32>
    %cst_9 = arith.constant 0.00999999977 : f32
    %19 = vector.broadcast %cst_9 : f32 to vector<128x64xf32>
    %20 = arith.mulf %18, %19 : vector<128x64xf32>
    %cst_10 = arith.constant 0.000000e+00 : f32
    %21 = vector.broadcast %cst_10 : f32 to vector<128x64xf32>
    %22 = arith.cmpf oge, %8, %21 : vector<128x64xf32>
    %cst_11 = arith.constant 1.000000e+00 : f32
    %23 = vector.broadcast %cst_11 : f32 to vector<128x64xf32>
    %24 = arith.select %22, %23, %12 : vector<128x64xi1>, vector<128x64xf32>
    %cst_12 = arith.constant 1.000000e+00 : f32
    %25 = vector.broadcast %cst_12 : f32 to vector<128x64xf32>
    %26 = arith.addf %25, %12 : vector<128x64xf32>
    %27 = arith.divf %24, %26 : vector<128x64xf32>
    %28 = vector.extract_strided_slice %2 {offsets = [0, 64], sizes = [128, 64], strides = [1, 1]} : vector<128x256xf32> to vector<128x64xf32>
    %29 = arith.mulf %28, %27 : vector<128x64xf32>
    %30 = vector.extract_strided_slice %2 {offsets = [0, 128], sizes = [128, 64], strides = [1, 1]} : vector<128x256xf32> to vector<128x64xf32>
    %31 = arith.mulf %30, %27 : vector<128x64xf32>
    %32 = vector.extract_strided_slice %2 {offsets = [0, 192], sizes = [128, 64], strides = [1, 1]} : vector<128x256xf32> to vector<128x64xf32>
    %33 = arith.mulf %32, %27 : vector<128x64xf32>
    %34 = tpu.concatenate %20, %29, %31, %33 in 1 : vector<128x64xf32>, vector<128x64xf32>, vector<128x64xf32>, vector<128x64xf32> -> vector<128x256xf32>
    %35 = arith.truncf %34 : vector<128x256xf32> to vector<128x256xbf16>
    %c0_13 = arith.constant 0 : index
    %c0_14 = arith.constant 0 : index
    %36 = vector.load %arg4[%c0_13, %c0_14] : memref<256x256xbf16, #tpu.memory_space<vmem>>, vector<256x256xbf16>
    %cst_15 = arith.constant dense<0.000000e+00> : vector<128x256xf32>
    %37 = tpu.matmul %35, %36, %cst_15 {dimension_numbers = #tpu.dot_dimension_numbers<[1], [0], [0], [1], [0, 0, 1, 1], [], []>} : vector<128x256xbf16>, vector<256x256xbf16>, vector<128x256xf32> -> vector<128x256xf32>
    %38 = vector.extract_strided_slice %37 {offsets = [0, 0], sizes = [128, 64], strides = [1, 1]} : vector<128x256xf32> to vector<128x64xf32>
    %c0_16 = arith.constant 0 : index
    %c0_17 = arith.constant 0 : index
    %39 = vector.load %arg5[%c0_16, %c0_17] : memref<1x64xf32, #tpu.memory_space<vmem>>, vector<1x64xf32>
    %40 = vector.broadcast %39 : vector<1x64xf32> to vector<128x64xf32>
    %41 = arith.addf %38, %40 : vector<128x64xf32>
    %cst_18 = arith.constant 1.000000e+02 : f32
    %42 = vector.broadcast %cst_18 : f32 to vector<128x64xf32>
    %43 = arith.mulf %42, %41 : vector<128x64xf32>
    %44 = math.absf %43 : vector<128x64xf32>
    %cst_19 = arith.constant 0.000000e+00 : f32
    %45 = vector.broadcast %cst_19 : f32 to vector<128x64xf32>
    %46 = arith.subf %45, %44 : vector<128x64xf32>
    %47 = math.exp %46 : vector<128x64xf32>
    %cst_20 = arith.constant 0.000000e+00 : f32
    %48 = vector.broadcast %cst_20 : f32 to vector<128x64xf32>
    %49 = arith.maximumf %43, %48 : vector<128x64xf32>
    %cst_21 = arith.constant 1.000000e+00 : f32
    %50 = vector.broadcast %cst_21 : f32 to vector<128x64xf32>
    %51 = arith.addf %50, %47 : vector<128x64xf32>
    %52 = math.log %51 : vector<128x64xf32>
    %53 = arith.addf %49, %52 : vector<128x64xf32>
    %cst_22 = arith.constant 0.00999999977 : f32
    %54 = vector.broadcast %cst_22 : f32 to vector<128x64xf32>
    %55 = arith.mulf %53, %54 : vector<128x64xf32>
    %cst_23 = arith.constant 0.000000e+00 : f32
    %56 = vector.broadcast %cst_23 : f32 to vector<128x64xf32>
    %57 = arith.cmpf oge, %43, %56 : vector<128x64xf32>
    %cst_24 = arith.constant 1.000000e+00 : f32
    %58 = vector.broadcast %cst_24 : f32 to vector<128x64xf32>
    %59 = arith.select %57, %58, %47 : vector<128x64xi1>, vector<128x64xf32>
    %cst_25 = arith.constant 1.000000e+00 : f32
    %60 = vector.broadcast %cst_25 : f32 to vector<128x64xf32>
    %61 = arith.addf %60, %47 : vector<128x64xf32>
    %62 = arith.divf %59, %61 : vector<128x64xf32>
    %63 = vector.extract_strided_slice %37 {offsets = [0, 64], sizes = [128, 64], strides = [1, 1]} : vector<128x256xf32> to vector<128x64xf32>
    %64 = arith.mulf %63, %62 : vector<128x64xf32>
    %65 = vector.extract_strided_slice %37 {offsets = [0, 128], sizes = [128, 64], strides = [1, 1]} : vector<128x256xf32> to vector<128x64xf32>
    %66 = arith.mulf %65, %62 : vector<128x64xf32>
    %67 = vector.extract_strided_slice %37 {offsets = [0, 192], sizes = [128, 64], strides = [1, 1]} : vector<128x256xf32> to vector<128x64xf32>
    %68 = arith.mulf %67, %62 : vector<128x64xf32>
    %69 = tpu.concatenate %55, %64, %66, %68 in 1 : vector<128x64xf32>, vector<128x64xf32>, vector<128x64xf32>, vector<128x64xf32> -> vector<128x256xf32>
    %70 = arith.truncf %69 : vector<128x256xf32> to vector<128x256xbf16>
    %c0_26 = arith.constant 0 : index
    %c0_27 = arith.constant 0 : index
    %71 = vector.load %arg6[%c0_26, %c0_27] : memref<256x256xbf16, #tpu.memory_space<vmem>>, vector<256x256xbf16>
    %cst_28 = arith.constant dense<0.000000e+00> : vector<128x256xf32>
    %72 = tpu.matmul %70, %71, %cst_28 {dimension_numbers = #tpu.dot_dimension_numbers<[1], [0], [0], [1], [0, 0, 1, 1], [], []>} : vector<128x256xbf16>, vector<256x256xbf16>, vector<128x256xf32> -> vector<128x256xf32>
    %73 = vector.extract_strided_slice %72 {offsets = [0, 0], sizes = [128, 64], strides = [1, 1]} : vector<128x256xf32> to vector<128x64xf32>
    %c0_29 = arith.constant 0 : index
    %c0_30 = arith.constant 0 : index
    %74 = vector.load %arg7[%c0_29, %c0_30] : memref<1x64xf32, #tpu.memory_space<vmem>>, vector<1x64xf32>
    %75 = vector.broadcast %74 : vector<1x64xf32> to vector<128x64xf32>
    %76 = arith.addf %73, %75 : vector<128x64xf32>
    %cst_31 = arith.constant 1.000000e+02 : f32
    %77 = vector.broadcast %cst_31 : f32 to vector<128x64xf32>
    %78 = arith.mulf %77, %76 : vector<128x64xf32>
    %79 = math.absf %78 : vector<128x64xf32>
    %cst_32 = arith.constant 0.000000e+00 : f32
    %80 = vector.broadcast %cst_32 : f32 to vector<128x64xf32>
    %81 = arith.subf %80, %79 : vector<128x64xf32>
    %82 = math.exp %81 : vector<128x64xf32>
    %cst_33 = arith.constant 0.000000e+00 : f32
    %83 = vector.broadcast %cst_33 : f32 to vector<128x64xf32>
    %84 = arith.maximumf %78, %83 : vector<128x64xf32>
    %cst_34 = arith.constant 1.000000e+00 : f32
    %85 = vector.broadcast %cst_34 : f32 to vector<128x64xf32>
    %86 = arith.addf %85, %82 : vector<128x64xf32>
    %87 = math.log %86 : vector<128x64xf32>
    %88 = arith.addf %84, %87 : vector<128x64xf32>
    %cst_35 = arith.constant 0.00999999977 : f32
    %89 = vector.broadcast %cst_35 : f32 to vector<128x64xf32>
    %90 = arith.mulf %88, %89 : vector<128x64xf32>
    %cst_36 = arith.constant 0.000000e+00 : f32
    %91 = vector.broadcast %cst_36 : f32 to vector<128x64xf32>
    %92 = arith.cmpf oge, %78, %91 : vector<128x64xf32>
    %cst_37 = arith.constant 1.000000e+00 : f32
    %93 = vector.broadcast %cst_37 : f32 to vector<128x64xf32>
    %94 = arith.select %92, %93, %82 : vector<128x64xi1>, vector<128x64xf32>
    %cst_38 = arith.constant 1.000000e+00 : f32
    %95 = vector.broadcast %cst_38 : f32 to vector<128x64xf32>
    %96 = arith.addf %95, %82 : vector<128x64xf32>
    %97 = arith.divf %94, %96 : vector<128x64xf32>
    %98 = vector.extract_strided_slice %72 {offsets = [0, 64], sizes = [128, 64], strides = [1, 1]} : vector<128x256xf32> to vector<128x64xf32>
    %99 = arith.mulf %98, %97 : vector<128x64xf32>
    %100 = vector.extract_strided_slice %72 {offsets = [0, 128], sizes = [128, 64], strides = [1, 1]} : vector<128x256xf32> to vector<128x64xf32>
    %101 = arith.mulf %100, %97 : vector<128x64xf32>
    %102 = vector.extract_strided_slice %72 {offsets = [0, 192], sizes = [128, 64], strides = [1, 1]} : vector<128x256xf32> to vector<128x64xf32>
    %103 = arith.mulf %102, %97 : vector<128x64xf32>
    %104 = tpu.concatenate %90, %99, %101, %103 in 1 : vector<128x64xf32>, vector<128x64xf32>, vector<128x64xf32>, vector<128x64xf32> -> vector<128x256xf32>
    %105 = arith.truncf %104 : vector<128x256xf32> to vector<128x256xbf16>
    %c0_39 = arith.constant 0 : index
    %c0_40 = arith.constant 0 : index
    %106 = vector.load %arg8[%c0_39, %c0_40] : memref<256x256xbf16, #tpu.memory_space<vmem>>, vector<256x256xbf16>
    %cst_41 = arith.constant dense<0.000000e+00> : vector<128x256xf32>
    %107 = tpu.matmul %105, %106, %cst_41 {dimension_numbers = #tpu.dot_dimension_numbers<[1], [0], [0], [1], [0, 0, 1, 1], [], []>} : vector<128x256xbf16>, vector<256x256xbf16>, vector<128x256xf32> -> vector<128x256xf32>
    %108 = vector.extract_strided_slice %107 {offsets = [0, 0], sizes = [128, 64], strides = [1, 1]} : vector<128x256xf32> to vector<128x64xf32>
    %c0_42 = arith.constant 0 : index
    %c0_43 = arith.constant 0 : index
    %109 = vector.load %arg9[%c0_42, %c0_43] : memref<1x64xf32, #tpu.memory_space<vmem>>, vector<1x64xf32>
    %110 = vector.broadcast %109 : vector<1x64xf32> to vector<128x64xf32>
    %111 = arith.addf %108, %110 : vector<128x64xf32>
    %cst_44 = arith.constant 1.000000e+02 : f32
    %112 = vector.broadcast %cst_44 : f32 to vector<128x64xf32>
    %113 = arith.mulf %112, %111 : vector<128x64xf32>
    %114 = math.absf %113 : vector<128x64xf32>
    %cst_45 = arith.constant 0.000000e+00 : f32
    %115 = vector.broadcast %cst_45 : f32 to vector<128x64xf32>
    %116 = arith.subf %115, %114 : vector<128x64xf32>
    %117 = math.exp %116 : vector<128x64xf32>
    %cst_46 = arith.constant 0.000000e+00 : f32
    %118 = vector.broadcast %cst_46 : f32 to vector<128x64xf32>
    %119 = arith.maximumf %113, %118 : vector<128x64xf32>
    %cst_47 = arith.constant 1.000000e+00 : f32
    %120 = vector.broadcast %cst_47 : f32 to vector<128x64xf32>
    %121 = arith.addf %120, %117 : vector<128x64xf32>
    %122 = math.log %121 : vector<128x64xf32>
    %123 = arith.addf %119, %122 : vector<128x64xf32>
    %cst_48 = arith.constant 0.00999999977 : f32
    %124 = vector.broadcast %cst_48 : f32 to vector<128x64xf32>
    %125 = arith.mulf %123, %124 : vector<128x64xf32>
    %cst_49 = arith.constant 0.000000e+00 : f32
    %126 = vector.broadcast %cst_49 : f32 to vector<128x64xf32>
    %127 = arith.cmpf oge, %113, %126 : vector<128x64xf32>
    %cst_50 = arith.constant 1.000000e+00 : f32
    %128 = vector.broadcast %cst_50 : f32 to vector<128x64xf32>
    %129 = arith.select %127, %128, %117 : vector<128x64xi1>, vector<128x64xf32>
    %cst_51 = arith.constant 1.000000e+00 : f32
    %130 = vector.broadcast %cst_51 : f32 to vector<128x64xf32>
    %131 = arith.addf %130, %117 : vector<128x64xf32>
    %132 = arith.divf %129, %131 : vector<128x64xf32>
    %133 = vector.extract_strided_slice %107 {offsets = [0, 64], sizes = [128, 64], strides = [1, 1]} : vector<128x256xf32> to vector<128x64xf32>
    %134 = arith.mulf %133, %132 : vector<128x64xf32>
    %135 = vector.extract_strided_slice %107 {offsets = [0, 128], sizes = [128, 64], strides = [1, 1]} : vector<128x256xf32> to vector<128x64xf32>
    %136 = arith.mulf %135, %132 : vector<128x64xf32>
    %137 = vector.extract_strided_slice %107 {offsets = [0, 192], sizes = [128, 64], strides = [1, 1]} : vector<128x256xf32> to vector<128x64xf32>
    %138 = arith.mulf %137, %132 : vector<128x64xf32>
    %139 = tpu.concatenate %125, %134, %136, %138 in 1 : vector<128x64xf32>, vector<128x64xf32>, vector<128x64xf32>, vector<128x64xf32> -> vector<128x256xf32>
    %140 = arith.truncf %139 : vector<128x256xf32> to vector<128x256xbf16>
    %c0_52 = arith.constant 0 : index
    %c0_53 = arith.constant 0 : index
    %141 = vector.load %arg10[%c0_52, %c0_53] : memref<256x68xbf16, #tpu.memory_space<vmem>>, vector<256x68xbf16>
    %cst_54 = arith.constant dense<0.000000e+00> : vector<128x68xf32>
    %142 = tpu.matmul %140, %141, %cst_54 {dimension_numbers = #tpu.dot_dimension_numbers<[1], [0], [0], [1], [0, 0, 1, 1], [], []>} : vector<128x256xbf16>, vector<256x68xbf16>, vector<128x68xf32> -> vector<128x68xf32>
    %c0_55 = arith.constant 0 : index
    %c0_56 = arith.constant 0 : index
    %143 = vector.load %arg11[%c0_55, %c0_56] : memref<1x68xf32, #tpu.memory_space<vmem>>, vector<1x68xf32>
    %144 = vector.broadcast %143 : vector<1x68xf32> to vector<128x68xf32>
    %145 = arith.addf %142, %144 : vector<128x68xf32>
    %146 = vector.extract_strided_slice %145 {offsets = [0, 0], sizes = [128, 64], strides = [1, 1]} : vector<128x68xf32> to vector<128x64xf32>
    %147 = vector.extract_strided_slice %145 {offsets = [0, 64], sizes = [128, 3], strides = [1, 1]} : vector<128x68xf32> to vector<128x3xf32>
    %148 = vector.extract_strided_slice %145 {offsets = [0, 67], sizes = [128, 1], strides = [1, 1]} : vector<128x68xf32> to vector<128x1xf32>
    %149 = arith.mulf %147, %147 : vector<128x3xf32>
    %cst_57 = arith.constant dense<0.000000e+00> : vector<128xf32>
    %150 = vector.multi_reduction <add>, %149, %cst_57 [1] : vector<128x3xf32> to vector<128xf32>
    %151 = vector.shape_cast %150 : vector<128xf32> to vector<128x1xf32>
    %cst_58 = arith.constant 1.000000e-24 : f32
    %152 = vector.broadcast %cst_58 : f32 to vector<128x1xf32>
    %153 = arith.maximumf %151, %152 : vector<128x1xf32>
    %154 = math.rsqrt %153 : vector<128x1xf32>
    %155 = vector.broadcast %154 : vector<128x1xf32> to vector<128x3xf32>
    %156 = arith.mulf %147, %155 : vector<128x3xf32>
    %157 = vector.extract_strided_slice %0 {offsets = [0, 0], sizes = [128, 24], strides = [1, 1]} : vector<128x69xbf16> to vector<128x24xbf16>
    %158 = arith.truncf %156 : vector<128x3xf32> to vector<128x3xbf16>
    %159 = arith.truncf %146 : vector<128x64xf32> to vector<128x64xbf16>
    %160 = tpu.concatenate %157, %158, %159 in 1 : vector<128x24xbf16>, vector<128x3xbf16>, vector<128x64xbf16> -> vector<128x91xbf16>
    %c0_59 = arith.constant 0 : index
    %c0_60 = arith.constant 0 : index
    %161 = vector.load %arg12[%c0_59, %c0_60] : memref<91x64xbf16, #tpu.memory_space<vmem>>, vector<91x64xbf16>
    %cst_61 = arith.constant dense<0.000000e+00> : vector<128x64xf32>
    %162 = tpu.matmul %160, %161, %cst_61 {dimension_numbers = #tpu.dot_dimension_numbers<[1], [0], [0], [1], [0, 0, 1, 1], [], []>} : vector<128x91xbf16>, vector<91x64xbf16>, vector<128x64xf32> -> vector<128x64xf32>
    %c0_62 = arith.constant 0 : index
    %c0_63 = arith.constant 0 : index
    %163 = vector.load %arg13[%c0_62, %c0_63] : memref<1x64xf32, #tpu.memory_space<vmem>>, vector<1x64xf32>
    %164 = vector.broadcast %163 : vector<1x64xf32> to vector<128x64xf32>
    %165 = arith.addf %162, %164 : vector<128x64xf32>
    %cst_64 = arith.constant 0.000000e+00 : f32
    %166 = vector.broadcast %cst_64 : f32 to vector<128x64xf32>
    %167 = arith.maximumf %165, %166 : vector<128x64xf32>
    %168 = arith.truncf %167 : vector<128x64xf32> to vector<128x64xbf16>
    %c0_65 = arith.constant 0 : index
    %c0_66 = arith.constant 0 : index
    %169 = vector.load %arg14[%c0_65, %c0_66] : memref<64x64xbf16, #tpu.memory_space<vmem>>, vector<64x64xbf16>
    %cst_67 = arith.constant dense<0.000000e+00> : vector<128x64xf32>
    %170 = tpu.matmul %168, %169, %cst_67 {dimension_numbers = #tpu.dot_dimension_numbers<[1], [0], [0], [1], [0, 0, 1, 1], [], []>} : vector<128x64xbf16>, vector<64x64xbf16>, vector<128x64xf32> -> vector<128x64xf32>
    %c0_68 = arith.constant 0 : index
    %c0_69 = arith.constant 0 : index
    %171 = vector.load %arg15[%c0_68, %c0_69] : memref<1x64xf32, #tpu.memory_space<vmem>>, vector<1x64xf32>
    %172 = vector.broadcast %171 : vector<1x64xf32> to vector<128x64xf32>
    %173 = arith.addf %170, %172 : vector<128x64xf32>
    %cst_70 = arith.constant 0.000000e+00 : f32
    %174 = vector.broadcast %cst_70 : f32 to vector<128x64xf32>
    %175 = arith.maximumf %173, %174 : vector<128x64xf32>
    %176 = arith.truncf %175 : vector<128x64xf32> to vector<128x64xbf16>
    %c0_71 = arith.constant 0 : index
    %c0_72 = arith.constant 0 : index
    %177 = vector.load %arg16[%c0_71, %c0_72] : memref<64x3xbf16, #tpu.memory_space<vmem>>, vector<64x3xbf16>
    %cst_73 = arith.constant dense<0.000000e+00> : vector<128x3xf32>
    %178 = tpu.matmul %176, %177, %cst_73 {dimension_numbers = #tpu.dot_dimension_numbers<[1], [0], [0], [1], [0, 0, 1, 1], [], []>} : vector<128x64xbf16>, vector<64x3xbf16>, vector<128x3xf32> -> vector<128x3xf32>
    %c0_74 = arith.constant 0 : index
    %c0_75 = arith.constant 0 : index
    %179 = vector.load %arg17[%c0_74, %c0_75] : memref<1x3xf32, #tpu.memory_space<vmem>>, vector<1x3xf32>
    %180 = vector.broadcast %179 : vector<1x3xf32> to vector<128x3xf32>
    %181 = arith.addf %178, %180 : vector<128x3xf32>
    %182 = math.absf %181 : vector<128x3xf32>
    %cst_76 = arith.constant 0.000000e+00 : f32
    %183 = vector.broadcast %cst_76 : f32 to vector<128x3xf32>
    %184 = arith.subf %183, %182 : vector<128x3xf32>
    %185 = math.exp %184 : vector<128x3xf32>
    %cst_77 = arith.constant 0.000000e+00 : f32
    %186 = vector.broadcast %cst_77 : f32 to vector<128x3xf32>
    %187 = arith.cmpf oge, %181, %186 : vector<128x3xf32>
    %cst_78 = arith.constant 1.000000e+00 : f32
    %188 = vector.broadcast %cst_78 : f32 to vector<128x3xf32>
    %189 = arith.select %187, %188, %185 : vector<128x3xi1>, vector<128x3xf32>
    %cst_79 = arith.constant 1.000000e+00 : f32
    %190 = vector.broadcast %cst_79 : f32 to vector<128x3xf32>
    %191 = arith.addf %190, %185 : vector<128x3xf32>
    %192 = tpu.reciprocal %191 {approx = true} : vector<128x3xf32> -> vector<128x3xf32>
    %193 = arith.mulf %189, %192 : vector<128x3xf32>
    %cst_80 = arith.constant 0.000000e+00 : f32
    %194 = vector.broadcast %cst_80 : f32 to vector<128x1xf32>
    %195 = tpu.concatenate %148, %147, %193, %194 in 1 : vector<128x1xf32>, vector<128x3xf32>, vector<128x3xf32>, vector<128x1xf32> -> vector<128x8xf32>
    %c0_81 = arith.constant 0 : index
    %c0_82 = arith.constant 0 : index
    %196 = vector.load %arg18[%c0_81, %c0_82] : memref<128x8xf32, #tpu.memory_space<vmem>>, vector<128x8xf32>
    tpu.vector_store %arg18[%c0_81, %c0_82], %195 {strides = array<i32>} : memref<128x8xf32, #tpu.memory_space<vmem>>, vector<128x8xf32>,
    return
  }
  func.func @transform_0(%arg0: i32) -> (i32, i32) {
    %c0_i32 = arith.constant 0 : i32
    %c0_i32_0 = arith.constant 0 : i32
    return %arg0, %c0_i32 : i32, i32
  }
  func.func @transform_1(%arg0: i32) -> (i32, i32) {
    %c0_i32 = arith.constant 0 : i32
    %c0_i32_0 = arith.constant 0 : i32
    %c0_i32_1 = arith.constant 0 : i32
    return %c0_i32, %c0_i32_0 : i32, i32
  }
  func.func @transform_2(%arg0: i32) -> (i32, i32) {
    %c0_i32 = arith.constant 0 : i32
    %c0_i32_0 = arith.constant 0 : i32
    %c0_i32_1 = arith.constant 0 : i32
    return %c0_i32, %c0_i32_0 : i32, i32
  }
  func.func @transform_3(%arg0: i32) -> (i32, i32) {
    %c0_i32 = arith.constant 0 : i32
    %c0_i32_0 = arith.constant 0 : i32
    %c0_i32_1 = arith.constant 0 : i32
    return %c0_i32, %c0_i32_0 : i32, i32
  }
  func.func @transform_4(%arg0: i32) -> (i32, i32) {
    %c0_i32 = arith.constant 0 : i32
    %c0_i32_0 = arith.constant 0 : i32
    %c0_i32_1 = arith.constant 0 : i32
    return %c0_i32, %c0_i32_0 : i32, i32
  }
  func.func @transform_5(%arg0: i32) -> (i32, i32) {
    %c0_i32 = arith.constant 0 : i32
    %c0_i32_0 = arith.constant 0 : i32
    %c0_i32_1 = arith.constant 0 : i32
    return %c0_i32, %c0_i32_0 : i32, i32
  }
  func.func @transform_6(%arg0: i32) -> (i32, i32) {
    %c0_i32 = arith.constant 0 : i32
    %c0_i32_0 = arith.constant 0 : i32
    %c0_i32_1 = arith.constant 0 : i32
    return %c0_i32, %c0_i32_0 : i32, i32
  }
  func.func @transform_7(%arg0: i32) -> (i32, i32) {
    %c0_i32 = arith.constant 0 : i32
    %c0_i32_0 = arith.constant 0 : i32
    %c0_i32_1 = arith.constant 0 : i32
    return %c0_i32, %c0_i32_0 : i32, i32
  }
  func.func @transform_8(%arg0: i32) -> (i32, i32) {
    %c0_i32 = arith.constant 0 : i32
    %c0_i32_0 = arith.constant 0 : i32
    %c0_i32_1 = arith.constant 0 : i32
    return %c0_i32, %c0_i32_0 : i32, i32
  }
  func.func @transform_9(%arg0: i32) -> (i32, i32) {
    %c0_i32 = arith.constant 0 : i32
    %c0_i32_0 = arith.constant 0 : i32
    %c0_i32_1 = arith.constant 0 : i32
    return %c0_i32, %c0_i32_0 : i32, i32
  }
  func.func @transform_10(%arg0: i32) -> (i32, i32) {
    %c0_i32 = arith.constant 0 : i32
    %c0_i32_0 = arith.constant 0 : i32
    %c0_i32_1 = arith.constant 0 : i32
    return %c0_i32, %c0_i32_0 : i32, i32
  }
  func.func @transform_11(%arg0: i32) -> (i32, i32) {
    %c0_i32 = arith.constant 0 : i32
    %c0_i32_0 = arith.constant 0 : i32
    %c0_i32_1 = arith.constant 0 : i32
    return %c0_i32, %c0_i32_0 : i32, i32
  }
  func.func @transform_12(%arg0: i32) -> (i32, i32) {
    %c0_i32 = arith.constant 0 : i32
    %c0_i32_0 = arith.constant 0 : i32
    %c0_i32_1 = arith.constant 0 : i32
    return %c0_i32, %c0_i32_0 : i32, i32
  }
  func.func @transform_13(%arg0: i32) -> (i32, i32) {
    %c0_i32 = arith.constant 0 : i32
    %c0_i32_0 = arith.constant 0 : i32
    %c0_i32_1 = arith.constant 0 : i32
    return %c0_i32, %c0_i32_0 : i32, i32
  }
  func.func @transform_14(%arg0: i32) -> (i32, i32) {
    %c0_i32 = arith.constant 0 : i32
    %c0_i32_0 = arith.constant 0 : i32
    %c0_i32_1 = arith.constant 0 : i32
    return %c0_i32, %c0_i32_0 : i32, i32
  }
  func.func @transform_15(%arg0: i32) -> (i32, i32) {
    %c0_i32 = arith.constant 0 : i32
    %c0_i32_0 = arith.constant 0 : i32
    %c0_i32_1 = arith.constant 0 : i32
    return %c0_i32, %c0_i32_0 : i32, i32
  }
  func.func @transform_16(%arg0: i32) -> (i32, i32) {
    %c0_i32 = arith.constant 0 : i32
    %c0_i32_0 = arith.constant 0 : i32
    %c0_i32_1 = arith.constant 0 : i32
    return %c0_i32, %c0_i32_0 : i32, i32
  }
  func.func @transform_17(%arg0: i32) -> (i32, i32) {
    %c0_i32 = arith.constant 0 : i32
    %c0_i32_0 = arith.constant 0 : i32
    return %arg0, %c0_i32 : i32, i32
  }
}

module attributes {stable_mosaic.version = 11 : i64} {
  func.func @_render_kernel(%arg0: i32, %arg1: memref<8x120xf32, #tpu.memory_space<vmem>>, %arg2: memref<24x24xf32, #tpu.memory_space<vmem>>, %arg3: memref<8x8xf32, #tpu.memory_space<vmem>>, %arg4: memref<8x24xf32, #tpu.memory_space<vmem>>) attributes {dimension_semantics = [#tpu.dimension_semantics<parallel>], iteration_bounds = array<i64: 1>, scalar_prefetch = 0 : i64, scratch_operands = 0 : i64, tpu.core_type = #tpu.core_type<tc>, window_params = [{transform_indices = @transform_0, window_bounds = array<i64: 8, 120>}, {pipeline_mode = #tpu.pipeline_mode<synchronous>, transform_indices = @transform_1, window_bounds = array<i64: 24, 24>}, {transform_indices = @transform_2, window_bounds = array<i64: 8, 8>}, {transform_indices = @transform_3, window_bounds = array<i64: 8, 24>}]} {
    %c0 = arith.constant 0 : index
    %c0_0 = arith.constant 0 : index
    %0 = vector.load %arg1[%c0, %c0_0] : memref<8x120xf32, #tpu.memory_space<vmem>>, vector<8x120xf32>
    %1 = vector.extract_strided_slice %0 {offsets = [0, 0], sizes = [8, 24], strides = [1, 1]} : vector<8x120xf32> to vector<8x24xf32>
    %2 = vector.extract_strided_slice %0 {offsets = [0, 24], sizes = [8, 24], strides = [1, 1]} : vector<8x120xf32> to vector<8x24xf32>
    %3 = vector.extract_strided_slice %0 {offsets = [0, 48], sizes = [8, 24], strides = [1, 1]} : vector<8x120xf32> to vector<8x24xf32>
    %4 = vector.extract_strided_slice %0 {offsets = [0, 72], sizes = [8, 24], strides = [1, 1]} : vector<8x120xf32> to vector<8x24xf32>
    %5 = vector.extract_strided_slice %0 {offsets = [0, 96], sizes = [8, 24], strides = [1, 1]} : vector<8x120xf32> to vector<8x24xf32>
    %6 = math.absf %1 : vector<8x24xf32>
    %cst = arith.constant 0.000000e+00 : f32
    %7 = vector.broadcast %cst : f32 to vector<8x24xf32>
    %8 = arith.subf %7, %6 : vector<8x24xf32>
    %9 = math.exp %8 : vector<8x24xf32>
    %cst_1 = arith.constant 0.000000e+00 : f32
    %10 = vector.broadcast %cst_1 : f32 to vector<8x24xf32>
    %11 = arith.cmpf ole, %1, %10 : vector<8x24xf32>
    %cst_2 = arith.constant 1.000000e+00 : f32
    %12 = vector.broadcast %cst_2 : f32 to vector<8x24xf32>
    %13 = arith.select %11, %12, %9 : vector<8x24xi1>, vector<8x24xf32>
    %cst_3 = arith.constant 1.000000e+00 : f32
    %14 = vector.broadcast %cst_3 : f32 to vector<8x24xf32>
    %15 = arith.addf %14, %9 : vector<8x24xf32>
    %16 = arith.divf %13, %15 : vector<8x24xf32>
    %cst_4 = arith.constant 1.000000e+00 : f32
    %17 = vector.broadcast %cst_4 : f32 to vector<8x24xf32>
    %18 = arith.subf %17, %16 : vector<8x24xf32>
    %cst_5 = arith.constant 1.000000e-10 : f32
    %19 = vector.broadcast %cst_5 : f32 to vector<8x24xf32>
    %20 = arith.addf %18, %19 : vector<8x24xf32>
    %21 = math.log %20 : vector<8x24xf32>
    %c0_6 = arith.constant 0 : index
    %c0_7 = arith.constant 0 : index
    %22 = vector.load %arg2[%c0_6, %c0_7] : memref<24x24xf32, #tpu.memory_space<vmem>>, vector<24x24xf32>
    %cst_8 = arith.constant dense<0.000000e+00> : vector<8x24xf32>
    %23 = tpu.matmul %21, %22, %cst_8 {dimension_numbers = #tpu.dot_dimension_numbers<[1], [0], [0], [1], [0, 0, 1, 1], [], []>} : vector<8x24xf32>, vector<24x24xf32>, vector<8x24xf32> -> vector<8x24xf32>
    %24 = math.exp %23 : vector<8x24xf32>
    %25 = arith.mulf %16, %24 : vector<8x24xf32>
    %c0_9 = arith.constant 0 : index
    %c0_10 = arith.constant 0 : index
    %26 = vector.load %arg4[%c0_9, %c0_10] : memref<8x24xf32, #tpu.memory_space<vmem>>, vector<8x24xf32>
    tpu.vector_store %arg4[%c0_9, %c0_10], %25 {strides = array<i32>} : memref<8x24xf32, #tpu.memory_space<vmem>>, vector<8x24xf32>,
    %27 = arith.mulf %25, %2 : vector<8x24xf32>
    %cst_11 = arith.constant dense<0.000000e+00> : vector<8xf32>
    %28 = vector.multi_reduction <add>, %27, %cst_11 [1] : vector<8x24xf32> to vector<8xf32>
    %29 = vector.shape_cast %28 : vector<8xf32> to vector<8x1xf32>
    %30 = arith.mulf %25, %3 : vector<8x24xf32>
    %cst_12 = arith.constant dense<0.000000e+00> : vector<8xf32>
    %31 = vector.multi_reduction <add>, %30, %cst_12 [1] : vector<8x24xf32> to vector<8xf32>
    %32 = vector.shape_cast %31 : vector<8xf32> to vector<8x1xf32>
    %33 = arith.mulf %25, %4 : vector<8x24xf32>
    %cst_13 = arith.constant dense<0.000000e+00> : vector<8xf32>
    %34 = vector.multi_reduction <add>, %33, %cst_13 [1] : vector<8x24xf32> to vector<8xf32>
    %35 = vector.shape_cast %34 : vector<8xf32> to vector<8x1xf32>
    %cst_14 = arith.constant dense<0.000000e+00> : vector<8xf32>
    %36 = vector.multi_reduction <add>, %25, %cst_14 [1] : vector<8x24xf32> to vector<8xf32>
    %37 = vector.shape_cast %36 : vector<8xf32> to vector<8x1xf32>
    %cst_15 = arith.constant 1.000000e-10 : f32
    %38 = vector.broadcast %cst_15 : f32 to vector<8x1xf32>
    %39 = arith.addf %37, %38 : vector<8x1xf32>
    %40 = tpu.reciprocal %39 {approx = true} : vector<8x1xf32> -> vector<8x1xf32>
    %41 = arith.mulf %25, %5 : vector<8x24xf32>
    %cst_16 = arith.constant dense<0.000000e+00> : vector<8xf32>
    %42 = vector.multi_reduction <add>, %41, %cst_16 [1] : vector<8x24xf32> to vector<8xf32>
    %43 = vector.shape_cast %42 : vector<8xf32> to vector<8x1xf32>
    %44 = arith.mulf %43, %40 : vector<8x1xf32>
    %cst_17 = arith.constant 0.000000e+00 : f32
    %45 = vector.broadcast %cst_17 : f32 to vector<8x3xf32>
    %46 = tpu.concatenate %29, %32, %35, %44, %37, %45 in 1 : vector<8x1xf32>, vector<8x1xf32>, vector<8x1xf32>, vector<8x1xf32>, vector<8x1xf32>, vector<8x3xf32> -> vector<8x8xf32>
    %c0_18 = arith.constant 0 : index
    %c0_19 = arith.constant 0 : index
    %47 = vector.load %arg3[%c0_18, %c0_19] : memref<8x8xf32, #tpu.memory_space<vmem>>, vector<8x8xf32>
    tpu.vector_store %arg3[%c0_18, %c0_19], %46 {strides = array<i32>} : memref<8x8xf32, #tpu.memory_space<vmem>>, vector<8x8xf32>,
    return
  }
  func.func @transform_0(%arg0: i32) -> (i32, i32) {
    %c0_i32 = arith.constant 0 : i32
    %c0_i32_0 = arith.constant 0 : i32
    return %arg0, %c0_i32 : i32, i32
  }
  func.func @transform_1(%arg0: i32) -> (i32, i32) {
    %c0_i32 = arith.constant 0 : i32
    %c0_i32_0 = arith.constant 0 : i32
    %c0_i32_1 = arith.constant 0 : i32
    return %c0_i32, %c0_i32_0 : i32, i32
  }
  func.func @transform_2(%arg0: i32) -> (i32, i32) {
    %c0_i32 = arith.constant 0 : i32
    %c0_i32_0 = arith.constant 0 : i32
    return %arg0, %c0_i32 : i32, i32
  }
  func.func @transform_3(%arg0: i32) -> (i32, i32) {
    %c0_i32 = arith.constant 0 : i32
    %c0_i32_0 = arith.constant 0 : i32
    return %arg0, %c0_i32 : i32, i32
  }
}

</mosaic_0001>

<llo_original>
// kernel: run.3
$region0: #{run.3}
  #allocation0 [shape = 'u32[]', space=smem, size = 0x4, offset = 0x4, fixed_abs, tag = 'smem constant byte address 0x4 - core index']
  #allocation1 [shape = 'u32[144,128]{1,0:T(1,128)}', space=vmem, size = 0x12000, scoped, tag = 'internal scratch']
  #allocation2 [shape = 'f32[1,1]{1,0:T(1,128)S(1)}', space=vmem, size = 0x200, scoped, tag = 'scoped memory for run.3']
  %s0 = inlined_call_operand.vmem [shape: bf16[256,15], index: 0, kind: input, shape index: {}]
  %s1 = inlined_call_operand.vmem [shape: bf16[15,64], index: 1, kind: input, shape index: {}]
  %s2 = inlined_call_operand.vmem [shape: f32[1,64], index: 2, kind: input, shape index: {}]
  %s3 = inlined_call_operand.vmem [shape: bf16[64,64], index: 3, kind: input, shape index: {}]
  %s4 = inlined_call_operand.vmem [shape: f32[1,64], index: 4, kind: input, shape index: {}]
  %s5 = inlined_call_operand.vmem [shape: bf16[64,64], index: 5, kind: input, shape index: {}]
  %s6 = inlined_call_operand.vmem [shape: f32[1,64], index: 6, kind: input, shape index: {}]
  %s7 = inlined_call_operand.vmem [shape: bf16[64,64], index: 7, kind: input, shape index: {}]
  %s8 = inlined_call_operand.vmem [shape: f32[1,64], index: 8, kind: input, shape index: {}]
  %s9 = inlined_call_operand.vmem [shape: bf16[64,1], index: 9, kind: input, shape index: {}]
  %s10 = inlined_call_operand.<no memory space> [shape: f32[1,1], index: 10, kind: input, shape index: {}]
  %s11 = inlined_call_operand.vmem [shape: f32[256,1], index: 11, kind: output, shape index: {}]
  %s12 = sld [smem:[#allocation0]]
  $region77: #{run.3} parent=0
    _
  %s14 = ssub.s32 1, %s12
  %s15 = scalar_select 0, %s14, %s12
  %v16 = vstv %s10
  %17 = vst [vmem:[#allocation2] sm:$0x1] %v16
  loop: start=0, step=1, limit=4
  $region2: #{run.3} parent=0 // loop_pre_header
    _
  $region3: #{run.3} parent=0 // loop_header
    %s19 = sphi 0, %s23
    %p20 = scmp.ge.s32.totalorder %s19, 4
    %s29 = sphi 0, %s31
    %s32 = sphi 0, %s29
    %s33 = sphi 0, %s32
    %s49 = sphi 0, %s33
    %s53 = sphi 0, %s53
    %s55 = sphi 0, %s53
    %s56 = sphi 0, %s55
    %s70 = sphi 0, %s56
    %s74 = sphi 0, %s74
    %s76 = sphi 0, %s74
    %s77 = sphi 0, %s76
    %s91 = sphi 0, %s77
    %s95 = sphi 0, %s95
    %s97 = sphi 0, %s95
    %s98 = sphi 0, %s97
    %s112 = sphi 0, %s98
    %s116 = sphi 0, %s116
    %s118 = sphi 0, %s116
    %s119 = sphi 0, %s118
    %s133 = sphi 0, %s119
    %s137 = sphi 0, %s137
    %s139 = sphi 0, %s137
    %s140 = sphi 0, %s139
    %s154 = sphi 0, %s140
    %s158 = sphi 0, %s158
    %s160 = sphi 0, %s158
    %s161 = sphi 0, %s160
    %s175 = sphi 0, %s161
    %s179 = sphi 0, %s179
    %s181 = sphi 0, %s179
    %s182 = sphi 0, %s181
    %s196 = sphi 0, %s182
    %s200 = sphi 0, %s200
    %s202 = sphi 0, %s200
    %s203 = sphi 0, %s202
    %s217 = sphi 0, %s203
    %s221 = sphi 0, %s221
    %s223 = sphi 0, %s221
    %s224 = sphi 0, %s223
    %s238 = sphi 0, %s224
    %s242 = sphi 0, %s242
    %s244 = sphi 0, %s242
    %s245 = sphi 0, %s244
    %s259 = sphi 0, %s245
    %s265 = sphi 0, %s267
    %s268 = sphi 0, %s265
    %s269 = sphi 0, %s268
    %s285 = sphi 0, %s269
  $region4: #{run.3} parent=0 // loop_header_branch
    %22 = sbr.rel (%p20) target = $region8
  $region5: #{run.3} parent=0 // loop_body
    %s24 = ssub.s32 %s19, 1
    %s25 = ssub.s32 %s19, 2
    %s26 = sadd.s32 %s19, 1
    %s27 = ssub.s32 %s19, %s26
    %p28 = scmp.eq.s32.totalorder %s27, 0
    %s30 = sadd.s32 %s29, 1
    %s31 = scalar_select %p28, %s29, %s30
    %p34 = pneg %p28
    %p35 = scmp.eq.s32.totalorder %s19, 1
    %p36 = por %p34, %p35
    %p37 = scmp.ne.s32.totalorder %s29, %s32
    %p38 = scmp.eq.s32.totalorder %s19, 0
    %p39 = por %p37, %p38
    %p40 = scmp.ne.s32.totalorder %s29, %s32
    %p41 = scmp.eq.s32.totalorder %s24, 1
    %p42 = por %p40, %p41
    %p43 = scmp.ne.s32.totalorder %s32, %s33
    %p44 = scmp.eq.s32.totalorder %s24, 0
    %p45 = por %p43, %p44
    %p46 = scmp.ne.s32.totalorder %s32, %s33
    %p47 = scmp.eq.s32.totalorder %s25, 1
    %p48 = por %p46, %p47
    %p50 = scmp.ne.s32.totalorder %s33, %s49
    %p51 = scmp.eq.s32.totalorder %s25, 0
    %p52 = por %p50, %p51
    %s54 = sadd.s32 %s53, 1
    %p57 = scmp.eq.s32.totalorder %s19, 1
    %p58 = scmp.ne.s32.totalorder %s53, %s55
    %p59 = scmp.eq.s32.totalorder %s19, 0
    %p60 = por %p58, %p59
    %p61 = scmp.ne.s32.totalorder %s53, %s55
    %p62 = scmp.eq.s32.totalorder %s24, 1
    %p63 = por %p61, %p62
    %p64 = scmp.ne.s32.totalorder %s55, %s56
    %p65 = scmp.eq.s32.totalorder %s24, 0
    %p66 = por %p64, %p65
    %p67 = scmp.ne.s32.totalorder %s55, %s56
    %p68 = scmp.eq.s32.totalorder %s25, 1
    %p69 = por %p67, %p68
    %p71 = scmp.ne.s32.totalorder %s56, %s70
    %p72 = scmp.eq.s32.totalorder %s25, 0
    %p73 = por %p71, %p72
    %s75 = sadd.s32 %s74, 1
    %p78 = scmp.eq.s32.totalorder %s19, 1
    %p79 = scmp.ne.s32.totalorder %s74, %s76
    %p80 = scmp.eq.s32.totalorder %s19, 0
    %p81 = por %p79, %p80
    %p82 = scmp.ne.s32.totalorder %s74, %s76
    %p83 = scmp.eq.s32.totalorder %s24, 1
    %p84 = por %p82, %p83
    %p85 = scmp.ne.s32.totalorder %s76, %s77
    %p86 = scmp.eq.s32.totalorder %s24, 0
    %p87 = por %p85, %p86
    %p88 = scmp.ne.s32.totalorder %s76, %s77
    %p89 = scmp.eq.s32.totalorder %s25, 1
    %p90 = por %p88, %p89
    %p92 = scmp.ne.s32.totalorder %s77, %s91
    %p93 = scmp.eq.s32.totalorder %s25, 0
    %p94 = por %p92, %p93
    %s96 = sadd.s32 %s95, 1
    %p99 = scmp.eq.s32.totalorder %s19, 1
    %p100 = scmp.ne.s32.totalorder %s95, %s97
    %p101 = scmp.eq.s32.totalorder %s19, 0
    %p102 = por %p100, %p101
    %p103 = scmp.ne.s32.totalorder %s95, %s97
    %p104 = scmp.eq.s32.totalorder %s24, 1
    %p105 = por %p103, %p104
    %p106 = scmp.ne.s32.totalorder %s97, %s98
    %p107 = scmp.eq.s32.totalorder %s24, 0
    %p108 = por %p106, %p107
    %p109 = scmp.ne.s32.totalorder %s97, %s98
    %p110 = scmp.eq.s32.totalorder %s25, 1
    %p111 = por %p109, %p110
    %p113 = scmp.ne.s32.totalorder %s98, %s112
    %p114 = scmp.eq.s32.totalorder %s25, 0
    %p115 = por %p113, %p114
    %s117 = sadd.s32 %s116, 1
    %p120 = scmp.eq.s32.totalorder %s19, 1
    %p121 = scmp.ne.s32.totalorder %s116, %s118
    %p122 = scmp.eq.s32.totalorder %s19, 0
    %p123 = por %p121, %p122
    %p124 = scmp.ne.s32.totalorder %s116, %s118
    %p125 = scmp.eq.s32.totalorder %s24, 1
    %p126 = por %p124, %p125
    %p127 = scmp.ne.s32.totalorder %s118, %s119
    %p128 = scmp.eq.s32.totalorder %s24, 0
    %p129 = por %p127, %p128
    %p130 = scmp.ne.s32.totalorder %s118, %s119
    %p131 = scmp.eq.s32.totalorder %s25, 1
    %p132 = por %p130, %p131
    %p134 = scmp.ne.s32.totalorder %s119, %s133
    %p135 = scmp.eq.s32.totalorder %s25, 0
    %p136 = por %p134, %p135
    %s138 = sadd.s32 %s137, 1
    %p141 = scmp.eq.s32.totalorder %s19, 1
    %p142 = scmp.ne.s32.totalorder %s137, %s139
    %p143 = scmp.eq.s32.totalorder %s19, 0
    %p144 = por %p142, %p143
    %p145 = scmp.ne.s32.totalorder %s137, %s139
    %p146 = scmp.eq.s32.totalorder %s24, 1
    %p147 = por %p145, %p146
    %p148 = scmp.ne.s32.totalorder %s139, %s140
    %p149 = scmp.eq.s32.totalorder %s24, 0
    %p150 = por %p148, %p149
    %p151 = scmp.ne.s32.totalorder %s139, %s140
    %p152 = scmp.eq.s32.totalorder %s25, 1
    %p153 = por %p151, %p152
    %p155 = scmp.ne.s32.totalorder %s140, %s154
    %p156 = scmp.eq.s32.totalorder %s25, 0
    %p157 = por %p155, %p156
    %s159 = sadd.s32 %s158, 1
    %p162 = scmp.eq.s32.totalorder %s19, 1
    %p163 = scmp.ne.s32.totalorder %s158, %s160
    %p164 = scmp.eq.s32.totalorder %s19, 0
    %p165 = por %p163, %p164
    %p166 = scmp.ne.s32.totalorder %s158, %s160
    %p167 = scmp.eq.s32.totalorder %s24, 1
    %p168 = por %p166, %p167
    %p169 = scmp.ne.s32.totalorder %s160, %s161
    %p170 = scmp.eq.s32.totalorder %s24, 0
    %p171 = por %p169, %p170
    %p172 = scmp.ne.s32.totalorder %s160, %s161
    %p173 = scmp.eq.s32.totalorder %s25, 1
    %p174 = por %p172, %p173
    %p176 = scmp.ne.s32.totalorder %s161, %s175
    %p177 = scmp.eq.s32.totalorder %s25, 0
    %p178 = por %p176, %p177
    %s180 = sadd.s32 %s179, 1
    %p183 = scmp.eq.s32.totalorder %s19, 1
    %p184 = scmp.ne.s32.totalorder %s179, %s181
    %p185 = scmp.eq.s32.totalorder %s19, 0
    %p186 = por %p184, %p185
    %p187 = scmp.ne.s32.totalorder %s179, %s181
    %p188 = scmp.eq.s32.totalorder %s24, 1
    %p189 = por %p187, %p188
    %p190 = scmp.ne.s32.totalorder %s181, %s182
    %p191 = scmp.eq.s32.totalorder %s24, 0
    %p192 = por %p190, %p191
    %p193 = scmp.ne.s32.totalorder %s181, %s182
    %p194 = scmp.eq.s32.totalorder %s25, 1
    %p195 = por %p193, %p194
    %p197 = scmp.ne.s32.totalorder %s182, %s196
    %p198 = scmp.eq.s32.totalorder %s25, 0
    %p199 = por %p197, %p198
    %s201 = sadd.s32 %s200, 1
    %p204 = scmp.eq.s32.totalorder %s19, 1
    %p205 = scmp.ne.s32.totalorder %s200, %s202
    %p206 = scmp.eq.s32.totalorder %s19, 0
    %p207 = por %p205, %p206
    %p208 = scmp.ne.s32.totalorder %s200, %s202
    %p209 = scmp.eq.s32.totalorder %s24, 1
    %p210 = por %p208, %p209
    %p211 = scmp.ne.s32.totalorder %s202, %s203
    %p212 = scmp.eq.s32.totalorder %s24, 0
    %p213 = por %p211, %p212
    %p214 = scmp.ne.s32.totalorder %s202, %s203
    %p215 = scmp.eq.s32.totalorder %s25, 1
    %p216 = por %p214, %p215
    %p218 = scmp.ne.s32.totalorder %s203, %s217
    %p219 = scmp.eq.s32.totalorder %s25, 0
    %p220 = por %p218, %p219
    %s222 = sadd.s32 %s221, 1
    %p225 = scmp.eq.s32.totalorder %s19, 1
    %p226 = scmp.ne.s32.totalorder %s221, %s223
    %p227 = scmp.eq.s32.totalorder %s19, 0
    %p228 = por %p226, %p227
    %p229 = scmp.ne.s32.totalorder %s221, %s223
    %p230 = scmp.eq.s32.totalorder %s24, 1
    %p231 = por %p229, %p230
    %p232 = scmp.ne.s32.totalorder %s223, %s224
    %p233 = scmp.eq.s32.totalorder %s24, 0
    %p234 = por %p232, %p233
    %p235 = scmp.ne.s32.totalorder %s223, %s224
    %p236 = scmp.eq.s32.totalorder %s25, 1
    %p237 = por %p235, %p236
    %p239 = scmp.ne.s32.totalorder %s224, %s238
    %p240 = scmp.eq.s32.totalorder %s25, 0
    %p241 = por %p239, %p240
    %s243 = sadd.s32 %s242, 1
    %p246 = scmp.eq.s32.totalorder %s19, 1
    %p247 = scmp.ne.s32.totalorder %s242, %s244
    %p248 = scmp.eq.s32.totalorder %s19, 0
    %p249 = por %p247, %p248
    %p250 = scmp.ne.s32.totalorder %s242, %s244
    %p251 = scmp.eq.s32.totalorder %s24, 1
    %p252 = por %p250, %p251
    %p253 = scmp.ne.s32.totalorder %s244, %s245
    %p254 = scmp.eq.s32.totalorder %s24, 0
    %p255 = por %p253, %p254
    %p256 = scmp.ne.s32.totalorder %s244, %s245
    %p257 = scmp.eq.s32.totalorder %s25, 1
    %p258 = por %p256, %p257
    %p260 = scmp.ne.s32.totalorder %s245, %s259
    %p261 = scmp.eq.s32.totalorder %s25, 0
    %p262 = por %p260, %p261
    %s263 = ssub.s32 %s19, %s26
    %p264 = scmp.eq.s32.totalorder %s263, 0
    %s266 = sadd.s32 %s265, 1
    %s267 = scalar_select %p264, %s265, %s266
    %p270 = pneg %p264
    %p271 = scmp.eq.s32.totalorder %s19, 1
    %p272 = por %p270, %p271
    %p273 = scmp.ne.s32.totalorder %s265, %s268
    %p274 = scmp.eq.s32.totalorder %s19, 0
    %p275 = por %p273, %p274
    %p276 = scmp.ne.s32.totalorder %s265, %s268
    %p277 = scmp.eq.s32.totalorder %s24, 1
    %p278 = por %p276, %p277
    %p279 = scmp.ne.s32.totalorder %s268, %s269
    %p280 = scmp.eq.s32.totalorder %s24, 0
    %p281 = por %p279, %p280
    %p282 = scmp.ne.s32.totalorder %s268, %s269
    %p283 = scmp.eq.s32.totalorder %s25, 1
    %p284 = por %p282, %p283
    %p286 = scmp.ne.s32.totalorder %s269, %s285
    %p287 = scmp.eq.s32.totalorder %s25, 0
    %p288 = por %p286, %p287
    %p289 = scmp.le.s32.totalorder 1, %s19
    %p290 = scmp.lt.s32.totalorder %s19, 3
    %p291 = pnand %p289, %p290
    %p292 = pneg %p291
    // Predicated region
    $region9: #{run.3} parent=5 // pred_check
      _
    $region10: #{run.3} parent=5 // pred_check_branch
      %294 = sbr.rel (%p291) target = $region12
    $region11: #{run.3} parent=5 // pred_region
      %s295 = ssub.s32 %s19, 1
      // Predicated region
      $region13: #{run.3} parent=11 // pred_check
        %p296 = pneg %p66
      $region14: #{run.3} parent=11 // pred_check_branch
        %298 = sbr.rel (%p296) target = $region16
      $region15: #{run.3} parent=11 // pred_region
        _
      $region16: #{run.3} parent=11 // pred_fallthru
        _
      // Predicated region
      $region17: #{run.3} parent=11 // pred_check
        %p299 = pneg %p87
      $region18: #{run.3} parent=11 // pred_check_branch
        %301 = sbr.rel (%p299) target = $region20
      $region19: #{run.3} parent=11 // pred_region
        _
      $region20: #{run.3} parent=11 // pred_fallthru
        _
      // Predicated region
      $region21: #{run.3} parent=11 // pred_check
        %p302 = pneg %p108
      $region22: #{run.3} parent=11 // pred_check_branch
        %304 = sbr.rel (%p302) target = $region24
      $region23: #{run.3} parent=11 // pred_region
        _
      $region24: #{run.3} parent=11 // pred_fallthru
        _
      // Predicated region
      $region25: #{run.3} parent=11 // pred_check
        %p305 = pneg %p129
      $region26: #{run.3} parent=11 // pred_check_branch
        %307 = sbr.rel (%p305) target = $region28
      $region27: #{run.3} parent=11 // pred_region
        _
      $region28: #{run.3} parent=11 // pred_fallthru
        _
      // Predicated region
      $region29: #{run.3} parent=11 // pred_check
        %p308 = pneg %p150
      $region30: #{run.3} parent=11 // pred_check_branch
        %310 = sbr.rel (%p308) target = $region32
      $region31: #{run.3} parent=11 // pred_region
        _
      $region32: #{run.3} parent=11 // pred_fallthru
        _
      // Predicated region
      $region33: #{run.3} parent=11 // pred_check
        %p311 = pneg %p171
      $region34: #{run.3} parent=11 // pred_check_branch
        %313 = sbr.rel (%p311) target = $region36
      $region35: #{run.3} parent=11 // pred_region
        _
      $region36: #{run.3} parent=11 // pred_fallthru
        _
      // Predicated region
      $region37: #{run.3} parent=11 // pred_check
        %p314 = pneg %p192
      $region38: #{run.3} parent=11 // pred_check_branch
        %316 = sbr.rel (%p314) target = $region40
      $region39: #{run.3} parent=11 // pred_region
        _
      $region40: #{run.3} parent=11 // pred_fallthru
        _
      // Predicated region
      $region41: #{run.3} parent=11 // pred_check
        %p317 = pneg %p213
      $region42: #{run.3} parent=11 // pred_check_branch
        %319 = sbr.rel (%p317) target = $region44
      $region43: #{run.3} parent=11 // pred_region
        _
      $region44: #{run.3} parent=11 // pred_fallthru
        _
      // Predicated region
      $region45: #{run.3} parent=11 // pred_check
        %p320 = pneg %p234
      $region46: #{run.3} parent=11 // pred_check_branch
        %322 = sbr.rel (%p320) target = $region48
      $region47: #{run.3} parent=11 // pred_region
        _
      $region48: #{run.3} parent=11 // pred_fallthru
        _
      // Predicated region
      $region49: #{run.3} parent=11 // pred_check
        %p323 = pneg %p255
      $region50: #{run.3} parent=11 // pred_check_branch
        %325 = sbr.rel (%p323) target = $region52
      $region51: #{run.3} parent=11 // pred_region
        _
      $region52: #{run.3} parent=11 // pred_fallthru
        _
    $region12: #{run.3} parent=5 // pred_fallthru
      _
    %p326 = scmp.lt.s32.totalorder %s19, 2
    // Predicated region
    $region53: #{run.3} parent=5 // pred_check
      %p327 = pneg %p326
    $region54: #{run.3} parent=5 // pred_check_branch
      %329 = sbr.rel (%p327) target = $region56
    $region55: #{run.3} parent=5 // pred_region
      // Predicated region
      $region57: #{run.3} parent=55 // pred_check
        %p330 = pneg %p39
      $region58: #{run.3} parent=55 // pred_check_branch
        %332 = sbr.rel (%p330) target = $region60
      $region59: #{run.3} parent=55 // pred_region
        %s333 = smul.u32 16, %s19
        %p334 = scmp.lt.s32.totalorder %s333, 31
        %s335 = scalar_select %p334, %s333, 31
        %s336 = smul.addr %s335, 4
        %s337 = scalar_lea.vmem %s0, %s336
        %s338 = smul.u32 16, %s19
      $region60: #{run.3} parent=55 // pred_fallthru
        _
    $region56: #{run.3} parent=5 // pred_fallthru
      _
    %p339 = scmp.le.s32.totalorder 1, %s19
    %p340 = scmp.lt.s32.totalorder %s19, 3
    %p341 = pnand %p339, %p340
    %p342 = pneg %p341
    // Predicated region
    $region61: #{run.3} parent=5 // pred_check
      _
    $region62: #{run.3} parent=5 // pred_check_branch
      %344 = sbr.rel (%p341) target = $region64
    $region63: #{run.3} parent=5 // pred_region
      %s345 = ssub.s32 %s19, 1
      %s346 = smul.u32 16, %s24
      %p347 = scmp.lt.s32.totalorder %s346, 31
      %s348 = scalar_select %p347, %s346, 31
      %s349 = smul.addr %s348, 4
      %s350 = scalar_lea.vmem %s0, %s349
      %p351 = pneg %p45
      %p352 = pneg %p42
      %p353 = pneg %p66
      %p354 = pneg %p63
      %p355 = pneg %p87
      %p356 = pneg %p84
      %p357 = pneg %p108
      %p358 = pneg %p105
      %p359 = pneg %p129
      %p360 = pneg %p126
      %p361 = pneg %p150
      %p362 = pneg %p147
      %p363 = pneg %p171
      %p364 = pneg %p168
      %p365 = pneg %p192
      %p366 = pneg %p189
      %p367 = pneg %p213
      %p368 = pneg %p210
      %p369 = pneg %p234
      %p370 = pneg %p231
      %p371 = pneg %p255
      %p372 = pneg %p252
      %p373 = pneg %p281
      %p374 = pneg %p278
      %s375 = smul.u32 16, %s24
      %p376 = scmp.lt.s32.totalorder %s375, 31
      %s377 = scalar_select %p376, %s375, 31
      %s378 = smul.addr %s377, 8
      %s379 = scalar_lea.vmem %s11, %s378
      %s380 = smul.u32 16, %s24
      %p381 = scmp.lt.s32.totalorder %s380, 31
      %s382 = scalar_select %p381, %s380, 31
      %s383 = smul.addr %s382, 4
      %s384 = scalar_lea.vmem %s0, %s383
      %s385 = smul.u32 16, %s24
      %s386 = smul.u32 16, %s24
      %p387 = scmp.lt.s32.totalorder %s386, 31
      %s388 = scalar_select %p387, %s386, 31
      %s389 = smul.addr %s388, 8
      %s390 = scalar_lea.vmem %s11, %s389
      %s391 = smul.u32 16, %s24
      %v393 = vld [vmem:[%s384] sm:$0xf]
      %v394 = vld [vmem:[%s384 + $0x4] sm:$0xf]
      %v395 = vld [vmem:[%s384 + $0x8] sm:$0xf]
      %v396 = vld [vmem:[%s384 + $0xc] sm:$0xf]
      %v397 = vld [vmem:[%s384 + $0x10] sm:$0xf]
      %v398 = vld [vmem:[%s384 + $0x14] sm:$0xf]
      %v399 = vld [vmem:[%s384 + $0x18] sm:$0xf]
      %v400 = vld [vmem:[%s384 + $0x1c] sm:$0xf]
      %v401 = vld [vmem:[%s384 + $0x20] sm:$0xf]
      %v402 = vld [vmem:[%s384 + $0x24] sm:$0xf]
      %v403 = vld [vmem:[%s384 + $0x28] sm:$0xf]
      %v404 = vld [vmem:[%s384 + $0x2c] sm:$0xf]
      %v405 = vld [vmem:[%s384 + $0x30] sm:$0xf]
      %v406 = vld [vmem:[%s384 + $0x34] sm:$0xf]
      %v407 = vld [vmem:[%s384 + $0x38] sm:$0xf]
      %v408 = vld [vmem:[%s384 + $0x3c] sm:$0xf]
      %v409 = vld [vmem:[%s1] sm:$0xf]
      %v410 = vld [vmem:[%s1 + $0x4] sm:$0xf]
      %v411 = vld [vmem:[%s2] sm:$0x1]
      %v413 = vlaneseq
      %v414 = vshrl.u32 %v413, 7
      %v415 = vsub.s32 0, %v414
      %v416 = vrot.slane %v411, %v415
      %v434 = vunpack.c.l.b16 %v393
      %v435 = vunpack.c.l.b16 %v394
      %v436 = vunpack.c.l.b16 %v395
      %v437 = vunpack.c.l.b16 %v396
      %v438 = vunpack.c.l.b16 %v397
      %v439 = vunpack.c.l.b16 %v398
      %v440 = vunpack.c.l.b16 %v399
      %v441 = vunpack.c.l.b16 %v400
      %v442 = vunpack.c.l.b16 %v401
      %v443 = vunpack.c.l.b16 %v402
      %v444 = vunpack.c.l.b16 %v403
      %v445 = vunpack.c.l.b16 %v404
      %v446 = vunpack.c.l.b16 %v405
      %v447 = vunpack.c.l.b16 %v406
      %v448 = vunpack.c.l.b16 %v407
      %v449 = vunpack.c.l.b16 %v408
      %v450 = vpack.c.b16 %v435, %v434
      %v451 = vpack.c.b16 %v437, %v436
      %v452 = vpack.c.b16 %v439, %v438
      %v453 = vpack.c.b16 %v441, %v440
      %v454 = vpack.c.b16 %v443, %v442
      %v455 = vpack.c.b16 %v445, %v444
      %v456 = vpack.c.b16 %v447, %v446
      %v457 = vpack.c.b16 %v449, %v448
      %v460 = vunpack.c.l.b16 %v409
      %v461 = vunpack.c.l.b16 %v410
      %v462 = vpack.c.b16 %v461, %v460
      %vm463 = vcmask 121856
      %v465 = vsel %vm463, %v450, 0
      %v468 = vsel %vm463, %v451, 0
      %v471 = vsel %vm463, %v452, 0
      %v474 = vsel %vm463, %v453, 0
      %v477 = vsel %vm463, %v454, 0
      %v480 = vsel %vm463, %v455, 0
      %v483 = vsel %vm463, %v456, 0
      %v486 = vsel %vm463, %v457, 0
      %vm488 = vcmask 1046528
      %vm489 = vcmask 1047552
      %v490 = vsel %vm488, 4294967295, 65535
      %v491 = vsel %vm489, %v490, 0
      %v493 = vand.u32 %v462, %v491
      %495 = vmatprep.subr.bf16.mxu0 0
      %496 = vmatpush1.bf16.msra.mxu0 0
      %497 = vmatprep.subr.bf16.mxu0 0
      %498 = vmatpush1.bf16.msra.mxu0 0
      %499 = vmatprep.subr.bf16.mxu0 0
      %500 = vmatpush1.bf16.msra.mxu0 0
      %501 = vmatprep.subr.bf16.mxu0 0
      %502 = vmatpush1.bf16.msra.mxu0 0
      %503 = vmatprep.subr.bf16.mxu0 0
      %504 = vmatpush1.bf16.msra.mxu0 0
      %505 = vmatprep.subr.bf16.mxu0 0
      %506 = vmatpush1.bf16.msra.mxu0 0
      %507 = vmatprep.subr.bf16.mxu0 0
      %508 = vmatpush1.bf16.msra.mxu0 0
      %509 = vmatprep.subr.bf16.mxu0 0
      %510 = vmatpush1.bf16.msra.mxu0 %v493
      %511 = vmatprep.subr.bf16.mxu0 0
      %512 = vmatpush2.bf16.msra.mxu0 0
      %513 = vmatprep.subr.bf16.mxu0 0
      %514 = vmatpush2.bf16.msra.mxu0 0
      %515 = vmatprep.subr.bf16.mxu0 0
      %516 = vmatpush2.bf16.msra.mxu0 0
      %517 = vmatprep.subr.bf16.mxu0 0
      %518 = vmatpush2.bf16.msra.mxu0 0
      %519 = vmatprep.subr.bf16.mxu0 0
      %520 = vmatpush2.bf16.msra.mxu0 0
      %521 = vmatprep.subr.bf16.mxu0 0
      %522 = vmatpush2.bf16.msra.mxu0 0
      %523 = vmatprep.subr.bf16.mxu0 0
      %524 = vmatpush2.bf16.msra.mxu0 0
      %525 = vmatprep.subr.bf16.mxu0 0
      %526 = vmatpush2.bf16.msra.mxu0 0
      %527 = vmatprep.mubr.bf16.mxu0 0
      %528 = vmatmul.mubr.bf16.gmra.mxu0 %v465
      %v529 = vpop.f32.mrf.mxu0
      %v530 = vadd.f32 %v416, %v529
      %v531 = vpop.f32.mrf.mxu0
      %v532 = vpop.f32.mrf.mxu0
      %v533 = vadd.f32 %v416, %v532
      %v534 = vpop.f32.mrf.mxu0
      %535 = vmatprep.mubr.bf16.mxu0 0
      %536 = vmatmul.mubr.bf16.gmra.mxu0 %v468
      %v537 = vpop.f32.mrf.mxu0
      %v538 = vadd.f32 %v416, %v537
      %v539 = vpop.f32.mrf.mxu0
      %v540 = vpop.f32.mrf.mxu0
      %v541 = vadd.f32 %v416, %v540
      %v542 = vpop.f32.mrf.mxu0
      %543 = vmatprep.mubr.bf16.mxu0 0
      %544 = vmatmul.mubr.bf16.gmra.mxu0 %v471
      %v545 = vpop.f32.mrf.mxu0
      %v546 = vadd.f32 %v416, %v545
      %v547 = vpop.f32.mrf.mxu0
      %v548 = vpop.f32.mrf.mxu0
      %v549 = vadd.f32 %v416, %v548
      %v550 = vpop.f32.mrf.mxu0
      %551 = vmatprep.mubr.bf16.mxu0 0
      %552 = vmatmul.mubr.bf16.gmra.mxu0 %v474
      %v553 = vpop.f32.mrf.mxu0
      %v554 = vadd.f32 %v416, %v553
      %v555 = vpop.f32.mrf.mxu0
      %v556 = vpop.f32.mrf.mxu0
      %v557 = vadd.f32 %v416, %v556
      %v558 = vpop.f32.mrf.mxu0
      %559 = vmatprep.mubr.bf16.mxu0 0
      %560 = vmatmul.mubr.bf16.gmra.mxu0 %v477
      %v561 = vpop.f32.mrf.mxu0
      %v562 = vadd.f32 %v416, %v561
      %v563 = vpop.f32.mrf.mxu0
      %v564 = vpop.f32.mrf.mxu0
      %v565 = vadd.f32 %v416, %v564
      %v566 = vpop.f32.mrf.mxu0
      %567 = vmatprep.mubr.bf16.mxu0 0
      %568 = vmatmul.mubr.bf16.gmra.mxu0 %v480
      %v569 = vpop.f32.mrf.mxu0
      %v570 = vadd.f32 %v416, %v569
      %v571 = vpop.f32.mrf.mxu0
      %v572 = vpop.f32.mrf.mxu0
      %v573 = vadd.f32 %v416, %v572
      %v574 = vpop.f32.mrf.mxu0
      %575 = vmatprep.mubr.bf16.mxu0 0
      %576 = vmatmul.mubr.bf16.gmra.mxu0 %v483
      %v577 = vpop.f32.mrf.mxu0
      %v578 = vadd.f32 %v416, %v577
      %v579 = vpop.f32.mrf.mxu0
      %v580 = vpop.f32.mrf.mxu0
      %v581 = vadd.f32 %v416, %v580
      %v582 = vpop.f32.mrf.mxu0
      %583 = vmatprep.mubr.bf16.mxu0 0
      %584 = vmatmul.mubr.bf16.gmra.mxu0 %v486
      %v585 = vpop.f32.mrf.mxu0
      %v586 = vadd.f32 %v416, %v585
      %v587 = vpop.f32.mrf.mxu0
      %v588 = vpop.f32.mrf.mxu0
      %v589 = vadd.f32 %v416, %v588
      %v590 = vpop.f32.mrf.mxu0
      %591 = vdwg.mxu0
      %v592 = vmul.f32 %v530, 100.0
      %v593 = vmul.f32 %v533, 100.0
      %v594 = vmul.f32 %v538, 100.0
      %v595 = vmul.f32 %v541, 100.0
      %v596 = vmul.f32 %v546, 100.0
      %v597 = vmul.f32 %v549, 100.0
      %v598 = vmul.f32 %v554, 100.0
      %v599 = vmul.f32 %v557, 100.0
      %v600 = vmul.f32 %v562, 100.0
      %v601 = vmul.f32 %v565, 100.0
      %v602 = vmul.f32 %v570, 100.0
      %v603 = vmul.f32 %v573, 100.0
      %v604 = vmul.f32 %v578, 100.0
      %v605 = vmul.f32 %v581, 100.0
      %v606 = vmul.f32 %v586, 100.0
      %v607 = vmul.f32 %v589, 100.0
      %v608 = vand.u32 2147483647, %v592
      %v609 = vand.u32 2147483647, %v593
      %v610 = vand.u32 2147483647, %v594
      %v611 = vand.u32 2147483647, %v595
      %v612 = vand.u32 2147483647, %v596
      %v613 = vand.u32 2147483647, %v597
      %v614 = vand.u32 2147483647, %v598
      %v615 = vand.u32 2147483647, %v599
      %v616 = vand.u32 2147483647, %v600
      %v617 = vand.u32 2147483647, %v601
      %v618 = vand.u32 2147483647, %v602
      %v619 = vand.u32 2147483647, %v603
      %v620 = vand.u32 2147483647, %v604
      %v621 = vand.u32 2147483647, %v605
      %v622 = vand.u32 2147483647, %v606
      %v623 = vand.u32 2147483647, %v607
      %v624 = vsub.f32 0.0, %v608
      %v625 = vsub.f32 0.0, %v609
      %v626 = vsub.f32 0.0, %v610
      %v627 = vsub.f32 0.0, %v611
      %v628 = vsub.f32 0.0, %v612
      %v629 = vsub.f32 0.0, %v613
      %v630 = vsub.f32 0.0, %v614
      %v631 = vsub.f32 0.0, %v615
      %v632 = vsub.f32 0.0, %v616
      %v633 = vsub.f32 0.0, %v617
      %v634 = vsub.f32 0.0, %v618
      %v635 = vsub.f32 0.0, %v619
      %v636 = vsub.f32 0.0, %v620
      %v637 = vsub.f32 0.0, %v621
      %v638 = vsub.f32 0.0, %v622
      %v639 = vsub.f32 0.0, %v623
      %v640 = vmul.f32 %v624, 1.442695
      %v641 = vpow.pop %v640
      %v642 = vmul.f32 %v625, 1.442695
      %v643 = vpow.pop %v642
      %v644 = vmul.f32 %v626, 1.442695
      %v645 = vpow.pop %v644
      %v646 = vmul.f32 %v627, 1.442695
      %v647 = vpow.pop %v646
      %v648 = vmul.f32 %v628, 1.442695
      %v649 = vpow.pop %v648
      %v650 = vmul.f32 %v629, 1.442695
      %v651 = vpow.pop %v650
      %v652 = vmul.f32 %v630, 1.442695
      %v653 = vpow.pop %v652
      %v654 = vmul.f32 %v631, 1.442695
      %v655 = vpow.pop %v654
      %v656 = vmul.f32 %v632, 1.442695
      %v657 = vpow.pop %v656
      %v658 = vmul.f32 %v633, 1.442695
      %v659 = vpow.pop %v658
      %v660 = vmul.f32 %v634, 1.442695
      %v661 = vpow.pop %v660
      %v662 = vmul.f32 %v635, 1.442695
      %v663 = vpow.pop %v662
      %v664 = vmul.f32 %v636, 1.442695
      %v665 = vpow.pop %v664
      %v666 = vmul.f32 %v637, 1.442695
      %v667 = vpow.pop %v666
      %v668 = vmul.f32 %v638, 1.442695
      %v669 = vpow.pop %v668
      %v670 = vmul.f32 %v639, 1.442695
      %v671 = vpow.pop %v670
      %v672 = vmax.f32 %v592, 0.0
      %v673 = vmax.f32 %v593, 0.0
      %v674 = vmax.f32 %v594, 0.0
      %v675 = vmax.f32 %v595, 0.0
      %v676 = vmax.f32 %v596, 0.0
      %v677 = vmax.f32 %v597, 0.0
      %v678 = vmax.f32 %v598, 0.0
      %v679 = vmax.f32 %v599, 0.0
      %v680 = vmax.f32 %v600, 0.0
      %v681 = vmax.f32 %v601, 0.0
      %v682 = vmax.f32 %v602, 0.0
      %v683 = vmax.f32 %v603, 0.0
      %v684 = vmax.f32 %v604, 0.0
      %v685 = vmax.f32 %v605, 0.0
      %v686 = vmax.f32 %v606, 0.0
      %v687 = vmax.f32 %v607, 0.0
      %v688 = vadd.f32 %v641, 1.0
      %v689 = vadd.f32 %v643, 1.0
      %v690 = vadd.f32 %v645, 1.0
      %v691 = vadd.f32 %v647, 1.0
      %v692 = vadd.f32 %v649, 1.0
      %v693 = vadd.f32 %v651, 1.0
      %v694 = vadd.f32 %v653, 1.0
      %v695 = vadd.f32 %v655, 1.0
      %v696 = vadd.f32 %v657, 1.0
      %v697 = vadd.f32 %v659, 1.0
      %v698 = vadd.f32 %v661, 1.0
      %v699 = vadd.f32 %v663, 1.0
      %v700 = vadd.f32 %v665, 1.0
      %v701 = vadd.f32 %v667, 1.0
      %v702 = vadd.f32 %v669, 1.0
      %v703 = vadd.f32 %v671, 1.0
      %v704 = vlog2.pop %v688
      %v705 = vmul.f32 %v704, 0.6931472
      %v706 = vlog2.pop %v689
      %v707 = vmul.f32 %v706, 0.6931472
      %v708 = vlog2.pop %v690
      %v709 = vmul.f32 %v708, 0.6931472
      %v710 = vlog2.pop %v691
      %v711 = vmul.f32 %v710, 0.6931472
      %v712 = vlog2.pop %v692
      %v713 = vmul.f32 %v712, 0.6931472
      %v714 = vlog2.pop %v693
      %v715 = vmul.f32 %v714, 0.6931472
      %v716 = vlog2.pop %v694
      %v717 = vmul.f32 %v716, 0.6931472
      %v718 = vlog2.pop %v695
      %v719 = vmul.f32 %v718, 0.6931472
      %v720 = vlog2.pop %v696
      %v721 = vmul.f32 %v720, 0.6931472
      %v722 = vlog2.pop %v697
      %v723 = vmul.f32 %v722, 0.6931472
      %v724 = vlog2.pop %v698
      %v725 = vmul.f32 %v724, 0.6931472
      %v726 = vlog2.pop %v699
      %v727 = vmul.f32 %v726, 0.6931472
      %v728 = vlog2.pop %v700
      %v729 = vmul.f32 %v728, 0.6931472
      %v730 = vlog2.pop %v701
      %v731 = vmul.f32 %v730, 0.6931472
      %v732 = vlog2.pop %v702
      %v733 = vmul.f32 %v732, 0.6931472
      %v734 = vlog2.pop %v703
      %v735 = vmul.f32 %v734, 0.6931472
      %v736 = vadd.f32 %v672, %v705
      %v737 = vadd.f32 %v673, %v707
      %v738 = vadd.f32 %v674, %v709
      %v739 = vadd.f32 %v675, %v711
      %v740 = vadd.f32 %v676, %v713
      %v741 = vadd.f32 %v677, %v715
      %v742 = vadd.f32 %v678, %v717
      %v743 = vadd.f32 %v679, %v719
      %v744 = vadd.f32 %v680, %v721
      %v745 = vadd.f32 %v681, %v723
      %v746 = vadd.f32 %v682, %v725
      %v747 = vadd.f32 %v683, %v727
      %v748 = vadd.f32 %v684, %v729
      %v749 = vadd.f32 %v685, %v731
      %v750 = vadd.f32 %v686, %v733
      %v751 = vadd.f32 %v687, %v735
      %v752 = vmul.f32 %v736, 0.01
      %v753 = vmul.f32 %v737, 0.01
      %v754 = vmul.f32 %v738, 0.01
      %v755 = vmul.f32 %v739, 0.01
      %v756 = vmul.f32 %v740, 0.01
      %v757 = vmul.f32 %v741, 0.01
      %v758 = vmul.f32 %v742, 0.01
      %v759 = vmul.f32 %v743, 0.01
      %v760 = vmul.f32 %v744, 0.01
      %v761 = vmul.f32 %v745, 0.01
      %v762 = vmul.f32 %v746, 0.01
      %v763 = vmul.f32 %v747, 0.01
      %v764 = vmul.f32 %v748, 0.01
      %v765 = vmul.f32 %v749, 0.01
      %v766 = vmul.f32 %v750, 0.01
      %v767 = vmul.f32 %v751, 0.01
      %v768 = vpack.c.bf16 %v753, %v752
      %v769 = vpack.c.bf16 %v755, %v754
      %v770 = vpack.c.bf16 %v757, %v756
      %v771 = vpack.c.bf16 %v759, %v758
      %v772 = vpack.c.bf16 %v761, %v760
      %v773 = vpack.c.bf16 %v763, %v762
      %v774 = vpack.c.bf16 %v765, %v764
      %v775 = vpack.c.bf16 %v767, %v766
      %v776 = vld [vmem:[%s3] sm:$0xf]
      %v777 = vld [vmem:[%s3 + $0x4] sm:$0xf]
      %v778 = vld [vmem:[%s3 + $0x8] sm:$0xf]
      %v779 = vld [vmem:[%s3 + $0xc] sm:$0xf]
      %v780 = vld [vmem:[%s3 + $0x10] sm:$0xf]
      %v781 = vld [vmem:[%s3 + $0x14] sm:$0xf]
      %v782 = vld [vmem:[%s3 + $0x18] sm:$0xf]
      %v783 = vld [vmem:[%s3 + $0x1c] sm:$0xf]
      %v784 = vld [vmem:[%s4] sm:$0x1]
      %v786 = vlaneseq
      %v787 = vshrl.u32 %v786, 7
      %v788 = vsub.s32 0, %v787
      %v789 = vrot.slane %v784, %v788
      %v799 = vunpack.c.l.b16 %v776
      %v800 = vunpack.c.l.b16 %v777
      %v801 = vunpack.c.l.b16 %v778
      %v802 = vunpack.c.l.b16 %v779
      %v803 = vunpack.c.l.b16 %v780
      %v804 = vunpack.c.l.b16 %v781
      %v805 = vunpack.c.l.b16 %v782
      %v806 = vunpack.c.l.b16 %v783
      %v807 = vpack.c.b16 %v800, %v799
      %v808 = vpack.c.b16 %v802, %v801
      %v809 = vpack.c.b16 %v804, %v803
      %v810 = vpack.c.b16 %v806, %v805
      %vm815 = vcmask 523264
      %v817 = vsel %vm815, %v768, 0
      %v820 = vsel %vm815, %v769, 0
      %v823 = vsel %vm815, %v770, 0
      %v826 = vsel %vm815, %v771, 0
      %v829 = vsel %vm815, %v772, 0
      %v832 = vsel %vm815, %v773, 0
      %v835 = vsel %vm815, %v774, 0
      %v838 = vsel %vm815, %v775, 0
      %840 = vmatprep.subr.bf16.mxu0 0
      %841 = vmatpush1.bf16.msra.mxu0 0
      %842 = vmatprep.subr.bf16.mxu0 0
      %843 = vmatpush1.bf16.msra.mxu0 0
      %844 = vmatprep.subr.bf16.mxu0 0
      %845 = vmatpush1.bf16.msra.mxu0 0
      %846 = vmatprep.subr.bf16.mxu0 0
      %847 = vmatpush1.bf16.msra.mxu0 0
      %848 = vmatprep.subr.bf16.mxu0 0
      %849 = vmatpush1.bf16.msra.mxu0 %v810
      %850 = vmatprep.subr.bf16.mxu0 0
      %851 = vmatpush1.bf16.msra.mxu0 %v809
      %852 = vmatprep.subr.bf16.mxu0 0
      %853 = vmatpush1.bf16.msra.mxu0 %v808
      %854 = vmatprep.subr.bf16.mxu0 0
      %855 = vmatpush1.bf16.msra.mxu0 %v807
      %856 = vmatprep.subr.bf16.mxu0 0
      %857 = vmatpush2.bf16.msra.mxu0 0
      %858 = vmatprep.subr.bf16.mxu0 0
      %859 = vmatpush2.bf16.msra.mxu0 0
      %860 = vmatprep.subr.bf16.mxu0 0
      %861 = vmatpush2.bf16.msra.mxu0 0
      %862 = vmatprep.subr.bf16.mxu0 0
      %863 = vmatpush2.bf16.msra.mxu0 0
      %864 = vmatprep.subr.bf16.mxu0 0
      %865 = vmatpush2.bf16.msra.mxu0 0
      %866 = vmatprep.subr.bf16.mxu0 0
      %867 = vmatpush2.bf16.msra.mxu0 0
      %868 = vmatprep.subr.bf16.mxu0 0
      %869 = vmatpush2.bf16.msra.mxu0 0
      %870 = vmatprep.subr.bf16.mxu0 0
      %871 = vmatpush2.bf16.msra.mxu0 0
      %872 = vmatprep.mubr.bf16.mxu0 0
      %873 = vmatmul.mubr.bf16.gmra.mxu0 %v817
      %v874 = vpop.f32.mrf.mxu0
      %v875 = vadd.f32 %v789, %v874
      %v876 = vpop.f32.mrf.mxu0
      %v877 = vpop.f32.mrf.mxu0
      %v878 = vadd.f32 %v789, %v877
      %v879 = vpop.f32.mrf.mxu0
      %880 = vmatprep.mubr.bf16.mxu0 0
      %881 = vmatmul.mubr.bf16.gmra.mxu0 %v820
      %v882 = vpop.f32.mrf.mxu0
      %v883 = vadd.f32 %v789, %v882
      %v884 = vpop.f32.mrf.mxu0
      %v885 = vpop.f32.mrf.mxu0
      %v886 = vadd.f32 %v789, %v885
      %v887 = vpop.f32.mrf.mxu0
      %888 = vmatprep.mubr.bf16.mxu0 0
      %889 = vmatmul.mubr.bf16.gmra.mxu0 %v823
      %v890 = vpop.f32.mrf.mxu0
      %v891 = vadd.f32 %v789, %v890
      %v892 = vpop.f32.mrf.mxu0
      %v893 = vpop.f32.mrf.mxu0
      %v894 = vadd.f32 %v789, %v893
      %v895 = vpop.f32.mrf.mxu0
      %896 = vmatprep.mubr.bf16.mxu0 0
      %897 = vmatmul.mubr.bf16.gmra.mxu0 %v826
      %v898 = vpop.f32.mrf.mxu0
      %v899 = vadd.f32 %v789, %v898
      %v900 = vpop.f32.mrf.mxu0
      %v901 = vpop.f32.mrf.mxu0
      %v902 = vadd.f32 %v789, %v901
      %v903 = vpop.f32.mrf.mxu0
      %904 = vmatprep.mubr.bf16.mxu0 0
      %905 = vmatmul.mubr.bf16.gmra.mxu0 %v829
      %v906 = vpop.f32.mrf.mxu0
      %v907 = vadd.f32 %v789, %v906
      %v908 = vpop.f32.mrf.mxu0
      %v909 = vpop.f32.mrf.mxu0
      %v910 = vadd.f32 %v789, %v909
      %v911 = vpop.f32.mrf.mxu0
      %912 = vmatprep.mubr.bf16.mxu0 0
      %913 = vmatmul.mubr.bf16.gmra.mxu0 %v832
      %v914 = vpop.f32.mrf.mxu0
      %v915 = vadd.f32 %v789, %v914
      %v916 = vpop.f32.mrf.mxu0
      %v917 = vpop.f32.mrf.mxu0
      %v918 = vadd.f32 %v789, %v917
      %v919 = vpop.f32.mrf.mxu0
      %920 = vmatprep.mubr.bf16.mxu0 0
      %921 = vmatmul.mubr.bf16.gmra.mxu0 %v835
      %v922 = vpop.f32.mrf.mxu0
      %v923 = vadd.f32 %v789, %v922
      %v924 = vpop.f32.mrf.mxu0
      %v925 = vpop.f32.mrf.mxu0
      %v926 = vadd.f32 %v789, %v925
      %v927 = vpop.f32.mrf.mxu0
      %928 = vmatprep.mubr.bf16.mxu0 0
      %929 = vmatmul.mubr.bf16.gmra.mxu0 %v838
      %v930 = vpop.f32.mrf.mxu0
      %v931 = vadd.f32 %v789, %v930
      %v932 = vpop.f32.mrf.mxu0
      %v933 = vpop.f32.mrf.mxu0
      %v934 = vadd.f32 %v789, %v933
      %v935 = vpop.f32.mrf.mxu0
      %936 = vdwg.mxu0
      %v937 = vmul.f32 %v875, 100.0
      %v938 = vmul.f32 %v878, 100.0
      %v939 = vmul.f32 %v883, 100.0
      %v940 = vmul.f32 %v886, 100.0
      %v941 = vmul.f32 %v891, 100.0
      %v942 = vmul.f32 %v894, 100.0
      %v943 = vmul.f32 %v899, 100.0
      %v944 = vmul.f32 %v902, 100.0
      %v945 = vmul.f32 %v907, 100.0
      %v946 = vmul.f32 %v910, 100.0
      %v947 = vmul.f32 %v915, 100.0
      %v948 = vmul.f32 %v918, 100.0
      %v949 = vmul.f32 %v923, 100.0
      %v950 = vmul.f32 %v926, 100.0
      %v951 = vmul.f32 %v931, 100.0
      %v952 = vmul.f32 %v934, 100.0
      %v953 = vand.u32 2147483647, %v937
      %v954 = vand.u32 2147483647, %v938
      %v955 = vand.u32 2147483647, %v939
      %v956 = vand.u32 2147483647, %v940
      %v957 = vand.u32 2147483647, %v941
      %v958 = vand.u32 2147483647, %v942
      %v959 = vand.u32 2147483647, %v943
      %v960 = vand.u32 2147483647, %v944
      %v961 = vand.u32 2147483647, %v945
      %v962 = vand.u32 2147483647, %v946
      %v963 = vand.u32 2147483647, %v947
      %v964 = vand.u32 2147483647, %v948
      %v965 = vand.u32 2147483647, %v949
      %v966 = vand.u32 2147483647, %v950
      %v967 = vand.u32 2147483647, %v951
      %v968 = vand.u32 2147483647, %v952
      %v969 = vsub.f32 0.0, %v953
      %v970 = vsub.f32 0.0, %v954
      %v971 = vsub.f32 0.0, %v955
      %v972 = vsub.f32 0.0, %v956
      %v973 = vsub.f32 0.0, %v957
      %v974 = vsub.f32 0.0, %v958
      %v975 = vsub.f32 0.0, %v959
      %v976 = vsub.f32 0.0, %v960
      %v977 = vsub.f32 0.0, %v961
      %v978 = vsub.f32 0.0, %v962
      %v979 = vsub.f32 0.0, %v963
      %v980 = vsub.f32 0.0, %v964
      %v981 = vsub.f32 0.0, %v965
      %v982 = vsub.f32 0.0, %v966
      %v983 = vsub.f32 0.0, %v967
      %v984 = vsub.f32 0.0, %v968
      %v985 = vmul.f32 %v969, 1.442695
      %v986 = vpow.pop %v985
      %v987 = vmul.f32 %v970, 1.442695
      %v988 = vpow.pop %v987
      %v989 = vmul.f32 %v971, 1.442695
      %v990 = vpow.pop %v989
      %v991 = vmul.f32 %v972, 1.442695
      %v992 = vpow.pop %v991
      %v993 = vmul.f32 %v973, 1.442695
      %v994 = vpow.pop %v993
      %v995 = vmul.f32 %v974, 1.442695
      %v996 = vpow.pop %v995
      %v997 = vmul.f32 %v975, 1.442695
      %v998 = vpow.pop %v997
      %v999 = vmul.f32 %v976, 1.442695
      %v1000 = vpow.pop %v999
      %v1001 = vmul.f32 %v977, 1.442695
      %v1002 = vpow.pop %v1001
      %v1003 = vmul.f32 %v978, 1.442695
      %v1004 = vpow.pop %v1003
      %v1005 = vmul.f32 %v979, 1.442695
      %v1006 = vpow.pop %v1005
      %v1007 = vmul.f32 %v980, 1.442695
      %v1008 = vpow.pop %v1007
      %v1009 = vmul.f32 %v981, 1.442695
      %v1010 = vpow.pop %v1009
      %v1011 = vmul.f32 %v982, 1.442695
      %v1012 = vpow.pop %v1011
      %v1013 = vmul.f32 %v983, 1.442695
      %v1014 = vpow.pop %v1013
      %v1015 = vmul.f32 %v984, 1.442695
      %v1016 = vpow.pop %v1015
      %v1017 = vmax.f32 %v937, 0.0
      %v1018 = vmax.f32 %v938, 0.0
      %v1019 = vmax.f32 %v939, 0.0
      %v1020 = vmax.f32 %v940, 0.0
      %v1021 = vmax.f32 %v941, 0.0
      %v1022 = vmax.f32 %v942, 0.0
      %v1023 = vmax.f32 %v943, 0.0
      %v1024 = vmax.f32 %v944, 0.0
      %v1025 = vmax.f32 %v945, 0.0
      %v1026 = vmax.f32 %v946, 0.0
      %v1027 = vmax.f32 %v947, 0.0
      %v1028 = vmax.f32 %v948, 0.0
      %v1029 = vmax.f32 %v949, 0.0
      %v1030 = vmax.f32 %v950, 0.0
      %v1031 = vmax.f32 %v951, 0.0
      %v1032 = vmax.f32 %v952, 0.0
      %v1033 = vadd.f32 %v986, 1.0
      %v1034 = vadd.f32 %v988, 1.0
      %v1035 = vadd.f32 %v990, 1.0
      %v1036 = vadd.f32 %v992, 1.0
      %v1037 = vadd.f32 %v994, 1.0
      %v1038 = vadd.f32 %v996, 1.0
      %v1039 = vadd.f32 %v998, 1.0
      %v1040 = vadd.f32 %v1000, 1.0
      %v1041 = vadd.f32 %v1002, 1.0
      %v1042 = vadd.f32 %v1004, 1.0
      %v1043 = vadd.f32 %v1006, 1.0
      %v1044 = vadd.f32 %v1008, 1.0
      %v1045 = vadd.f32 %v1010, 1.0
      %v1046 = vadd.f32 %v1012, 1.0
      %v1047 = vadd.f32 %v1014, 1.0
      %v1048 = vadd.f32 %v1016, 1.0
      %v1049 = vlog2.pop %v1033
      %v1050 = vmul.f32 %v1049, 0.6931472
      %v1051 = vlog2.pop %v1034
      %v1052 = vmul.f32 %v1051, 0.6931472
      %v1053 = vlog2.pop %v1035
      %v1054 = vmul.f32 %v1053, 0.6931472
      %v1055 = vlog2.pop %v1036
      %v1056 = vmul.f32 %v1055, 0.6931472
      %v1057 = vlog2.pop %v1037
      %v1058 = vmul.f32 %v1057, 0.6931472
      %v1059 = vlog2.pop %v1038
      %v1060 = vmul.f32 %v1059, 0.6931472
      %v1061 = vlog2.pop %v1039
      %v1062 = vmul.f32 %v1061, 0.6931472
      %v1063 = vlog2.pop %v1040
      %v1064 = vmul.f32 %v1063, 0.6931472
      %v1065 = vlog2.pop %v1041
      %v1066 = vmul.f32 %v1065, 0.6931472
      %v1067 = vlog2.pop %v1042
      %v1068 = vmul.f32 %v1067, 0.6931472
      %v1069 = vlog2.pop %v1043
      %v1070 = vmul.f32 %v1069, 0.6931472
      %v1071 = vlog2.pop %v1044
      %v1072 = vmul.f32 %v1071, 0.6931472
      %v1073 = vlog2.pop %v1045
      %v1074 = vmul.f32 %v1073, 0.6931472
      %v1075 = vlog2.pop %v1046
      %v1076 = vmul.f32 %v1075, 0.6931472
      %v1077 = vlog2.pop %v1047
      %v1078 = vmul.f32 %v1077, 0.6931472
      %v1079 = vlog2.pop %v1048
      %v1080 = vmul.f32 %v1079, 0.6931472
      %v1081 = vadd.f32 %v1017, %v1050
      %v1082 = vadd.f32 %v1018, %v1052
      %v1083 = vadd.f32 %v1019, %v1054
      %v1084 = vadd.f32 %v1020, %v1056
      %v1085 = vadd.f32 %v1021, %v1058
      %v1086 = vadd.f32 %v1022, %v1060
      %v1087 = vadd.f32 %v1023, %v1062
      %v1088 = vadd.f32 %v1024, %v1064
      %v1089 = vadd.f32 %v1025, %v1066
      %v1090 = vadd.f32 %v1026, %v1068
      %v1091 = vadd.f32 %v1027, %v1070
      %v1092 = vadd.f32 %v1028, %v1072
      %v1093 = vadd.f32 %v1029, %v1074
      %v1094 = vadd.f32 %v1030, %v1076
      %v1095 = vadd.f32 %v1031, %v1078
      %v1096 = vadd.f32 %v1032, %v1080
      %v1097 = vmul.f32 %v1081, 0.01
      %v1098 = vmul.f32 %v1082, 0.01
      %v1099 = vmul.f32 %v1083, 0.01
      %v1100 = vmul.f32 %v1084, 0.01
      %v1101 = vmul.f32 %v1085, 0.01
      %v1102 = vmul.f32 %v1086, 0.01
      %v1103 = vmul.f32 %v1087, 0.01
      %v1104 = vmul.f32 %v1088, 0.01
      %v1105 = vmul.f32 %v1089, 0.01
      %v1106 = vmul.f32 %v1090, 0.01
      %v1107 = vmul.f32 %v1091, 0.01
      %v1108 = vmul.f32 %v1092, 0.01
      %v1109 = vmul.f32 %v1093, 0.01
      %v1110 = vmul.f32 %v1094, 0.01
      %v1111 = vmul.f32 %v1095, 0.01
      %v1112 = vmul.f32 %v1096, 0.01
      %v1113 = vpack.c.bf16 %v1098, %v1097
      %v1114 = vpack.c.bf16 %v1100, %v1099
      %v1115 = vpack.c.bf16 %v1102, %v1101
      %v1116 = vpack.c.bf16 %v1104, %v1103
      %v1117 = vpack.c.bf16 %v1106, %v1105
      %v1118 = vpack.c.bf16 %v1108, %v1107
      %v1119 = vpack.c.bf16 %v1110, %v1109
      %v1120 = vpack.c.bf16 %v1112, %v1111
      %v1121 = vld [vmem:[%s5] sm:$0xf]
      %v1122 = vld [vmem:[%s5 + $0x4] sm:$0xf]
      %v1123 = vld [vmem:[%s5 + $0x8] sm:$0xf]
      %v1124 = vld [vmem:[%s5 + $0xc] sm:$0xf]
      %v1125 = vld [vmem:[%s5 + $0x10] sm:$0xf]
      %v1126 = vld [vmem:[%s5 + $0x14] sm:$0xf]
      %v1127 = vld [vmem:[%s5 + $0x18] sm:$0xf]
      %v1128 = vld [vmem:[%s5 + $0x1c] sm:$0xf]
      %v1129 = vld [vmem:[%s6] sm:$0x1]
      %v1131 = vlaneseq
      %v1132 = vshrl.u32 %v1131, 7
      %v1133 = vsub.s32 0, %v1132
      %v1134 = vrot.slane %v1129, %v1133
      %v1144 = vunpack.c.l.b16 %v1121
      %v1145 = vunpack.c.l.b16 %v1122
      %v1146 = vunpack.c.l.b16 %v1123
      %v1147 = vunpack.c.l.b16 %v1124
      %v1148 = vunpack.c.l.b16 %v1125
      %v1149 = vunpack.c.l.b16 %v1126
      %v1150 = vunpack.c.l.b16 %v1127
      %v1151 = vunpack.c.l.b16 %v1128
      %v1152 = vpack.c.b16 %v1145, %v1144
      %v1153 = vpack.c.b16 %v1147, %v1146
      %v1154 = vpack.c.b16 %v1149, %v1148
      %v1155 = vpack.c.b16 %v1151, %v1150
      %v1161 = vsel %vm815, %v1113, 0
      %v1164 = vsel %vm815, %v1114, 0
      %v1167 = vsel %vm815, %v1115, 0
      %v1170 = vsel %vm815, %v1116, 0
      %v1173 = vsel %vm815, %v1117, 0
      %v1176 = vsel %vm815, %v1118, 0
      %v1179 = vsel %vm815, %v1119, 0
      %v1182 = vsel %vm815, %v1120, 0
      %1184 = vmatprep.subr.bf16.mxu0 0
      %1185 = vmatpush1.bf16.msra.mxu0 0
      %1186 = vmatprep.subr.bf16.mxu0 0
      %1187 = vmatpush1.bf16.msra.mxu0 0
      %1188 = vmatprep.subr.bf16.mxu0 0
      %1189 = vmatpush1.bf16.msra.mxu0 0
      %1190 = vmatprep.subr.bf16.mxu0 0
      %1191 = vmatpush1.bf16.msra.mxu0 0
      %1192 = vmatprep.subr.bf16.mxu0 0
      %1193 = vmatpush1.bf16.msra.mxu0 %v1155
      %1194 = vmatprep.subr.bf16.mxu0 0
      %1195 = vmatpush1.bf16.msra.mxu0 %v1154
      %1196 = vmatprep.subr.bf16.mxu0 0
      %1197 = vmatpush1.bf16.msra.mxu0 %v1153
      %1198 = vmatprep.subr.bf16.mxu0 0
      %1199 = vmatpush1.bf16.msra.mxu0 %v1152
      %1200 = vmatprep.subr.bf16.mxu0 0
      %1201 = vmatpush2.bf16.msra.mxu0 0
      %1202 = vmatprep.subr.bf16.mxu0 0
      %1203 = vmatpush2.bf16.msra.mxu0 0
      %1204 = vmatprep.subr.bf16.mxu0 0
      %1205 = vmatpush2.bf16.msra.mxu0 0
      %1206 = vmatprep.subr.bf16.mxu0 0
      %1207 = vmatpush2.bf16.msra.mxu0 0
      %1208 = vmatprep.subr.bf16.mxu0 0
      %1209 = vmatpush2.bf16.msra.mxu0 0
      %1210 = vmatprep.subr.bf16.mxu0 0
      %1211 = vmatpush2.bf16.msra.mxu0 0
      %1212 = vmatprep.subr.bf16.mxu0 0
      %1213 = vmatpush2.bf16.msra.mxu0 0
      %1214 = vmatprep.subr.bf16.mxu0 0
      %1215 = vmatpush2.bf16.msra.mxu0 0
      %1216 = vmatprep.mubr.bf16.mxu0 0
      %1217 = vmatmul.mubr.bf16.gmra.mxu0 %v1161
      %v1218 = vpop.f32.mrf.mxu0
      %v1219 = vadd.f32 %v1134, %v1218
      %v1220 = vpop.f32.mrf.mxu0
      %v1221 = vpop.f32.mrf.mxu0
      %v1222 = vadd.f32 %v1134, %v1221
      %v1223 = vpop.f32.mrf.mxu0
      %1224 = vmatprep.mubr.bf16.mxu0 0
      %1225 = vmatmul.mubr.bf16.gmra.mxu0 %v1164
      %v1226 = vpop.f32.mrf.mxu0
      %v1227 = vadd.f32 %v1134, %v1226
      %v1228 = vpop.f32.mrf.mxu0
      %v1229 = vpop.f32.mrf.mxu0
      %v1230 = vadd.f32 %v1134, %v1229
      %v1231 = vpop.f32.mrf.mxu0
      %1232 = vmatprep.mubr.bf16.mxu0 0
      %1233 = vmatmul.mubr.bf16.gmra.mxu0 %v1167
      %v1234 = vpop.f32.mrf.mxu0
      %v1235 = vadd.f32 %v1134, %v1234
      %v1236 = vpop.f32.mrf.mxu0
      %v1237 = vpop.f32.mrf.mxu0
      %v1238 = vadd.f32 %v1134, %v1237
      %v1239 = vpop.f32.mrf.mxu0
      %1240 = vmatprep.mubr.bf16.mxu0 0
      %1241 = vmatmul.mubr.bf16.gmra.mxu0 %v1170
      %v1242 = vpop.f32.mrf.mxu0
      %v1243 = vadd.f32 %v1134, %v1242
      %v1244 = vpop.f32.mrf.mxu0
      %v1245 = vpop.f32.mrf.mxu0
      %v1246 = vadd.f32 %v1134, %v1245
      %v1247 = vpop.f32.mrf.mxu0
      %1248 = vmatprep.mubr.bf16.mxu0 0
      %1249 = vmatmul.mubr.bf16.gmra.mxu0 %v1173
      %v1250 = vpop.f32.mrf.mxu0
      %v1251 = vadd.f32 %v1134, %v1250
      %v1252 = vpop.f32.mrf.mxu0
      %v1253 = vpop.f32.mrf.mxu0
      %v1254 = vadd.f32 %v1134, %v1253
      %v1255 = vpop.f32.mrf.mxu0
      %1256 = vmatprep.mubr.bf16.mxu0 0
      %1257 = vmatmul.mubr.bf16.gmra.mxu0 %v1176
      %v1258 = vpop.f32.mrf.mxu0
      %v1259 = vadd.f32 %v1134, %v1258
      %v1260 = vpop.f32.mrf.mxu0
      %v1261 = vpop.f32.mrf.mxu0
      %v1262 = vadd.f32 %v1134, %v1261
      %v1263 = vpop.f32.mrf.mxu0
      %1264 = vmatprep.mubr.bf16.mxu0 0
      %1265 = vmatmul.mubr.bf16.gmra.mxu0 %v1179
      %v1266 = vpop.f32.mrf.mxu0
      %v1267 = vadd.f32 %v1134, %v1266
      %v1268 = vpop.f32.mrf.mxu0
      %v1269 = vpop.f32.mrf.mxu0
      %v1270 = vadd.f32 %v1134, %v1269
      %v1271 = vpop.f32.mrf.mxu0
      %1272 = vmatprep.mubr.bf16.mxu0 0
      %1273 = vmatmul.mubr.bf16.gmra.mxu0 %v1182
      %v1274 = vpop.f32.mrf.mxu0
      %v1275 = vadd.f32 %v1134, %v1274
      %v1276 = vpop.f32.mrf.mxu0
      %v1277 = vpop.f32.mrf.mxu0
      %v1278 = vadd.f32 %v1134, %v1277
      %v1279 = vpop.f32.mrf.mxu0
      %1280 = vdwg.mxu0
      %v1281 = vmul.f32 %v1219, 100.0
      %v1282 = vmul.f32 %v1222, 100.0
      %v1283 = vmul.f32 %v1227, 100.0
      %v1284 = vmul.f32 %v1230, 100.0
      %v1285 = vmul.f32 %v1235, 100.0
      %v1286 = vmul.f32 %v1238, 100.0
      %v1287 = vmul.f32 %v1243, 100.0
      %v1288 = vmul.f32 %v1246, 100.0
      %v1289 = vmul.f32 %v1251, 100.0
      %v1290 = vmul.f32 %v1254, 100.0
      %v1291 = vmul.f32 %v1259, 100.0
      %v1292 = vmul.f32 %v1262, 100.0
      %v1293 = vmul.f32 %v1267, 100.0
      %v1294 = vmul.f32 %v1270, 100.0
      %v1295 = vmul.f32 %v1275, 100.0
      %v1296 = vmul.f32 %v1278, 100.0
      %v1297 = vand.u32 2147483647, %v1281
      %v1298 = vand.u32 2147483647, %v1282
      %v1299 = vand.u32 2147483647, %v1283
      %v1300 = vand.u32 2147483647, %v1284
      %v1301 = vand.u32 2147483647, %v1285
      %v1302 = vand.u32 2147483647, %v1286
      %v1303 = vand.u32 2147483647, %v1287
      %v1304 = vand.u32 2147483647, %v1288
      %v1305 = vand.u32 2147483647, %v1289
      %v1306 = vand.u32 2147483647, %v1290
      %v1307 = vand.u32 2147483647, %v1291
      %v1308 = vand.u32 2147483647, %v1292
      %v1309 = vand.u32 2147483647, %v1293
      %v1310 = vand.u32 2147483647, %v1294
      %v1311 = vand.u32 2147483647, %v1295
      %v1312 = vand.u32 2147483647, %v1296
      %v1313 = vsub.f32 0.0, %v1297
      %v1314 = vsub.f32 0.0, %v1298
      %v1315 = vsub.f32 0.0, %v1299
      %v1316 = vsub.f32 0.0, %v1300
      %v1317 = vsub.f32 0.0, %v1301
      %v1318 = vsub.f32 0.0, %v1302
      %v1319 = vsub.f32 0.0, %v1303
      %v1320 = vsub.f32 0.0, %v1304
      %v1321 = vsub.f32 0.0, %v1305
      %v1322 = vsub.f32 0.0, %v1306
      %v1323 = vsub.f32 0.0, %v1307
      %v1324 = vsub.f32 0.0, %v1308
      %v1325 = vsub.f32 0.0, %v1309
      %v1326 = vsub.f32 0.0, %v1310
      %v1327 = vsub.f32 0.0, %v1311
      %v1328 = vsub.f32 0.0, %v1312
      %v1329 = vmul.f32 %v1313, 1.442695
      %v1330 = vpow.pop %v1329
      %v1331 = vmul.f32 %v1314, 1.442695
      %v1332 = vpow.pop %v1331
      %v1333 = vmul.f32 %v1315, 1.442695
      %v1334 = vpow.pop %v1333
      %v1335 = vmul.f32 %v1316, 1.442695
      %v1336 = vpow.pop %v1335
      %v1337 = vmul.f32 %v1317, 1.442695
      %v1338 = vpow.pop %v1337
      %v1339 = vmul.f32 %v1318, 1.442695
      %v1340 = vpow.pop %v1339
      %v1341 = vmul.f32 %v1319, 1.442695
      %v1342 = vpow.pop %v1341
      %v1343 = vmul.f32 %v1320, 1.442695
      %v1344 = vpow.pop %v1343
      %v1345 = vmul.f32 %v1321, 1.442695
      %v1346 = vpow.pop %v1345
      %v1347 = vmul.f32 %v1322, 1.442695
      %v1348 = vpow.pop %v1347
      %v1349 = vmul.f32 %v1323, 1.442695
      %v1350 = vpow.pop %v1349
      %v1351 = vmul.f32 %v1324, 1.442695
      %v1352 = vpow.pop %v1351
      %v1353 = vmul.f32 %v1325, 1.442695
      %v1354 = vpow.pop %v1353
      %v1355 = vmul.f32 %v1326, 1.442695
      %v1356 = vpow.pop %v1355
      %v1357 = vmul.f32 %v1327, 1.442695
      %v1358 = vpow.pop %v1357
      %v1359 = vmul.f32 %v1328, 1.442695
      %v1360 = vpow.pop %v1359
      %v1361 = vmax.f32 %v1281, 0.0
      %v1362 = vmax.f32 %v1282, 0.0
      %v1363 = vmax.f32 %v1283, 0.0
      %v1364 = vmax.f32 %v1284, 0.0
      %v1365 = vmax.f32 %v1285, 0.0
      %v1366 = vmax.f32 %v1286, 0.0
      %v1367 = vmax.f32 %v1287, 0.0
      %v1368 = vmax.f32 %v1288, 0.0
      %v1369 = vmax.f32 %v1289, 0.0
      %v1370 = vmax.f32 %v1290, 0.0
      %v1371 = vmax.f32 %v1291, 0.0
      %v1372 = vmax.f32 %v1292, 0.0
      %v1373 = vmax.f32 %v1293, 0.0
      %v1374 = vmax.f32 %v1294, 0.0
      %v1375 = vmax.f32 %v1295, 0.0
      %v1376 = vmax.f32 %v1296, 0.0
      %v1377 = vadd.f32 %v1330, 1.0
      %v1378 = vadd.f32 %v1332, 1.0
      %v1379 = vadd.f32 %v1334, 1.0
      %v1380 = vadd.f32 %v1336, 1.0
      %v1381 = vadd.f32 %v1338, 1.0
      %v1382 = vadd.f32 %v1340, 1.0
      %v1383 = vadd.f32 %v1342, 1.0
      %v1384 = vadd.f32 %v1344, 1.0
      %v1385 = vadd.f32 %v1346, 1.0
      %v1386 = vadd.f32 %v1348, 1.0
      %v1387 = vadd.f32 %v1350, 1.0
      %v1388 = vadd.f32 %v1352, 1.0
      %v1389 = vadd.f32 %v1354, 1.0
      %v1390 = vadd.f32 %v1356, 1.0
      %v1391 = vadd.f32 %v1358, 1.0
      %v1392 = vadd.f32 %v1360, 1.0
      %v1393 = vlog2.pop %v1377
      %v1394 = vmul.f32 %v1393, 0.6931472
      %v1395 = vlog2.pop %v1378
      %v1396 = vmul.f32 %v1395, 0.6931472
      %v1397 = vlog2.pop %v1379
      %v1398 = vmul.f32 %v1397, 0.6931472
      %v1399 = vlog2.pop %v1380
      %v1400 = vmul.f32 %v1399, 0.6931472
      %v1401 = vlog2.pop %v1381
      %v1402 = vmul.f32 %v1401, 0.6931472
      %v1403 = vlog2.pop %v1382
      %v1404 = vmul.f32 %v1403, 0.6931472
      %v1405 = vlog2.pop %v1383
      %v1406 = vmul.f32 %v1405, 0.6931472
      %v1407 = vlog2.pop %v1384
      %v1408 = vmul.f32 %v1407, 0.6931472
      %v1409 = vlog2.pop %v1385
      %v1410 = vmul.f32 %v1409, 0.6931472
      %v1411 = vlog2.pop %v1386
      %v1412 = vmul.f32 %v1411, 0.6931472
      %v1413 = vlog2.pop %v1387
      %v1414 = vmul.f32 %v1413, 0.6931472
      %v1415 = vlog2.pop %v1388
      %v1416 = vmul.f32 %v1415, 0.6931472
      %v1417 = vlog2.pop %v1389
      %v1418 = vmul.f32 %v1417, 0.6931472
      %v1419 = vlog2.pop %v1390
      %v1420 = vmul.f32 %v1419, 0.6931472
      %v1421 = vlog2.pop %v1391
      %v1422 = vmul.f32 %v1421, 0.6931472
      %v1423 = vlog2.pop %v1392
      %v1424 = vmul.f32 %v1423, 0.6931472
      %v1425 = vadd.f32 %v1361, %v1394
      %v1426 = vadd.f32 %v1362, %v1396
      %v1427 = vadd.f32 %v1363, %v1398
      %v1428 = vadd.f32 %v1364, %v1400
      %v1429 = vadd.f32 %v1365, %v1402
      %v1430 = vadd.f32 %v1366, %v1404
      %v1431 = vadd.f32 %v1367, %v1406
      %v1432 = vadd.f32 %v1368, %v1408
      %v1433 = vadd.f32 %v1369, %v1410
      %v1434 = vadd.f32 %v1370, %v1412
      %v1435 = vadd.f32 %v1371, %v1414
      %v1436 = vadd.f32 %v1372, %v1416
      %v1437 = vadd.f32 %v1373, %v1418
      %v1438 = vadd.f32 %v1374, %v1420
      %v1439 = vadd.f32 %v1375, %v1422
      %v1440 = vadd.f32 %v1376, %v1424
      %v1441 = vmul.f32 %v1425, 0.01
      %v1442 = vmul.f32 %v1426, 0.01
      %v1443 = vmul.f32 %v1427, 0.01
      %v1444 = vmul.f32 %v1428, 0.01
      %v1445 = vmul.f32 %v1429, 0.01
      %v1446 = vmul.f32 %v1430, 0.01
      %v1447 = vmul.f32 %v1431, 0.01
      %v1448 = vmul.f32 %v1432, 0.01
      %v1449 = vmul.f32 %v1433, 0.01
      %v1450 = vmul.f32 %v1434, 0.01
      %v1451 = vmul.f32 %v1435, 0.01
      %v1452 = vmul.f32 %v1436, 0.01
      %v1453 = vmul.f32 %v1437, 0.01
      %v1454 = vmul.f32 %v1438, 0.01
      %v1455 = vmul.f32 %v1439, 0.01
      %v1456 = vmul.f32 %v1440, 0.01
      %v1457 = vpack.c.bf16 %v1442, %v1441
      %v1458 = vpack.c.bf16 %v1444, %v1443
      %v1459 = vpack.c.bf16 %v1446, %v1445
      %v1460 = vpack.c.bf16 %v1448, %v1447
      %v1461 = vpack.c.bf16 %v1450, %v1449
      %v1462 = vpack.c.bf16 %v1452, %v1451
      %v1463 = vpack.c.bf16 %v1454, %v1453
      %v1464 = vpack.c.bf16 %v1456, %v1455
      %v1465 = vld [vmem:[%s7] sm:$0xf]
      %v1466 = vld [vmem:[%s7 + $0x4] sm:$0xf]
      %v1467 = vld [vmem:[%s7 + $0x8] sm:$0xf]
      %v1468 = vld [vmem:[%s7 + $0xc] sm:$0xf]
      %v1469 = vld [vmem:[%s7 + $0x10] sm:$0xf]
      %v1470 = vld [vmem:[%s7 + $0x14] sm:$0xf]
      %v1471 = vld [vmem:[%s7 + $0x18] sm:$0xf]
      %v1472 = vld [vmem:[%s7 + $0x1c] sm:$0xf]
      %v1473 = vld [vmem:[%s8] sm:$0x1]
      %v1475 = vlaneseq
      %v1476 = vshrl.u32 %v1475, 7
      %v1477 = vsub.s32 0, %v1476
      %v1478 = vrot.slane %v1473, %v1477
      %v1488 = vunpack.c.l.b16 %v1465
      %v1489 = vunpack.c.l.b16 %v1466
      %v1490 = vunpack.c.l.b16 %v1467
      %v1491 = vunpack.c.l.b16 %v1468
      %v1492 = vunpack.c.l.b16 %v1469
      %v1493 = vunpack.c.l.b16 %v1470
      %v1494 = vunpack.c.l.b16 %v1471
      %v1495 = vunpack.c.l.b16 %v1472
      %v1496 = vpack.c.b16 %v1489, %v1488
      %v1497 = vpack.c.b16 %v1491, %v1490
      %v1498 = vpack.c.b16 %v1493, %v1492
      %v1499 = vpack.c.b16 %v1495, %v1494
      %v1505 = vsel %vm815, %v1457, 0
      %v1508 = vsel %vm815, %v1458, 0
      %v1511 = vsel %vm815, %v1459, 0
      %v1514 = vsel %vm815, %v1460, 0
      %v1517 = vsel %vm815, %v1461, 0
      %v1520 = vsel %vm815, %v1462, 0
      %v1523 = vsel %vm815, %v1463, 0
      %v1526 = vsel %vm815, %v1464, 0
      %1528 = vmatprep.subr.bf16.mxu0 0
      %1529 = vmatpush1.bf16.msra.mxu0 0
      %1530 = vmatprep.subr.bf16.mxu0 0
      %1531 = vmatpush1.bf16.msra.mxu0 0
      %1532 = vmatprep.subr.bf16.mxu0 0
      %1533 = vmatpush1.bf16.msra.mxu0 0
      %1534 = vmatprep.subr.bf16.mxu0 0
      %1535 = vmatpush1.bf16.msra.mxu0 0
      %1536 = vmatprep.subr.bf16.mxu0 0
      %1537 = vmatpush1.bf16.msra.mxu0 %v1499
      %1538 = vmatprep.subr.bf16.mxu0 0
      %1539 = vmatpush1.bf16.msra.mxu0 %v1498
      %1540 = vmatprep.subr.bf16.mxu0 0
      %1541 = vmatpush1.bf16.msra.mxu0 %v1497
      %1542 = vmatprep.subr.bf16.mxu0 0
      %1543 = vmatpush1.bf16.msra.mxu0 %v1496
      %1544 = vmatprep.subr.bf16.mxu0 0
      %1545 = vmatpush2.bf16.msra.mxu0 0
      %1546 = vmatprep.subr.bf16.mxu0 0
      %1547 = vmatpush2.bf16.msra.mxu0 0
      %1548 = vmatprep.subr.bf16.mxu0 0
      %1549 = vmatpush2.bf16.msra.mxu0 0
      %1550 = vmatprep.subr.bf16.mxu0 0
      %1551 = vmatpush2.bf16.msra.mxu0 0
      %1552 = vmatprep.subr.bf16.mxu0 0
      %1553 = vmatpush2.bf16.msra.mxu0 0
      %1554 = vmatprep.subr.bf16.mxu0 0
      %1555 = vmatpush2.bf16.msra.mxu0 0
      %1556 = vmatprep.subr.bf16.mxu0 0
      %1557 = vmatpush2.bf16.msra.mxu0 0
      %1558 = vmatprep.subr.bf16.mxu0 0
      %1559 = vmatpush2.bf16.msra.mxu0 0
      %1560 = vmatprep.mubr.bf16.mxu0 0
      %1561 = vmatmul.mubr.bf16.gmra.mxu0 %v1505
      %v1562 = vpop.f32.mrf.mxu0
      %v1563 = vadd.f32 %v1478, %v1562
      %v1564 = vpop.f32.mrf.mxu0
      %v1565 = vpop.f32.mrf.mxu0
      %v1566 = vadd.f32 %v1478, %v1565
      %v1567 = vpop.f32.mrf.mxu0
      %1568 = vmatprep.mubr.bf16.mxu0 0
      %1569 = vmatmul.mubr.bf16.gmra.mxu0 %v1508
      %v1570 = vpop.f32.mrf.mxu0
      %v1571 = vadd.f32 %v1478, %v1570
      %v1572 = vpop.f32.mrf.mxu0
      %v1573 = vpop.f32.mrf.mxu0
      %v1574 = vadd.f32 %v1478, %v1573
      %v1575 = vpop.f32.mrf.mxu0
      %1576 = vmatprep.mubr.bf16.mxu0 0
      %1577 = vmatmul.mubr.bf16.gmra.mxu0 %v1511
      %v1578 = vpop.f32.mrf.mxu0
      %v1579 = vadd.f32 %v1478, %v1578
      %v1580 = vpop.f32.mrf.mxu0
      %v1581 = vpop.f32.mrf.mxu0
      %v1582 = vadd.f32 %v1478, %v1581
      %v1583 = vpop.f32.mrf.mxu0
      %1584 = vmatprep.mubr.bf16.mxu0 0
      %1585 = vmatmul.mubr.bf16.gmra.mxu0 %v1514
      %v1586 = vpop.f32.mrf.mxu0
      %v1587 = vadd.f32 %v1478, %v1586
      %v1588 = vpop.f32.mrf.mxu0
      %v1589 = vpop.f32.mrf.mxu0
      %v1590 = vadd.f32 %v1478, %v1589
      %v1591 = vpop.f32.mrf.mxu0
      %1592 = vmatprep.mubr.bf16.mxu0 0
      %1593 = vmatmul.mubr.bf16.gmra.mxu0 %v1517
      %v1594 = vpop.f32.mrf.mxu0
      %v1595 = vadd.f32 %v1478, %v1594
      %v1596 = vpop.f32.mrf.mxu0
      %v1597 = vpop.f32.mrf.mxu0
      %v1598 = vadd.f32 %v1478, %v1597
      %v1599 = vpop.f32.mrf.mxu0
      %1600 = vmatprep.mubr.bf16.mxu0 0
      %1601 = vmatmul.mubr.bf16.gmra.mxu0 %v1520
      %v1602 = vpop.f32.mrf.mxu0
      %v1603 = vadd.f32 %v1478, %v1602
      %v1604 = vpop.f32.mrf.mxu0
      %v1605 = vpop.f32.mrf.mxu0
      %v1606 = vadd.f32 %v1478, %v1605
      %v1607 = vpop.f32.mrf.mxu0
      %1608 = vmatprep.mubr.bf16.mxu0 0
      %1609 = vmatmul.mubr.bf16.gmra.mxu0 %v1523
      %v1610 = vpop.f32.mrf.mxu0
      %v1611 = vadd.f32 %v1478, %v1610
      %v1612 = vpop.f32.mrf.mxu0
      %v1613 = vpop.f32.mrf.mxu0
      %v1614 = vadd.f32 %v1478, %v1613
      %v1615 = vpop.f32.mrf.mxu0
      %1616 = vmatprep.mubr.bf16.mxu0 0
      %1617 = vmatmul.mubr.bf16.gmra.mxu0 %v1526
      %v1618 = vpop.f32.mrf.mxu0
      %v1619 = vadd.f32 %v1478, %v1618
      %v1620 = vpop.f32.mrf.mxu0
      %v1621 = vpop.f32.mrf.mxu0
      %v1622 = vadd.f32 %v1478, %v1621
      %v1623 = vpop.f32.mrf.mxu0
      %1624 = vdwg.mxu0
      %v1625 = vmul.f32 %v1563, 100.0
      %v1626 = vmul.f32 %v1566, 100.0
      %v1627 = vmul.f32 %v1571, 100.0
      %v1628 = vmul.f32 %v1574, 100.0
      %v1629 = vmul.f32 %v1579, 100.0
      %v1630 = vmul.f32 %v1582, 100.0
      %v1631 = vmul.f32 %v1587, 100.0
      %v1632 = vmul.f32 %v1590, 100.0
      %v1633 = vmul.f32 %v1595, 100.0
      %v1634 = vmul.f32 %v1598, 100.0
      %v1635 = vmul.f32 %v1603, 100.0
      %v1636 = vmul.f32 %v1606, 100.0
      %v1637 = vmul.f32 %v1611, 100.0
      %v1638 = vmul.f32 %v1614, 100.0
      %v1639 = vmul.f32 %v1619, 100.0
      %v1640 = vmul.f32 %v1622, 100.0
      %v1641 = vand.u32 2147483647, %v1625
      %v1642 = vand.u32 2147483647, %v1626
      %v1643 = vand.u32 2147483647, %v1627
      %v1644 = vand.u32 2147483647, %v1628
      %v1645 = vand.u32 2147483647, %v1629
      %v1646 = vand.u32 2147483647, %v1630
      %v1647 = vand.u32 2147483647, %v1631
      %v1648 = vand.u32 2147483647, %v1632
      %v1649 = vand.u32 2147483647, %v1633
      %v1650 = vand.u32 2147483647, %v1634
      %v1651 = vand.u32 2147483647, %v1635
      %v1652 = vand.u32 2147483647, %v1636
      %v1653 = vand.u32 2147483647, %v1637
      %v1654 = vand.u32 2147483647, %v1638
      %v1655 = vand.u32 2147483647, %v1639
      %v1656 = vand.u32 2147483647, %v1640
      %v1657 = vsub.f32 0.0, %v1641
      %v1658 = vsub.f32 0.0, %v1642
      %v1659 = vsub.f32 0.0, %v1643
      %v1660 = vsub.f32 0.0, %v1644
      %v1661 = vsub.f32 0.0, %v1645
      %v1662 = vsub.f32 0.0, %v1646
      %v1663 = vsub.f32 0.0, %v1647
      %v1664 = vsub.f32 0.0, %v1648
      %v1665 = vsub.f32 0.0, %v1649
      %v1666 = vsub.f32 0.0, %v1650
      %v1667 = vsub.f32 0.0, %v1651
      %v1668 = vsub.f32 0.0, %v1652
      %v1669 = vsub.f32 0.0, %v1653
      %v1670 = vsub.f32 0.0, %v1654
      %v1671 = vsub.f32 0.0, %v1655
      %v1672 = vsub.f32 0.0, %v1656
      %v1673 = vmul.f32 %v1657, 1.442695
      %v1674 = vpow.pop %v1673
      %v1675 = vmul.f32 %v1658, 1.442695
      %v1676 = vpow.pop %v1675
      %v1677 = vmul.f32 %v1659, 1.442695
      %v1678 = vpow.pop %v1677
      %v1679 = vmul.f32 %v1660, 1.442695
      %v1680 = vpow.pop %v1679
      %v1681 = vmul.f32 %v1661, 1.442695
      %v1682 = vpow.pop %v1681
      %v1683 = vmul.f32 %v1662, 1.442695
      %v1684 = vpow.pop %v1683
      %v1685 = vmul.f32 %v1663, 1.442695
      %v1686 = vpow.pop %v1685
      %v1687 = vmul.f32 %v1664, 1.442695
      %v1688 = vpow.pop %v1687
      %v1689 = vmul.f32 %v1665, 1.442695
      %v1690 = vpow.pop %v1689
      %v1691 = vmul.f32 %v1666, 1.442695
      %v1692 = vpow.pop %v1691
      %v1693 = vmul.f32 %v1667, 1.442695
      %v1694 = vpow.pop %v1693
      %v1695 = vmul.f32 %v1668, 1.442695
      %v1696 = vpow.pop %v1695
      %v1697 = vmul.f32 %v1669, 1.442695
      %v1698 = vpow.pop %v1697
      %v1699 = vmul.f32 %v1670, 1.442695
      %v1700 = vpow.pop %v1699
      %v1701 = vmul.f32 %v1671, 1.442695
      %v1702 = vpow.pop %v1701
      %v1703 = vmul.f32 %v1672, 1.442695
      %v1704 = vpow.pop %v1703
      %v1705 = vmax.f32 %v1625, 0.0
      %v1706 = vmax.f32 %v1626, 0.0
      %v1707 = vmax.f32 %v1627, 0.0
      %v1708 = vmax.f32 %v1628, 0.0
      %v1709 = vmax.f32 %v1629, 0.0
      %v1710 = vmax.f32 %v1630, 0.0
      %v1711 = vmax.f32 %v1631, 0.0
      %v1712 = vmax.f32 %v1632, 0.0
      %v1713 = vmax.f32 %v1633, 0.0
      %v1714 = vmax.f32 %v1634, 0.0
      %v1715 = vmax.f32 %v1635, 0.0
      %v1716 = vmax.f32 %v1636, 0.0
      %v1717 = vmax.f32 %v1637, 0.0
      %v1718 = vmax.f32 %v1638, 0.0
      %v1719 = vmax.f32 %v1639, 0.0
      %v1720 = vmax.f32 %v1640, 0.0
      %v1721 = vadd.f32 %v1674, 1.0
      %v1722 = vadd.f32 %v1676, 1.0
      %v1723 = vadd.f32 %v1678, 1.0
      %v1724 = vadd.f32 %v1680, 1.0
      %v1725 = vadd.f32 %v1682, 1.0
      %v1726 = vadd.f32 %v1684, 1.0
      %v1727 = vadd.f32 %v1686, 1.0
      %v1728 = vadd.f32 %v1688, 1.0
      %v1729 = vadd.f32 %v1690, 1.0
      %v1730 = vadd.f32 %v1692, 1.0
      %v1731 = vadd.f32 %v1694, 1.0
      %v1732 = vadd.f32 %v1696, 1.0
      %v1733 = vadd.f32 %v1698, 1.0
      %v1734 = vadd.f32 %v1700, 1.0
      %v1735 = vadd.f32 %v1702, 1.0
      %v1736 = vadd.f32 %v1704, 1.0
      %v1737 = vlog2.pop %v1721
      %v1738 = vmul.f32 %v1737, 0.6931472
      %v1739 = vlog2.pop %v1722
      %v1740 = vmul.f32 %v1739, 0.6931472
      %v1741 = vlog2.pop %v1723
      %v1742 = vmul.f32 %v1741, 0.6931472
      %v1743 = vlog2.pop %v1724
      %v1744 = vmul.f32 %v1743, 0.6931472
      %v1745 = vlog2.pop %v1725
      %v1746 = vmul.f32 %v1745, 0.6931472
      %v1747 = vlog2.pop %v1726
      %v1748 = vmul.f32 %v1747, 0.6931472
      %v1749 = vlog2.pop %v1727
      %v1750 = vmul.f32 %v1749, 0.6931472
      %v1751 = vlog2.pop %v1728
      %v1752 = vmul.f32 %v1751, 0.6931472
      %v1753 = vlog2.pop %v1729
      %v1754 = vmul.f32 %v1753, 0.6931472
      %v1755 = vlog2.pop %v1730
      %v1756 = vmul.f32 %v1755, 0.6931472
      %v1757 = vlog2.pop %v1731
      %v1758 = vmul.f32 %v1757, 0.6931472
      %v1759 = vlog2.pop %v1732
      %v1760 = vmul.f32 %v1759, 0.6931472
      %v1761 = vlog2.pop %v1733
      %v1762 = vmul.f32 %v1761, 0.6931472
      %v1763 = vlog2.pop %v1734
      %v1764 = vmul.f32 %v1763, 0.6931472
      %v1765 = vlog2.pop %v1735
      %v1766 = vmul.f32 %v1765, 0.6931472
      %v1767 = vlog2.pop %v1736
      %v1768 = vmul.f32 %v1767, 0.6931472
      %v1769 = vadd.f32 %v1705, %v1738
      %v1770 = vadd.f32 %v1706, %v1740
      %v1771 = vadd.f32 %v1707, %v1742
      %v1772 = vadd.f32 %v1708, %v1744
      %v1773 = vadd.f32 %v1709, %v1746
      %v1774 = vadd.f32 %v1710, %v1748
      %v1775 = vadd.f32 %v1711, %v1750
      %v1776 = vadd.f32 %v1712, %v1752
      %v1777 = vadd.f32 %v1713, %v1754
      %v1778 = vadd.f32 %v1714, %v1756
      %v1779 = vadd.f32 %v1715, %v1758
      %v1780 = vadd.f32 %v1716, %v1760
      %v1781 = vadd.f32 %v1717, %v1762
      %v1782 = vadd.f32 %v1718, %v1764
      %v1783 = vadd.f32 %v1719, %v1766
      %v1784 = vadd.f32 %v1720, %v1768
      %v1785 = vmul.f32 %v1769, 0.01
      %v1786 = vmul.f32 %v1770, 0.01
      %v1787 = vmul.f32 %v1771, 0.01
      %v1788 = vmul.f32 %v1772, 0.01
      %v1789 = vmul.f32 %v1773, 0.01
      %v1790 = vmul.f32 %v1774, 0.01
      %v1791 = vmul.f32 %v1775, 0.01
      %v1792 = vmul.f32 %v1776, 0.01
      %v1793 = vmul.f32 %v1777, 0.01
      %v1794 = vmul.f32 %v1778, 0.01
      %v1795 = vmul.f32 %v1779, 0.01
      %v1796 = vmul.f32 %v1780, 0.01
      %v1797 = vmul.f32 %v1781, 0.01
      %v1798 = vmul.f32 %v1782, 0.01
      %v1799 = vmul.f32 %v1783, 0.01
      %v1800 = vmul.f32 %v1784, 0.01
      %v1801 = vpack.c.bf16 %v1786, %v1785
      %v1802 = vpack.c.bf16 %v1788, %v1787
      %v1803 = vpack.c.bf16 %v1790, %v1789
      %v1804 = vpack.c.bf16 %v1792, %v1791
      %v1805 = vpack.c.bf16 %v1794, %v1793
      %v1806 = vpack.c.bf16 %v1796, %v1795
      %v1807 = vpack.c.bf16 %v1798, %v1797
      %v1808 = vpack.c.bf16 %v1800, %v1799
      %v1809 = vld [vmem:[%s9] sm:$0xf]
      %v1810 = vld [vmem:[%s9 + $0x4] sm:$0xf]
      %v1811 = vld [vmem:[%s9 + $0x8] sm:$0xf]
      %v1812 = vld [vmem:[%s9 + $0xc] sm:$0xf]
      %v1813 = vld [vmem:[%s9 + $0x10] sm:$0xf]
      %v1814 = vld [vmem:[%s9 + $0x14] sm:$0xf]
      %v1815 = vld [vmem:[%s9 + $0x18] sm:$0xf]
      %v1816 = vld [vmem:[%s9 + $0x1c] sm:$0xf]
      %v1817 = vld [vmem:[#allocation2] sm:$0x1]
      %v1819 = vlaneseq
      %v1820 = vshrl.u32 %v1819, 7
      %v1821 = vsub.s32 0, %v1820
      %v1822 = vrot.slane %v1817, %v1821
      %v1832 = vunpack.c.l.b16 %v1809
      %v1833 = vunpack.c.l.b16 %v1810
      %v1834 = vunpack.c.l.b16 %v1811
      %v1835 = vunpack.c.l.b16 %v1812
      %v1836 = vunpack.c.l.b16 %v1813
      %v1837 = vunpack.c.l.b16 %v1814
      %v1838 = vunpack.c.l.b16 %v1815
      %v1839 = vunpack.c.l.b16 %v1816
      %v1840 = vpack.c.b16 %v1833, %v1832
      %v1841 = vpack.c.b16 %v1835, %v1834
      %v1842 = vpack.c.b16 %v1837, %v1836
      %v1843 = vpack.c.b16 %v1839, %v1838
      %v1849 = vsel %vm815, %v1801, 0
      %v1852 = vsel %vm815, %v1802, 0
      %v1855 = vsel %vm815, %v1803, 0
      %v1858 = vsel %vm815, %v1804, 0
      %v1861 = vsel %vm815, %v1805, 0
      %v1864 = vsel %vm815, %v1806, 0
      %v1867 = vsel %vm815, %v1807, 0
      %v1870 = vsel %vm815, %v1808, 0
      %1872 = vmatprep.subr.bf16.mxu0 0
      %1873 = vmatpush1.bf16.msra.mxu0 0
      %1874 = vmatprep.subr.bf16.mxu0 0
      %1875 = vmatpush1.bf16.msra.mxu0 0
      %1876 = vmatprep.subr.bf16.mxu0 0
      %1877 = vmatpush1.bf16.msra.mxu0 0
      %1878 = vmatprep.subr.bf16.mxu0 0
      %1879 = vmatpush1.bf16.msra.mxu0 0
      %1880 = vmatprep.subr.bf16.mxu0 0
      %1881 = vmatpush1.bf16.msra.mxu0 %v1843
      %1882 = vmatprep.subr.bf16.mxu0 0
      %1883 = vmatpush1.bf16.msra.mxu0 %v1842
      %1884 = vmatprep.subr.bf16.mxu0 0
      %1885 = vmatpush1.bf16.msra.mxu0 %v1841
      %1886 = vmatprep.subr.bf16.mxu0 0
      %1887 = vmatpush1.bf16.msra.mxu0 %v1840
      %1888 = vmatprep.subr.bf16.mxu0 0
      %1889 = vmatpush2.bf16.msra.mxu0 0
      %1890 = vmatprep.subr.bf16.mxu0 0
      %1891 = vmatpush2.bf16.msra.mxu0 0
      %1892 = vmatprep.subr.bf16.mxu0 0
      %1893 = vmatpush2.bf16.msra.mxu0 0
      %1894 = vmatprep.subr.bf16.mxu0 0
      %1895 = vmatpush2.bf16.msra.mxu0 0
      %1896 = vmatprep.subr.bf16.mxu0 0
      %1897 = vmatpush2.bf16.msra.mxu0 0
      %1898 = vmatprep.subr.bf16.mxu0 0
      %1899 = vmatpush2.bf16.msra.mxu0 0
      %1900 = vmatprep.subr.bf16.mxu0 0
      %1901 = vmatpush2.bf16.msra.mxu0 0
      %1902 = vmatprep.subr.bf16.mxu0 0
      %1903 = vmatpush2.bf16.msra.mxu0 0
      %1904 = vmatprep.mubr.bf16.mxu0 0
      %1905 = vmatmul.mubr.bf16.gmra.mxu0 %v1849
      %v1906 = vpop.f32.mrf.mxu0
      %v1907 = vadd.f32 %v1822, %v1906
      %v1908 = vpop.f32.mrf.mxu0
      %v1909 = vpop.f32.mrf.mxu0
      %v1910 = vadd.f32 %v1822, %v1909
      %v1911 = vpop.f32.mrf.mxu0
      %1912 = vmatprep.mubr.bf16.mxu0 0
      %1913 = vmatmul.mubr.bf16.gmra.mxu0 %v1852
      %v1914 = vpop.f32.mrf.mxu0
      %v1915 = vadd.f32 %v1822, %v1914
      %v1916 = vpop.f32.mrf.mxu0
      %v1917 = vpop.f32.mrf.mxu0
      %v1918 = vadd.f32 %v1822, %v1917
      %v1919 = vpop.f32.mrf.mxu0
      %1920 = vmatprep.mubr.bf16.mxu0 0
      %1921 = vmatmul.mubr.bf16.gmra.mxu0 %v1855
      %v1922 = vpop.f32.mrf.mxu0
      %v1923 = vadd.f32 %v1822, %v1922
      %v1924 = vpop.f32.mrf.mxu0
      %v1925 = vpop.f32.mrf.mxu0
      %v1926 = vadd.f32 %v1822, %v1925
      %v1927 = vpop.f32.mrf.mxu0
      %1928 = vmatprep.mubr.bf16.mxu0 0
      %1929 = vmatmul.mubr.bf16.gmra.mxu0 %v1858
      %v1930 = vpop.f32.mrf.mxu0
      %v1931 = vadd.f32 %v1822, %v1930
      %v1932 = vpop.f32.mrf.mxu0
      %v1933 = vpop.f32.mrf.mxu0
      %v1934 = vadd.f32 %v1822, %v1933
      %v1935 = vpop.f32.mrf.mxu0
      %1936 = vmatprep.mubr.bf16.mxu0 0
      %1937 = vmatmul.mubr.bf16.gmra.mxu0 %v1861
      %v1938 = vpop.f32.mrf.mxu0
      %v1939 = vadd.f32 %v1822, %v1938
      %v1940 = vpop.f32.mrf.mxu0
      %v1941 = vpop.f32.mrf.mxu0
      %v1942 = vadd.f32 %v1822, %v1941
      %v1943 = vpop.f32.mrf.mxu0
      %1944 = vmatprep.mubr.bf16.mxu0 0
      %1945 = vmatmul.mubr.bf16.gmra.mxu0 %v1864
      %v1946 = vpop.f32.mrf.mxu0
      %v1947 = vadd.f32 %v1822, %v1946
      %v1948 = vpop.f32.mrf.mxu0
      %v1949 = vpop.f32.mrf.mxu0
      %v1950 = vadd.f32 %v1822, %v1949
      %v1951 = vpop.f32.mrf.mxu0
      %1952 = vmatprep.mubr.bf16.mxu0 0
      %1953 = vmatmul.mubr.bf16.gmra.mxu0 %v1867
      %v1954 = vpop.f32.mrf.mxu0
      %v1955 = vadd.f32 %v1822, %v1954
      %v1956 = vpop.f32.mrf.mxu0
      %v1957 = vpop.f32.mrf.mxu0
      %v1958 = vadd.f32 %v1822, %v1957
      %v1959 = vpop.f32.mrf.mxu0
      %1960 = vmatprep.mubr.bf16.mxu0 0
      %1961 = vmatmul.mubr.bf16.gmra.mxu0 %v1870
      %v1962 = vpop.f32.mrf.mxu0
      %v1963 = vadd.f32 %v1822, %v1962
      %v1964 = vpop.f32.mrf.mxu0
      %v1965 = vpop.f32.mrf.mxu0
      %v1966 = vadd.f32 %v1822, %v1965
      %v1967 = vpop.f32.mrf.mxu0
      %1968 = vdwg.mxu0
      %vm1969 = vcmask 7168
      %1970 = vst.msk [vmem:[%s390] sm:$0xff] %vm1969, %v1907
      %1971 = vst.msk [vmem:[%s390 + $0x8] sm:$0xff] %vm1969, %v1910
      %1972 = vst.msk [vmem:[%s390 + $0x10] sm:$0xff] %vm1969, %v1915
      %1973 = vst.msk [vmem:[%s390 + $0x18] sm:$0xff] %vm1969, %v1918
      %1974 = vst.msk [vmem:[%s390 + $0x20] sm:$0xff] %vm1969, %v1923
      %1975 = vst.msk [vmem:[%s390 + $0x28] sm:$0xff] %vm1969, %v1926
      %1976 = vst.msk [vmem:[%s390 + $0x30] sm:$0xff] %vm1969, %v1931
      %1977 = vst.msk [vmem:[%s390 + $0x38] sm:$0xff] %vm1969, %v1934
      %1978 = vst.msk [vmem:[%s390 + $0x40] sm:$0xff] %vm1969, %v1939
      %1979 = vst.msk [vmem:[%s390 + $0x48] sm:$0xff] %vm1969, %v1942
      %1980 = vst.msk [vmem:[%s390 + $0x50] sm:$0xff] %vm1969, %v1947
      %1981 = vst.msk [vmem:[%s390 + $0x58] sm:$0xff] %vm1969, %v1950
      %1982 = vst.msk [vmem:[%s390 + $0x60] sm:$0xff] %vm1969, %v1955
      %1983 = vst.msk [vmem:[%s390 + $0x68] sm:$0xff] %vm1969, %v1958
      %1984 = vst.msk [vmem:[%s390 + $0x70] sm:$0xff] %vm1969, %v1963
      %1985 = vst.msk [vmem:[%s390 + $0x78] sm:$0xff] %vm1969, %v1966
      %s1986 = smul.u32 16, %s24
      %p1987 = scmp.lt.s32.totalorder %s1986, 31
      %s1988 = scalar_select %p1987, %s1986, 31
      %s1989 = smul.addr %s1988, 8
      %s1990 = scalar_lea.vmem %s11, %s1989
      // Predicated region
      $region65: #{run.3} parent=63 // pred_check
        %p1991 = pneg %p278
      $region66: #{run.3} parent=63 // pred_check_branch
        %1993 = sbr.rel (%p1991) target = $region68
      $region67: #{run.3} parent=63 // pred_region
        %s1994 = smul.u32 16, %s24
      $region68: #{run.3} parent=63 // pred_fallthru
        _
    $region64: #{run.3} parent=5 // pred_fallthru
      _
    %p1995 = scmp.le.s32.totalorder 2, %s19
    // Predicated region
    $region69: #{run.3} parent=5 // pred_check
      %p1996 = pneg %p1995
    $region70: #{run.3} parent=5 // pred_check_branch
      %1998 = sbr.rel (%p1996) target = $region72
    $region71: #{run.3} parent=5 // pred_region
      %s1999 = ssub.s32 %s19, 2
      // Predicated region
      $region73: #{run.3} parent=71 // pred_check
        %p2000 = pneg %p284
      $region74: #{run.3} parent=71 // pred_check_branch
        %2002 = sbr.rel (%p2000) target = $region76
      $region75: #{run.3} parent=71 // pred_region
        %s2003 = smul.u32 16, %s25
        %p2004 = scmp.lt.s32.totalorder %s2003, 31
        %s2005 = scalar_select %p2004, %s2003, 31
        %s2006 = smul.addr %s2005, 8
        %s2007 = scalar_lea.vmem %s11, %s2006
      $region76: #{run.3} parent=71 // pred_fallthru
        _
    $region72: #{run.3} parent=5 // pred_fallthru
      _
  $region6: #{run.3} parent=0 // loop_footer
    %s23 = sadd.s32 1, %s19
  $region7: #{run.3} parent=0 // loop_footer_branch
    %18 = sbr.rel target = $region3
  $region8: #{run.3} parent=0 // loop_exit
    _

// kernel: run.5
$region0: #{run.5}
  #allocation0 [shape = 'u32[]', space=smem, size = 0x4, offset = 0x4, fixed_abs, tag = 'smem constant byte address 0x4 - core index']
  #allocation1 [shape = 'u32[144,128]{1,0:T(1,128)}', space=vmem, size = 0x12000, scoped, tag = 'internal scratch']
  %s0 = inlined_call_operand.vmem [shape: f32[8,120], index: 0, kind: input, shape index: {}]
  %s1 = inlined_call_operand.vmem [shape: f32[24,24], index: 1, kind: input, shape index: {}]
  %s2 = inlined_call_operand.vmem [shape: f32[8,8], index: 2, kind: output, shape index: {0}]
  %s3 = inlined_call_operand.hbm [shape: f32[8,24], index: 3, kind: output, shape index: {1}]
  %4 = xla_tuple %s2, %s3
  %s5 = sld [smem:[#allocation0]]
  $region26: #{run.5} parent=0
    _
  %s7 = ssub.s32 1, %s5
  %s8 = scalar_select 0, %s7, %s5
  $region1: #{run.5} parent=0
    #allocation2 [shape = 'u8[4096]{0}', space=vmem, size = 0x1000, scoped, tag = 'output window, operand 1, single buffered']
    #allocation3 [shape = 's32[1]{0}', space=sflag, size = 0x4, scoped, tag = 'scoped memory for run.5']
    %9 = vsyncpa [#allocation3], 0
    // Predicated region
    $region2: #{run.5} parent=1 // pred_check
      _
    $region3: #{run.5} parent=1 // pred_check_branch
      %11 = sbr.rel (0) target = $region5
    $region4: #{run.5} parent=1 // pred_region
      _
    $region5: #{run.5} parent=1 // pred_fallthru
      _
    // Predicated region
    $region6: #{run.5} parent=1 // pred_check
      _
    $region7: #{run.5} parent=1 // pred_check_branch
      %13 = sbr.rel (0) target = $region9
    $region8: #{run.5} parent=1 // pred_region
      _
    $region9: #{run.5} parent=1 // pred_fallthru
      _
    %v14 = vld [vmem:[%s0] sm:$0xff]
    %v15 = vand.u32 2147483647, %v14
    %v16 = vsub.f32 0.0, %v15
    %v17 = vmul.f32 %v16, 1.442695
    %v18 = vpow.pop %v17
    %vm19 = vcmp.le.f32.partialorder %v14, 0.0
    %v20 = vsel %vm19, 1.0, %v18
    %v21 = vadd.f32 %v18, 1.0
    %v22 = vrcp.pop %v21
    %v23 = vmul.f32 %v20, %v22
    %v24 = vsub.f32 1.0, %v23
    %v25 = vadd.f32 %v24, 1e-10
    %v26 = vlog2.pop %v25
    %v27 = vmul.f32 %v26, 0.6931472
    %v28 = vld [vmem:[%s1] sm:$0xff]
    %v29 = vld [vmem:[%s1 + $0x8] sm:$0xff]
    %v30 = vld [vmem:[%s1 + $0x10] sm:$0xff]
    %vm31 = vcmask 195584
    %v33 = vsel %vm31, %v27, 0
    %35 = vmatprep.subr.mxu0 0.0
    %36 = vmatpush1.msra.mxu0 0.0
    %37 = vmatprep.subr.mxu0 0.0
    %38 = vmatpush1.msra.mxu0 0.0
    %39 = vmatprep.subr.mxu0 0.0
    %40 = vmatpush1.msra.mxu0 0.0
    %41 = vmatprep.subr.mxu0 0.0
    %42 = vmatpush1.msra.mxu0 0.0
    %43 = vmatprep.subr.mxu0 0.0
    %44 = vmatpush1.msra.mxu0 0.0
    %45 = vmatprep.subr.mxu0 0.0
    %46 = vmatpush1.msra.mxu0 0.0
    %47 = vmatprep.subr.mxu0 0.0
    %48 = vmatpush1.msra.mxu0 0.0
    %49 = vmatprep.subr.mxu0 0.0
    %50 = vmatpush1.msra.mxu0 0.0
    %51 = vmatprep.subr.mxu0 0.0
    %52 = vmatpush1.msra.mxu0 0.0
    %53 = vmatprep.subr.mxu0 0.0
    %54 = vmatpush1.msra.mxu0 0.0
    %55 = vmatprep.subr.mxu0 0.0
    %56 = vmatpush1.msra.mxu0 0.0
    %57 = vmatprep.subr.mxu0 0.0
    %58 = vmatpush1.msra.mxu0 0.0
    %59 = vmatprep.subr.mxu0 0.0
    %60 = vmatpush1.msra.mxu0 0.0
    %61 = vmatprep.subr.mxu0 0.0
    %62 = vmatpush1.msra.mxu0 %v30
    %63 = vmatprep.subr.mxu0 0.0
    %64 = vmatpush1.msra.mxu0 %v29
    %65 = vmatprep.subr.mxu0 0.0
    %66 = vmatpush1.msra.mxu0 %v28
    %67 = vmatprep.subr.mxu0 0.0
    %68 = vmatpush2.msra.mxu0 0.0
    %69 = vmatprep.subr.mxu0 0.0
    %70 = vmatpush2.msra.mxu0 0.0
    %71 = vmatprep.subr.mxu0 0.0
    %72 = vmatpush2.msra.mxu0 0.0
    %73 = vmatprep.subr.mxu0 0.0
    %74 = vmatpush2.msra.mxu0 0.0
    %75 = vmatprep.subr.mxu0 0.0
    %76 = vmatpush2.msra.mxu0 0.0
    %77 = vmatprep.subr.mxu0 0.0
    %78 = vmatpush2.msra.mxu0 0.0
    %79 = vmatprep.subr.mxu0 0.0
    %80 = vmatpush2.msra.mxu0 0.0
    %81 = vmatprep.subr.mxu0 0.0
    %82 = vmatpush2.msra.mxu0 0.0
    %83 = vmatprep.subr.mxu0 0.0
    %84 = vmatpush2.msra.mxu0 0.0
    %85 = vmatprep.subr.mxu0 0.0
    %86 = vmatpush2.msra.mxu0 0.0
    %87 = vmatprep.subr.mxu0 0.0
    %88 = vmatpush2.msra.mxu0 0.0
    %89 = vmatprep.subr.mxu0 0.0
    %90 = vmatpush2.msra.mxu0 0.0
    %91 = vmatprep.subr.mxu0 0.0
    %92 = vmatpush2.msra.mxu0 0.0
    %93 = vmatprep.subr.mxu0 0.0
    %94 = vmatpush2.msra.mxu0 0.0
    %95 = vmatprep.subr.mxu0 0.0
    %96 = vmatpush2.msra.mxu0 0.0
    %97 = vmatprep.subr.mxu0 0.0
    %98 = vmatpush2.msra.mxu0 0.0
    %99 = vmatprep.mubr.f32.mxu0 0.0
    %100 = vmatmul.mubr.f32.gmra.mxu0 %v33
    %v101 = vpop.f32.mrf.mxu0
    %v102 = vadd.f32 0.0, %v101
    %v103 = vpop.f32.mrf.mxu0
    %104 = vdwg.mxu0
    %v105 = vmul.f32 %v102, 1.442695
    %v106 = vpow.pop %v105
    %v107 = vmul.f32 %v23, %v106
    %108 = vst.msk [vmem:[#allocation2] sm:$0xff] %vm31, %v107
    %110 = vrot.lane.b32.xlu0 %v14, 104
    %v111 = vpop.permute.xlu0 %110
    %v113 = vmul.f32 %v107, %v111
    %v114 = vsel %vm31, %v113, 0.0
    %115 = vadd.xlane.f32.xlu0 %v114
    %v116 = vpop.xlane.xlu0 %115
    %117 = vrot.lane.b32.xlu0 %v14, 80
    %v118 = vpop.permute.xlu0 %117
    %v120 = vmul.f32 %v107, %v118
    %v121 = vsel %vm31, %v120, 0.0
    %122 = vadd.xlane.f32.xlu0 %v121
    %v123 = vpop.xlane.xlu0 %122
    %124 = vrot.lane.b32.xlu0 %v14, 56
    %v125 = vpop.permute.xlu0 %124
    %v127 = vmul.f32 %v107, %v125
    %v128 = vsel %vm31, %v127, 0.0
    %129 = vadd.xlane.f32.xlu0 %v128
    %v130 = vpop.xlane.xlu0 %129
    %v131 = vsel %vm31, %v107, 0.0
    %132 = vadd.xlane.f32.xlu0 %v131
    %v133 = vpop.xlane.xlu0 %132
    %v134 = vadd.f32 %v133, 1e-10
    %v135 = vrcp.pop %v134
    %136 = vrot.lane.b32.xlu0 %v14, 32
    %v137 = vpop.permute.xlu0 %136
    %v139 = vmul.f32 %v107, %v137
    %v140 = vsel %vm31, %v139, 0.0
    %141 = vadd.xlane.f32.xlu0 %v140
    %v142 = vpop.xlane.xlu0 %141
    %v143 = vmul.f32 %v142, %v135
    %vm144 = vcmask 7168
    %v145 = vsel %vm144, %v116, %v123
    %vm146 = vcmask 15360
    %v147 = vsel %vm146, %v145, %v130
    %vm148 = vcmask 23552
    %v149 = vsel %vm148, %v147, %v143
    %vm150 = vcmask 31744
    %v151 = vsel %vm150, %v149, %v133
    %vm152 = vcmask 39936
    %v153 = vsel %vm152, %v151, 0.0
    %vm154 = vcmask 64512
    %155 = vst.msk [vmem:[%s2] sm:$0xff] %vm154, %v153
    // Predicated region
    $region10: #{run.5} parent=1 // pred_check
      _
    $region11: #{run.5} parent=1 // pred_check_branch
      %157 = sbr.rel (0) target = $region13
    $region12: #{run.5} parent=1 // pred_region
      _
    $region13: #{run.5} parent=1 // pred_fallthru
      _
    // Predicated region
    $region14: #{run.5} parent=1 // pred_check
      _
    $region15: #{run.5} parent=1 // pred_check_branch
      %159 = sbr.rel (0) target = $region17
    $region16: #{run.5} parent=1 // pred_region
      %s161 = ssub.s32 128, 128
      %162 = vsyncadd [#allocation3], %s161
      %s164 = sshll.u32 [#allocation2], 4
      %s165 = int_to_ptr.vmem [resolvable:$true] %s164
      %167 = dma.vmem_to_hbm [thread:$0]  %s165, 128, %s3, [#allocation3]
    $region17: #{run.5} parent=1 // pred_fallthru
      _
    // Predicated region
    $region18: #{run.5} parent=1 // pred_check
      _
    $region19: #{run.5} parent=1 // pred_check_branch
      %169 = sbr.rel (0) target = $region21
    $region20: #{run.5} parent=1 // pred_region
      _
    $region21: #{run.5} parent=1 // pred_fallthru
      _
    // Predicated region
    $region22: #{run.5} parent=1 // pred_check
      _
    $region23: #{run.5} parent=1 // pred_check_branch
      %171 = sbr.rel (0) target = $region25
    $region24: #{run.5} parent=1 // pred_region
      %172 = dma.done [#allocation3], 128
    $region25: #{run.5} parent=1 // pred_fallthru
      _
    %173 = vsyncpa [#allocation3], 1

// kernel: run.4
$region0: #{run.4}
  #allocation0 [shape = 'u32[]', space=smem, size = 0x4, offset = 0x4, fixed_abs, tag = 'smem constant byte address 0x4 - core index']
  #allocation1 [shape = 'u32[144,128]{1,0:T(1,128)}', space=vmem, size = 0x12000, scoped, tag = 'internal scratch']
  %s0 = inlined_call_operand.vmem [shape: bf16[256,69], index: 0, kind: input, shape index: {}]
  %s1 = inlined_call_operand.vmem [shape: bf16[69,256], index: 1, kind: input, shape index: {}]
  %s2 = inlined_call_operand.vmem [shape: f32[1,64], index: 2, kind: input, shape index: {}]
  %s3 = inlined_call_operand.vmem [shape: bf16[256,256], index: 3, kind: input, shape index: {}]
  %s4 = inlined_call_operand.vmem [shape: f32[1,64], index: 4, kind: input, shape index: {}]
  %s5 = inlined_call_operand.vmem [shape: bf16[256,256], index: 5, kind: input, shape index: {}]
  %s6 = inlined_call_operand.vmem [shape: f32[1,64], index: 6, kind: input, shape index: {}]
  %s7 = inlined_call_operand.vmem [shape: bf16[256,256], index: 7, kind: input, shape index: {}]
  %s8 = inlined_call_operand.vmem [shape: f32[1,64], index: 8, kind: input, shape index: {}]
  %s9 = inlined_call_operand.vmem [shape: bf16[256,68], index: 9, kind: input, shape index: {}]
  %s10 = inlined_call_operand.vmem [shape: f32[1,68], index: 10, kind: input, shape index: {}]
  %s11 = inlined_call_operand.vmem [shape: bf16[91,64], index: 11, kind: input, shape index: {}]
  %s12 = inlined_call_operand.vmem [shape: f32[1,64], index: 12, kind: input, shape index: {}]
  %s13 = inlined_call_operand.vmem [shape: bf16[64,64], index: 13, kind: input, shape index: {}]
  %s14 = inlined_call_operand.vmem [shape: f32[1,64], index: 14, kind: input, shape index: {}]
  %s15 = inlined_call_operand.vmem [shape: bf16[64,3], index: 15, kind: input, shape index: {}]
  %s16 = inlined_call_operand.vmem [shape: f32[1,3], index: 16, kind: input, shape index: {}]
  %s17 = inlined_call_operand.vmem [shape: f32[256,8], index: 17, kind: output, shape index: {}]
  %s18 = sld [smem:[#allocation0]]
  $region101: #{run.4} parent=0
    _
  %s20 = ssub.s32 1, %s18
  %s21 = scalar_select 0, %s20, %s18
  loop: start=0, step=1, limit=4
  $region2: #{run.4} parent=0 // loop_pre_header
    _
  $region3: #{run.4} parent=0 // loop_header
    %s23 = sphi 0, %s27
    %p24 = scmp.ge.s32.totalorder %s23, 4
    %s33 = sphi 0, %s35
    %s36 = sphi 0, %s33
    %s37 = sphi 0, %s36
    %s53 = sphi 0, %s37
    %s57 = sphi 0, %s57
    %s59 = sphi 0, %s57
    %s60 = sphi 0, %s59
    %s74 = sphi 0, %s60
    %s78 = sphi 0, %s78
    %s80 = sphi 0, %s78
    %s81 = sphi 0, %s80
    %s95 = sphi 0, %s81
    %s99 = sphi 0, %s99
    %s101 = sphi 0, %s99
    %s102 = sphi 0, %s101
    %s116 = sphi 0, %s102
    %s120 = sphi 0, %s120
    %s122 = sphi 0, %s120
    %s123 = sphi 0, %s122
    %s137 = sphi 0, %s123
    %s141 = sphi 0, %s141
    %s143 = sphi 0, %s141
    %s144 = sphi 0, %s143
    %s158 = sphi 0, %s144
    %s162 = sphi 0, %s162
    %s164 = sphi 0, %s162
    %s165 = sphi 0, %s164
    %s179 = sphi 0, %s165
    %s183 = sphi 0, %s183
    %s185 = sphi 0, %s183
    %s186 = sphi 0, %s185
    %s200 = sphi 0, %s186
    %s204 = sphi 0, %s204
    %s206 = sphi 0, %s204
    %s207 = sphi 0, %s206
    %s221 = sphi 0, %s207
    %s225 = sphi 0, %s225
    %s227 = sphi 0, %s225
    %s228 = sphi 0, %s227
    %s242 = sphi 0, %s228
    %s246 = sphi 0, %s246
    %s248 = sphi 0, %s246
    %s249 = sphi 0, %s248
    %s263 = sphi 0, %s249
    %s267 = sphi 0, %s267
    %s269 = sphi 0, %s267
    %s270 = sphi 0, %s269
    %s284 = sphi 0, %s270
    %s288 = sphi 0, %s288
    %s290 = sphi 0, %s288
    %s291 = sphi 0, %s290
    %s305 = sphi 0, %s291
    %s309 = sphi 0, %s309
    %s311 = sphi 0, %s309
    %s312 = sphi 0, %s311
    %s326 = sphi 0, %s312
    %s330 = sphi 0, %s330
    %s332 = sphi 0, %s330
    %s333 = sphi 0, %s332
    %s347 = sphi 0, %s333
    %s351 = sphi 0, %s351
    %s353 = sphi 0, %s351
    %s354 = sphi 0, %s353
    %s368 = sphi 0, %s354
    %s372 = sphi 0, %s372
    %s374 = sphi 0, %s372
    %s375 = sphi 0, %s374
    %s389 = sphi 0, %s375
    %s395 = sphi 0, %s397
    %s398 = sphi 0, %s395
    %s399 = sphi 0, %s398
    %s415 = sphi 0, %s399
  $region4: #{run.4} parent=0 // loop_header_branch
    %26 = sbr.rel (%p24) target = $region8
  $region5: #{run.4} parent=0 // loop_body
    %s28 = ssub.s32 %s23, 1
    %s29 = ssub.s32 %s23, 2
    %s30 = sadd.s32 %s23, 1
    %s31 = ssub.s32 %s23, %s30
    %p32 = scmp.eq.s32.totalorder %s31, 0
    %s34 = sadd.s32 %s33, 1
    %s35 = scalar_select %p32, %s33, %s34
    %p38 = pneg %p32
    %p39 = scmp.eq.s32.totalorder %s23, 1
    %p40 = por %p38, %p39
    %p41 = scmp.ne.s32.totalorder %s33, %s36
    %p42 = scmp.eq.s32.totalorder %s23, 0
    %p43 = por %p41, %p42
    %p44 = scmp.ne.s32.totalorder %s33, %s36
    %p45 = scmp.eq.s32.totalorder %s28, 1
    %p46 = por %p44, %p45
    %p47 = scmp.ne.s32.totalorder %s36, %s37
    %p48 = scmp.eq.s32.totalorder %s28, 0
    %p49 = por %p47, %p48
    %p50 = scmp.ne.s32.totalorder %s36, %s37
    %p51 = scmp.eq.s32.totalorder %s29, 1
    %p52 = por %p50, %p51
    %p54 = scmp.ne.s32.totalorder %s37, %s53
    %p55 = scmp.eq.s32.totalorder %s29, 0
    %p56 = por %p54, %p55
    %s58 = sadd.s32 %s57, 1
    %p61 = scmp.eq.s32.totalorder %s23, 1
    %p62 = scmp.ne.s32.totalorder %s57, %s59
    %p63 = scmp.eq.s32.totalorder %s23, 0
    %p64 = por %p62, %p63
    %p65 = scmp.ne.s32.totalorder %s57, %s59
    %p66 = scmp.eq.s32.totalorder %s28, 1
    %p67 = por %p65, %p66
    %p68 = scmp.ne.s32.totalorder %s59, %s60
    %p69 = scmp.eq.s32.totalorder %s28, 0
    %p70 = por %p68, %p69
    %p71 = scmp.ne.s32.totalorder %s59, %s60
    %p72 = scmp.eq.s32.totalorder %s29, 1
    %p73 = por %p71, %p72
    %p75 = scmp.ne.s32.totalorder %s60, %s74
    %p76 = scmp.eq.s32.totalorder %s29, 0
    %p77 = por %p75, %p76
    %s79 = sadd.s32 %s78, 1
    %p82 = scmp.eq.s32.totalorder %s23, 1
    %p83 = scmp.ne.s32.totalorder %s78, %s80
    %p84 = scmp.eq.s32.totalorder %s23, 0
    %p85 = por %p83, %p84
    %p86 = scmp.ne.s32.totalorder %s78, %s80
    %p87 = scmp.eq.s32.totalorder %s28, 1
    %p88 = por %p86, %p87
    %p89 = scmp.ne.s32.totalorder %s80, %s81
    %p90 = scmp.eq.s32.totalorder %s28, 0
    %p91 = por %p89, %p90
    %p92 = scmp.ne.s32.totalorder %s80, %s81
    %p93 = scmp.eq.s32.totalorder %s29, 1
    %p94 = por %p92, %p93
    %p96 = scmp.ne.s32.totalorder %s81, %s95
    %p97 = scmp.eq.s32.totalorder %s29, 0
    %p98 = por %p96, %p97
    %s100 = sadd.s32 %s99, 1
    %p103 = scmp.eq.s32.totalorder %s23, 1
    %p104 = scmp.ne.s32.totalorder %s99, %s101
    %p105 = scmp.eq.s32.totalorder %s23, 0
    %p106 = por %p104, %p105
    %p107 = scmp.ne.s32.totalorder %s99, %s101
    %p108 = scmp.eq.s32.totalorder %s28, 1
    %p109 = por %p107, %p108
    %p110 = scmp.ne.s32.totalorder %s101, %s102
    %p111 = scmp.eq.s32.totalorder %s28, 0
    %p112 = por %p110, %p111
    %p113 = scmp.ne.s32.totalorder %s101, %s102
    %p114 = scmp.eq.s32.totalorder %s29, 1
    %p115 = por %p113, %p114
    %p117 = scmp.ne.s32.totalorder %s102, %s116
    %p118 = scmp.eq.s32.totalorder %s29, 0
    %p119 = por %p117, %p118
    %s121 = sadd.s32 %s120, 1
    %p124 = scmp.eq.s32.totalorder %s23, 1
    %p125 = scmp.ne.s32.totalorder %s120, %s122
    %p126 = scmp.eq.s32.totalorder %s23, 0
    %p127 = por %p125, %p126
    %p128 = scmp.ne.s32.totalorder %s120, %s122
    %p129 = scmp.eq.s32.totalorder %s28, 1
    %p130 = por %p128, %p129
    %p131 = scmp.ne.s32.totalorder %s122, %s123
    %p132 = scmp.eq.s32.totalorder %s28, 0
    %p133 = por %p131, %p132
    %p134 = scmp.ne.s32.totalorder %s122, %s123
    %p135 = scmp.eq.s32.totalorder %s29, 1
    %p136 = por %p134, %p135
    %p138 = scmp.ne.s32.totalorder %s123, %s137
    %p139 = scmp.eq.s32.totalorder %s29, 0
    %p140 = por %p138, %p139
    %s142 = sadd.s32 %s141, 1
    %p145 = scmp.eq.s32.totalorder %s23, 1
    %p146 = scmp.ne.s32.totalorder %s141, %s143
    %p147 = scmp.eq.s32.totalorder %s23, 0
    %p148 = por %p146, %p147
    %p149 = scmp.ne.s32.totalorder %s141, %s143
    %p150 = scmp.eq.s32.totalorder %s28, 1
    %p151 = por %p149, %p150
    %p152 = scmp.ne.s32.totalorder %s143, %s144
    %p153 = scmp.eq.s32.totalorder %s28, 0
    %p154 = por %p152, %p153
    %p155 = scmp.ne.s32.totalorder %s143, %s144
    %p156 = scmp.eq.s32.totalorder %s29, 1
    %p157 = por %p155, %p156
    %p159 = scmp.ne.s32.totalorder %s144, %s158
    %p160 = scmp.eq.s32.totalorder %s29, 0
    %p161 = por %p159, %p160
    %s163 = sadd.s32 %s162, 1
    %p166 = scmp.eq.s32.totalorder %s23, 1
    %p167 = scmp.ne.s32.totalorder %s162, %s164
    %p168 = scmp.eq.s32.totalorder %s23, 0
    %p169 = por %p167, %p168
    %p170 = scmp.ne.s32.totalorder %s162, %s164
    %p171 = scmp.eq.s32.totalorder %s28, 1
    %p172 = por %p170, %p171
    %p173 = scmp.ne.s32.totalorder %s164, %s165
    %p174 = scmp.eq.s32.totalorder %s28, 0
    %p175 = por %p173, %p174
    %p176 = scmp.ne.s32.totalorder %s164, %s165
    %p177 = scmp.eq.s32.totalorder %s29, 1
    %p178 = por %p176, %p177
    %p180 = scmp.ne.s32.totalorder %s165, %s179
    %p181 = scmp.eq.s32.totalorder %s29, 0
    %p182 = por %p180, %p181
    %s184 = sadd.s32 %s183, 1
    %p187 = scmp.eq.s32.totalorder %s23, 1
    %p188 = scmp.ne.s32.totalorder %s183, %s185
    %p189 = scmp.eq.s32.totalorder %s23, 0
    %p190 = por %p188, %p189
    %p191 = scmp.ne.s32.totalorder %s183, %s185
    %p192 = scmp.eq.s32.totalorder %s28, 1
    %p193 = por %p191, %p192
    %p194 = scmp.ne.s32.totalorder %s185, %s186
    %p195 = scmp.eq.s32.totalorder %s28, 0
    %p196 = por %p194, %p195
    %p197 = scmp.ne.s32.totalorder %s185, %s186
    %p198 = scmp.eq.s32.totalorder %s29, 1
    %p199 = por %p197, %p198
    %p201 = scmp.ne.s32.totalorder %s186, %s200
    %p202 = scmp.eq.s32.totalorder %s29, 0
    %p203 = por %p201, %p202
    %s205 = sadd.s32 %s204, 1
    %p208 = scmp.eq.s32.totalorder %s23, 1
    %p209 = scmp.ne.s32.totalorder %s204, %s206
    %p210 = scmp.eq.s32.totalorder %s23, 0
    %p211 = por %p209, %p210
    %p212 = scmp.ne.s32.totalorder %s204, %s206
    %p213 = scmp.eq.s32.totalorder %s28, 1
    %p214 = por %p212, %p213
    %p215 = scmp.ne.s32.totalorder %s206, %s207
    %p216 = scmp.eq.s32.totalorder %s28, 0
    %p217 = por %p215, %p216
    %p218 = scmp.ne.s32.totalorder %s206, %s207
    %p219 = scmp.eq.s32.totalorder %s29, 1
    %p220 = por %p218, %p219
    %p222 = scmp.ne.s32.totalorder %s207, %s221
    %p223 = scmp.eq.s32.totalorder %s29, 0
    %p224 = por %p222, %p223
    %s226 = sadd.s32 %s225, 1
    %p229 = scmp.eq.s32.totalorder %s23, 1
    %p230 = scmp.ne.s32.totalorder %s225, %s227
    %p231 = scmp.eq.s32.totalorder %s23, 0
    %p232 = por %p230, %p231
    %p233 = scmp.ne.s32.totalorder %s225, %s227
    %p234 = scmp.eq.s32.totalorder %s28, 1
    %p235 = por %p233, %p234
    %p236 = scmp.ne.s32.totalorder %s227, %s228
    %p237 = scmp.eq.s32.totalorder %s28, 0
    %p238 = por %p236, %p237
    %p239 = scmp.ne.s32.totalorder %s227, %s228
    %p240 = scmp.eq.s32.totalorder %s29, 1
    %p241 = por %p239, %p240
    %p243 = scmp.ne.s32.totalorder %s228, %s242
    %p244 = scmp.eq.s32.totalorder %s29, 0
    %p245 = por %p243, %p244
    %s247 = sadd.s32 %s246, 1
    %p250 = scmp.eq.s32.totalorder %s23, 1
    %p251 = scmp.ne.s32.totalorder %s246, %s248
    %p252 = scmp.eq.s32.totalorder %s23, 0
    %p253 = por %p251, %p252
    %p254 = scmp.ne.s32.totalorder %s246, %s248
    %p255 = scmp.eq.s32.totalorder %s28, 1
    %p256 = por %p254, %p255
    %p257 = scmp.ne.s32.totalorder %s248, %s249
    %p258 = scmp.eq.s32.totalorder %s28, 0
    %p259 = por %p257, %p258
    %p260 = scmp.ne.s32.totalorder %s248, %s249
    %p261 = scmp.eq.s32.totalorder %s29, 1
    %p262 = por %p260, %p261
    %p264 = scmp.ne.s32.totalorder %s249, %s263
    %p265 = scmp.eq.s32.totalorder %s29, 0
    %p266 = por %p264, %p265
    %s268 = sadd.s32 %s267, 1
    %p271 = scmp.eq.s32.totalorder %s23, 1
    %p272 = scmp.ne.s32.totalorder %s267, %s269
    %p273 = scmp.eq.s32.totalorder %s23, 0
    %p274 = por %p272, %p273
    %p275 = scmp.ne.s32.totalorder %s267, %s269
    %p276 = scmp.eq.s32.totalorder %s28, 1
    %p277 = por %p275, %p276
    %p278 = scmp.ne.s32.totalorder %s269, %s270
    %p279 = scmp.eq.s32.totalorder %s28, 0
    %p280 = por %p278, %p279
    %p281 = scmp.ne.s32.totalorder %s269, %s270
    %p282 = scmp.eq.s32.totalorder %s29, 1
    %p283 = por %p281, %p282
    %p285 = scmp.ne.s32.totalorder %s270, %s284
    %p286 = scmp.eq.s32.totalorder %s29, 0
    %p287 = por %p285, %p286
    %s289 = sadd.s32 %s288, 1
    %p292 = scmp.eq.s32.totalorder %s23, 1
    %p293 = scmp.ne.s32.totalorder %s288, %s290
    %p294 = scmp.eq.s32.totalorder %s23, 0
    %p295 = por %p293, %p294
    %p296 = scmp.ne.s32.totalorder %s288, %s290
    %p297 = scmp.eq.s32.totalorder %s28, 1
    %p298 = por %p296, %p297
    %p299 = scmp.ne.s32.totalorder %s290, %s291
    %p300 = scmp.eq.s32.totalorder %s28, 0
    %p301 = por %p299, %p300
    %p302 = scmp.ne.s32.totalorder %s290, %s291
    %p303 = scmp.eq.s32.totalorder %s29, 1
    %p304 = por %p302, %p303
    %p306 = scmp.ne.s32.totalorder %s291, %s305
    %p307 = scmp.eq.s32.totalorder %s29, 0
    %p308 = por %p306, %p307
    %s310 = sadd.s32 %s309, 1
    %p313 = scmp.eq.s32.totalorder %s23, 1
    %p314 = scmp.ne.s32.totalorder %s309, %s311
    %p315 = scmp.eq.s32.totalorder %s23, 0
    %p316 = por %p314, %p315
    %p317 = scmp.ne.s32.totalorder %s309, %s311
    %p318 = scmp.eq.s32.totalorder %s28, 1
    %p319 = por %p317, %p318
    %p320 = scmp.ne.s32.totalorder %s311, %s312
    %p321 = scmp.eq.s32.totalorder %s28, 0
    %p322 = por %p320, %p321
    %p323 = scmp.ne.s32.totalorder %s311, %s312
    %p324 = scmp.eq.s32.totalorder %s29, 1
    %p325 = por %p323, %p324
    %p327 = scmp.ne.s32.totalorder %s312, %s326
    %p328 = scmp.eq.s32.totalorder %s29, 0
    %p329 = por %p327, %p328
    %s331 = sadd.s32 %s330, 1
    %p334 = scmp.eq.s32.totalorder %s23, 1
    %p335 = scmp.ne.s32.totalorder %s330, %s332
    %p336 = scmp.eq.s32.totalorder %s23, 0
    %p337 = por %p335, %p336
    %p338 = scmp.ne.s32.totalorder %s330, %s332
    %p339 = scmp.eq.s32.totalorder %s28, 1
    %p340 = por %p338, %p339
    %p341 = scmp.ne.s32.totalorder %s332, %s333
    %p342 = scmp.eq.s32.totalorder %s28, 0
    %p343 = por %p341, %p342
    %p344 = scmp.ne.s32.totalorder %s332, %s333
    %p345 = scmp.eq.s32.totalorder %s29, 1
    %p346 = por %p344, %p345
    %p348 = scmp.ne.s32.totalorder %s333, %s347
    %p349 = scmp.eq.s32.totalorder %s29, 0
    %p350 = por %p348, %p349
    %s352 = sadd.s32 %s351, 1
    %p355 = scmp.eq.s32.totalorder %s23, 1
    %p356 = scmp.ne.s32.totalorder %s351, %s353
    %p357 = scmp.eq.s32.totalorder %s23, 0
    %p358 = por %p356, %p357
    %p359 = scmp.ne.s32.totalorder %s351, %s353
    %p360 = scmp.eq.s32.totalorder %s28, 1
    %p361 = por %p359, %p360
    %p362 = scmp.ne.s32.totalorder %s353, %s354
    %p363 = scmp.eq.s32.totalorder %s28, 0
    %p364 = por %p362, %p363
    %p365 = scmp.ne.s32.totalorder %s353, %s354
    %p366 = scmp.eq.s32.totalorder %s29, 1
    %p367 = por %p365, %p366
    %p369 = scmp.ne.s32.totalorder %s354, %s368
    %p370 = scmp.eq.s32.totalorder %s29, 0
    %p371 = por %p369, %p370
    %s373 = sadd.s32 %s372, 1
    %p376 = scmp.eq.s32.totalorder %s23, 1
    %p377 = scmp.ne.s32.totalorder %s372, %s374
    %p378 = scmp.eq.s32.totalorder %s23, 0
    %p379 = por %p377, %p378
    %p380 = scmp.ne.s32.totalorder %s372, %s374
    %p381 = scmp.eq.s32.totalorder %s28, 1
    %p382 = por %p380, %p381
    %p383 = scmp.ne.s32.totalorder %s374, %s375
    %p384 = scmp.eq.s32.totalorder %s28, 0
    %p385 = por %p383, %p384
    %p386 = scmp.ne.s32.totalorder %s374, %s375
    %p387 = scmp.eq.s32.totalorder %s29, 1
    %p388 = por %p386, %p387
    %p390 = scmp.ne.s32.totalorder %s375, %s389
    %p391 = scmp.eq.s32.totalorder %s29, 0
    %p392 = por %p390, %p391
    %s393 = ssub.s32 %s23, %s30
    %p394 = scmp.eq.s32.totalorder %s393, 0
    %s396 = sadd.s32 %s395, 1
    %s397 = scalar_select %p394, %s395, %s396
    %p400 = pneg %p394
    %p401 = scmp.eq.s32.totalorder %s23, 1
    %p402 = por %p400, %p401
    %p403 = scmp.ne.s32.totalorder %s395, %s398
    %p404 = scmp.eq.s32.totalorder %s23, 0
    %p405 = por %p403, %p404
    %p406 = scmp.ne.s32.totalorder %s395, %s398
    %p407 = scmp.eq.s32.totalorder %s28, 1
    %p408 = por %p406, %p407
    %p409 = scmp.ne.s32.totalorder %s398, %s399
    %p410 = scmp.eq.s32.totalorder %s28, 0
    %p411 = por %p409, %p410
    %p412 = scmp.ne.s32.totalorder %s398, %s399
    %p413 = scmp.eq.s32.totalorder %s29, 1
    %p414 = por %p412, %p413
    %p416 = scmp.ne.s32.totalorder %s399, %s415
    %p417 = scmp.eq.s32.totalorder %s29, 0
    %p418 = por %p416, %p417
    %p419 = scmp.le.s32.totalorder 1, %s23
    %p420 = scmp.lt.s32.totalorder %s23, 3
    %p421 = pnand %p419, %p420
    %p422 = pneg %p421
    // Predicated region
    $region9: #{run.4} parent=5 // pred_check
      _
    $region10: #{run.4} parent=5 // pred_check_branch
      %424 = sbr.rel (%p421) target = $region12
    $region11: #{run.4} parent=5 // pred_region
      %s425 = ssub.s32 %s23, 1
      // Predicated region
      $region13: #{run.4} parent=11 // pred_check
        %p426 = pneg %p70
      $region14: #{run.4} parent=11 // pred_check_branch
        %428 = sbr.rel (%p426) target = $region16
      $region15: #{run.4} parent=11 // pred_region
        _
      $region16: #{run.4} parent=11 // pred_fallthru
        _
      // Predicated region
      $region17: #{run.4} parent=11 // pred_check
        %p429 = pneg %p91
      $region18: #{run.4} parent=11 // pred_check_branch
        %431 = sbr.rel (%p429) target = $region20
      $region19: #{run.4} parent=11 // pred_region
        _
      $region20: #{run.4} parent=11 // pred_fallthru
        _
      // Predicated region
      $region21: #{run.4} parent=11 // pred_check
        %p432 = pneg %p112
      $region22: #{run.4} parent=11 // pred_check_branch
        %434 = sbr.rel (%p432) target = $region24
      $region23: #{run.4} parent=11 // pred_region
        _
      $region24: #{run.4} parent=11 // pred_fallthru
        _
      // Predicated region
      $region25: #{run.4} parent=11 // pred_check
        %p435 = pneg %p133
      $region26: #{run.4} parent=11 // pred_check_branch
        %437 = sbr.rel (%p435) target = $region28
      $region27: #{run.4} parent=11 // pred_region
        _
      $region28: #{run.4} parent=11 // pred_fallthru
        _
      // Predicated region
      $region29: #{run.4} parent=11 // pred_check
        %p438 = pneg %p154
      $region30: #{run.4} parent=11 // pred_check_branch
        %440 = sbr.rel (%p438) target = $region32
      $region31: #{run.4} parent=11 // pred_region
        _
      $region32: #{run.4} parent=11 // pred_fallthru
        _
      // Predicated region
      $region33: #{run.4} parent=11 // pred_check
        %p441 = pneg %p175
      $region34: #{run.4} parent=11 // pred_check_branch
        %443 = sbr.rel (%p441) target = $region36
      $region35: #{run.4} parent=11 // pred_region
        _
      $region36: #{run.4} parent=11 // pred_fallthru
        _
      // Predicated region
      $region37: #{run.4} parent=11 // pred_check
        %p444 = pneg %p196
      $region38: #{run.4} parent=11 // pred_check_branch
        %446 = sbr.rel (%p444) target = $region40
      $region39: #{run.4} parent=11 // pred_region
        _
      $region40: #{run.4} parent=11 // pred_fallthru
        _
      // Predicated region
      $region41: #{run.4} parent=11 // pred_check
        %p447 = pneg %p217
      $region42: #{run.4} parent=11 // pred_check_branch
        %449 = sbr.rel (%p447) target = $region44
      $region43: #{run.4} parent=11 // pred_region
        _
      $region44: #{run.4} parent=11 // pred_fallthru
        _
      // Predicated region
      $region45: #{run.4} parent=11 // pred_check
        %p450 = pneg %p238
      $region46: #{run.4} parent=11 // pred_check_branch
        %452 = sbr.rel (%p450) target = $region48
      $region47: #{run.4} parent=11 // pred_region
        _
      $region48: #{run.4} parent=11 // pred_fallthru
        _
      // Predicated region
      $region49: #{run.4} parent=11 // pred_check
        %p453 = pneg %p259
      $region50: #{run.4} parent=11 // pred_check_branch
        %455 = sbr.rel (%p453) target = $region52
      $region51: #{run.4} parent=11 // pred_region
        _
      $region52: #{run.4} parent=11 // pred_fallthru
        _
      // Predicated region
      $region53: #{run.4} parent=11 // pred_check
        %p456 = pneg %p280
      $region54: #{run.4} parent=11 // pred_check_branch
        %458 = sbr.rel (%p456) target = $region56
      $region55: #{run.4} parent=11 // pred_region
        _
      $region56: #{run.4} parent=11 // pred_fallthru
        _
      // Predicated region
      $region57: #{run.4} parent=11 // pred_check
        %p459 = pneg %p301
      $region58: #{run.4} parent=11 // pred_check_branch
        %461 = sbr.rel (%p459) target = $region60
      $region59: #{run.4} parent=11 // pred_region
        _
      $region60: #{run.4} parent=11 // pred_fallthru
        _
      // Predicated region
      $region61: #{run.4} parent=11 // pred_check
        %p462 = pneg %p322
      $region62: #{run.4} parent=11 // pred_check_branch
        %464 = sbr.rel (%p462) target = $region64
      $region63: #{run.4} parent=11 // pred_region
        _
      $region64: #{run.4} parent=11 // pred_fallthru
        _
      // Predicated region
      $region65: #{run.4} parent=11 // pred_check
        %p465 = pneg %p343
      $region66: #{run.4} parent=11 // pred_check_branch
        %467 = sbr.rel (%p465) target = $region68
      $region67: #{run.4} parent=11 // pred_region
        _
      $region68: #{run.4} parent=11 // pred_fallthru
        _
      // Predicated region
      $region69: #{run.4} parent=11 // pred_check
        %p468 = pneg %p364
      $region70: #{run.4} parent=11 // pred_check_branch
        %470 = sbr.rel (%p468) target = $region72
      $region71: #{run.4} parent=11 // pred_region
        _
      $region72: #{run.4} parent=11 // pred_fallthru
        _
      // Predicated region
      $region73: #{run.4} parent=11 // pred_check
        %p471 = pneg %p385
      $region74: #{run.4} parent=11 // pred_check_branch
        %473 = sbr.rel (%p471) target = $region76
      $region75: #{run.4} parent=11 // pred_region
        _
      $region76: #{run.4} parent=11 // pred_fallthru
        _
    $region12: #{run.4} parent=5 // pred_fallthru
      _
    %p474 = scmp.lt.s32.totalorder %s23, 2
    // Predicated region
    $region77: #{run.4} parent=5 // pred_check
      %p475 = pneg %p474
    $region78: #{run.4} parent=5 // pred_check_branch
      %477 = sbr.rel (%p475) target = $region80
    $region79: #{run.4} parent=5 // pred_region
      // Predicated region
      $region81: #{run.4} parent=79 // pred_check
        %p478 = pneg %p43
      $region82: #{run.4} parent=79 // pred_check_branch
        %480 = sbr.rel (%p478) target = $region84
      $region83: #{run.4} parent=79 // pred_region
        %s481 = smul.u32 16, %s23
        %p482 = scmp.lt.s32.totalorder %s481, 31
        %s483 = scalar_select %p482, %s481, 31
        %s484 = smul.addr %s483, 4
        %s485 = scalar_lea.vmem %s0, %s484
        %s486 = smul.u32 16, %s23
      $region84: #{run.4} parent=79 // pred_fallthru
        _
    $region80: #{run.4} parent=5 // pred_fallthru
      _
    %p487 = scmp.le.s32.totalorder 1, %s23
    %p488 = scmp.lt.s32.totalorder %s23, 3
    %p489 = pnand %p487, %p488
    %p490 = pneg %p489
    // Predicated region
    $region85: #{run.4} parent=5 // pred_check
      _
    $region86: #{run.4} parent=5 // pred_check_branch
      %492 = sbr.rel (%p489) target = $region88
    $region87: #{run.4} parent=5 // pred_region
      %s493 = ssub.s32 %s23, 1
      %s494 = smul.u32 16, %s28
      %p495 = scmp.lt.s32.totalorder %s494, 31
      %s496 = scalar_select %p495, %s494, 31
      %s497 = smul.addr %s496, 4
      %s498 = scalar_lea.vmem %s0, %s497
      %p499 = pneg %p49
      %p500 = pneg %p46
      %p501 = pneg %p70
      %p502 = pneg %p67
      %p503 = pneg %p91
      %p504 = pneg %p88
      %p505 = pneg %p112
      %p506 = pneg %p109
      %p507 = pneg %p133
      %p508 = pneg %p130
      %p509 = pneg %p154
      %p510 = pneg %p151
      %p511 = pneg %p175
      %p512 = pneg %p172
      %p513 = pneg %p196
      %p514 = pneg %p193
      %p515 = pneg %p217
      %p516 = pneg %p214
      %p517 = pneg %p238
      %p518 = pneg %p235
      %p519 = pneg %p259
      %p520 = pneg %p256
      %p521 = pneg %p280
      %p522 = pneg %p277
      %p523 = pneg %p301
      %p524 = pneg %p298
      %p525 = pneg %p322
      %p526 = pneg %p319
      %p527 = pneg %p343
      %p528 = pneg %p340
      %p529 = pneg %p364
      %p530 = pneg %p361
      %p531 = pneg %p385
      %p532 = pneg %p382
      %p533 = pneg %p411
      %p534 = pneg %p408
      %s535 = smul.u32 16, %s28
      %p536 = scmp.lt.s32.totalorder %s535, 31
      %s537 = scalar_select %p536, %s535, 31
      %s538 = smul.addr %s537, 8
      %s539 = scalar_lea.vmem %s17, %s538
      %s540 = smul.u32 16, %s28
      %p541 = scmp.lt.s32.totalorder %s540, 31
      %s542 = scalar_select %p541, %s540, 31
      %s543 = smul.addr %s542, 4
      %s544 = scalar_lea.vmem %s0, %s543
      %s545 = smul.u32 16, %s28
      %s546 = smul.u32 16, %s28
      %p547 = scmp.lt.s32.totalorder %s546, 31
      %s548 = scalar_select %p547, %s546, 31
      %s549 = smul.addr %s548, 8
      %s550 = scalar_lea.vmem %s17, %s549
      %s551 = smul.u32 16, %s28
      %v553 = vld [vmem:[%s544] sm:$0xf]
      %v554 = vld [vmem:[%s544 + $0x4] sm:$0xf]
      %v555 = vld [vmem:[%s544 + $0x8] sm:$0xf]
      %v556 = vld [vmem:[%s544 + $0xc] sm:$0xf]
      %v557 = vld [vmem:[%s544 + $0x10] sm:$0xf]
      %v558 = vld [vmem:[%s544 + $0x14] sm:$0xf]
      %v559 = vld [vmem:[%s544 + $0x18] sm:$0xf]
      %v560 = vld [vmem:[%s544 + $0x1c] sm:$0xf]
      %v561 = vld [vmem:[%s544 + $0x20] sm:$0xf]
      %v562 = vld [vmem:[%s544 + $0x24] sm:$0xf]
      %v563 = vld [vmem:[%s544 + $0x28] sm:$0xf]
      %v564 = vld [vmem:[%s544 + $0x2c] sm:$0xf]
      %v565 = vld [vmem:[%s544 + $0x30] sm:$0xf]
      %v566 = vld [vmem:[%s544 + $0x34] sm:$0xf]
      %v567 = vld [vmem:[%s544 + $0x38] sm:$0xf]
      %v568 = vld [vmem:[%s544 + $0x3c] sm:$0xf]
      %v569 = vld [vmem:[%s1] sm:$0xff]
      %v570 = vld [vmem:[%s1 + $0x8] sm:$0xff]
      %v571 = vld [vmem:[%s1 + $0x10] sm:$0xff]
      %v572 = vld [vmem:[%s1 + $0x18] sm:$0xff]
      %v573 = vld [vmem:[%s1 + $0x20] sm:$0xff]
      %v574 = vld [vmem:[%s1 + $0x28] sm:$0xff]
      %v575 = vld [vmem:[%s1 + $0x30] sm:$0xff]
      %v576 = vld [vmem:[%s1 + $0x38] sm:$0xff]
      %v577 = vld [vmem:[%s1 + $0x40] sm:$0x77]
      %v594 = vunpack.c.l.b16 %v553
      %v595 = vunpack.c.l.b16 %v554
      %v596 = vunpack.c.l.b16 %v555
      %v597 = vunpack.c.l.b16 %v556
      %v598 = vunpack.c.l.b16 %v557
      %v599 = vunpack.c.l.b16 %v558
      %v600 = vunpack.c.l.b16 %v559
      %v601 = vunpack.c.l.b16 %v560
      %v602 = vunpack.c.l.b16 %v561
      %v603 = vunpack.c.l.b16 %v562
      %v604 = vunpack.c.l.b16 %v563
      %v605 = vunpack.c.l.b16 %v564
      %v606 = vunpack.c.l.b16 %v565
      %v607 = vunpack.c.l.b16 %v566
      %v608 = vunpack.c.l.b16 %v567
      %v609 = vunpack.c.l.b16 %v568
      %v610 = vpack.c.b16 %v595, %v594
      %v611 = vpack.c.b16 %v597, %v596
      %v612 = vpack.c.b16 %v599, %v598
      %v613 = vpack.c.b16 %v601, %v600
      %v614 = vpack.c.b16 %v603, %v602
      %v615 = vpack.c.b16 %v605, %v604
      %v616 = vpack.c.b16 %v607, %v606
      %v617 = vpack.c.b16 %v609, %v608
      %v627 = vunpack.c.l.b16 %v569
      %v628 = vunpack.c.h.b16 %v569
      %v629 = vunpack.c.l.b16 %v570
      %v630 = vunpack.c.h.b16 %v570
      %v631 = vunpack.c.l.b16 %v571
      %v632 = vunpack.c.h.b16 %v571
      %v633 = vunpack.c.l.b16 %v572
      %v634 = vunpack.c.h.b16 %v572
      %v635 = vunpack.c.l.b16 %v573
      %v636 = vunpack.c.h.b16 %v573
      %v637 = vunpack.c.l.b16 %v574
      %v638 = vunpack.c.h.b16 %v574
      %v639 = vunpack.c.l.b16 %v575
      %v640 = vunpack.c.h.b16 %v575
      %v641 = vunpack.c.l.b16 %v576
      %v642 = vunpack.c.h.b16 %v576
      %v643 = vunpack.c.l.b16 %v577
      %v644 = vunpack.c.h.b16 %v577
      %v645 = vpack.c.b16 %v629, %v627
      %v646 = vpack.c.b16 %v630, %v628
      %v647 = vpack.c.b16 %v633, %v631
      %v648 = vpack.c.b16 %v634, %v632
      %v649 = vpack.c.b16 %v637, %v635
      %v650 = vpack.c.b16 %v638, %v636
      %v651 = vpack.c.b16 %v641, %v639
      %v652 = vpack.c.b16 %v642, %v640
      %v653 = vpack.c.b16 %v643, %v643
      %v654 = vpack.c.b16 %v644, %v644
      %vm663 = vcmask 564224
      %v665 = vsel %vm663, %v610, 0
      %v668 = vsel %vm663, %v611, 0
      %v671 = vsel %vm663, %v612, 0
      %v674 = vsel %vm663, %v613, 0
      %v677 = vsel %vm663, %v614, 0
      %v680 = vsel %vm663, %v615, 0
      %v683 = vsel %vm663, %v616, 0
      %v686 = vsel %vm663, %v617, 0
      %vm688 = vcmask 1041408
      %vm689 = vcmask 1042432
      %v690 = vsel %vm688, 4294967295, 65535
      %v691 = vsel %vm689, %v690, 0
      %v693 = vand.u32 %v653, %v691
      %v696 = vand.u32 %v654, %v691
      %698 = vmatprep.subr.bf16.mxu0 0
      %699 = vmatpush1.bf16.msra.mxu0 0
      %700 = vmatprep.subr.bf16.mxu0 0
      %701 = vmatpush1.bf16.msra.mxu0 0
      %702 = vmatprep.subr.bf16.mxu0 0
      %703 = vmatpush1.bf16.msra.mxu0 0
      %704 = vmatprep.subr.bf16.mxu0 %v696
      %705 = vmatpush1.bf16.msra.mxu0 %v693
      %706 = vmatprep.subr.bf16.mxu0 %v652
      %707 = vmatpush1.bf16.msra.mxu0 %v651
      %708 = vmatprep.subr.bf16.mxu0 %v650
      %709 = vmatpush1.bf16.msra.mxu0 %v649
      %710 = vmatprep.subr.bf16.mxu0 %v648
      %711 = vmatpush1.bf16.msra.mxu0 %v647
      %712 = vmatprep.subr.bf16.mxu0 %v646
      %713 = vmatpush1.bf16.msra.mxu0 %v645
      %714 = vmatprep.subr.bf16.mxu0 0
      %715 = vmatpush2.bf16.msra.mxu0 0
      %716 = vmatprep.subr.bf16.mxu0 0
      %717 = vmatpush2.bf16.msra.mxu0 0
      %718 = vmatprep.subr.bf16.mxu0 0
      %719 = vmatpush2.bf16.msra.mxu0 0
      %720 = vmatprep.subr.bf16.mxu0 0
      %721 = vmatpush2.bf16.msra.mxu0 0
      %722 = vmatprep.subr.bf16.mxu0 0
      %723 = vmatpush2.bf16.msra.mxu0 0
      %724 = vmatprep.subr.bf16.mxu0 0
      %725 = vmatpush2.bf16.msra.mxu0 0
      %726 = vmatprep.subr.bf16.mxu0 0
      %727 = vmatpush2.bf16.msra.mxu0 0
      %728 = vmatprep.subr.bf16.mxu0 0
      %729 = vmatpush2.bf16.msra.mxu0 0
      %730 = vmatprep.mubr.bf16.mxu0 0
      %731 = vmatmul.mubr.bf16.gmra.mxu0 %v665
      %v732 = vpop.f32.mrf.mxu0
      %v733 = vadd.f32 0.0, %v732
      %v734 = vpop.f32.mrf.mxu0
      %v735 = vadd.f32 0.0, %v734
      %v736 = vpop.f32.mrf.mxu0
      %v737 = vadd.f32 0.0, %v736
      %v738 = vpop.f32.mrf.mxu0
      %v739 = vadd.f32 0.0, %v738
      %740 = vmatprep.mubr.bf16.mxu0 0
      %741 = vmatmul.mubr.bf16.gmra.mxu0 %v668
      %v742 = vpop.f32.mrf.mxu0
      %v743 = vadd.f32 0.0, %v742
      %v744 = vpop.f32.mrf.mxu0
      %v745 = vadd.f32 0.0, %v744
      %v746 = vpop.f32.mrf.mxu0
      %v747 = vadd.f32 0.0, %v746
      %v748 = vpop.f32.mrf.mxu0
      %v749 = vadd.f32 0.0, %v748
      %750 = vmatprep.mubr.bf16.mxu0 0
      %751 = vmatmul.mubr.bf16.gmra.mxu0 %v671
      %v752 = vpop.f32.mrf.mxu0
      %v753 = vadd.f32 0.0, %v752
      %v754 = vpop.f32.mrf.mxu0
      %v755 = vadd.f32 0.0, %v754
      %v756 = vpop.f32.mrf.mxu0
      %v757 = vadd.f32 0.0, %v756
      %v758 = vpop.f32.mrf.mxu0
      %v759 = vadd.f32 0.0, %v758
      %760 = vmatprep.mubr.bf16.mxu0 0
      %761 = vmatmul.mubr.bf16.gmra.mxu0 %v674
      %v762 = vpop.f32.mrf.mxu0
      %v763 = vadd.f32 0.0, %v762
      %v764 = vpop.f32.mrf.mxu0
      %v765 = vadd.f32 0.0, %v764
      %v766 = vpop.f32.mrf.mxu0
      %v767 = vadd.f32 0.0, %v766
      %v768 = vpop.f32.mrf.mxu0
      %v769 = vadd.f32 0.0, %v768
      %770 = vmatprep.mubr.bf16.mxu0 0
      %771 = vmatmul.mubr.bf16.gmra.mxu0 %v677
      %v772 = vpop.f32.mrf.mxu0
      %v773 = vadd.f32 0.0, %v772
      %v774 = vpop.f32.mrf.mxu0
      %v775 = vadd.f32 0.0, %v774
      %v776 = vpop.f32.mrf.mxu0
      %v777 = vadd.f32 0.0, %v776
      %v778 = vpop.f32.mrf.mxu0
      %v779 = vadd.f32 0.0, %v778
      %780 = vmatprep.mubr.bf16.mxu0 0
      %781 = vmatmul.mubr.bf16.gmra.mxu0 %v680
      %v782 = vpop.f32.mrf.mxu0
      %v783 = vadd.f32 0.0, %v782
      %v784 = vpop.f32.mrf.mxu0
      %v785 = vadd.f32 0.0, %v784
      %v786 = vpop.f32.mrf.mxu0
      %v787 = vadd.f32 0.0, %v786
      %v788 = vpop.f32.mrf.mxu0
      %v789 = vadd.f32 0.0, %v788
      %790 = vmatprep.mubr.bf16.mxu0 0
      %791 = vmatmul.mubr.bf16.gmra.mxu0 %v683
      %v792 = vpop.f32.mrf.mxu0
      %v793 = vadd.f32 0.0, %v792
      %v794 = vpop.f32.mrf.mxu0
      %v795 = vadd.f32 0.0, %v794
      %v796 = vpop.f32.mrf.mxu0
      %v797 = vadd.f32 0.0, %v796
      %v798 = vpop.f32.mrf.mxu0
      %v799 = vadd.f32 0.0, %v798
      %800 = vmatprep.mubr.bf16.mxu0 0
      %801 = vmatmul.mubr.bf16.gmra.mxu0 %v686
      %v802 = vpop.f32.mrf.mxu0
      %v803 = vadd.f32 0.0, %v802
      %v804 = vpop.f32.mrf.mxu0
      %v805 = vadd.f32 0.0, %v804
      %v806 = vpop.f32.mrf.mxu0
      %v807 = vadd.f32 0.0, %v806
      %v808 = vpop.f32.mrf.mxu0
      %v809 = vadd.f32 0.0, %v808
      %810 = vdwg.mxu0
      %v811 = vld [vmem:[%s2] sm:$0x1]
      %v813 = vlaneseq
      %v814 = vshrl.u32 %v813, 7
      %v815 = vsub.s32 0, %v814
      %v816 = vrot.slane %v811, %v815
      %v818 = vadd.f32 %v733, %v816
      %v819 = vadd.f32 %v737, %v816
      %v820 = vadd.f32 %v743, %v816
      %v821 = vadd.f32 %v747, %v816
      %v822 = vadd.f32 %v753, %v816
      %v823 = vadd.f32 %v757, %v816
      %v824 = vadd.f32 %v763, %v816
      %v825 = vadd.f32 %v767, %v816
      %v826 = vadd.f32 %v773, %v816
      %v827 = vadd.f32 %v777, %v816
      %v828 = vadd.f32 %v783, %v816
      %v829 = vadd.f32 %v787, %v816
      %v830 = vadd.f32 %v793, %v816
      %v831 = vadd.f32 %v797, %v816
      %v832 = vadd.f32 %v803, %v816
      %v833 = vadd.f32 %v807, %v816
      %v834 = vmul.f32 %v818, 100.0
      %v835 = vmul.f32 %v819, 100.0
      %v836 = vmul.f32 %v820, 100.0
      %v837 = vmul.f32 %v821, 100.0
      %v838 = vmul.f32 %v822, 100.0
      %v839 = vmul.f32 %v823, 100.0
      %v840 = vmul.f32 %v824, 100.0
      %v841 = vmul.f32 %v825, 100.0
      %v842 = vmul.f32 %v826, 100.0
      %v843 = vmul.f32 %v827, 100.0
      %v844 = vmul.f32 %v828, 100.0
      %v845 = vmul.f32 %v829, 100.0
      %v846 = vmul.f32 %v830, 100.0
      %v847 = vmul.f32 %v831, 100.0
      %v848 = vmul.f32 %v832, 100.0
      %v849 = vmul.f32 %v833, 100.0
      %v850 = vand.u32 2147483647, %v834
      %v851 = vand.u32 2147483647, %v835
      %v852 = vand.u32 2147483647, %v836
      %v853 = vand.u32 2147483647, %v837
      %v854 = vand.u32 2147483647, %v838
      %v855 = vand.u32 2147483647, %v839
      %v856 = vand.u32 2147483647, %v840
      %v857 = vand.u32 2147483647, %v841
      %v858 = vand.u32 2147483647, %v842
      %v859 = vand.u32 2147483647, %v843
      %v860 = vand.u32 2147483647, %v844
      %v861 = vand.u32 2147483647, %v845
      %v862 = vand.u32 2147483647, %v846
      %v863 = vand.u32 2147483647, %v847
      %v864 = vand.u32 2147483647, %v848
      %v865 = vand.u32 2147483647, %v849
      %v866 = vsub.f32 0.0, %v850
      %v867 = vsub.f32 0.0, %v851
      %v868 = vsub.f32 0.0, %v852
      %v869 = vsub.f32 0.0, %v853
      %v870 = vsub.f32 0.0, %v854
      %v871 = vsub.f32 0.0, %v855
      %v872 = vsub.f32 0.0, %v856
      %v873 = vsub.f32 0.0, %v857
      %v874 = vsub.f32 0.0, %v858
      %v875 = vsub.f32 0.0, %v859
      %v876 = vsub.f32 0.0, %v860
      %v877 = vsub.f32 0.0, %v861
      %v878 = vsub.f32 0.0, %v862
      %v879 = vsub.f32 0.0, %v863
      %v880 = vsub.f32 0.0, %v864
      %v881 = vsub.f32 0.0, %v865
      %v882 = vmul.f32 %v866, 1.442695
      %v883 = vpow.pop %v882
      %v884 = vmul.f32 %v867, 1.442695
      %v885 = vpow.pop %v884
      %v886 = vmul.f32 %v868, 1.442695
      %v887 = vpow.pop %v886
      %v888 = vmul.f32 %v869, 1.442695
      %v889 = vpow.pop %v888
      %v890 = vmul.f32 %v870, 1.442695
      %v891 = vpow.pop %v890
      %v892 = vmul.f32 %v871, 1.442695
      %v893 = vpow.pop %v892
      %v894 = vmul.f32 %v872, 1.442695
      %v895 = vpow.pop %v894
      %v896 = vmul.f32 %v873, 1.442695
      %v897 = vpow.pop %v896
      %v898 = vmul.f32 %v874, 1.442695
      %v899 = vpow.pop %v898
      %v900 = vmul.f32 %v875, 1.442695
      %v901 = vpow.pop %v900
      %v902 = vmul.f32 %v876, 1.442695
      %v903 = vpow.pop %v902
      %v904 = vmul.f32 %v877, 1.442695
      %v905 = vpow.pop %v904
      %v906 = vmul.f32 %v878, 1.442695
      %v907 = vpow.pop %v906
      %v908 = vmul.f32 %v879, 1.442695
      %v909 = vpow.pop %v908
      %v910 = vmul.f32 %v880, 1.442695
      %v911 = vpow.pop %v910
      %v912 = vmul.f32 %v881, 1.442695
      %v913 = vpow.pop %v912
      %v914 = vmax.f32 %v834, 0.0
      %v915 = vmax.f32 %v835, 0.0
      %v916 = vmax.f32 %v836, 0.0
      %v917 = vmax.f32 %v837, 0.0
      %v918 = vmax.f32 %v838, 0.0
      %v919 = vmax.f32 %v839, 0.0
      %v920 = vmax.f32 %v840, 0.0
      %v921 = vmax.f32 %v841, 0.0
      %v922 = vmax.f32 %v842, 0.0
      %v923 = vmax.f32 %v843, 0.0
      %v924 = vmax.f32 %v844, 0.0
      %v925 = vmax.f32 %v845, 0.0
      %v926 = vmax.f32 %v846, 0.0
      %v927 = vmax.f32 %v847, 0.0
      %v928 = vmax.f32 %v848, 0.0
      %v929 = vmax.f32 %v849, 0.0
      %v930 = vadd.f32 %v883, 1.0
      %v931 = vadd.f32 %v885, 1.0
      %v932 = vadd.f32 %v887, 1.0
      %v933 = vadd.f32 %v889, 1.0
      %v934 = vadd.f32 %v891, 1.0
      %v935 = vadd.f32 %v893, 1.0
      %v936 = vadd.f32 %v895, 1.0
      %v937 = vadd.f32 %v897, 1.0
      %v938 = vadd.f32 %v899, 1.0
      %v939 = vadd.f32 %v901, 1.0
      %v940 = vadd.f32 %v903, 1.0
      %v941 = vadd.f32 %v905, 1.0
      %v942 = vadd.f32 %v907, 1.0
      %v943 = vadd.f32 %v909, 1.0
      %v944 = vadd.f32 %v911, 1.0
      %v945 = vadd.f32 %v913, 1.0
      %v946 = vlog2.pop %v930
      %v947 = vmul.f32 %v946, 0.6931472
      %v948 = vlog2.pop %v931
      %v949 = vmul.f32 %v948, 0.6931472
      %v950 = vlog2.pop %v932
      %v951 = vmul.f32 %v950, 0.6931472
      %v952 = vlog2.pop %v933
      %v953 = vmul.f32 %v952, 0.6931472
      %v954 = vlog2.pop %v934
      %v955 = vmul.f32 %v954, 0.6931472
      %v956 = vlog2.pop %v935
      %v957 = vmul.f32 %v956, 0.6931472
      %v958 = vlog2.pop %v936
      %v959 = vmul.f32 %v958, 0.6931472
      %v960 = vlog2.pop %v937
      %v961 = vmul.f32 %v960, 0.6931472
      %v962 = vlog2.pop %v938
      %v963 = vmul.f32 %v962, 0.6931472
      %v964 = vlog2.pop %v939
      %v965 = vmul.f32 %v964, 0.6931472
      %v966 = vlog2.pop %v940
      %v967 = vmul.f32 %v966, 0.6931472
      %v968 = vlog2.pop %v941
      %v969 = vmul.f32 %v968, 0.6931472
      %v970 = vlog2.pop %v942
      %v971 = vmul.f32 %v970, 0.6931472
      %v972 = vlog2.pop %v943
      %v973 = vmul.f32 %v972, 0.6931472
      %v974 = vlog2.pop %v944
      %v975 = vmul.f32 %v974, 0.6931472
      %v976 = vlog2.pop %v945
      %v977 = vmul.f32 %v976, 0.6931472
      %v978 = vadd.f32 %v914, %v947
      %v979 = vadd.f32 %v915, %v949
      %v980 = vadd.f32 %v916, %v951
      %v981 = vadd.f32 %v917, %v953
      %v982 = vadd.f32 %v918, %v955
      %v983 = vadd.f32 %v919, %v957
      %v984 = vadd.f32 %v920, %v959
      %v985 = vadd.f32 %v921, %v961
      %v986 = vadd.f32 %v922, %v963
      %v987 = vadd.f32 %v923, %v965
      %v988 = vadd.f32 %v924, %v967
      %v989 = vadd.f32 %v925, %v969
      %v990 = vadd.f32 %v926, %v971
      %v991 = vadd.f32 %v927, %v973
      %v992 = vadd.f32 %v928, %v975
      %v993 = vadd.f32 %v929, %v977
      %v994 = vmul.f32 %v978, 0.01
      %v995 = vmul.f32 %v979, 0.01
      %v996 = vmul.f32 %v980, 0.01
      %v997 = vmul.f32 %v981, 0.01
      %v998 = vmul.f32 %v982, 0.01
      %v999 = vmul.f32 %v983, 0.01
      %v1000 = vmul.f32 %v984, 0.01
      %v1001 = vmul.f32 %v985, 0.01
      %v1002 = vmul.f32 %v986, 0.01
      %v1003 = vmul.f32 %v987, 0.01
      %v1004 = vmul.f32 %v988, 0.01
      %v1005 = vmul.f32 %v989, 0.01
      %v1006 = vmul.f32 %v990, 0.01
      %v1007 = vmul.f32 %v991, 0.01
      %v1008 = vmul.f32 %v992, 0.01
      %v1009 = vmul.f32 %v993, 0.01
      %vm1010 = vcmp.ge.f32.partialorder %v834, 0.0
      %vm1011 = vcmp.ge.f32.partialorder %v835, 0.0
      %vm1012 = vcmp.ge.f32.partialorder %v836, 0.0
      %vm1013 = vcmp.ge.f32.partialorder %v837, 0.0
      %vm1014 = vcmp.ge.f32.partialorder %v838, 0.0
      %vm1015 = vcmp.ge.f32.partialorder %v839, 0.0
      %vm1016 = vcmp.ge.f32.partialorder %v840, 0.0
      %vm1017 = vcmp.ge.f32.partialorder %v841, 0.0
      %vm1018 = vcmp.ge.f32.partialorder %v842, 0.0
      %vm1019 = vcmp.ge.f32.partialorder %v843, 0.0
      %vm1020 = vcmp.ge.f32.partialorder %v844, 0.0
      %vm1021 = vcmp.ge.f32.partialorder %v845, 0.0
      %vm1022 = vcmp.ge.f32.partialorder %v846, 0.0
      %vm1023 = vcmp.ge.f32.partialorder %v847, 0.0
      %vm1024 = vcmp.ge.f32.partialorder %v848, 0.0
      %vm1025 = vcmp.ge.f32.partialorder %v849, 0.0
      %v1026 = vsel %vm1010, 1.0, %v883
      %v1027 = vsel %vm1011, 1.0, %v885
      %v1028 = vsel %vm1012, 1.0, %v887
      %v1029 = vsel %vm1013, 1.0, %v889
      %v1030 = vsel %vm1014, 1.0, %v891
      %v1031 = vsel %vm1015, 1.0, %v893
      %v1032 = vsel %vm1016, 1.0, %v895
      %v1033 = vsel %vm1017, 1.0, %v897
      %v1034 = vsel %vm1018, 1.0, %v899
      %v1035 = vsel %vm1019, 1.0, %v901
      %v1036 = vsel %vm1020, 1.0, %v903
      %v1037 = vsel %vm1021, 1.0, %v905
      %v1038 = vsel %vm1022, 1.0, %v907
      %v1039 = vsel %vm1023, 1.0, %v909
      %v1040 = vsel %vm1024, 1.0, %v911
      %v1041 = vsel %vm1025, 1.0, %v913
      %v1042 = vrcp.pop %v930
      %v1043 = vmul.f32 %v1026, %v1042
      %v1044 = vrcp.pop %v931
      %v1045 = vmul.f32 %v1027, %v1044
      %v1046 = vrcp.pop %v932
      %v1047 = vmul.f32 %v1028, %v1046
      %v1048 = vrcp.pop %v933
      %v1049 = vmul.f32 %v1029, %v1048
      %v1050 = vrcp.pop %v934
      %v1051 = vmul.f32 %v1030, %v1050
      %v1052 = vrcp.pop %v935
      %v1053 = vmul.f32 %v1031, %v1052
      %v1054 = vrcp.pop %v936
      %v1055 = vmul.f32 %v1032, %v1054
      %v1056 = vrcp.pop %v937
      %v1057 = vmul.f32 %v1033, %v1056
      %v1058 = vrcp.pop %v938
      %v1059 = vmul.f32 %v1034, %v1058
      %v1060 = vrcp.pop %v939
      %v1061 = vmul.f32 %v1035, %v1060
      %v1062 = vrcp.pop %v940
      %v1063 = vmul.f32 %v1036, %v1062
      %v1064 = vrcp.pop %v941
      %v1065 = vmul.f32 %v1037, %v1064
      %v1066 = vrcp.pop %v942
      %v1067 = vmul.f32 %v1038, %v1066
      %v1068 = vrcp.pop %v943
      %v1069 = vmul.f32 %v1039, %v1068
      %v1070 = vrcp.pop %v944
      %v1071 = vmul.f32 %v1040, %v1070
      %v1072 = vrcp.pop %v945
      %v1073 = vmul.f32 %v1041, %v1072
      %1090 = vrot.lane.b32.xlu0 %v1043, 64
      %v1091 = vpop.permute.xlu0 %1090
      %1092 = vrot.lane.b32.xlu0 %v1045, 64
      %v1093 = vpop.permute.xlu0 %1092
      %1094 = vrot.lane.b32.xlu0 %v1047, 64
      %v1095 = vpop.permute.xlu0 %1094
      %1096 = vrot.lane.b32.xlu0 %v1049, 64
      %v1097 = vpop.permute.xlu0 %1096
      %1098 = vrot.lane.b32.xlu0 %v1051, 64
      %v1099 = vpop.permute.xlu0 %1098
      %1100 = vrot.lane.b32.xlu0 %v1053, 64
      %v1101 = vpop.permute.xlu0 %1100
      %1102 = vrot.lane.b32.xlu0 %v1055, 64
      %v1103 = vpop.permute.xlu0 %1102
      %1104 = vrot.lane.b32.xlu0 %v1057, 64
      %v1105 = vpop.permute.xlu0 %1104
      %1106 = vrot.lane.b32.xlu0 %v1059, 64
      %v1107 = vpop.permute.xlu0 %1106
      %1108 = vrot.lane.b32.xlu0 %v1061, 64
      %v1109 = vpop.permute.xlu0 %1108
      %1110 = vrot.lane.b32.xlu0 %v1063, 64
      %v1111 = vpop.permute.xlu0 %1110
      %1112 = vrot.lane.b32.xlu0 %v1065, 64
      %v1113 = vpop.permute.xlu0 %1112
      %1114 = vrot.lane.b32.xlu0 %v1067, 64
      %v1115 = vpop.permute.xlu0 %1114
      %1116 = vrot.lane.b32.xlu0 %v1069, 64
      %v1117 = vpop.permute.xlu0 %1116
      %1118 = vrot.lane.b32.xlu0 %v1071, 64
      %v1119 = vpop.permute.xlu0 %1118
      %1120 = vrot.lane.b32.xlu0 %v1073, 64
      %v1121 = vpop.permute.xlu0 %1120
      %v1138 = vmul.f32 %v733, %v1091
      %v1139 = vmul.f32 %v737, %v1093
      %v1140 = vmul.f32 %v743, %v1095
      %v1141 = vmul.f32 %v747, %v1097
      %v1142 = vmul.f32 %v753, %v1099
      %v1143 = vmul.f32 %v757, %v1101
      %v1144 = vmul.f32 %v763, %v1103
      %v1145 = vmul.f32 %v767, %v1105
      %v1146 = vmul.f32 %v773, %v1107
      %v1147 = vmul.f32 %v777, %v1109
      %v1148 = vmul.f32 %v783, %v1111
      %v1149 = vmul.f32 %v787, %v1113
      %v1150 = vmul.f32 %v793, %v1115
      %v1151 = vmul.f32 %v797, %v1117
      %v1152 = vmul.f32 %v803, %v1119
      %v1153 = vmul.f32 %v807, %v1121
      %v1154 = vmul.f32 %v735, %v1043
      %v1155 = vmul.f32 %v739, %v1045
      %v1156 = vmul.f32 %v745, %v1047
      %v1157 = vmul.f32 %v749, %v1049
      %v1158 = vmul.f32 %v755, %v1051
      %v1159 = vmul.f32 %v759, %v1053
      %v1160 = vmul.f32 %v765, %v1055
      %v1161 = vmul.f32 %v769, %v1057
      %v1162 = vmul.f32 %v775, %v1059
      %v1163 = vmul.f32 %v779, %v1061
      %v1164 = vmul.f32 %v785, %v1063
      %v1165 = vmul.f32 %v789, %v1065
      %v1166 = vmul.f32 %v795, %v1067
      %v1167 = vmul.f32 %v799, %v1069
      %v1168 = vmul.f32 %v805, %v1071
      %v1169 = vmul.f32 %v809, %v1073
      %v1170 = vmul.f32 %v735, %v1091
      %v1171 = vmul.f32 %v739, %v1093
      %v1172 = vmul.f32 %v745, %v1095
      %v1173 = vmul.f32 %v749, %v1097
      %v1174 = vmul.f32 %v755, %v1099
      %v1175 = vmul.f32 %v759, %v1101
      %v1176 = vmul.f32 %v765, %v1103
      %v1177 = vmul.f32 %v769, %v1105
      %v1178 = vmul.f32 %v775, %v1107
      %v1179 = vmul.f32 %v779, %v1109
      %v1180 = vmul.f32 %v785, %v1111
      %v1181 = vmul.f32 %v789, %v1113
      %v1182 = vmul.f32 %v795, %v1115
      %v1183 = vmul.f32 %v799, %v1117
      %v1184 = vmul.f32 %v805, %v1119
      %v1185 = vmul.f32 %v809, %v1121
      %vm1186 = vcmask 523264
      %v1187 = vsel %vm1186, %v994, %v1138
      %v1188 = vsel %vm1186, %v995, %v1139
      %v1189 = vsel %vm1186, %v996, %v1140
      %v1190 = vsel %vm1186, %v997, %v1141
      %v1191 = vsel %vm1186, %v998, %v1142
      %v1192 = vsel %vm1186, %v999, %v1143
      %v1193 = vsel %vm1186, %v1000, %v1144
      %v1194 = vsel %vm1186, %v1001, %v1145
      %v1195 = vsel %vm1186, %v1002, %v1146
      %v1196 = vsel %vm1186, %v1003, %v1147
      %v1197 = vsel %vm1186, %v1004, %v1148
      %v1198 = vsel %vm1186, %v1005, %v1149
      %v1199 = vsel %vm1186, %v1006, %v1150
      %v1200 = vsel %vm1186, %v1007, %v1151
      %v1201 = vsel %vm1186, %v1008, %v1152
      %v1202 = vsel %vm1186, %v1009, %v1153
      %v1203 = vsel %vm1186, %v1154, %v1170
      %v1204 = vsel %vm1186, %v1155, %v1171
      %v1205 = vsel %vm1186, %v1156, %v1172
      %v1206 = vsel %vm1186, %v1157, %v1173
      %v1207 = vsel %vm1186, %v1158, %v1174
      %v1208 = vsel %vm1186, %v1159, %v1175
      %v1209 = vsel %vm1186, %v1160, %v1176
      %v1210 = vsel %vm1186, %v1161, %v1177
      %v1211 = vsel %vm1186, %v1162, %v1178
      %v1212 = vsel %vm1186, %v1163, %v1179
      %v1213 = vsel %vm1186, %v1164, %v1180
      %v1214 = vsel %vm1186, %v1165, %v1181
      %v1215 = vsel %vm1186, %v1166, %v1182
      %v1216 = vsel %vm1186, %v1167, %v1183
      %v1217 = vsel %vm1186, %v1168, %v1184
      %v1218 = vsel %vm1186, %v1169, %v1185
      %v1219 = vpack.c.bf16 %v1188, %v1187
      %v1220 = vpack.c.bf16 %v1204, %v1203
      %v1221 = vpack.c.bf16 %v1190, %v1189
      %v1222 = vpack.c.bf16 %v1206, %v1205
      %v1223 = vpack.c.bf16 %v1192, %v1191
      %v1224 = vpack.c.bf16 %v1208, %v1207
      %v1225 = vpack.c.bf16 %v1194, %v1193
      %v1226 = vpack.c.bf16 %v1210, %v1209
      %v1227 = vpack.c.bf16 %v1196, %v1195
      %v1228 = vpack.c.bf16 %v1212, %v1211
      %v1229 = vpack.c.bf16 %v1198, %v1197
      %v1230 = vpack.c.bf16 %v1214, %v1213
      %v1231 = vpack.c.bf16 %v1200, %v1199
      %v1232 = vpack.c.bf16 %v1216, %v1215
      %v1233 = vpack.c.bf16 %v1202, %v1201
      %v1234 = vpack.c.bf16 %v1218, %v1217
      %v1235 = vld [vmem:[%s3] sm:$0xff]
      %v1236 = vld [vmem:[%s3 + $0x8] sm:$0xff]
      %v1237 = vld [vmem:[%s3 + $0x10] sm:$0xff]
      %v1238 = vld [vmem:[%s3 + $0x18] sm:$0xff]
      %v1239 = vld [vmem:[%s3 + $0x20] sm:$0xff]
      %v1240 = vld [vmem:[%s3 + $0x28] sm:$0xff]
      %v1241 = vld [vmem:[%s3 + $0x30] sm:$0xff]
      %v1242 = vld [vmem:[%s3 + $0x38] sm:$0xff]
      %v1243 = vld [vmem:[%s3 + $0x40] sm:$0xff]
      %v1244 = vld [vmem:[%s3 + $0x48] sm:$0xff]
      %v1245 = vld [vmem:[%s3 + $0x50] sm:$0xff]
      %v1246 = vld [vmem:[%s3 + $0x58] sm:$0xff]
      %v1247 = vld [vmem:[%s3 + $0x60] sm:$0xff]
      %v1248 = vld [vmem:[%s3 + $0x68] sm:$0xff]
      %v1249 = vld [vmem:[%s3 + $0x70] sm:$0xff]
      %v1250 = vld [vmem:[%s3 + $0x78] sm:$0xff]
      %v1251 = vld [vmem:[%s3 + $0x80] sm:$0xff]
      %v1252 = vld [vmem:[%s3 + $0x88] sm:$0xff]
      %v1253 = vld [vmem:[%s3 + $0x90] sm:$0xff]
      %v1254 = vld [vmem:[%s3 + $0x98] sm:$0xff]
      %v1255 = vld [vmem:[%s3 + $0xa0] sm:$0xff]
      %v1256 = vld [vmem:[%s3 + $0xa8] sm:$0xff]
      %v1257 = vld [vmem:[%s3 + $0xb0] sm:$0xff]
      %v1258 = vld [vmem:[%s3 + $0xb8] sm:$0xff]
      %v1259 = vld [vmem:[%s3 + $0xc0] sm:$0xff]
      %v1260 = vld [vmem:[%s3 + $0xc8] sm:$0xff]
      %v1261 = vld [vmem:[%s3 + $0xd0] sm:$0xff]
      %v1262 = vld [vmem:[%s3 + $0xd8] sm:$0xff]
      %v1263 = vld [vmem:[%s3 + $0xe0] sm:$0xff]
      %v1264 = vld [vmem:[%s3 + $0xe8] sm:$0xff]
      %v1265 = vld [vmem:[%s3 + $0xf0] sm:$0xff]
      %v1266 = vld [vmem:[%s3 + $0xf8] sm:$0xff]
      %v1299 = vunpack.c.l.b16 %v1235
      %v1300 = vunpack.c.h.b16 %v1235
      %v1301 = vunpack.c.l.b16 %v1236
      %v1302 = vunpack.c.h.b16 %v1236
      %v1303 = vunpack.c.l.b16 %v1237
      %v1304 = vunpack.c.h.b16 %v1237
      %v1305 = vunpack.c.l.b16 %v1238
      %v1306 = vunpack.c.h.b16 %v1238
      %v1307 = vunpack.c.l.b16 %v1239
      %v1308 = vunpack.c.h.b16 %v1239
      %v1309 = vunpack.c.l.b16 %v1240
      %v1310 = vunpack.c.h.b16 %v1240
      %v1311 = vunpack.c.l.b16 %v1241
      %v1312 = vunpack.c.h.b16 %v1241
      %v1313 = vunpack.c.l.b16 %v1242
      %v1314 = vunpack.c.h.b16 %v1242
      %v1315 = vunpack.c.l.b16 %v1243
      %v1316 = vunpack.c.h.b16 %v1243
      %v1317 = vunpack.c.l.b16 %v1244
      %v1318 = vunpack.c.h.b16 %v1244
      %v1319 = vunpack.c.l.b16 %v1245
      %v1320 = vunpack.c.h.b16 %v1245
      %v1321 = vunpack.c.l.b16 %v1246
      %v1322 = vunpack.c.h.b16 %v1246
      %v1323 = vunpack.c.l.b16 %v1247
      %v1324 = vunpack.c.h.b16 %v1247
      %v1325 = vunpack.c.l.b16 %v1248
      %v1326 = vunpack.c.h.b16 %v1248
      %v1327 = vunpack.c.l.b16 %v1249
      %v1328 = vunpack.c.h.b16 %v1249
      %v1329 = vunpack.c.l.b16 %v1250
      %v1330 = vunpack.c.h.b16 %v1250
      %v1331 = vunpack.c.l.b16 %v1251
      %v1332 = vunpack.c.h.b16 %v1251
      %v1333 = vunpack.c.l.b16 %v1252
      %v1334 = vunpack.c.h.b16 %v1252
      %v1335 = vunpack.c.l.b16 %v1253
      %v1336 = vunpack.c.h.b16 %v1253
      %v1337 = vunpack.c.l.b16 %v1254
      %v1338 = vunpack.c.h.b16 %v1254
      %v1339 = vunpack.c.l.b16 %v1255
      %v1340 = vunpack.c.h.b16 %v1255
      %v1341 = vunpack.c.l.b16 %v1256
      %v1342 = vunpack.c.h.b16 %v1256
      %v1343 = vunpack.c.l.b16 %v1257
      %v1344 = vunpack.c.h.b16 %v1257
      %v1345 = vunpack.c.l.b16 %v1258
      %v1346 = vunpack.c.h.b16 %v1258
      %v1347 = vunpack.c.l.b16 %v1259
      %v1348 = vunpack.c.h.b16 %v1259
      %v1349 = vunpack.c.l.b16 %v1260
      %v1350 = vunpack.c.h.b16 %v1260
      %v1351 = vunpack.c.l.b16 %v1261
      %v1352 = vunpack.c.h.b16 %v1261
      %v1353 = vunpack.c.l.b16 %v1262
      %v1354 = vunpack.c.h.b16 %v1262
      %v1355 = vunpack.c.l.b16 %v1263
      %v1356 = vunpack.c.h.b16 %v1263
      %v1357 = vunpack.c.l.b16 %v1264
      %v1358 = vunpack.c.h.b16 %v1264
      %v1359 = vunpack.c.l.b16 %v1265
      %v1360 = vunpack.c.h.b16 %v1265
      %v1361 = vunpack.c.l.b16 %v1266
      %v1362 = vunpack.c.h.b16 %v1266
      %v1363 = vpack.c.b16 %v1301, %v1299
      %v1364 = vpack.c.b16 %v1302, %v1300
      %v1365 = vpack.c.b16 %v1305, %v1303
      %v1366 = vpack.c.b16 %v1306, %v1304
      %v1367 = vpack.c.b16 %v1309, %v1307
      %v1368 = vpack.c.b16 %v1310, %v1308
      %v1369 = vpack.c.b16 %v1313, %v1311
      %v1370 = vpack.c.b16 %v1314, %v1312
      %v1371 = vpack.c.b16 %v1317, %v1315
      %v1372 = vpack.c.b16 %v1318, %v1316
      %v1373 = vpack.c.b16 %v1321, %v1319
      %v1374 = vpack.c.b16 %v1322, %v1320
      %v1375 = vpack.c.b16 %v1325, %v1323
      %v1376 = vpack.c.b16 %v1326, %v1324
      %v1377 = vpack.c.b16 %v1329, %v1327
      %v1378 = vpack.c.b16 %v1330, %v1328
      %v1379 = vpack.c.b16 %v1333, %v1331
      %v1380 = vpack.c.b16 %v1334, %v1332
      %v1381 = vpack.c.b16 %v1337, %v1335
      %v1382 = vpack.c.b16 %v1338, %v1336
      %v1383 = vpack.c.b16 %v1341, %v1339
      %v1384 = vpack.c.b16 %v1342, %v1340
      %v1385 = vpack.c.b16 %v1345, %v1343
      %v1386 = vpack.c.b16 %v1346, %v1344
      %v1387 = vpack.c.b16 %v1349, %v1347
      %v1388 = vpack.c.b16 %v1350, %v1348
      %v1389 = vpack.c.b16 %v1353, %v1351
      %v1390 = vpack.c.b16 %v1354, %v1352
      %v1391 = vpack.c.b16 %v1357, %v1355
      %v1392 = vpack.c.b16 %v1358, %v1356
      %v1393 = vpack.c.b16 %v1361, %v1359
      %v1394 = vpack.c.b16 %v1362, %v1360
      %1427 = vmatprep.subr.bf16.mxu0 %v1378
      %1428 = vmatpush1.bf16.msra.mxu0 %v1377
      %1429 = vmatprep.subr.bf16.mxu0 %v1376
      %1430 = vmatpush1.bf16.msra.mxu0 %v1375
      %1431 = vmatprep.subr.bf16.mxu0 %v1374
      %1432 = vmatpush1.bf16.msra.mxu0 %v1373
      %1433 = vmatprep.subr.bf16.mxu0 %v1372
      %1434 = vmatpush1.bf16.msra.mxu0 %v1371
      %1435 = vmatprep.subr.bf16.mxu0 %v1370
      %1436 = vmatpush1.bf16.msra.mxu0 %v1369
      %1437 = vmatprep.subr.bf16.mxu0 %v1368
      %1438 = vmatpush1.bf16.msra.mxu0 %v1367
      %1439 = vmatprep.subr.bf16.mxu0 %v1366
      %1440 = vmatpush1.bf16.msra.mxu0 %v1365
      %1441 = vmatprep.subr.bf16.mxu0 %v1364
      %1442 = vmatpush1.bf16.msra.mxu0 %v1363
      %1443 = vmatprep.subr.bf16.mxu0 %v1394
      %1444 = vmatpush2.bf16.msra.mxu0 %v1393
      %1445 = vmatprep.subr.bf16.mxu0 %v1392
      %1446 = vmatpush2.bf16.msra.mxu0 %v1391
      %1447 = vmatprep.subr.bf16.mxu0 %v1390
      %1448 = vmatpush2.bf16.msra.mxu0 %v1389
      %1449 = vmatprep.subr.bf16.mxu0 %v1388
      %1450 = vmatpush2.bf16.msra.mxu0 %v1387
      %1451 = vmatprep.subr.bf16.mxu0 %v1386
      %1452 = vmatpush2.bf16.msra.mxu0 %v1385
      %1453 = vmatprep.subr.bf16.mxu0 %v1384
      %1454 = vmatpush2.bf16.msra.mxu0 %v1383
      %1455 = vmatprep.subr.bf16.mxu0 %v1382
      %1456 = vmatpush2.bf16.msra.mxu0 %v1381
      %1457 = vmatprep.subr.bf16.mxu0 %v1380
      %1458 = vmatpush2.bf16.msra.mxu0 %v1379
      %1459 = vmatprep.mubr.bf16.mxu0 %v1220
      %1460 = vmatmul.mubr.bf16.gmra.mxu0 %v1219
      %v1461 = vpop.f32.mrf.mxu0
      %v1462 = vadd.f32 0.0, %v1461
      %v1463 = vpop.f32.mrf.mxu0
      %v1464 = vadd.f32 0.0, %v1463
      %v1465 = vpop.f32.mrf.mxu0
      %v1466 = vadd.f32 0.0, %v1465
      %v1467 = vpop.f32.mrf.mxu0
      %v1468 = vadd.f32 0.0, %v1467
      %1469 = vmatprep.mubr.bf16.mxu0 %v1222
      %1470 = vmatmul.mubr.bf16.gmra.mxu0 %v1221
      %v1471 = vpop.f32.mrf.mxu0
      %v1472 = vadd.f32 0.0, %v1471
      %v1473 = vpop.f32.mrf.mxu0
      %v1474 = vadd.f32 0.0, %v1473
      %v1475 = vpop.f32.mrf.mxu0
      %v1476 = vadd.f32 0.0, %v1475
      %v1477 = vpop.f32.mrf.mxu0
      %v1478 = vadd.f32 0.0, %v1477
      %1479 = vmatprep.mubr.bf16.mxu0 %v1224
      %1480 = vmatmul.mubr.bf16.gmra.mxu0 %v1223
      %v1481 = vpop.f32.mrf.mxu0
      %v1482 = vadd.f32 0.0, %v1481
      %v1483 = vpop.f32.mrf.mxu0
      %v1484 = vadd.f32 0.0, %v1483
      %v1485 = vpop.f32.mrf.mxu0
      %v1486 = vadd.f32 0.0, %v1485
      %v1487 = vpop.f32.mrf.mxu0
      %v1488 = vadd.f32 0.0, %v1487
      %1489 = vmatprep.mubr.bf16.mxu0 %v1226
      %1490 = vmatmul.mubr.bf16.gmra.mxu0 %v1225
      %v1491 = vpop.f32.mrf.mxu0
      %v1492 = vadd.f32 0.0, %v1491
      %v1493 = vpop.f32.mrf.mxu0
      %v1494 = vadd.f32 0.0, %v1493
      %v1495 = vpop.f32.mrf.mxu0
      %v1496 = vadd.f32 0.0, %v1495
      %v1497 = vpop.f32.mrf.mxu0
      %v1498 = vadd.f32 0.0, %v1497
      %1499 = vmatprep.mubr.bf16.mxu0 %v1228
      %1500 = vmatmul.mubr.bf16.gmra.mxu0 %v1227
      %v1501 = vpop.f32.mrf.mxu0
      %v1502 = vadd.f32 0.0, %v1501
      %v1503 = vpop.f32.mrf.mxu0
      %v1504 = vadd.f32 0.0, %v1503
      %v1505 = vpop.f32.mrf.mxu0
      %v1506 = vadd.f32 0.0, %v1505
      %v1507 = vpop.f32.mrf.mxu0
      %v1508 = vadd.f32 0.0, %v1507
      %1509 = vmatprep.mubr.bf16.mxu0 %v1230
      %1510 = vmatmul.mubr.bf16.gmra.mxu0 %v1229
      %v1511 = vpop.f32.mrf.mxu0
      %v1512 = vadd.f32 0.0, %v1511
      %v1513 = vpop.f32.mrf.mxu0
      %v1514 = vadd.f32 0.0, %v1513
      %v1515 = vpop.f32.mrf.mxu0
      %v1516 = vadd.f32 0.0, %v1515
      %v1517 = vpop.f32.mrf.mxu0
      %v1518 = vadd.f32 0.0, %v1517
      %1519 = vmatprep.mubr.bf16.mxu0 %v1232
      %1520 = vmatmul.mubr.bf16.gmra.mxu0 %v1231
      %v1521 = vpop.f32.mrf.mxu0
      %v1522 = vadd.f32 0.0, %v1521
      %v1523 = vpop.f32.mrf.mxu0
      %v1524 = vadd.f32 0.0, %v1523
      %v1525 = vpop.f32.mrf.mxu0
      %v1526 = vadd.f32 0.0, %v1525
      %v1527 = vpop.f32.mrf.mxu0
      %v1528 = vadd.f32 0.0, %v1527
      %1529 = vmatprep.mubr.bf16.mxu0 %v1234
      %1530 = vmatmul.mubr.bf16.gmra.mxu0 %v1233
      %v1531 = vpop.f32.mrf.mxu0
      %v1532 = vadd.f32 0.0, %v1531
      %v1533 = vpop.f32.mrf.mxu0
      %v1534 = vadd.f32 0.0, %v1533
      %v1535 = vpop.f32.mrf.mxu0
      %v1536 = vadd.f32 0.0, %v1535
      %v1537 = vpop.f32.mrf.mxu0
      %v1538 = vadd.f32 0.0, %v1537
      %1539 = vdwg.mxu0
      %v1540 = vld [vmem:[%s4] sm:$0x1]
      %v1542 = vlaneseq
      %v1543 = vshrl.u32 %v1542, 7
      %v1544 = vsub.s32 0, %v1543
      %v1545 = vrot.slane %v1540, %v1544
      %v1547 = vadd.f32 %v1462, %v1545
      %v1548 = vadd.f32 %v1466, %v1545
      %v1549 = vadd.f32 %v1472, %v1545
      %v1550 = vadd.f32 %v1476, %v1545
      %v1551 = vadd.f32 %v1482, %v1545
      %v1552 = vadd.f32 %v1486, %v1545
      %v1553 = vadd.f32 %v1492, %v1545
      %v1554 = vadd.f32 %v1496, %v1545
      %v1555 = vadd.f32 %v1502, %v1545
      %v1556 = vadd.f32 %v1506, %v1545
      %v1557 = vadd.f32 %v1512, %v1545
      %v1558 = vadd.f32 %v1516, %v1545
      %v1559 = vadd.f32 %v1522, %v1545
      %v1560 = vadd.f32 %v1526, %v1545
      %v1561 = vadd.f32 %v1532, %v1545
      %v1562 = vadd.f32 %v1536, %v1545
      %v1563 = vmul.f32 %v1547, 100.0
      %v1564 = vmul.f32 %v1548, 100.0
      %v1565 = vmul.f32 %v1549, 100.0
      %v1566 = vmul.f32 %v1550, 100.0
      %v1567 = vmul.f32 %v1551, 100.0
      %v1568 = vmul.f32 %v1552, 100.0
      %v1569 = vmul.f32 %v1553, 100.0
      %v1570 = vmul.f32 %v1554, 100.0
      %v1571 = vmul.f32 %v1555, 100.0
      %v1572 = vmul.f32 %v1556, 100.0
      %v1573 = vmul.f32 %v1557, 100.0
      %v1574 = vmul.f32 %v1558, 100.0
      %v1575 = vmul.f32 %v1559, 100.0
      %v1576 = vmul.f32 %v1560, 100.0
      %v1577 = vmul.f32 %v1561, 100.0
      %v1578 = vmul.f32 %v1562, 100.0
      %v1579 = vand.u32 2147483647, %v1563
      %v1580 = vand.u32 2147483647, %v1564
      %v1581 = vand.u32 2147483647, %v1565
      %v1582 = vand.u32 2147483647, %v1566
      %v1583 = vand.u32 2147483647, %v1567
      %v1584 = vand.u32 2147483647, %v1568
      %v1585 = vand.u32 2147483647, %v1569
      %v1586 = vand.u32 2147483647, %v1570
      %v1587 = vand.u32 2147483647, %v1571
      %v1588 = vand.u32 2147483647, %v1572
      %v1589 = vand.u32 2147483647, %v1573
      %v1590 = vand.u32 2147483647, %v1574
      %v1591 = vand.u32 2147483647, %v1575
      %v1592 = vand.u32 2147483647, %v1576
      %v1593 = vand.u32 2147483647, %v1577
      %v1594 = vand.u32 2147483647, %v1578
      %v1595 = vsub.f32 0.0, %v1579
      %v1596 = vsub.f32 0.0, %v1580
      %v1597 = vsub.f32 0.0, %v1581
      %v1598 = vsub.f32 0.0, %v1582
      %v1599 = vsub.f32 0.0, %v1583
      %v1600 = vsub.f32 0.0, %v1584
      %v1601 = vsub.f32 0.0, %v1585
      %v1602 = vsub.f32 0.0, %v1586
      %v1603 = vsub.f32 0.0, %v1587
      %v1604 = vsub.f32 0.0, %v1588
      %v1605 = vsub.f32 0.0, %v1589
      %v1606 = vsub.f32 0.0, %v1590
      %v1607 = vsub.f32 0.0, %v1591
      %v1608 = vsub.f32 0.0, %v1592
      %v1609 = vsub.f32 0.0, %v1593
      %v1610 = vsub.f32 0.0, %v1594
      %v1611 = vmul.f32 %v1595, 1.442695
      %v1612 = vpow.pop %v1611
      %v1613 = vmul.f32 %v1596, 1.442695
      %v1614 = vpow.pop %v1613
      %v1615 = vmul.f32 %v1597, 1.442695
      %v1616 = vpow.pop %v1615
      %v1617 = vmul.f32 %v1598, 1.442695
      %v1618 = vpow.pop %v1617
      %v1619 = vmul.f32 %v1599, 1.442695
      %v1620 = vpow.pop %v1619
      %v1621 = vmul.f32 %v1600, 1.442695
      %v1622 = vpow.pop %v1621
      %v1623 = vmul.f32 %v1601, 1.442695
      %v1624 = vpow.pop %v1623
      %v1625 = vmul.f32 %v1602, 1.442695
      %v1626 = vpow.pop %v1625
      %v1627 = vmul.f32 %v1603, 1.442695
      %v1628 = vpow.pop %v1627
      %v1629 = vmul.f32 %v1604, 1.442695
      %v1630 = vpow.pop %v1629
      %v1631 = vmul.f32 %v1605, 1.442695
      %v1632 = vpow.pop %v1631
      %v1633 = vmul.f32 %v1606, 1.442695
      %v1634 = vpow.pop %v1633
      %v1635 = vmul.f32 %v1607, 1.442695
      %v1636 = vpow.pop %v1635
      %v1637 = vmul.f32 %v1608, 1.442695
      %v1638 = vpow.pop %v1637
      %v1639 = vmul.f32 %v1609, 1.442695
      %v1640 = vpow.pop %v1639
      %v1641 = vmul.f32 %v1610, 1.442695
      %v1642 = vpow.pop %v1641
      %v1643 = vmax.f32 %v1563, 0.0
      %v1644 = vmax.f32 %v1564, 0.0
      %v1645 = vmax.f32 %v1565, 0.0
      %v1646 = vmax.f32 %v1566, 0.0
      %v1647 = vmax.f32 %v1567, 0.0
      %v1648 = vmax.f32 %v1568, 0.0
      %v1649 = vmax.f32 %v1569, 0.0
      %v1650 = vmax.f32 %v1570, 0.0
      %v1651 = vmax.f32 %v1571, 0.0
      %v1652 = vmax.f32 %v1572, 0.0
      %v1653 = vmax.f32 %v1573, 0.0
      %v1654 = vmax.f32 %v1574, 0.0
      %v1655 = vmax.f32 %v1575, 0.0
      %v1656 = vmax.f32 %v1576, 0.0
      %v1657 = vmax.f32 %v1577, 0.0
      %v1658 = vmax.f32 %v1578, 0.0
      %v1659 = vadd.f32 %v1612, 1.0
      %v1660 = vadd.f32 %v1614, 1.0
      %v1661 = vadd.f32 %v1616, 1.0
      %v1662 = vadd.f32 %v1618, 1.0
      %v1663 = vadd.f32 %v1620, 1.0
      %v1664 = vadd.f32 %v1622, 1.0
      %v1665 = vadd.f32 %v1624, 1.0
      %v1666 = vadd.f32 %v1626, 1.0
      %v1667 = vadd.f32 %v1628, 1.0
      %v1668 = vadd.f32 %v1630, 1.0
      %v1669 = vadd.f32 %v1632, 1.0
      %v1670 = vadd.f32 %v1634, 1.0
      %v1671 = vadd.f32 %v1636, 1.0
      %v1672 = vadd.f32 %v1638, 1.0
      %v1673 = vadd.f32 %v1640, 1.0
      %v1674 = vadd.f32 %v1642, 1.0
      %v1675 = vlog2.pop %v1659
      %v1676 = vmul.f32 %v1675, 0.6931472
      %v1677 = vlog2.pop %v1660
      %v1678 = vmul.f32 %v1677, 0.6931472
      %v1679 = vlog2.pop %v1661
      %v1680 = vmul.f32 %v1679, 0.6931472
      %v1681 = vlog2.pop %v1662
      %v1682 = vmul.f32 %v1681, 0.6931472
      %v1683 = vlog2.pop %v1663
      %v1684 = vmul.f32 %v1683, 0.6931472
      %v1685 = vlog2.pop %v1664
      %v1686 = vmul.f32 %v1685, 0.6931472
      %v1687 = vlog2.pop %v1665
      %v1688 = vmul.f32 %v1687, 0.6931472
      %v1689 = vlog2.pop %v1666
      %v1690 = vmul.f32 %v1689, 0.6931472
      %v1691 = vlog2.pop %v1667
      %v1692 = vmul.f32 %v1691, 0.6931472
      %v1693 = vlog2.pop %v1668
      %v1694 = vmul.f32 %v1693, 0.6931472
      %v1695 = vlog2.pop %v1669
      %v1696 = vmul.f32 %v1695, 0.6931472
      %v1697 = vlog2.pop %v1670
      %v1698 = vmul.f32 %v1697, 0.6931472
      %v1699 = vlog2.pop %v1671
      %v1700 = vmul.f32 %v1699, 0.6931472
      %v1701 = vlog2.pop %v1672
      %v1702 = vmul.f32 %v1701, 0.6931472
      %v1703 = vlog2.pop %v1673
      %v1704 = vmul.f32 %v1703, 0.6931472
      %v1705 = vlog2.pop %v1674
      %v1706 = vmul.f32 %v1705, 0.6931472
      %v1707 = vadd.f32 %v1643, %v1676
      %v1708 = vadd.f32 %v1644, %v1678
      %v1709 = vadd.f32 %v1645, %v1680
      %v1710 = vadd.f32 %v1646, %v1682
      %v1711 = vadd.f32 %v1647, %v1684
      %v1712 = vadd.f32 %v1648, %v1686
      %v1713 = vadd.f32 %v1649, %v1688
      %v1714 = vadd.f32 %v1650, %v1690
      %v1715 = vadd.f32 %v1651, %v1692
      %v1716 = vadd.f32 %v1652, %v1694
      %v1717 = vadd.f32 %v1653, %v1696
      %v1718 = vadd.f32 %v1654, %v1698
      %v1719 = vadd.f32 %v1655, %v1700
      %v1720 = vadd.f32 %v1656, %v1702
      %v1721 = vadd.f32 %v1657, %v1704
      %v1722 = vadd.f32 %v1658, %v1706
      %v1723 = vmul.f32 %v1707, 0.01
      %v1724 = vmul.f32 %v1708, 0.01
      %v1725 = vmul.f32 %v1709, 0.01
      %v1726 = vmul.f32 %v1710, 0.01
      %v1727 = vmul.f32 %v1711, 0.01
      %v1728 = vmul.f32 %v1712, 0.01
      %v1729 = vmul.f32 %v1713, 0.01
      %v1730 = vmul.f32 %v1714, 0.01
      %v1731 = vmul.f32 %v1715, 0.01
      %v1732 = vmul.f32 %v1716, 0.01
      %v1733 = vmul.f32 %v1717, 0.01
      %v1734 = vmul.f32 %v1718, 0.01
      %v1735 = vmul.f32 %v1719, 0.01
      %v1736 = vmul.f32 %v1720, 0.01
      %v1737 = vmul.f32 %v1721, 0.01
      %v1738 = vmul.f32 %v1722, 0.01
      %vm1739 = vcmp.ge.f32.partialorder %v1563, 0.0
      %vm1740 = vcmp.ge.f32.partialorder %v1564, 0.0
      %vm1741 = vcmp.ge.f32.partialorder %v1565, 0.0
      %vm1742 = vcmp.ge.f32.partialorder %v1566, 0.0
      %vm1743 = vcmp.ge.f32.partialorder %v1567, 0.0
      %vm1744 = vcmp.ge.f32.partialorder %v1568, 0.0
      %vm1745 = vcmp.ge.f32.partialorder %v1569, 0.0
      %vm1746 = vcmp.ge.f32.partialorder %v1570, 0.0
      %vm1747 = vcmp.ge.f32.partialorder %v1571, 0.0
      %vm1748 = vcmp.ge.f32.partialorder %v1572, 0.0
      %vm1749 = vcmp.ge.f32.partialorder %v1573, 0.0
      %vm1750 = vcmp.ge.f32.partialorder %v1574, 0.0
      %vm1751 = vcmp.ge.f32.partialorder %v1575, 0.0
      %vm1752 = vcmp.ge.f32.partialorder %v1576, 0.0
      %vm1753 = vcmp.ge.f32.partialorder %v1577, 0.0
      %vm1754 = vcmp.ge.f32.partialorder %v1578, 0.0
      %v1755 = vsel %vm1739, 1.0, %v1612
      %v1756 = vsel %vm1740, 1.0, %v1614
      %v1757 = vsel %vm1741, 1.0, %v1616
      %v1758 = vsel %vm1742, 1.0, %v1618
      %v1759 = vsel %vm1743, 1.0, %v1620
      %v1760 = vsel %vm1744, 1.0, %v1622
      %v1761 = vsel %vm1745, 1.0, %v1624
      %v1762 = vsel %vm1746, 1.0, %v1626
      %v1763 = vsel %vm1747, 1.0, %v1628
      %v1764 = vsel %vm1748, 1.0, %v1630
      %v1765 = vsel %vm1749, 1.0, %v1632
      %v1766 = vsel %vm1750, 1.0, %v1634
      %v1767 = vsel %vm1751, 1.0, %v1636
      %v1768 = vsel %vm1752, 1.0, %v1638
      %v1769 = vsel %vm1753, 1.0, %v1640
      %v1770 = vsel %vm1754, 1.0, %v1642
      %v1771 = vrcp.pop %v1659
      %v1772 = vmul.f32 %v1755, %v1771
      %v1773 = vrcp.pop %v1660
      %v1774 = vmul.f32 %v1756, %v1773
      %v1775 = vrcp.pop %v1661
      %v1776 = vmul.f32 %v1757, %v1775
      %v1777 = vrcp.pop %v1662
      %v1778 = vmul.f32 %v1758, %v1777
      %v1779 = vrcp.pop %v1663
      %v1780 = vmul.f32 %v1759, %v1779
      %v1781 = vrcp.pop %v1664
      %v1782 = vmul.f32 %v1760, %v1781
      %v1783 = vrcp.pop %v1665
      %v1784 = vmul.f32 %v1761, %v1783
      %v1785 = vrcp.pop %v1666
      %v1786 = vmul.f32 %v1762, %v1785
      %v1787 = vrcp.pop %v1667
      %v1788 = vmul.f32 %v1763, %v1787
      %v1789 = vrcp.pop %v1668
      %v1790 = vmul.f32 %v1764, %v1789
      %v1791 = vrcp.pop %v1669
      %v1792 = vmul.f32 %v1765, %v1791
      %v1793 = vrcp.pop %v1670
      %v1794 = vmul.f32 %v1766, %v1793
      %v1795 = vrcp.pop %v1671
      %v1796 = vmul.f32 %v1767, %v1795
      %v1797 = vrcp.pop %v1672
      %v1798 = vmul.f32 %v1768, %v1797
      %v1799 = vrcp.pop %v1673
      %v1800 = vmul.f32 %v1769, %v1799
      %v1801 = vrcp.pop %v1674
      %v1802 = vmul.f32 %v1770, %v1801
      %1819 = vrot.lane.b32.xlu0 %v1772, 64
      %v1820 = vpop.permute.xlu0 %1819
      %1821 = vrot.lane.b32.xlu0 %v1774, 64
      %v1822 = vpop.permute.xlu0 %1821
      %1823 = vrot.lane.b32.xlu0 %v1776, 64
      %v1824 = vpop.permute.xlu0 %1823
      %1825 = vrot.lane.b32.xlu0 %v1778, 64
      %v1826 = vpop.permute.xlu0 %1825
      %1827 = vrot.lane.b32.xlu0 %v1780, 64
      %v1828 = vpop.permute.xlu0 %1827
      %1829 = vrot.lane.b32.xlu0 %v1782, 64
      %v1830 = vpop.permute.xlu0 %1829
      %1831 = vrot.lane.b32.xlu0 %v1784, 64
      %v1832 = vpop.permute.xlu0 %1831
      %1833 = vrot.lane.b32.xlu0 %v1786, 64
      %v1834 = vpop.permute.xlu0 %1833
      %1835 = vrot.lane.b32.xlu0 %v1788, 64
      %v1836 = vpop.permute.xlu0 %1835
      %1837 = vrot.lane.b32.xlu0 %v1790, 64
      %v1838 = vpop.permute.xlu0 %1837
      %1839 = vrot.lane.b32.xlu0 %v1792, 64
      %v1840 = vpop.permute.xlu0 %1839
      %1841 = vrot.lane.b32.xlu0 %v1794, 64
      %v1842 = vpop.permute.xlu0 %1841
      %1843 = vrot.lane.b32.xlu0 %v1796, 64
      %v1844 = vpop.permute.xlu0 %1843
      %1845 = vrot.lane.b32.xlu0 %v1798, 64
      %v1846 = vpop.permute.xlu0 %1845
      %1847 = vrot.lane.b32.xlu0 %v1800, 64
      %v1848 = vpop.permute.xlu0 %1847
      %1849 = vrot.lane.b32.xlu0 %v1802, 64
      %v1850 = vpop.permute.xlu0 %1849
      %v1867 = vmul.f32 %v1462, %v1820
      %v1868 = vmul.f32 %v1466, %v1822
      %v1869 = vmul.f32 %v1472, %v1824
      %v1870 = vmul.f32 %v1476, %v1826
      %v1871 = vmul.f32 %v1482, %v1828
      %v1872 = vmul.f32 %v1486, %v1830
      %v1873 = vmul.f32 %v1492, %v1832
      %v1874 = vmul.f32 %v1496, %v1834
      %v1875 = vmul.f32 %v1502, %v1836
      %v1876 = vmul.f32 %v1506, %v1838
      %v1877 = vmul.f32 %v1512, %v1840
      %v1878 = vmul.f32 %v1516, %v1842
      %v1879 = vmul.f32 %v1522, %v1844
      %v1880 = vmul.f32 %v1526, %v1846
      %v1881 = vmul.f32 %v1532, %v1848
      %v1882 = vmul.f32 %v1536, %v1850
      %v1883 = vmul.f32 %v1464, %v1772
      %v1884 = vmul.f32 %v1468, %v1774
      %v1885 = vmul.f32 %v1474, %v1776
      %v1886 = vmul.f32 %v1478, %v1778
      %v1887 = vmul.f32 %v1484, %v1780
      %v1888 = vmul.f32 %v1488, %v1782
      %v1889 = vmul.f32 %v1494, %v1784
      %v1890 = vmul.f32 %v1498, %v1786
      %v1891 = vmul.f32 %v1504, %v1788
      %v1892 = vmul.f32 %v1508, %v1790
      %v1893 = vmul.f32 %v1514, %v1792
      %v1894 = vmul.f32 %v1518, %v1794
      %v1895 = vmul.f32 %v1524, %v1796
      %v1896 = vmul.f32 %v1528, %v1798
      %v1897 = vmul.f32 %v1534, %v1800
      %v1898 = vmul.f32 %v1538, %v1802
      %v1899 = vmul.f32 %v1464, %v1820
      %v1900 = vmul.f32 %v1468, %v1822
      %v1901 = vmul.f32 %v1474, %v1824
      %v1902 = vmul.f32 %v1478, %v1826
      %v1903 = vmul.f32 %v1484, %v1828
      %v1904 = vmul.f32 %v1488, %v1830
      %v1905 = vmul.f32 %v1494, %v1832
      %v1906 = vmul.f32 %v1498, %v1834
      %v1907 = vmul.f32 %v1504, %v1836
      %v1908 = vmul.f32 %v1508, %v1838
      %v1909 = vmul.f32 %v1514, %v1840
      %v1910 = vmul.f32 %v1518, %v1842
      %v1911 = vmul.f32 %v1524, %v1844
      %v1912 = vmul.f32 %v1528, %v1846
      %v1913 = vmul.f32 %v1534, %v1848
      %v1914 = vmul.f32 %v1538, %v1850
      %v1915 = vsel %vm1186, %v1723, %v1867
      %v1916 = vsel %vm1186, %v1724, %v1868
      %v1917 = vsel %vm1186, %v1725, %v1869
      %v1918 = vsel %vm1186, %v1726, %v1870
      %v1919 = vsel %vm1186, %v1727, %v1871
      %v1920 = vsel %vm1186, %v1728, %v1872
      %v1921 = vsel %vm1186, %v1729, %v1873
      %v1922 = vsel %vm1186, %v1730, %v1874
      %v1923 = vsel %vm1186, %v1731, %v1875
      %v1924 = vsel %vm1186, %v1732, %v1876
      %v1925 = vsel %vm1186, %v1733, %v1877
      %v1926 = vsel %vm1186, %v1734, %v1878
      %v1927 = vsel %vm1186, %v1735, %v1879
      %v1928 = vsel %vm1186, %v1736, %v1880
      %v1929 = vsel %vm1186, %v1737, %v1881
      %v1930 = vsel %vm1186, %v1738, %v1882
      %v1931 = vsel %vm1186, %v1883, %v1899
      %v1932 = vsel %vm1186, %v1884, %v1900
      %v1933 = vsel %vm1186, %v1885, %v1901
      %v1934 = vsel %vm1186, %v1886, %v1902
      %v1935 = vsel %vm1186, %v1887, %v1903
      %v1936 = vsel %vm1186, %v1888, %v1904
      %v1937 = vsel %vm1186, %v1889, %v1905
      %v1938 = vsel %vm1186, %v1890, %v1906
      %v1939 = vsel %vm1186, %v1891, %v1907
      %v1940 = vsel %vm1186, %v1892, %v1908
      %v1941 = vsel %vm1186, %v1893, %v1909
      %v1942 = vsel %vm1186, %v1894, %v1910
      %v1943 = vsel %vm1186, %v1895, %v1911
      %v1944 = vsel %vm1186, %v1896, %v1912
      %v1945 = vsel %vm1186, %v1897, %v1913
      %v1946 = vsel %vm1186, %v1898, %v1914
      %v1947 = vpack.c.bf16 %v1916, %v1915
      %v1948 = vpack.c.bf16 %v1932, %v1931
      %v1949 = vpack.c.bf16 %v1918, %v1917
      %v1950 = vpack.c.bf16 %v1934, %v1933
      %v1951 = vpack.c.bf16 %v1920, %v1919
      %v1952 = vpack.c.bf16 %v1936, %v1935
      %v1953 = vpack.c.bf16 %v1922, %v1921
      %v1954 = vpack.c.bf16 %v1938, %v1937
      %v1955 = vpack.c.bf16 %v1924, %v1923
      %v1956 = vpack.c.bf16 %v1940, %v1939
      %v1957 = vpack.c.bf16 %v1926, %v1925
      %v1958 = vpack.c.bf16 %v1942, %v1941
      %v1959 = vpack.c.bf16 %v1928, %v1927
      %v1960 = vpack.c.bf16 %v1944, %v1943
      %v1961 = vpack.c.bf16 %v1930, %v1929
      %v1962 = vpack.c.bf16 %v1946, %v1945
      %v1963 = vld [vmem:[%s5] sm:$0xff]
      %v1964 = vld [vmem:[%s5 + $0x8] sm:$0xff]
      %v1965 = vld [vmem:[%s5 + $0x10] sm:$0xff]
      %v1966 = vld [vmem:[%s5 + $0x18] sm:$0xff]
      %v1967 = vld [vmem:[%s5 + $0x20] sm:$0xff]
      %v1968 = vld [vmem:[%s5 + $0x28] sm:$0xff]
      %v1969 = vld [vmem:[%s5 + $0x30] sm:$0xff]
      %v1970 = vld [vmem:[%s5 + $0x38] sm:$0xff]
      %v1971 = vld [vmem:[%s5 + $0x40] sm:$0xff]
      %v1972 = vld [vmem:[%s5 + $0x48] sm:$0xff]
      %v1973 = vld [vmem:[%s5 + $0x50] sm:$0xff]
      %v1974 = vld [vmem:[%s5 + $0x58] sm:$0xff]
      %v1975 = vld [vmem:[%s5 + $0x60] sm:$0xff]
      %v1976 = vld [vmem:[%s5 + $0x68] sm:$0xff]
      %v1977 = vld [vmem:[%s5 + $0x70] sm:$0xff]
      %v1978 = vld [vmem:[%s5 + $0x78] sm:$0xff]
      %v1979 = vld [vmem:[%s5 + $0x80] sm:$0xff]
      %v1980 = vld [vmem:[%s5 + $0x88] sm:$0xff]
      %v1981 = vld [vmem:[%s5 + $0x90] sm:$0xff]
      %v1982 = vld [vmem:[%s5 + $0x98] sm:$0xff]
      %v1983 = vld [vmem:[%s5 + $0xa0] sm:$0xff]
      %v1984 = vld [vmem:[%s5 + $0xa8] sm:$0xff]
      %v1985 = vld [vmem:[%s5 + $0xb0] sm:$0xff]
      %v1986 = vld [vmem:[%s5 + $0xb8] sm:$0xff]
      %v1987 = vld [vmem:[%s5 + $0xc0] sm:$0xff]
      %v1988 = vld [vmem:[%s5 + $0xc8] sm:$0xff]
      %v1989 = vld [vmem:[%s5 + $0xd0] sm:$0xff]
      %v1990 = vld [vmem:[%s5 + $0xd8] sm:$0xff]
      %v1991 = vld [vmem:[%s5 + $0xe0] sm:$0xff]
      %v1992 = vld [vmem:[%s5 + $0xe8] sm:$0xff]
      %v1993 = vld [vmem:[%s5 + $0xf0] sm:$0xff]
      %v1994 = vld [vmem:[%s5 + $0xf8] sm:$0xff]
      %v2027 = vunpack.c.l.b16 %v1963
      %v2028 = vunpack.c.h.b16 %v1963
      %v2029 = vunpack.c.l.b16 %v1964
      %v2030 = vunpack.c.h.b16 %v1964
      %v2031 = vunpack.c.l.b16 %v1965
      %v2032 = vunpack.c.h.b16 %v1965
      %v2033 = vunpack.c.l.b16 %v1966
      %v2034 = vunpack.c.h.b16 %v1966
      %v2035 = vunpack.c.l.b16 %v1967
      %v2036 = vunpack.c.h.b16 %v1967
      %v2037 = vunpack.c.l.b16 %v1968
      %v2038 = vunpack.c.h.b16 %v1968
      %v2039 = vunpack.c.l.b16 %v1969
      %v2040 = vunpack.c.h.b16 %v1969
      %v2041 = vunpack.c.l.b16 %v1970
      %v2042 = vunpack.c.h.b16 %v1970
      %v2043 = vunpack.c.l.b16 %v1971
      %v2044 = vunpack.c.h.b16 %v1971
      %v2045 = vunpack.c.l.b16 %v1972
      %v2046 = vunpack.c.h.b16 %v1972
      %v2047 = vunpack.c.l.b16 %v1973
      %v2048 = vunpack.c.h.b16 %v1973
      %v2049 = vunpack.c.l.b16 %v1974
      %v2050 = vunpack.c.h.b16 %v1974
      %v2051 = vunpack.c.l.b16 %v1975
      %v2052 = vunpack.c.h.b16 %v1975
      %v2053 = vunpack.c.l.b16 %v1976
      %v2054 = vunpack.c.h.b16 %v1976
      %v2055 = vunpack.c.l.b16 %v1977
      %v2056 = vunpack.c.h.b16 %v1977
      %v2057 = vunpack.c.l.b16 %v1978
      %v2058 = vunpack.c.h.b16 %v1978
      %v2059 = vunpack.c.l.b16 %v1979
      %v2060 = vunpack.c.h.b16 %v1979
      %v2061 = vunpack.c.l.b16 %v1980
      %v2062 = vunpack.c.h.b16 %v1980
      %v2063 = vunpack.c.l.b16 %v1981
      %v2064 = vunpack.c.h.b16 %v1981
      %v2065 = vunpack.c.l.b16 %v1982
      %v2066 = vunpack.c.h.b16 %v1982
      %v2067 = vunpack.c.l.b16 %v1983
      %v2068 = vunpack.c.h.b16 %v1983
      %v2069 = vunpack.c.l.b16 %v1984
      %v2070 = vunpack.c.h.b16 %v1984
      %v2071 = vunpack.c.l.b16 %v1985
      %v2072 = vunpack.c.h.b16 %v1985
      %v2073 = vunpack.c.l.b16 %v1986
      %v2074 = vunpack.c.h.b16 %v1986
      %v2075 = vunpack.c.l.b16 %v1987
      %v2076 = vunpack.c.h.b16 %v1987
      %v2077 = vunpack.c.l.b16 %v1988
      %v2078 = vunpack.c.h.b16 %v1988
      %v2079 = vunpack.c.l.b16 %v1989
      %v2080 = vunpack.c.h.b16 %v1989
      %v2081 = vunpack.c.l.b16 %v1990
      %v2082 = vunpack.c.h.b16 %v1990
      %v2083 = vunpack.c.l.b16 %v1991
      %v2084 = vunpack.c.h.b16 %v1991
      %v2085 = vunpack.c.l.b16 %v1992
      %v2086 = vunpack.c.h.b16 %v1992
      %v2087 = vunpack.c.l.b16 %v1993
      %v2088 = vunpack.c.h.b16 %v1993
      %v2089 = vunpack.c.l.b16 %v1994
      %v2090 = vunpack.c.h.b16 %v1994
      %v2091 = vpack.c.b16 %v2029, %v2027
      %v2092 = vpack.c.b16 %v2030, %v2028
      %v2093 = vpack.c.b16 %v2033, %v2031
      %v2094 = vpack.c.b16 %v2034, %v2032
      %v2095 = vpack.c.b16 %v2037, %v2035
      %v2096 = vpack.c.b16 %v2038, %v2036
      %v2097 = vpack.c.b16 %v2041, %v2039
      %v2098 = vpack.c.b16 %v2042, %v2040
      %v2099 = vpack.c.b16 %v2045, %v2043
      %v2100 = vpack.c.b16 %v2046, %v2044
      %v2101 = vpack.c.b16 %v2049, %v2047
      %v2102 = vpack.c.b16 %v2050, %v2048
      %v2103 = vpack.c.b16 %v2053, %v2051
      %v2104 = vpack.c.b16 %v2054, %v2052
      %v2105 = vpack.c.b16 %v2057, %v2055
      %v2106 = vpack.c.b16 %v2058, %v2056
      %v2107 = vpack.c.b16 %v2061, %v2059
      %v2108 = vpack.c.b16 %v2062, %v2060
      %v2109 = vpack.c.b16 %v2065, %v2063
      %v2110 = vpack.c.b16 %v2066, %v2064
      %v2111 = vpack.c.b16 %v2069, %v2067
      %v2112 = vpack.c.b16 %v2070, %v2068
      %v2113 = vpack.c.b16 %v2073, %v2071
      %v2114 = vpack.c.b16 %v2074, %v2072
      %v2115 = vpack.c.b16 %v2077, %v2075
      %v2116 = vpack.c.b16 %v2078, %v2076
      %v2117 = vpack.c.b16 %v2081, %v2079
      %v2118 = vpack.c.b16 %v2082, %v2080
      %v2119 = vpack.c.b16 %v2085, %v2083
      %v2120 = vpack.c.b16 %v2086, %v2084
      %v2121 = vpack.c.b16 %v2089, %v2087
      %v2122 = vpack.c.b16 %v2090, %v2088
      %2155 = vmatprep.subr.bf16.mxu0 %v2106
      %2156 = vmatpush1.bf16.msra.mxu0 %v2105
      %2157 = vmatprep.subr.bf16.mxu0 %v2104
      %2158 = vmatpush1.bf16.msra.mxu0 %v2103
      %2159 = vmatprep.subr.bf16.mxu0 %v2102
      %2160 = vmatpush1.bf16.msra.mxu0 %v2101
      %2161 = vmatprep.subr.bf16.mxu0 %v2100
      %2162 = vmatpush1.bf16.msra.mxu0 %v2099
      %2163 = vmatprep.subr.bf16.mxu0 %v2098
      %2164 = vmatpush1.bf16.msra.mxu0 %v2097
      %2165 = vmatprep.subr.bf16.mxu0 %v2096
      %2166 = vmatpush1.bf16.msra.mxu0 %v2095
      %2167 = vmatprep.subr.bf16.mxu0 %v2094
      %2168 = vmatpush1.bf16.msra.mxu0 %v2093
      %2169 = vmatprep.subr.bf16.mxu0 %v2092
      %2170 = vmatpush1.bf16.msra.mxu0 %v2091
      %2171 = vmatprep.subr.bf16.mxu0 %v2122
      %2172 = vmatpush2.bf16.msra.mxu0 %v2121
      %2173 = vmatprep.subr.bf16.mxu0 %v2120
      %2174 = vmatpush2.bf16.msra.mxu0 %v2119
      %2175 = vmatprep.subr.bf16.mxu0 %v2118
      %2176 = vmatpush2.bf16.msra.mxu0 %v2117
      %2177 = vmatprep.subr.bf16.mxu0 %v2116
      %2178 = vmatpush2.bf16.msra.mxu0 %v2115
      %2179 = vmatprep.subr.bf16.mxu0 %v2114
      %2180 = vmatpush2.bf16.msra.mxu0 %v2113
      %2181 = vmatprep.subr.bf16.mxu0 %v2112
      %2182 = vmatpush2.bf16.msra.mxu0 %v2111
      %2183 = vmatprep.subr.bf16.mxu0 %v2110
      %2184 = vmatpush2.bf16.msra.mxu0 %v2109
      %2185 = vmatprep.subr.bf16.mxu0 %v2108
      %2186 = vmatpush2.bf16.msra.mxu0 %v2107
      %2187 = vmatprep.mubr.bf16.mxu0 %v1948
      %2188 = vmatmul.mubr.bf16.gmra.mxu0 %v1947
      %v2189 = vpop.f32.mrf.mxu0
      %v2190 = vadd.f32 0.0, %v2189
      %v2191 = vpop.f32.mrf.mxu0
      %v2192 = vadd.f32 0.0, %v2191
      %v2193 = vpop.f32.mrf.mxu0
      %v2194 = vadd.f32 0.0, %v2193
      %v2195 = vpop.f32.mrf.mxu0
      %v2196 = vadd.f32 0.0, %v2195
      %2197 = vmatprep.mubr.bf16.mxu0 %v1950
      %2198 = vmatmul.mubr.bf16.gmra.mxu0 %v1949
      %v2199 = vpop.f32.mrf.mxu0
      %v2200 = vadd.f32 0.0, %v2199
      %v2201 = vpop.f32.mrf.mxu0
      %v2202 = vadd.f32 0.0, %v2201
      %v2203 = vpop.f32.mrf.mxu0
      %v2204 = vadd.f32 0.0, %v2203
      %v2205 = vpop.f32.mrf.mxu0
      %v2206 = vadd.f32 0.0, %v2205
      %2207 = vmatprep.mubr.bf16.mxu0 %v1952
      %2208 = vmatmul.mubr.bf16.gmra.mxu0 %v1951
      %v2209 = vpop.f32.mrf.mxu0
      %v2210 = vadd.f32 0.0, %v2209
      %v2211 = vpop.f32.mrf.mxu0
      %v2212 = vadd.f32 0.0, %v2211
      %v2213 = vpop.f32.mrf.mxu0
      %v2214 = vadd.f32 0.0, %v2213
      %v2215 = vpop.f32.mrf.mxu0
      %v2216 = vadd.f32 0.0, %v2215
      %2217 = vmatprep.mubr.bf16.mxu0 %v1954
      %2218 = vmatmul.mubr.bf16.gmra.mxu0 %v1953
      %v2219 = vpop.f32.mrf.mxu0
      %v2220 = vadd.f32 0.0, %v2219
      %v2221 = vpop.f32.mrf.mxu0
      %v2222 = vadd.f32 0.0, %v2221
      %v2223 = vpop.f32.mrf.mxu0
      %v2224 = vadd.f32 0.0, %v2223
      %v2225 = vpop.f32.mrf.mxu0
      %v2226 = vadd.f32 0.0, %v2225
      %2227 = vmatprep.mubr.bf16.mxu0 %v1956
      %2228 = vmatmul.mubr.bf16.gmra.mxu0 %v1955
      %v2229 = vpop.f32.mrf.mxu0
      %v2230 = vadd.f32 0.0, %v2229
      %v2231 = vpop.f32.mrf.mxu0
      %v2232 = vadd.f32 0.0, %v2231
      %v2233 = vpop.f32.mrf.mxu0
      %v2234 = vadd.f32 0.0, %v2233
      %v2235 = vpop.f32.mrf.mxu0
      %v2236 = vadd.f32 0.0, %v2235
      %2237 = vmatprep.mubr.bf16.mxu0 %v1958
      %2238 = vmatmul.mubr.bf16.gmra.mxu0 %v1957
      %v2239 = vpop.f32.mrf.mxu0
      %v2240 = vadd.f32 0.0, %v2239
      %v2241 = vpop.f32.mrf.mxu0
      %v2242 = vadd.f32 0.0, %v2241
      %v2243 = vpop.f32.mrf.mxu0
      %v2244 = vadd.f32 0.0, %v2243
      %v2245 = vpop.f32.mrf.mxu0
      %v2246 = vadd.f32 0.0, %v2245
      %2247 = vmatprep.mubr.bf16.mxu0 %v1960
      %2248 = vmatmul.mubr.bf16.gmra.mxu0 %v1959
      %v2249 = vpop.f32.mrf.mxu0
      %v2250 = vadd.f32 0.0, %v2249
      %v2251 = vpop.f32.mrf.mxu0
      %v2252 = vadd.f32 0.0, %v2251
      %v2253 = vpop.f32.mrf.mxu0
      %v2254 = vadd.f32 0.0, %v2253
      %v2255 = vpop.f32.mrf.mxu0
      %v2256 = vadd.f32 0.0, %v2255
      %2257 = vmatprep.mubr.bf16.mxu0 %v1962
      %2258 = vmatmul.mubr.bf16.gmra.mxu0 %v1961
      %v2259 = vpop.f32.mrf.mxu0
      %v2260 = vadd.f32 0.0, %v2259
      %v2261 = vpop.f32.mrf.mxu0
      %v2262 = vadd.f32 0.0, %v2261
      %v2263 = vpop.f32.mrf.mxu0
      %v2264 = vadd.f32 0.0, %v2263
      %v2265 = vpop.f32.mrf.mxu0
      %v2266 = vadd.f32 0.0, %v2265
      %2267 = vdwg.mxu0
      %v2268 = vld [vmem:[%s6] sm:$0x1]
      %v2270 = vlaneseq
      %v2271 = vshrl.u32 %v2270, 7
      %v2272 = vsub.s32 0, %v2271
      %v2273 = vrot.slane %v2268, %v2272
      %v2275 = vadd.f32 %v2190, %v2273
      %v2276 = vadd.f32 %v2194, %v2273
      %v2277 = vadd.f32 %v2200, %v2273
      %v2278 = vadd.f32 %v2204, %v2273
      %v2279 = vadd.f32 %v2210, %v2273
      %v2280 = vadd.f32 %v2214, %v2273
      %v2281 = vadd.f32 %v2220, %v2273
      %v2282 = vadd.f32 %v2224, %v2273
      %v2283 = vadd.f32 %v2230, %v2273
      %v2284 = vadd.f32 %v2234, %v2273
      %v2285 = vadd.f32 %v2240, %v2273
      %v2286 = vadd.f32 %v2244, %v2273
      %v2287 = vadd.f32 %v2250, %v2273
      %v2288 = vadd.f32 %v2254, %v2273
      %v2289 = vadd.f32 %v2260, %v2273
      %v2290 = vadd.f32 %v2264, %v2273
      %v2291 = vmul.f32 %v2275, 100.0
      %v2292 = vmul.f32 %v2276, 100.0
      %v2293 = vmul.f32 %v2277, 100.0
      %v2294 = vmul.f32 %v2278, 100.0
      %v2295 = vmul.f32 %v2279, 100.0
      %v2296 = vmul.f32 %v2280, 100.0
      %v2297 = vmul.f32 %v2281, 100.0
      %v2298 = vmul.f32 %v2282, 100.0
      %v2299 = vmul.f32 %v2283, 100.0
      %v2300 = vmul.f32 %v2284, 100.0
      %v2301 = vmul.f32 %v2285, 100.0
      %v2302 = vmul.f32 %v2286, 100.0
      %v2303 = vmul.f32 %v2287, 100.0
      %v2304 = vmul.f32 %v2288, 100.0
      %v2305 = vmul.f32 %v2289, 100.0
      %v2306 = vmul.f32 %v2290, 100.0
      %v2307 = vand.u32 2147483647, %v2291
      %v2308 = vand.u32 2147483647, %v2292
      %v2309 = vand.u32 2147483647, %v2293
      %v2310 = vand.u32 2147483647, %v2294
      %v2311 = vand.u32 2147483647, %v2295
      %v2312 = vand.u32 2147483647, %v2296
      %v2313 = vand.u32 2147483647, %v2297
      %v2314 = vand.u32 2147483647, %v2298
      %v2315 = vand.u32 2147483647, %v2299
      %v2316 = vand.u32 2147483647, %v2300
      %v2317 = vand.u32 2147483647, %v2301
      %v2318 = vand.u32 2147483647, %v2302
      %v2319 = vand.u32 2147483647, %v2303
      %v2320 = vand.u32 2147483647, %v2304
      %v2321 = vand.u32 2147483647, %v2305
      %v2322 = vand.u32 2147483647, %v2306
      %v2323 = vsub.f32 0.0, %v2307
      %v2324 = vsub.f32 0.0, %v2308
      %v2325 = vsub.f32 0.0, %v2309
      %v2326 = vsub.f32 0.0, %v2310
      %v2327 = vsub.f32 0.0, %v2311
      %v2328 = vsub.f32 0.0, %v2312
      %v2329 = vsub.f32 0.0, %v2313
      %v2330 = vsub.f32 0.0, %v2314
      %v2331 = vsub.f32 0.0, %v2315
      %v2332 = vsub.f32 0.0, %v2316
      %v2333 = vsub.f32 0.0, %v2317
      %v2334 = vsub.f32 0.0, %v2318
      %v2335 = vsub.f32 0.0, %v2319
      %v2336 = vsub.f32 0.0, %v2320
      %v2337 = vsub.f32 0.0, %v2321
      %v2338 = vsub.f32 0.0, %v2322
      %v2339 = vmul.f32 %v2323, 1.442695
      %v2340 = vpow.pop %v2339
      %v2341 = vmul.f32 %v2324, 1.442695
      %v2342 = vpow.pop %v2341
      %v2343 = vmul.f32 %v2325, 1.442695
      %v2344 = vpow.pop %v2343
      %v2345 = vmul.f32 %v2326, 1.442695
      %v2346 = vpow.pop %v2345
      %v2347 = vmul.f32 %v2327, 1.442695
      %v2348 = vpow.pop %v2347
      %v2349 = vmul.f32 %v2328, 1.442695
      %v2350 = vpow.pop %v2349
      %v2351 = vmul.f32 %v2329, 1.442695
      %v2352 = vpow.pop %v2351
      %v2353 = vmul.f32 %v2330, 1.442695
      %v2354 = vpow.pop %v2353
      %v2355 = vmul.f32 %v2331, 1.442695
      %v2356 = vpow.pop %v2355
      %v2357 = vmul.f32 %v2332, 1.442695
      %v2358 = vpow.pop %v2357
      %v2359 = vmul.f32 %v2333, 1.442695
      %v2360 = vpow.pop %v2359
      %v2361 = vmul.f32 %v2334, 1.442695
      %v2362 = vpow.pop %v2361
      %v2363 = vmul.f32 %v2335, 1.442695
      %v2364 = vpow.pop %v2363
      %v2365 = vmul.f32 %v2336, 1.442695
      %v2366 = vpow.pop %v2365
      %v2367 = vmul.f32 %v2337, 1.442695
      %v2368 = vpow.pop %v2367
      %v2369 = vmul.f32 %v2338, 1.442695
      %v2370 = vpow.pop %v2369
      %v2371 = vmax.f32 %v2291, 0.0
      %v2372 = vmax.f32 %v2292, 0.0
      %v2373 = vmax.f32 %v2293, 0.0
      %v2374 = vmax.f32 %v2294, 0.0
      %v2375 = vmax.f32 %v2295, 0.0
      %v2376 = vmax.f32 %v2296, 0.0
      %v2377 = vmax.f32 %v2297, 0.0
      %v2378 = vmax.f32 %v2298, 0.0
      %v2379 = vmax.f32 %v2299, 0.0
      %v2380 = vmax.f32 %v2300, 0.0
      %v2381 = vmax.f32 %v2301, 0.0
      %v2382 = vmax.f32 %v2302, 0.0
      %v2383 = vmax.f32 %v2303, 0.0
      %v2384 = vmax.f32 %v2304, 0.0
      %v2385 = vmax.f32 %v2305, 0.0
      %v2386 = vmax.f32 %v2306, 0.0
      %v2387 = vadd.f32 %v2340, 1.0
      %v2388 = vadd.f32 %v2342, 1.0
      %v2389 = vadd.f32 %v2344, 1.0
      %v2390 = vadd.f32 %v2346, 1.0
      %v2391 = vadd.f32 %v2348, 1.0
      %v2392 = vadd.f32 %v2350, 1.0
      %v2393 = vadd.f32 %v2352, 1.0
      %v2394 = vadd.f32 %v2354, 1.0
      %v2395 = vadd.f32 %v2356, 1.0
      %v2396 = vadd.f32 %v2358, 1.0
      %v2397 = vadd.f32 %v2360, 1.0
      %v2398 = vadd.f32 %v2362, 1.0
      %v2399 = vadd.f32 %v2364, 1.0
      %v2400 = vadd.f32 %v2366, 1.0
      %v2401 = vadd.f32 %v2368, 1.0
      %v2402 = vadd.f32 %v2370, 1.0
      %v2403 = vlog2.pop %v2387
      %v2404 = vmul.f32 %v2403, 0.6931472
      %v2405 = vlog2.pop %v2388
      %v2406 = vmul.f32 %v2405, 0.6931472
      %v2407 = vlog2.pop %v2389
      %v2408 = vmul.f32 %v2407, 0.6931472
      %v2409 = vlog2.pop %v2390
      %v2410 = vmul.f32 %v2409, 0.6931472
      %v2411 = vlog2.pop %v2391
      %v2412 = vmul.f32 %v2411, 0.6931472
      %v2413 = vlog2.pop %v2392
      %v2414 = vmul.f32 %v2413, 0.6931472
      %v2415 = vlog2.pop %v2393
      %v2416 = vmul.f32 %v2415, 0.6931472
      %v2417 = vlog2.pop %v2394
      %v2418 = vmul.f32 %v2417, 0.6931472
      %v2419 = vlog2.pop %v2395
      %v2420 = vmul.f32 %v2419, 0.6931472
      %v2421 = vlog2.pop %v2396
      %v2422 = vmul.f32 %v2421, 0.6931472
      %v2423 = vlog2.pop %v2397
      %v2424 = vmul.f32 %v2423, 0.6931472
      %v2425 = vlog2.pop %v2398
      %v2426 = vmul.f32 %v2425, 0.6931472
      %v2427 = vlog2.pop %v2399
      %v2428 = vmul.f32 %v2427, 0.6931472
      %v2429 = vlog2.pop %v2400
      %v2430 = vmul.f32 %v2429, 0.6931472
      %v2431 = vlog2.pop %v2401
      %v2432 = vmul.f32 %v2431, 0.6931472
      %v2433 = vlog2.pop %v2402
      %v2434 = vmul.f32 %v2433, 0.6931472
      %v2435 = vadd.f32 %v2371, %v2404
      %v2436 = vadd.f32 %v2372, %v2406
      %v2437 = vadd.f32 %v2373, %v2408
      %v2438 = vadd.f32 %v2374, %v2410
      %v2439 = vadd.f32 %v2375, %v2412
      %v2440 = vadd.f32 %v2376, %v2414
      %v2441 = vadd.f32 %v2377, %v2416
      %v2442 = vadd.f32 %v2378, %v2418
      %v2443 = vadd.f32 %v2379, %v2420
      %v2444 = vadd.f32 %v2380, %v2422
      %v2445 = vadd.f32 %v2381, %v2424
      %v2446 = vadd.f32 %v2382, %v2426
      %v2447 = vadd.f32 %v2383, %v2428
      %v2448 = vadd.f32 %v2384, %v2430
      %v2449 = vadd.f32 %v2385, %v2432
      %v2450 = vadd.f32 %v2386, %v2434
      %v2451 = vmul.f32 %v2435, 0.01
      %v2452 = vmul.f32 %v2436, 0.01
      %v2453 = vmul.f32 %v2437, 0.01
      %v2454 = vmul.f32 %v2438, 0.01
      %v2455 = vmul.f32 %v2439, 0.01
      %v2456 = vmul.f32 %v2440, 0.01
      %v2457 = vmul.f32 %v2441, 0.01
      %v2458 = vmul.f32 %v2442, 0.01
      %v2459 = vmul.f32 %v2443, 0.01
      %v2460 = vmul.f32 %v2444, 0.01
      %v2461 = vmul.f32 %v2445, 0.01
      %v2462 = vmul.f32 %v2446, 0.01
      %v2463 = vmul.f32 %v2447, 0.01
      %v2464 = vmul.f32 %v2448, 0.01
      %v2465 = vmul.f32 %v2449, 0.01
      %v2466 = vmul.f32 %v2450, 0.01
      %vm2467 = vcmp.ge.f32.partialorder %v2291, 0.0
      %vm2468 = vcmp.ge.f32.partialorder %v2292, 0.0
      %vm2469 = vcmp.ge.f32.partialorder %v2293, 0.0
      %vm2470 = vcmp.ge.f32.partialorder %v2294, 0.0
      %vm2471 = vcmp.ge.f32.partialorder %v2295, 0.0
      %vm2472 = vcmp.ge.f32.partialorder %v2296, 0.0
      %vm2473 = vcmp.ge.f32.partialorder %v2297, 0.0
      %vm2474 = vcmp.ge.f32.partialorder %v2298, 0.0
      %vm2475 = vcmp.ge.f32.partialorder %v2299, 0.0
      %vm2476 = vcmp.ge.f32.partialorder %v2300, 0.0
      %vm2477 = vcmp.ge.f32.partialorder %v2301, 0.0
      %vm2478 = vcmp.ge.f32.partialorder %v2302, 0.0
      %vm2479 = vcmp.ge.f32.partialorder %v2303, 0.0
      %vm2480 = vcmp.ge.f32.partialorder %v2304, 0.0
      %vm2481 = vcmp.ge.f32.partialorder %v2305, 0.0
      %vm2482 = vcmp.ge.f32.partialorder %v2306, 0.0
      %v2483 = vsel %vm2467, 1.0, %v2340
      %v2484 = vsel %vm2468, 1.0, %v2342
      %v2485 = vsel %vm2469, 1.0, %v2344
      %v2486 = vsel %vm2470, 1.0, %v2346
      %v2487 = vsel %vm2471, 1.0, %v2348
      %v2488 = vsel %vm2472, 1.0, %v2350
      %v2489 = vsel %vm2473, 1.0, %v2352
      %v2490 = vsel %vm2474, 1.0, %v2354
      %v2491 = vsel %vm2475, 1.0, %v2356
      %v2492 = vsel %vm2476, 1.0, %v2358
      %v2493 = vsel %vm2477, 1.0, %v2360
      %v2494 = vsel %vm2478, 1.0, %v2362
      %v2495 = vsel %vm2479, 1.0, %v2364
      %v2496 = vsel %vm2480, 1.0, %v2366
      %v2497 = vsel %vm2481, 1.0, %v2368
      %v2498 = vsel %vm2482, 1.0, %v2370
      %v2499 = vrcp.pop %v2387
      %v2500 = vmul.f32 %v2483, %v2499
      %v2501 = vrcp.pop %v2388
      %v2502 = vmul.f32 %v2484, %v2501
      %v2503 = vrcp.pop %v2389
      %v2504 = vmul.f32 %v2485, %v2503
      %v2505 = vrcp.pop %v2390
      %v2506 = vmul.f32 %v2486, %v2505
      %v2507 = vrcp.pop %v2391
      %v2508 = vmul.f32 %v2487, %v2507
      %v2509 = vrcp.pop %v2392
      %v2510 = vmul.f32 %v2488, %v2509
      %v2511 = vrcp.pop %v2393
      %v2512 = vmul.f32 %v2489, %v2511
      %v2513 = vrcp.pop %v2394
      %v2514 = vmul.f32 %v2490, %v2513
      %v2515 = vrcp.pop %v2395
      %v2516 = vmul.f32 %v2491, %v2515
      %v2517 = vrcp.pop %v2396
      %v2518 = vmul.f32 %v2492, %v2517
      %v2519 = vrcp.pop %v2397
      %v2520 = vmul.f32 %v2493, %v2519
      %v2521 = vrcp.pop %v2398
      %v2522 = vmul.f32 %v2494, %v2521
      %v2523 = vrcp.pop %v2399
      %v2524 = vmul.f32 %v2495, %v2523
      %v2525 = vrcp.pop %v2400
      %v2526 = vmul.f32 %v2496, %v2525
      %v2527 = vrcp.pop %v2401
      %v2528 = vmul.f32 %v2497, %v2527
      %v2529 = vrcp.pop %v2402
      %v2530 = vmul.f32 %v2498, %v2529
      %2547 = vrot.lane.b32.xlu0 %v2500, 64
      %v2548 = vpop.permute.xlu0 %2547
      %2549 = vrot.lane.b32.xlu0 %v2502, 64
      %v2550 = vpop.permute.xlu0 %2549
      %2551 = vrot.lane.b32.xlu0 %v2504, 64
      %v2552 = vpop.permute.xlu0 %2551
      %2553 = vrot.lane.b32.xlu0 %v2506, 64
      %v2554 = vpop.permute.xlu0 %2553
      %2555 = vrot.lane.b32.xlu0 %v2508, 64
      %v2556 = vpop.permute.xlu0 %2555
      %2557 = vrot.lane.b32.xlu0 %v2510, 64
      %v2558 = vpop.permute.xlu0 %2557
      %2559 = vrot.lane.b32.xlu0 %v2512, 64
      %v2560 = vpop.permute.xlu0 %2559
      %2561 = vrot.lane.b32.xlu0 %v2514, 64
      %v2562 = vpop.permute.xlu0 %2561
      %2563 = vrot.lane.b32.xlu0 %v2516, 64
      %v2564 = vpop.permute.xlu0 %2563
      %2565 = vrot.lane.b32.xlu0 %v2518, 64
      %v2566 = vpop.permute.xlu0 %2565
      %2567 = vrot.lane.b32.xlu0 %v2520, 64
      %v2568 = vpop.permute.xlu0 %2567
      %2569 = vrot.lane.b32.xlu0 %v2522, 64
      %v2570 = vpop.permute.xlu0 %2569
      %2571 = vrot.lane.b32.xlu0 %v2524, 64
      %v2572 = vpop.permute.xlu0 %2571
      %2573 = vrot.lane.b32.xlu0 %v2526, 64
      %v2574 = vpop.permute.xlu0 %2573
      %2575 = vrot.lane.b32.xlu0 %v2528, 64
      %v2576 = vpop.permute.xlu0 %2575
      %2577 = vrot.lane.b32.xlu0 %v2530, 64
      %v2578 = vpop.permute.xlu0 %2577
      %v2595 = vmul.f32 %v2190, %v2548
      %v2596 = vmul.f32 %v2194, %v2550
      %v2597 = vmul.f32 %v2200, %v2552
      %v2598 = vmul.f32 %v2204, %v2554
      %v2599 = vmul.f32 %v2210, %v2556
      %v2600 = vmul.f32 %v2214, %v2558
      %v2601 = vmul.f32 %v2220, %v2560
      %v2602 = vmul.f32 %v2224, %v2562
      %v2603 = vmul.f32 %v2230, %v2564
      %v2604 = vmul.f32 %v2234, %v2566
      %v2605 = vmul.f32 %v2240, %v2568
      %v2606 = vmul.f32 %v2244, %v2570
      %v2607 = vmul.f32 %v2250, %v2572
      %v2608 = vmul.f32 %v2254, %v2574
      %v2609 = vmul.f32 %v2260, %v2576
      %v2610 = vmul.f32 %v2264, %v2578
      %v2611 = vmul.f32 %v2192, %v2500
      %v2612 = vmul.f32 %v2196, %v2502
      %v2613 = vmul.f32 %v2202, %v2504
      %v2614 = vmul.f32 %v2206, %v2506
      %v2615 = vmul.f32 %v2212, %v2508
      %v2616 = vmul.f32 %v2216, %v2510
      %v2617 = vmul.f32 %v2222, %v2512
      %v2618 = vmul.f32 %v2226, %v2514
      %v2619 = vmul.f32 %v2232, %v2516
      %v2620 = vmul.f32 %v2236, %v2518
      %v2621 = vmul.f32 %v2242, %v2520
      %v2622 = vmul.f32 %v2246, %v2522
      %v2623 = vmul.f32 %v2252, %v2524
      %v2624 = vmul.f32 %v2256, %v2526
      %v2625 = vmul.f32 %v2262, %v2528
      %v2626 = vmul.f32 %v2266, %v2530
      %v2627 = vmul.f32 %v2192, %v2548
      %v2628 = vmul.f32 %v2196, %v2550
      %v2629 = vmul.f32 %v2202, %v2552
      %v2630 = vmul.f32 %v2206, %v2554
      %v2631 = vmul.f32 %v2212, %v2556
      %v2632 = vmul.f32 %v2216, %v2558
      %v2633 = vmul.f32 %v2222, %v2560
      %v2634 = vmul.f32 %v2226, %v2562
      %v2635 = vmul.f32 %v2232, %v2564
      %v2636 = vmul.f32 %v2236, %v2566
      %v2637 = vmul.f32 %v2242, %v2568
      %v2638 = vmul.f32 %v2246, %v2570
      %v2639 = vmul.f32 %v2252, %v2572
      %v2640 = vmul.f32 %v2256, %v2574
      %v2641 = vmul.f32 %v2262, %v2576
      %v2642 = vmul.f32 %v2266, %v2578
      %v2643 = vsel %vm1186, %v2451, %v2595
      %v2644 = vsel %vm1186, %v2452, %v2596
      %v2645 = vsel %vm1186, %v2453, %v2597
      %v2646 = vsel %vm1186, %v2454, %v2598
      %v2647 = vsel %vm1186, %v2455, %v2599
      %v2648 = vsel %vm1186, %v2456, %v2600
      %v2649 = vsel %vm1186, %v2457, %v2601
      %v2650 = vsel %vm1186, %v2458, %v2602
      %v2651 = vsel %vm1186, %v2459, %v2603
      %v2652 = vsel %vm1186, %v2460, %v2604
      %v2653 = vsel %vm1186, %v2461, %v2605
      %v2654 = vsel %vm1186, %v2462, %v2606
      %v2655 = vsel %vm1186, %v2463, %v2607
      %v2656 = vsel %vm1186, %v2464, %v2608
      %v2657 = vsel %vm1186, %v2465, %v2609
      %v2658 = vsel %vm1186, %v2466, %v2610
      %v2659 = vsel %vm1186, %v2611, %v2627
      %v2660 = vsel %vm1186, %v2612, %v2628
      %v2661 = vsel %vm1186, %v2613, %v2629
      %v2662 = vsel %vm1186, %v2614, %v2630
      %v2663 = vsel %vm1186, %v2615, %v2631
      %v2664 = vsel %vm1186, %v2616, %v2632
      %v2665 = vsel %vm1186, %v2617, %v2633
      %v2666 = vsel %vm1186, %v2618, %v2634
      %v2667 = vsel %vm1186, %v2619, %v2635
      %v2668 = vsel %vm1186, %v2620, %v2636
      %v2669 = vsel %vm1186, %v2621, %v2637
      %v2670 = vsel %vm1186, %v2622, %v2638
      %v2671 = vsel %vm1186, %v2623, %v2639
      %v2672 = vsel %vm1186, %v2624, %v2640
      %v2673 = vsel %vm1186, %v2625, %v2641
      %v2674 = vsel %vm1186, %v2626, %v2642
      %v2675 = vpack.c.bf16 %v2644, %v2643
      %v2676 = vpack.c.bf16 %v2660, %v2659
      %v2677 = vpack.c.bf16 %v2646, %v2645
      %v2678 = vpack.c.bf16 %v2662, %v2661
      %v2679 = vpack.c.bf16 %v2648, %v2647
      %v2680 = vpack.c.bf16 %v2664, %v2663
      %v2681 = vpack.c.bf16 %v2650, %v2649
      %v2682 = vpack.c.bf16 %v2666, %v2665
      %v2683 = vpack.c.bf16 %v2652, %v2651
      %v2684 = vpack.c.bf16 %v2668, %v2667
      %v2685 = vpack.c.bf16 %v2654, %v2653
      %v2686 = vpack.c.bf16 %v2670, %v2669
      %v2687 = vpack.c.bf16 %v2656, %v2655
      %v2688 = vpack.c.bf16 %v2672, %v2671
      %v2689 = vpack.c.bf16 %v2658, %v2657
      %v2690 = vpack.c.bf16 %v2674, %v2673
      %v2691 = vld [vmem:[%s7] sm:$0xff]
      %v2692 = vld [vmem:[%s7 + $0x8] sm:$0xff]
      %v2693 = vld [vmem:[%s7 + $0x10] sm:$0xff]
      %v2694 = vld [vmem:[%s7 + $0x18] sm:$0xff]
      %v2695 = vld [vmem:[%s7 + $0x20] sm:$0xff]
      %v2696 = vld [vmem:[%s7 + $0x28] sm:$0xff]
      %v2697 = vld [vmem:[%s7 + $0x30] sm:$0xff]
      %v2698 = vld [vmem:[%s7 + $0x38] sm:$0xff]
      %v2699 = vld [vmem:[%s7 + $0x40] sm:$0xff]
      %v2700 = vld [vmem:[%s7 + $0x48] sm:$0xff]
      %v2701 = vld [vmem:[%s7 + $0x50] sm:$0xff]
      %v2702 = vld [vmem:[%s7 + $0x58] sm:$0xff]
      %v2703 = vld [vmem:[%s7 + $0x60] sm:$0xff]
      %v2704 = vld [vmem:[%s7 + $0x68] sm:$0xff]
      %v2705 = vld [vmem:[%s7 + $0x70] sm:$0xff]
      %v2706 = vld [vmem:[%s7 + $0x78] sm:$0xff]
      %v2707 = vld [vmem:[%s7 + $0x80] sm:$0xff]
      %v2708 = vld [vmem:[%s7 + $0x88] sm:$0xff]
      %v2709 = vld [vmem:[%s7 + $0x90] sm:$0xff]
      %v2710 = vld [vmem:[%s7 + $0x98] sm:$0xff]
      %v2711 = vld [vmem:[%s7 + $0xa0] sm:$0xff]
      %v2712 = vld [vmem:[%s7 + $0xa8] sm:$0xff]
      %v2713 = vld [vmem:[%s7 + $0xb0] sm:$0xff]
      %v2714 = vld [vmem:[%s7 + $0xb8] sm:$0xff]
      %v2715 = vld [vmem:[%s7 + $0xc0] sm:$0xff]
      %v2716 = vld [vmem:[%s7 + $0xc8] sm:$0xff]
      %v2717 = vld [vmem:[%s7 + $0xd0] sm:$0xff]
      %v2718 = vld [vmem:[%s7 + $0xd8] sm:$0xff]
      %v2719 = vld [vmem:[%s7 + $0xe0] sm:$0xff]
      %v2720 = vld [vmem:[%s7 + $0xe8] sm:$0xff]
      %v2721 = vld [vmem:[%s7 + $0xf0] sm:$0xff]
      %v2722 = vld [vmem:[%s7 + $0xf8] sm:$0xff]
      %v2755 = vunpack.c.l.b16 %v2691
      %v2756 = vunpack.c.h.b16 %v2691
      %v2757 = vunpack.c.l.b16 %v2692
      %v2758 = vunpack.c.h.b16 %v2692
      %v2759 = vunpack.c.l.b16 %v2693
      %v2760 = vunpack.c.h.b16 %v2693
      %v2761 = vunpack.c.l.b16 %v2694
      %v2762 = vunpack.c.h.b16 %v2694
      %v2763 = vunpack.c.l.b16 %v2695
      %v2764 = vunpack.c.h.b16 %v2695
      %v2765 = vunpack.c.l.b16 %v2696
      %v2766 = vunpack.c.h.b16 %v2696
      %v2767 = vunpack.c.l.b16 %v2697
      %v2768 = vunpack.c.h.b16 %v2697
      %v2769 = vunpack.c.l.b16 %v2698
      %v2770 = vunpack.c.h.b16 %v2698
      %v2771 = vunpack.c.l.b16 %v2699
      %v2772 = vunpack.c.h.b16 %v2699
      %v2773 = vunpack.c.l.b16 %v2700
      %v2774 = vunpack.c.h.b16 %v2700
      %v2775 = vunpack.c.l.b16 %v2701
      %v2776 = vunpack.c.h.b16 %v2701
      %v2777 = vunpack.c.l.b16 %v2702
      %v2778 = vunpack.c.h.b16 %v2702
      %v2779 = vunpack.c.l.b16 %v2703
      %v2780 = vunpack.c.h.b16 %v2703
      %v2781 = vunpack.c.l.b16 %v2704
      %v2782 = vunpack.c.h.b16 %v2704
      %v2783 = vunpack.c.l.b16 %v2705
      %v2784 = vunpack.c.h.b16 %v2705
      %v2785 = vunpack.c.l.b16 %v2706
      %v2786 = vunpack.c.h.b16 %v2706
      %v2787 = vunpack.c.l.b16 %v2707
      %v2788 = vunpack.c.h.b16 %v2707
      %v2789 = vunpack.c.l.b16 %v2708
      %v2790 = vunpack.c.h.b16 %v2708
      %v2791 = vunpack.c.l.b16 %v2709
      %v2792 = vunpack.c.h.b16 %v2709
      %v2793 = vunpack.c.l.b16 %v2710
      %v2794 = vunpack.c.h.b16 %v2710
      %v2795 = vunpack.c.l.b16 %v2711
      %v2796 = vunpack.c.h.b16 %v2711
      %v2797 = vunpack.c.l.b16 %v2712
      %v2798 = vunpack.c.h.b16 %v2712
      %v2799 = vunpack.c.l.b16 %v2713
      %v2800 = vunpack.c.h.b16 %v2713
      %v2801 = vunpack.c.l.b16 %v2714
      %v2802 = vunpack.c.h.b16 %v2714
      %v2803 = vunpack.c.l.b16 %v2715
      %v2804 = vunpack.c.h.b16 %v2715
      %v2805 = vunpack.c.l.b16 %v2716
      %v2806 = vunpack.c.h.b16 %v2716
      %v2807 = vunpack.c.l.b16 %v2717
      %v2808 = vunpack.c.h.b16 %v2717
      %v2809 = vunpack.c.l.b16 %v2718
      %v2810 = vunpack.c.h.b16 %v2718
      %v2811 = vunpack.c.l.b16 %v2719
      %v2812 = vunpack.c.h.b16 %v2719
      %v2813 = vunpack.c.l.b16 %v2720
      %v2814 = vunpack.c.h.b16 %v2720
      %v2815 = vunpack.c.l.b16 %v2721
      %v2816 = vunpack.c.h.b16 %v2721
      %v2817 = vunpack.c.l.b16 %v2722
      %v2818 = vunpack.c.h.b16 %v2722
      %v2819 = vpack.c.b16 %v2757, %v2755
      %v2820 = vpack.c.b16 %v2758, %v2756
      %v2821 = vpack.c.b16 %v2761, %v2759
      %v2822 = vpack.c.b16 %v2762, %v2760
      %v2823 = vpack.c.b16 %v2765, %v2763
      %v2824 = vpack.c.b16 %v2766, %v2764
      %v2825 = vpack.c.b16 %v2769, %v2767
      %v2826 = vpack.c.b16 %v2770, %v2768
      %v2827 = vpack.c.b16 %v2773, %v2771
      %v2828 = vpack.c.b16 %v2774, %v2772
      %v2829 = vpack.c.b16 %v2777, %v2775
      %v2830 = vpack.c.b16 %v2778, %v2776
      %v2831 = vpack.c.b16 %v2781, %v2779
      %v2832 = vpack.c.b16 %v2782, %v2780
      %v2833 = vpack.c.b16 %v2785, %v2783
      %v2834 = vpack.c.b16 %v2786, %v2784
      %v2835 = vpack.c.b16 %v2789, %v2787
      %v2836 = vpack.c.b16 %v2790, %v2788
      %v2837 = vpack.c.b16 %v2793, %v2791
      %v2838 = vpack.c.b16 %v2794, %v2792
      %v2839 = vpack.c.b16 %v2797, %v2795
      %v2840 = vpack.c.b16 %v2798, %v2796
      %v2841 = vpack.c.b16 %v2801, %v2799
      %v2842 = vpack.c.b16 %v2802, %v2800
      %v2843 = vpack.c.b16 %v2805, %v2803
      %v2844 = vpack.c.b16 %v2806, %v2804
      %v2845 = vpack.c.b16 %v2809, %v2807
      %v2846 = vpack.c.b16 %v2810, %v2808
      %v2847 = vpack.c.b16 %v2813, %v2811
      %v2848 = vpack.c.b16 %v2814, %v2812
      %v2849 = vpack.c.b16 %v2817, %v2815
      %v2850 = vpack.c.b16 %v2818, %v2816
      %2883 = vmatprep.subr.bf16.mxu0 %v2834
      %2884 = vmatpush1.bf16.msra.mxu0 %v2833
      %2885 = vmatprep.subr.bf16.mxu0 %v2832
      %2886 = vmatpush1.bf16.msra.mxu0 %v2831
      %2887 = vmatprep.subr.bf16.mxu0 %v2830
      %2888 = vmatpush1.bf16.msra.mxu0 %v2829
      %2889 = vmatprep.subr.bf16.mxu0 %v2828
      %2890 = vmatpush1.bf16.msra.mxu0 %v2827
      %2891 = vmatprep.subr.bf16.mxu0 %v2826
      %2892 = vmatpush1.bf16.msra.mxu0 %v2825
      %2893 = vmatprep.subr.bf16.mxu0 %v2824
      %2894 = vmatpush1.bf16.msra.mxu0 %v2823
      %2895 = vmatprep.subr.bf16.mxu0 %v2822
      %2896 = vmatpush1.bf16.msra.mxu0 %v2821
      %2897 = vmatprep.subr.bf16.mxu0 %v2820
      %2898 = vmatpush1.bf16.msra.mxu0 %v2819
      %2899 = vmatprep.subr.bf16.mxu0 %v2850
      %2900 = vmatpush2.bf16.msra.mxu0 %v2849
      %2901 = vmatprep.subr.bf16.mxu0 %v2848
      %2902 = vmatpush2.bf16.msra.mxu0 %v2847
      %2903 = vmatprep.subr.bf16.mxu0 %v2846
      %2904 = vmatpush2.bf16.msra.mxu0 %v2845
      %2905 = vmatprep.subr.bf16.mxu0 %v2844
      %2906 = vmatpush2.bf16.msra.mxu0 %v2843
      %2907 = vmatprep.subr.bf16.mxu0 %v2842
      %2908 = vmatpush2.bf16.msra.mxu0 %v2841
      %2909 = vmatprep.subr.bf16.mxu0 %v2840
      %2910 = vmatpush2.bf16.msra.mxu0 %v2839
      %2911 = vmatprep.subr.bf16.mxu0 %v2838
      %2912 = vmatpush2.bf16.msra.mxu0 %v2837
      %2913 = vmatprep.subr.bf16.mxu0 %v2836
      %2914 = vmatpush2.bf16.msra.mxu0 %v2835
      %2915 = vmatprep.mubr.bf16.mxu0 %v2676
      %2916 = vmatmul.mubr.bf16.gmra.mxu0 %v2675
      %v2917 = vpop.f32.mrf.mxu0
      %v2918 = vadd.f32 0.0, %v2917
      %v2919 = vpop.f32.mrf.mxu0
      %v2920 = vadd.f32 0.0, %v2919
      %v2921 = vpop.f32.mrf.mxu0
      %v2922 = vadd.f32 0.0, %v2921
      %v2923 = vpop.f32.mrf.mxu0
      %v2924 = vadd.f32 0.0, %v2923
      %2925 = vmatprep.mubr.bf16.mxu0 %v2678
      %2926 = vmatmul.mubr.bf16.gmra.mxu0 %v2677
      %v2927 = vpop.f32.mrf.mxu0
      %v2928 = vadd.f32 0.0, %v2927
      %v2929 = vpop.f32.mrf.mxu0
      %v2930 = vadd.f32 0.0, %v2929
      %v2931 = vpop.f32.mrf.mxu0
      %v2932 = vadd.f32 0.0, %v2931
      %v2933 = vpop.f32.mrf.mxu0
      %v2934 = vadd.f32 0.0, %v2933
      %2935 = vmatprep.mubr.bf16.mxu0 %v2680
      %2936 = vmatmul.mubr.bf16.gmra.mxu0 %v2679
      %v2937 = vpop.f32.mrf.mxu0
      %v2938 = vadd.f32 0.0, %v2937
      %v2939 = vpop.f32.mrf.mxu0
      %v2940 = vadd.f32 0.0, %v2939
      %v2941 = vpop.f32.mrf.mxu0
      %v2942 = vadd.f32 0.0, %v2941
      %v2943 = vpop.f32.mrf.mxu0
      %v2944 = vadd.f32 0.0, %v2943
      %2945 = vmatprep.mubr.bf16.mxu0 %v2682
      %2946 = vmatmul.mubr.bf16.gmra.mxu0 %v2681
      %v2947 = vpop.f32.mrf.mxu0
      %v2948 = vadd.f32 0.0, %v2947
      %v2949 = vpop.f32.mrf.mxu0
      %v2950 = vadd.f32 0.0, %v2949
      %v2951 = vpop.f32.mrf.mxu0
      %v2952 = vadd.f32 0.0, %v2951
      %v2953 = vpop.f32.mrf.mxu0
      %v2954 = vadd.f32 0.0, %v2953
      %2955 = vmatprep.mubr.bf16.mxu0 %v2684
      %2956 = vmatmul.mubr.bf16.gmra.mxu0 %v2683
      %v2957 = vpop.f32.mrf.mxu0
      %v2958 = vadd.f32 0.0, %v2957
      %v2959 = vpop.f32.mrf.mxu0
      %v2960 = vadd.f32 0.0, %v2959
      %v2961 = vpop.f32.mrf.mxu0
      %v2962 = vadd.f32 0.0, %v2961
      %v2963 = vpop.f32.mrf.mxu0
      %v2964 = vadd.f32 0.0, %v2963
      %2965 = vmatprep.mubr.bf16.mxu0 %v2686
      %2966 = vmatmul.mubr.bf16.gmra.mxu0 %v2685
      %v2967 = vpop.f32.mrf.mxu0
      %v2968 = vadd.f32 0.0, %v2967
      %v2969 = vpop.f32.mrf.mxu0
      %v2970 = vadd.f32 0.0, %v2969
      %v2971 = vpop.f32.mrf.mxu0
      %v2972 = vadd.f32 0.0, %v2971
      %v2973 = vpop.f32.mrf.mxu0
      %v2974 = vadd.f32 0.0, %v2973
      %2975 = vmatprep.mubr.bf16.mxu0 %v2688
      %2976 = vmatmul.mubr.bf16.gmra.mxu0 %v2687
      %v2977 = vpop.f32.mrf.mxu0
      %v2978 = vadd.f32 0.0, %v2977
      %v2979 = vpop.f32.mrf.mxu0
      %v2980 = vadd.f32 0.0, %v2979
      %v2981 = vpop.f32.mrf.mxu0
      %v2982 = vadd.f32 0.0, %v2981
      %v2983 = vpop.f32.mrf.mxu0
      %v2984 = vadd.f32 0.0, %v2983
      %2985 = vmatprep.mubr.bf16.mxu0 %v2690
      %2986 = vmatmul.mubr.bf16.gmra.mxu0 %v2689
      %v2987 = vpop.f32.mrf.mxu0
      %v2988 = vadd.f32 0.0, %v2987
      %v2989 = vpop.f32.mrf.mxu0
      %v2990 = vadd.f32 0.0, %v2989
      %v2991 = vpop.f32.mrf.mxu0
      %v2992 = vadd.f32 0.0, %v2991
      %v2993 = vpop.f32.mrf.mxu0
      %v2994 = vadd.f32 0.0, %v2993
      %2995 = vdwg.mxu0
      %v2996 = vld [vmem:[%s8] sm:$0x1]
      %v2998 = vlaneseq
      %v2999 = vshrl.u32 %v2998, 7
      %v3000 = vsub.s32 0, %v2999
      %v3001 = vrot.slane %v2996, %v3000
      %v3003 = vadd.f32 %v2918, %v3001
      %v3004 = vadd.f32 %v2922, %v3001
      %v3005 = vadd.f32 %v2928, %v3001
      %v3006 = vadd.f32 %v2932, %v3001
      %v3007 = vadd.f32 %v2938, %v3001
      %v3008 = vadd.f32 %v2942, %v3001
      %v3009 = vadd.f32 %v2948, %v3001
      %v3010 = vadd.f32 %v2952, %v3001
      %v3011 = vadd.f32 %v2958, %v3001
      %v3012 = vadd.f32 %v2962, %v3001
      %v3013 = vadd.f32 %v2968, %v3001
      %v3014 = vadd.f32 %v2972, %v3001
      %v3015 = vadd.f32 %v2978, %v3001
      %v3016 = vadd.f32 %v2982, %v3001
      %v3017 = vadd.f32 %v2988, %v3001
      %v3018 = vadd.f32 %v2992, %v3001
      %v3019 = vmul.f32 %v3003, 100.0
      %v3020 = vmul.f32 %v3004, 100.0
      %v3021 = vmul.f32 %v3005, 100.0
      %v3022 = vmul.f32 %v3006, 100.0
      %v3023 = vmul.f32 %v3007, 100.0
      %v3024 = vmul.f32 %v3008, 100.0
      %v3025 = vmul.f32 %v3009, 100.0
      %v3026 = vmul.f32 %v3010, 100.0
      %v3027 = vmul.f32 %v3011, 100.0
      %v3028 = vmul.f32 %v3012, 100.0
      %v3029 = vmul.f32 %v3013, 100.0
      %v3030 = vmul.f32 %v3014, 100.0
      %v3031 = vmul.f32 %v3015, 100.0
      %v3032 = vmul.f32 %v3016, 100.0
      %v3033 = vmul.f32 %v3017, 100.0
      %v3034 = vmul.f32 %v3018, 100.0
      %v3035 = vand.u32 2147483647, %v3019
      %v3036 = vand.u32 2147483647, %v3020
      %v3037 = vand.u32 2147483647, %v3021
      %v3038 = vand.u32 2147483647, %v3022
      %v3039 = vand.u32 2147483647, %v3023
      %v3040 = vand.u32 2147483647, %v3024
      %v3041 = vand.u32 2147483647, %v3025
      %v3042 = vand.u32 2147483647, %v3026
      %v3043 = vand.u32 2147483647, %v3027
      %v3044 = vand.u32 2147483647, %v3028
      %v3045 = vand.u32 2147483647, %v3029
      %v3046 = vand.u32 2147483647, %v3030
      %v3047 = vand.u32 2147483647, %v3031
      %v3048 = vand.u32 2147483647, %v3032
      %v3049 = vand.u32 2147483647, %v3033
      %v3050 = vand.u32 2147483647, %v3034
      %v3051 = vsub.f32 0.0, %v3035
      %v3052 = vsub.f32 0.0, %v3036
      %v3053 = vsub.f32 0.0, %v3037
      %v3054 = vsub.f32 0.0, %v3038
      %v3055 = vsub.f32 0.0, %v3039
      %v3056 = vsub.f32 0.0, %v3040
      %v3057 = vsub.f32 0.0, %v3041
      %v3058 = vsub.f32 0.0, %v3042
      %v3059 = vsub.f32 0.0, %v3043
      %v3060 = vsub.f32 0.0, %v3044
      %v3061 = vsub.f32 0.0, %v3045
      %v3062 = vsub.f32 0.0, %v3046
      %v3063 = vsub.f32 0.0, %v3047
      %v3064 = vsub.f32 0.0, %v3048
      %v3065 = vsub.f32 0.0, %v3049
      %v3066 = vsub.f32 0.0, %v3050
      %v3067 = vmul.f32 %v3051, 1.442695
      %v3068 = vpow.pop %v3067
      %v3069 = vmul.f32 %v3052, 1.442695
      %v3070 = vpow.pop %v3069
      %v3071 = vmul.f32 %v3053, 1.442695
      %v3072 = vpow.pop %v3071
      %v3073 = vmul.f32 %v3054, 1.442695
      %v3074 = vpow.pop %v3073
      %v3075 = vmul.f32 %v3055, 1.442695
      %v3076 = vpow.pop %v3075
      %v3077 = vmul.f32 %v3056, 1.442695
      %v3078 = vpow.pop %v3077
      %v3079 = vmul.f32 %v3057, 1.442695
      %v3080 = vpow.pop %v3079
      %v3081 = vmul.f32 %v3058, 1.442695
      %v3082 = vpow.pop %v3081
      %v3083 = vmul.f32 %v3059, 1.442695
      %v3084 = vpow.pop %v3083
      %v3085 = vmul.f32 %v3060, 1.442695
      %v3086 = vpow.pop %v3085
      %v3087 = vmul.f32 %v3061, 1.442695
      %v3088 = vpow.pop %v3087
      %v3089 = vmul.f32 %v3062, 1.442695
      %v3090 = vpow.pop %v3089
      %v3091 = vmul.f32 %v3063, 1.442695
      %v3092 = vpow.pop %v3091
      %v3093 = vmul.f32 %v3064, 1.442695
      %v3094 = vpow.pop %v3093
      %v3095 = vmul.f32 %v3065, 1.442695
      %v3096 = vpow.pop %v3095
      %v3097 = vmul.f32 %v3066, 1.442695
      %v3098 = vpow.pop %v3097
      %v3099 = vmax.f32 %v3019, 0.0
      %v3100 = vmax.f32 %v3020, 0.0
      %v3101 = vmax.f32 %v3021, 0.0
      %v3102 = vmax.f32 %v3022, 0.0
      %v3103 = vmax.f32 %v3023, 0.0
      %v3104 = vmax.f32 %v3024, 0.0
      %v3105 = vmax.f32 %v3025, 0.0
      %v3106 = vmax.f32 %v3026, 0.0
      %v3107 = vmax.f32 %v3027, 0.0
      %v3108 = vmax.f32 %v3028, 0.0
      %v3109 = vmax.f32 %v3029, 0.0
      %v3110 = vmax.f32 %v3030, 0.0
      %v3111 = vmax.f32 %v3031, 0.0
      %v3112 = vmax.f32 %v3032, 0.0
      %v3113 = vmax.f32 %v3033, 0.0
      %v3114 = vmax.f32 %v3034, 0.0
      %v3115 = vadd.f32 %v3068, 1.0
      %v3116 = vadd.f32 %v3070, 1.0
      %v3117 = vadd.f32 %v3072, 1.0
      %v3118 = vadd.f32 %v3074, 1.0
      %v3119 = vadd.f32 %v3076, 1.0
      %v3120 = vadd.f32 %v3078, 1.0
      %v3121 = vadd.f32 %v3080, 1.0
      %v3122 = vadd.f32 %v3082, 1.0
      %v3123 = vadd.f32 %v3084, 1.0
      %v3124 = vadd.f32 %v3086, 1.0
      %v3125 = vadd.f32 %v3088, 1.0
      %v3126 = vadd.f32 %v3090, 1.0
      %v3127 = vadd.f32 %v3092, 1.0
      %v3128 = vadd.f32 %v3094, 1.0
      %v3129 = vadd.f32 %v3096, 1.0
      %v3130 = vadd.f32 %v3098, 1.0
      %v3131 = vlog2.pop %v3115
      %v3132 = vmul.f32 %v3131, 0.6931472
      %v3133 = vlog2.pop %v3116
      %v3134 = vmul.f32 %v3133, 0.6931472
      %v3135 = vlog2.pop %v3117
      %v3136 = vmul.f32 %v3135, 0.6931472
      %v3137 = vlog2.pop %v3118
      %v3138 = vmul.f32 %v3137, 0.6931472
      %v3139 = vlog2.pop %v3119
      %v3140 = vmul.f32 %v3139, 0.6931472
      %v3141 = vlog2.pop %v3120
      %v3142 = vmul.f32 %v3141, 0.6931472
      %v3143 = vlog2.pop %v3121
      %v3144 = vmul.f32 %v3143, 0.6931472
      %v3145 = vlog2.pop %v3122
      %v3146 = vmul.f32 %v3145, 0.6931472
      %v3147 = vlog2.pop %v3123
      %v3148 = vmul.f32 %v3147, 0.6931472
      %v3149 = vlog2.pop %v3124
      %v3150 = vmul.f32 %v3149, 0.6931472
      %v3151 = vlog2.pop %v3125
      %v3152 = vmul.f32 %v3151, 0.6931472
      %v3153 = vlog2.pop %v3126
      %v3154 = vmul.f32 %v3153, 0.6931472
      %v3155 = vlog2.pop %v3127
      %v3156 = vmul.f32 %v3155, 0.6931472
      %v3157 = vlog2.pop %v3128
      %v3158 = vmul.f32 %v3157, 0.6931472
      %v3159 = vlog2.pop %v3129
      %v3160 = vmul.f32 %v3159, 0.6931472
      %v3161 = vlog2.pop %v3130
      %v3162 = vmul.f32 %v3161, 0.6931472
      %v3163 = vadd.f32 %v3099, %v3132
      %v3164 = vadd.f32 %v3100, %v3134
      %v3165 = vadd.f32 %v3101, %v3136
      %v3166 = vadd.f32 %v3102, %v3138
      %v3167 = vadd.f32 %v3103, %v3140
      %v3168 = vadd.f32 %v3104, %v3142
      %v3169 = vadd.f32 %v3105, %v3144
      %v3170 = vadd.f32 %v3106, %v3146
      %v3171 = vadd.f32 %v3107, %v3148
      %v3172 = vadd.f32 %v3108, %v3150
      %v3173 = vadd.f32 %v3109, %v3152
      %v3174 = vadd.f32 %v3110, %v3154
      %v3175 = vadd.f32 %v3111, %v3156
      %v3176 = vadd.f32 %v3112, %v3158
      %v3177 = vadd.f32 %v3113, %v3160
      %v3178 = vadd.f32 %v3114, %v3162
      %v3179 = vmul.f32 %v3163, 0.01
      %v3180 = vmul.f32 %v3164, 0.01
      %v3181 = vmul.f32 %v3165, 0.01
      %v3182 = vmul.f32 %v3166, 0.01
      %v3183 = vmul.f32 %v3167, 0.01
      %v3184 = vmul.f32 %v3168, 0.01
      %v3185 = vmul.f32 %v3169, 0.01
      %v3186 = vmul.f32 %v3170, 0.01
      %v3187 = vmul.f32 %v3171, 0.01
      %v3188 = vmul.f32 %v3172, 0.01
      %v3189 = vmul.f32 %v3173, 0.01
      %v3190 = vmul.f32 %v3174, 0.01
      %v3191 = vmul.f32 %v3175, 0.01
      %v3192 = vmul.f32 %v3176, 0.01
      %v3193 = vmul.f32 %v3177, 0.01
      %v3194 = vmul.f32 %v3178, 0.01
      %vm3195 = vcmp.ge.f32.partialorder %v3019, 0.0
      %vm3196 = vcmp.ge.f32.partialorder %v3020, 0.0
      %vm3197 = vcmp.ge.f32.partialorder %v3021, 0.0
      %vm3198 = vcmp.ge.f32.partialorder %v3022, 0.0
      %vm3199 = vcmp.ge.f32.partialorder %v3023, 0.0
      %vm3200 = vcmp.ge.f32.partialorder %v3024, 0.0
      %vm3201 = vcmp.ge.f32.partialorder %v3025, 0.0
      %vm3202 = vcmp.ge.f32.partialorder %v3026, 0.0
      %vm3203 = vcmp.ge.f32.partialorder %v3027, 0.0
      %vm3204 = vcmp.ge.f32.partialorder %v3028, 0.0
      %vm3205 = vcmp.ge.f32.partialorder %v3029, 0.0
      %vm3206 = vcmp.ge.f32.partialorder %v3030, 0.0
      %vm3207 = vcmp.ge.f32.partialorder %v3031, 0.0
      %vm3208 = vcmp.ge.f32.partialorder %v3032, 0.0
      %vm3209 = vcmp.ge.f32.partialorder %v3033, 0.0
      %vm3210 = vcmp.ge.f32.partialorder %v3034, 0.0
      %v3211 = vsel %vm3195, 1.0, %v3068
      %v3212 = vsel %vm3196, 1.0, %v3070
      %v3213 = vsel %vm3197, 1.0, %v3072
      %v3214 = vsel %vm3198, 1.0, %v3074
      %v3215 = vsel %vm3199, 1.0, %v3076
      %v3216 = vsel %vm3200, 1.0, %v3078
      %v3217 = vsel %vm3201, 1.0, %v3080
      %v3218 = vsel %vm3202, 1.0, %v3082
      %v3219 = vsel %vm3203, 1.0, %v3084
      %v3220 = vsel %vm3204, 1.0, %v3086
      %v3221 = vsel %vm3205, 1.0, %v3088
      %v3222 = vsel %vm3206, 1.0, %v3090
      %v3223 = vsel %vm3207, 1.0, %v3092
      %v3224 = vsel %vm3208, 1.0, %v3094
      %v3225 = vsel %vm3209, 1.0, %v3096
      %v3226 = vsel %vm3210, 1.0, %v3098
      %v3227 = vrcp.pop %v3115
      %v3228 = vmul.f32 %v3211, %v3227
      %v3229 = vrcp.pop %v3116
      %v3230 = vmul.f32 %v3212, %v3229
      %v3231 = vrcp.pop %v3117
      %v3232 = vmul.f32 %v3213, %v3231
      %v3233 = vrcp.pop %v3118
      %v3234 = vmul.f32 %v3214, %v3233
      %v3235 = vrcp.pop %v3119
      %v3236 = vmul.f32 %v3215, %v3235
      %v3237 = vrcp.pop %v3120
      %v3238 = vmul.f32 %v3216, %v3237
      %v3239 = vrcp.pop %v3121
      %v3240 = vmul.f32 %v3217, %v3239
      %v3241 = vrcp.pop %v3122
      %v3242 = vmul.f32 %v3218, %v3241
      %v3243 = vrcp.pop %v3123
      %v3244 = vmul.f32 %v3219, %v3243
      %v3245 = vrcp.pop %v3124
      %v3246 = vmul.f32 %v3220, %v3245
      %v3247 = vrcp.pop %v3125
      %v3248 = vmul.f32 %v3221, %v3247
      %v3249 = vrcp.pop %v3126
      %v3250 = vmul.f32 %v3222, %v3249
      %v3251 = vrcp.pop %v3127
      %v3252 = vmul.f32 %v3223, %v3251
      %v3253 = vrcp.pop %v3128
      %v3254 = vmul.f32 %v3224, %v3253
      %v3255 = vrcp.pop %v3129
      %v3256 = vmul.f32 %v3225, %v3255
      %v3257 = vrcp.pop %v3130
      %v3258 = vmul.f32 %v3226, %v3257
      %3275 = vrot.lane.b32.xlu0 %v3228, 64
      %v3276 = vpop.permute.xlu0 %3275
      %3277 = vrot.lane.b32.xlu0 %v3230, 64
      %v3278 = vpop.permute.xlu0 %3277
      %3279 = vrot.lane.b32.xlu0 %v3232, 64
      %v3280 = vpop.permute.xlu0 %3279
      %3281 = vrot.lane.b32.xlu0 %v3234, 64
      %v3282 = vpop.permute.xlu0 %3281
      %3283 = vrot.lane.b32.xlu0 %v3236, 64
      %v3284 = vpop.permute.xlu0 %3283
      %3285 = vrot.lane.b32.xlu0 %v3238, 64
      %v3286 = vpop.permute.xlu0 %3285
      %3287 = vrot.lane.b32.xlu0 %v3240, 64
      %v3288 = vpop.permute.xlu0 %3287
      %3289 = vrot.lane.b32.xlu0 %v3242, 64
      %v3290 = vpop.permute.xlu0 %3289
      %3291 = vrot.lane.b32.xlu0 %v3244, 64
      %v3292 = vpop.permute.xlu0 %3291
      %3293 = vrot.lane.b32.xlu0 %v3246, 64
      %v3294 = vpop.permute.xlu0 %3293
      %3295 = vrot.lane.b32.xlu0 %v3248, 64
      %v3296 = vpop.permute.xlu0 %3295
      %3297 = vrot.lane.b32.xlu0 %v3250, 64
      %v3298 = vpop.permute.xlu0 %3297
      %3299 = vrot.lane.b32.xlu0 %v3252, 64
      %v3300 = vpop.permute.xlu0 %3299
      %3301 = vrot.lane.b32.xlu0 %v3254, 64
      %v3302 = vpop.permute.xlu0 %3301
      %3303 = vrot.lane.b32.xlu0 %v3256, 64
      %v3304 = vpop.permute.xlu0 %3303
      %3305 = vrot.lane.b32.xlu0 %v3258, 64
      %v3306 = vpop.permute.xlu0 %3305
      %v3323 = vmul.f32 %v2918, %v3276
      %v3324 = vmul.f32 %v2922, %v3278
      %v3325 = vmul.f32 %v2928, %v3280
      %v3326 = vmul.f32 %v2932, %v3282
      %v3327 = vmul.f32 %v2938, %v3284
      %v3328 = vmul.f32 %v2942, %v3286
      %v3329 = vmul.f32 %v2948, %v3288
      %v3330 = vmul.f32 %v2952, %v3290
      %v3331 = vmul.f32 %v2958, %v3292
      %v3332 = vmul.f32 %v2962, %v3294
      %v3333 = vmul.f32 %v2968, %v3296
      %v3334 = vmul.f32 %v2972, %v3298
      %v3335 = vmul.f32 %v2978, %v3300
      %v3336 = vmul.f32 %v2982, %v3302
      %v3337 = vmul.f32 %v2988, %v3304
      %v3338 = vmul.f32 %v2992, %v3306
      %v3339 = vmul.f32 %v2920, %v3228
      %v3340 = vmul.f32 %v2924, %v3230
      %v3341 = vmul.f32 %v2930, %v3232
      %v3342 = vmul.f32 %v2934, %v3234
      %v3343 = vmul.f32 %v2940, %v3236
      %v3344 = vmul.f32 %v2944, %v3238
      %v3345 = vmul.f32 %v2950, %v3240
      %v3346 = vmul.f32 %v2954, %v3242
      %v3347 = vmul.f32 %v2960, %v3244
      %v3348 = vmul.f32 %v2964, %v3246
      %v3349 = vmul.f32 %v2970, %v3248
      %v3350 = vmul.f32 %v2974, %v3250
      %v3351 = vmul.f32 %v2980, %v3252
      %v3352 = vmul.f32 %v2984, %v3254
      %v3353 = vmul.f32 %v2990, %v3256
      %v3354 = vmul.f32 %v2994, %v3258
      %v3355 = vmul.f32 %v2920, %v3276
      %v3356 = vmul.f32 %v2924, %v3278
      %v3357 = vmul.f32 %v2930, %v3280
      %v3358 = vmul.f32 %v2934, %v3282
      %v3359 = vmul.f32 %v2940, %v3284
      %v3360 = vmul.f32 %v2944, %v3286
      %v3361 = vmul.f32 %v2950, %v3288
      %v3362 = vmul.f32 %v2954, %v3290
      %v3363 = vmul.f32 %v2960, %v3292
      %v3364 = vmul.f32 %v2964, %v3294
      %v3365 = vmul.f32 %v2970, %v3296
      %v3366 = vmul.f32 %v2974, %v3298
      %v3367 = vmul.f32 %v2980, %v3300
      %v3368 = vmul.f32 %v2984, %v3302
      %v3369 = vmul.f32 %v2990, %v3304
      %v3370 = vmul.f32 %v2994, %v3306
      %v3371 = vsel %vm1186, %v3179, %v3323
      %v3372 = vsel %vm1186, %v3180, %v3324
      %v3373 = vsel %vm1186, %v3181, %v3325
      %v3374 = vsel %vm1186, %v3182, %v3326
      %v3375 = vsel %vm1186, %v3183, %v3327
      %v3376 = vsel %vm1186, %v3184, %v3328
      %v3377 = vsel %vm1186, %v3185, %v3329
      %v3378 = vsel %vm1186, %v3186, %v3330
      %v3379 = vsel %vm1186, %v3187, %v3331
      %v3380 = vsel %vm1186, %v3188, %v3332
      %v3381 = vsel %vm1186, %v3189, %v3333
      %v3382 = vsel %vm1186, %v3190, %v3334
      %v3383 = vsel %vm1186, %v3191, %v3335
      %v3384 = vsel %vm1186, %v3192, %v3336
      %v3385 = vsel %vm1186, %v3193, %v3337
      %v3386 = vsel %vm1186, %v3194, %v3338
      %v3387 = vsel %vm1186, %v3339, %v3355
      %v3388 = vsel %vm1186, %v3340, %v3356
      %v3389 = vsel %vm1186, %v3341, %v3357
      %v3390 = vsel %vm1186, %v3342, %v3358
      %v3391 = vsel %vm1186, %v3343, %v3359
      %v3392 = vsel %vm1186, %v3344, %v3360
      %v3393 = vsel %vm1186, %v3345, %v3361
      %v3394 = vsel %vm1186, %v3346, %v3362
      %v3395 = vsel %vm1186, %v3347, %v3363
      %v3396 = vsel %vm1186, %v3348, %v3364
      %v3397 = vsel %vm1186, %v3349, %v3365
      %v3398 = vsel %vm1186, %v3350, %v3366
      %v3399 = vsel %vm1186, %v3351, %v3367
      %v3400 = vsel %vm1186, %v3352, %v3368
      %v3401 = vsel %vm1186, %v3353, %v3369
      %v3402 = vsel %vm1186, %v3354, %v3370
      %v3403 = vpack.c.bf16 %v3372, %v3371
      %v3404 = vpack.c.bf16 %v3388, %v3387
      %v3405 = vpack.c.bf16 %v3374, %v3373
      %v3406 = vpack.c.bf16 %v3390, %v3389
      %v3407 = vpack.c.bf16 %v3376, %v3375
      %v3408 = vpack.c.bf16 %v3392, %v3391
      %v3409 = vpack.c.bf16 %v3378, %v3377
      %v3410 = vpack.c.bf16 %v3394, %v3393
      %v3411 = vpack.c.bf16 %v3380, %v3379
      %v3412 = vpack.c.bf16 %v3396, %v3395
      %v3413 = vpack.c.bf16 %v3382, %v3381
      %v3414 = vpack.c.bf16 %v3398, %v3397
      %v3415 = vpack.c.bf16 %v3384, %v3383
      %v3416 = vpack.c.bf16 %v3400, %v3399
      %v3417 = vpack.c.bf16 %v3386, %v3385
      %v3418 = vpack.c.bf16 %v3402, %v3401
      %v3419 = vld [vmem:[%s9] sm:$0xf]
      %v3420 = vld [vmem:[%s9 + $0x4] sm:$0xf]
      %v3421 = vld [vmem:[%s9 + $0x8] sm:$0xf]
      %v3422 = vld [vmem:[%s9 + $0xc] sm:$0xf]
      %v3423 = vld [vmem:[%s9 + $0x10] sm:$0xf]
      %v3424 = vld [vmem:[%s9 + $0x14] sm:$0xf]
      %v3425 = vld [vmem:[%s9 + $0x18] sm:$0xf]
      %v3426 = vld [vmem:[%s9 + $0x1c] sm:$0xf]
      %v3427 = vld [vmem:[%s9 + $0x20] sm:$0xf]
      %v3428 = vld [vmem:[%s9 + $0x24] sm:$0xf]
      %v3429 = vld [vmem:[%s9 + $0x28] sm:$0xf]
      %v3430 = vld [vmem:[%s9 + $0x2c] sm:$0xf]
      %v3431 = vld [vmem:[%s9 + $0x30] sm:$0xf]
      %v3432 = vld [vmem:[%s9 + $0x34] sm:$0xf]
      %v3433 = vld [vmem:[%s9 + $0x38] sm:$0xf]
      %v3434 = vld [vmem:[%s9 + $0x3c] sm:$0xf]
      %v3435 = vld [vmem:[%s9 + $0x40] sm:$0xf]
      %v3436 = vld [vmem:[%s9 + $0x44] sm:$0xf]
      %v3437 = vld [vmem:[%s9 + $0x48] sm:$0xf]
      %v3438 = vld [vmem:[%s9 + $0x4c] sm:$0xf]
      %v3439 = vld [vmem:[%s9 + $0x50] sm:$0xf]
      %v3440 = vld [vmem:[%s9 + $0x54] sm:$0xf]
      %v3441 = vld [vmem:[%s9 + $0x58] sm:$0xf]
      %v3442 = vld [vmem:[%s9 + $0x5c] sm:$0xf]
      %v3443 = vld [vmem:[%s9 + $0x60] sm:$0xf]
      %v3444 = vld [vmem:[%s9 + $0x64] sm:$0xf]
      %v3445 = vld [vmem:[%s9 + $0x68] sm:$0xf]
      %v3446 = vld [vmem:[%s9 + $0x6c] sm:$0xf]
      %v3447 = vld [vmem:[%s9 + $0x70] sm:$0xf]
      %v3448 = vld [vmem:[%s9 + $0x74] sm:$0xf]
      %v3449 = vld [vmem:[%s9 + $0x78] sm:$0xf]
      %v3450 = vld [vmem:[%s9 + $0x7c] sm:$0xf]
      %v3451 = vld [vmem:[%s10] sm:$0x1]
      %v3453 = vlaneseq
      %v3454 = vshrl.u32 %v3453, 7
      %v3455 = vsub.s32 0, %v3454
      %v3456 = vrot.slane %v3451, %v3455
      %v3490 = vunpack.c.l.b16 %v3419
      %v3491 = vunpack.c.l.b16 %v3420
      %v3492 = vunpack.c.l.b16 %v3421
      %v3493 = vunpack.c.l.b16 %v3422
      %v3494 = vunpack.c.l.b16 %v3423
      %v3495 = vunpack.c.l.b16 %v3424
      %v3496 = vunpack.c.l.b16 %v3425
      %v3497 = vunpack.c.l.b16 %v3426
      %v3498 = vunpack.c.l.b16 %v3427
      %v3499 = vunpack.c.l.b16 %v3428
      %v3500 = vunpack.c.l.b16 %v3429
      %v3501 = vunpack.c.l.b16 %v3430
      %v3502 = vunpack.c.l.b16 %v3431
      %v3503 = vunpack.c.l.b16 %v3432
      %v3504 = vunpack.c.l.b16 %v3433
      %v3505 = vunpack.c.l.b16 %v3434
      %v3506 = vunpack.c.l.b16 %v3435
      %v3507 = vunpack.c.l.b16 %v3436
      %v3508 = vunpack.c.l.b16 %v3437
      %v3509 = vunpack.c.l.b16 %v3438
      %v3510 = vunpack.c.l.b16 %v3439
      %v3511 = vunpack.c.l.b16 %v3440
      %v3512 = vunpack.c.l.b16 %v3441
      %v3513 = vunpack.c.l.b16 %v3442
      %v3514 = vunpack.c.l.b16 %v3443
      %v3515 = vunpack.c.l.b16 %v3444
      %v3516 = vunpack.c.l.b16 %v3445
      %v3517 = vunpack.c.l.b16 %v3446
      %v3518 = vunpack.c.l.b16 %v3447
      %v3519 = vunpack.c.l.b16 %v3448
      %v3520 = vunpack.c.l.b16 %v3449
      %v3521 = vunpack.c.l.b16 %v3450
      %v3522 = vpack.c.b16 %v3491, %v3490
      %v3523 = vpack.c.b16 %v3493, %v3492
      %v3524 = vpack.c.b16 %v3495, %v3494
      %v3525 = vpack.c.b16 %v3497, %v3496
      %v3526 = vpack.c.b16 %v3499, %v3498
      %v3527 = vpack.c.b16 %v3501, %v3500
      %v3528 = vpack.c.b16 %v3503, %v3502
      %v3529 = vpack.c.b16 %v3505, %v3504
      %v3530 = vpack.c.b16 %v3507, %v3506
      %v3531 = vpack.c.b16 %v3509, %v3508
      %v3532 = vpack.c.b16 %v3511, %v3510
      %v3533 = vpack.c.b16 %v3513, %v3512
      %v3534 = vpack.c.b16 %v3515, %v3514
      %v3535 = vpack.c.b16 %v3517, %v3516
      %v3536 = vpack.c.b16 %v3519, %v3518
      %v3537 = vpack.c.b16 %v3521, %v3520
      %3554 = vmatprep.subr.bf16.mxu0 0
      %3555 = vmatpush1.bf16.msra.mxu0 %v3529
      %3556 = vmatprep.subr.bf16.mxu0 0
      %3557 = vmatpush1.bf16.msra.mxu0 %v3528
      %3558 = vmatprep.subr.bf16.mxu0 0
      %3559 = vmatpush1.bf16.msra.mxu0 %v3527
      %3560 = vmatprep.subr.bf16.mxu0 0
      %3561 = vmatpush1.bf16.msra.mxu0 %v3526
      %3562 = vmatprep.subr.bf16.mxu0 0
      %3563 = vmatpush1.bf16.msra.mxu0 %v3525
      %3564 = vmatprep.subr.bf16.mxu0 0
      %3565 = vmatpush1.bf16.msra.mxu0 %v3524
      %3566 = vmatprep.subr.bf16.mxu0 0
      %3567 = vmatpush1.bf16.msra.mxu0 %v3523
      %3568 = vmatprep.subr.bf16.mxu0 0
      %3569 = vmatpush1.bf16.msra.mxu0 %v3522
      %3570 = vmatprep.subr.bf16.mxu0 0
      %3571 = vmatpush2.bf16.msra.mxu0 %v3537
      %3572 = vmatprep.subr.bf16.mxu0 0
      %3573 = vmatpush2.bf16.msra.mxu0 %v3536
      %3574 = vmatprep.subr.bf16.mxu0 0
      %3575 = vmatpush2.bf16.msra.mxu0 %v3535
      %3576 = vmatprep.subr.bf16.mxu0 0
      %3577 = vmatpush2.bf16.msra.mxu0 %v3534
      %3578 = vmatprep.subr.bf16.mxu0 0
      %3579 = vmatpush2.bf16.msra.mxu0 %v3533
      %3580 = vmatprep.subr.bf16.mxu0 0
      %3581 = vmatpush2.bf16.msra.mxu0 %v3532
      %3582 = vmatprep.subr.bf16.mxu0 0
      %3583 = vmatpush2.bf16.msra.mxu0 %v3531
      %3584 = vmatprep.subr.bf16.mxu0 0
      %3585 = vmatpush2.bf16.msra.mxu0 %v3530
      %3586 = vmatprep.mubr.bf16.mxu0 %v3404
      %3587 = vmatmul.mubr.bf16.gmra.mxu0 %v3403
      %v3588 = vpop.f32.mrf.mxu0
      %v3589 = vadd.f32 %v3456, %v3588
      %v3590 = vpop.f32.mrf.mxu0
      %v3591 = vpop.f32.mrf.mxu0
      %v3592 = vadd.f32 %v3456, %v3591
      %v3593 = vpop.f32.mrf.mxu0
      %3594 = vmatprep.mubr.bf16.mxu0 %v3406
      %3595 = vmatmul.mubr.bf16.gmra.mxu0 %v3405
      %v3596 = vpop.f32.mrf.mxu0
      %v3597 = vadd.f32 %v3456, %v3596
      %v3598 = vpop.f32.mrf.mxu0
      %v3599 = vpop.f32.mrf.mxu0
      %v3600 = vadd.f32 %v3456, %v3599
      %v3601 = vpop.f32.mrf.mxu0
      %3602 = vmatprep.mubr.bf16.mxu0 %v3408
      %3603 = vmatmul.mubr.bf16.gmra.mxu0 %v3407
      %v3604 = vpop.f32.mrf.mxu0
      %v3605 = vadd.f32 %v3456, %v3604
      %v3606 = vpop.f32.mrf.mxu0
      %v3607 = vpop.f32.mrf.mxu0
      %v3608 = vadd.f32 %v3456, %v3607
      %v3609 = vpop.f32.mrf.mxu0
      %3610 = vmatprep.mubr.bf16.mxu0 %v3410
      %3611 = vmatmul.mubr.bf16.gmra.mxu0 %v3409
      %v3612 = vpop.f32.mrf.mxu0
      %v3613 = vadd.f32 %v3456, %v3612
      %v3614 = vpop.f32.mrf.mxu0
      %v3615 = vpop.f32.mrf.mxu0
      %v3616 = vadd.f32 %v3456, %v3615
      %v3617 = vpop.f32.mrf.mxu0
      %3618 = vmatprep.mubr.bf16.mxu0 %v3412
      %3619 = vmatmul.mubr.bf16.gmra.mxu0 %v3411
      %v3620 = vpop.f32.mrf.mxu0
      %v3621 = vadd.f32 %v3456, %v3620
      %v3622 = vpop.f32.mrf.mxu0
      %v3623 = vpop.f32.mrf.mxu0
      %v3624 = vadd.f32 %v3456, %v3623
      %v3625 = vpop.f32.mrf.mxu0
      %3626 = vmatprep.mubr.bf16.mxu0 %v3414
      %3627 = vmatmul.mubr.bf16.gmra.mxu0 %v3413
      %v3628 = vpop.f32.mrf.mxu0
      %v3629 = vadd.f32 %v3456, %v3628
      %v3630 = vpop.f32.mrf.mxu0
      %v3631 = vpop.f32.mrf.mxu0
      %v3632 = vadd.f32 %v3456, %v3631
      %v3633 = vpop.f32.mrf.mxu0
      %3634 = vmatprep.mubr.bf16.mxu0 %v3416
      %3635 = vmatmul.mubr.bf16.gmra.mxu0 %v3415
      %v3636 = vpop.f32.mrf.mxu0
      %v3637 = vadd.f32 %v3456, %v3636
      %v3638 = vpop.f32.mrf.mxu0
      %v3639 = vpop.f32.mrf.mxu0
      %v3640 = vadd.f32 %v3456, %v3639
      %v3641 = vpop.f32.mrf.mxu0
      %3642 = vmatprep.mubr.bf16.mxu0 %v3418
      %3643 = vmatmul.mubr.bf16.gmra.mxu0 %v3417
      %v3644 = vpop.f32.mrf.mxu0
      %v3645 = vadd.f32 %v3456, %v3644
      %v3646 = vpop.f32.mrf.mxu0
      %v3647 = vpop.f32.mrf.mxu0
      %v3648 = vadd.f32 %v3456, %v3647
      %v3649 = vpop.f32.mrf.mxu0
      %3650 = vdwg.mxu0
      %v3651 = vmul.f32 %v3589, %v3589
      %v3652 = vmul.f32 %v3592, %v3592
      %v3653 = vmul.f32 %v3597, %v3597
      %v3654 = vmul.f32 %v3600, %v3600
      %v3655 = vmul.f32 %v3605, %v3605
      %v3656 = vmul.f32 %v3608, %v3608
      %v3657 = vmul.f32 %v3613, %v3613
      %v3658 = vmul.f32 %v3616, %v3616
      %v3659 = vmul.f32 %v3621, %v3621
      %v3660 = vmul.f32 %v3624, %v3624
      %v3661 = vmul.f32 %v3629, %v3629
      %v3662 = vmul.f32 %v3632, %v3632
      %v3663 = vmul.f32 %v3637, %v3637
      %v3664 = vmul.f32 %v3640, %v3640
      %v3665 = vmul.f32 %v3645, %v3645
      %v3666 = vmul.f32 %v3648, %v3648
      %3683 = vrot.lane.b32.xlu0 %v3651, 64
      %v3684 = vpop.permute.xlu0 %3683
      %3685 = vrot.lane.b32.xlu0 %v3652, 64
      %v3686 = vpop.permute.xlu0 %3685
      %3687 = vrot.lane.b32.xlu0 %v3653, 64
      %v3688 = vpop.permute.xlu0 %3687
      %3689 = vrot.lane.b32.xlu0 %v3654, 64
      %v3690 = vpop.permute.xlu0 %3689
      %3691 = vrot.lane.b32.xlu0 %v3655, 64
      %v3692 = vpop.permute.xlu0 %3691
      %3693 = vrot.lane.b32.xlu0 %v3656, 64
      %v3694 = vpop.permute.xlu0 %3693
      %3695 = vrot.lane.b32.xlu0 %v3657, 64
      %v3696 = vpop.permute.xlu0 %3695
      %3697 = vrot.lane.b32.xlu0 %v3658, 64
      %v3698 = vpop.permute.xlu0 %3697
      %3699 = vrot.lane.b32.xlu0 %v3659, 64
      %v3700 = vpop.permute.xlu0 %3699
      %3701 = vrot.lane.b32.xlu0 %v3660, 64
      %v3702 = vpop.permute.xlu0 %3701
      %3703 = vrot.lane.b32.xlu0 %v3661, 64
      %v3704 = vpop.permute.xlu0 %3703
      %3705 = vrot.lane.b32.xlu0 %v3662, 64
      %v3706 = vpop.permute.xlu0 %3705
      %3707 = vrot.lane.b32.xlu0 %v3663, 64
      %v3708 = vpop.permute.xlu0 %3707
      %3709 = vrot.lane.b32.xlu0 %v3664, 64
      %v3710 = vpop.permute.xlu0 %3709
      %3711 = vrot.lane.b32.xlu0 %v3665, 64
      %v3712 = vpop.permute.xlu0 %3711
      %3713 = vrot.lane.b32.xlu0 %v3666, 64
      %v3714 = vpop.permute.xlu0 %3713
      %vm3731 = vcmask 23552
      %v3732 = vsel %vm3731, %v3684, 0.0
      %3733 = vadd.xlane.f32.xlu0 %v3732
      %v3734 = vpop.xlane.xlu0 %3733
      %v3735 = vsel %vm3731, %v3686, 0.0
      %3736 = vadd.xlane.f32.xlu0 %v3735
      %v3737 = vpop.xlane.xlu0 %3736
      %v3738 = vsel %vm3731, %v3688, 0.0
      %3739 = vadd.xlane.f32.xlu0 %v3738
      %v3740 = vpop.xlane.xlu0 %3739
      %v3741 = vsel %vm3731, %v3690, 0.0
      %3742 = vadd.xlane.f32.xlu0 %v3741
      %v3743 = vpop.xlane.xlu0 %3742
      %v3744 = vsel %vm3731, %v3692, 0.0
      %3745 = vadd.xlane.f32.xlu0 %v3744
      %v3746 = vpop.xlane.xlu0 %3745
      %v3747 = vsel %vm3731, %v3694, 0.0
      %3748 = vadd.xlane.f32.xlu0 %v3747
      %v3749 = vpop.xlane.xlu0 %3748
      %v3750 = vsel %vm3731, %v3696, 0.0
      %3751 = vadd.xlane.f32.xlu0 %v3750
      %v3752 = vpop.xlane.xlu0 %3751
      %v3753 = vsel %vm3731, %v3698, 0.0
      %3754 = vadd.xlane.f32.xlu0 %v3753
      %v3755 = vpop.xlane.xlu0 %3754
      %v3756 = vsel %vm3731, %v3700, 0.0
      %3757 = vadd.xlane.f32.xlu0 %v3756
      %v3758 = vpop.xlane.xlu0 %3757
      %v3759 = vsel %vm3731, %v3702, 0.0
      %3760 = vadd.xlane.f32.xlu0 %v3759
      %v3761 = vpop.xlane.xlu0 %3760
      %v3762 = vsel %vm3731, %v3704, 0.0
      %3763 = vadd.xlane.f32.xlu0 %v3762
      %v3764 = vpop.xlane.xlu0 %3763
      %v3765 = vsel %vm3731, %v3706, 0.0
      %3766 = vadd.xlane.f32.xlu0 %v3765
      %v3767 = vpop.xlane.xlu0 %3766
      %v3768 = vsel %vm3731, %v3708, 0.0
      %3769 = vadd.xlane.f32.xlu0 %v3768
      %v3770 = vpop.xlane.xlu0 %3769
      %v3771 = vsel %vm3731, %v3710, 0.0
      %3772 = vadd.xlane.f32.xlu0 %v3771
      %v3773 = vpop.xlane.xlu0 %3772
      %v3774 = vsel %vm3731, %v3712, 0.0
      %3775 = vadd.xlane.f32.xlu0 %v3774
      %v3776 = vpop.xlane.xlu0 %3775
      %v3777 = vsel %vm3731, %v3714, 0.0
      %3778 = vadd.xlane.f32.xlu0 %v3777
      %v3779 = vpop.xlane.xlu0 %3778
      %v3780 = vmax.f32 %v3734, 1e-24
      %v3781 = vmax.f32 %v3737, 1e-24
      %v3782 = vmax.f32 %v3740, 1e-24
      %v3783 = vmax.f32 %v3743, 1e-24
      %v3784 = vmax.f32 %v3746, 1e-24
      %v3785 = vmax.f32 %v3749, 1e-24
      %v3786 = vmax.f32 %v3752, 1e-24
      %v3787 = vmax.f32 %v3755, 1e-24
      %v3788 = vmax.f32 %v3758, 1e-24
      %v3789 = vmax.f32 %v3761, 1e-24
      %v3790 = vmax.f32 %v3764, 1e-24
      %v3791 = vmax.f32 %v3767, 1e-24
      %v3792 = vmax.f32 %v3770, 1e-24
      %v3793 = vmax.f32 %v3773, 1e-24
      %v3794 = vmax.f32 %v3776, 1e-24
      %v3795 = vmax.f32 %v3779, 1e-24
      %v3796 = vrsqrt.pop %v3780
      %v3797 = vrsqrt.pop %v3781
      %v3798 = vrsqrt.pop %v3782
      %v3799 = vrsqrt.pop %v3783
      %v3800 = vrsqrt.pop %v3784
      %v3801 = vrsqrt.pop %v3785
      %v3802 = vrsqrt.pop %v3786
      %v3803 = vrsqrt.pop %v3787
      %v3804 = vrsqrt.pop %v3788
      %v3805 = vrsqrt.pop %v3789
      %v3806 = vrsqrt.pop %v3790
      %v3807 = vrsqrt.pop %v3791
      %v3808 = vrsqrt.pop %v3792
      %v3809 = vrsqrt.pop %v3793
      %v3810 = vrsqrt.pop %v3794
      %v3811 = vrsqrt.pop %v3795
      %v3812 = vmul.f32 %v3589, %v3796
      %v3813 = vmul.f32 %v3592, %v3797
      %v3814 = vmul.f32 %v3597, %v3798
      %v3815 = vmul.f32 %v3600, %v3799
      %v3816 = vmul.f32 %v3605, %v3800
      %v3817 = vmul.f32 %v3608, %v3801
      %v3818 = vmul.f32 %v3613, %v3802
      %v3819 = vmul.f32 %v3616, %v3803
      %v3820 = vmul.f32 %v3621, %v3804
      %v3821 = vmul.f32 %v3624, %v3805
      %v3822 = vmul.f32 %v3629, %v3806
      %v3823 = vmul.f32 %v3632, %v3807
      %v3824 = vmul.f32 %v3637, %v3808
      %v3825 = vmul.f32 %v3640, %v3809
      %v3826 = vmul.f32 %v3645, %v3810
      %v3827 = vmul.f32 %v3648, %v3811
      %v3828 = vpack.c.bf16 %v3813, %v3812
      %v3829 = vpack.c.bf16 %v3815, %v3814
      %v3830 = vpack.c.bf16 %v3817, %v3816
      %v3831 = vpack.c.bf16 %v3819, %v3818
      %v3832 = vpack.c.bf16 %v3821, %v3820
      %v3833 = vpack.c.bf16 %v3823, %v3822
      %v3834 = vpack.c.bf16 %v3825, %v3824
      %v3835 = vpack.c.bf16 %v3827, %v3826
      %v3836 = vpack.c.bf16 %v3592, %v3589
      %v3837 = vpack.c.bf16 %v3600, %v3597
      %v3838 = vpack.c.bf16 %v3608, %v3605
      %v3839 = vpack.c.bf16 %v3616, %v3613
      %v3840 = vpack.c.bf16 %v3624, %v3621
      %v3841 = vpack.c.bf16 %v3632, %v3629
      %v3842 = vpack.c.bf16 %v3640, %v3637
      %v3843 = vpack.c.bf16 %v3648, %v3645
      %3852 = vrot.lane.b32.xlu0 %v3828, 88
      %v3853 = vpop.permute.xlu0 %3852
      %3854 = vrot.lane.b32.xlu0 %v3829, 88
      %v3855 = vpop.permute.xlu0 %3854
      %3856 = vrot.lane.b32.xlu0 %v3830, 88
      %v3857 = vpop.permute.xlu0 %3856
      %3858 = vrot.lane.b32.xlu0 %v3831, 88
      %v3859 = vpop.permute.xlu0 %3858
      %3860 = vrot.lane.b32.xlu0 %v3832, 88
      %v3861 = vpop.permute.xlu0 %3860
      %3862 = vrot.lane.b32.xlu0 %v3833, 88
      %v3863 = vpop.permute.xlu0 %3862
      %3864 = vrot.lane.b32.xlu0 %v3834, 88
      %v3865 = vpop.permute.xlu0 %3864
      %3866 = vrot.lane.b32.xlu0 %v3835, 88
      %v3867 = vpop.permute.xlu0 %3866
      %3876 = vrot.lane.b32.xlu0 %v3836, 27
      %v3877 = vpop.permute.xlu0 %3876
      %3878 = vrot.lane.b32.xlu0 %v3837, 27
      %v3879 = vpop.permute.xlu0 %3878
      %3880 = vrot.lane.b32.xlu0 %v3838, 27
      %v3881 = vpop.permute.xlu0 %3880
      %3882 = vrot.lane.b32.xlu0 %v3839, 27
      %v3883 = vpop.permute.xlu0 %3882
      %3884 = vrot.lane.b32.xlu0 %v3840, 27
      %v3885 = vpop.permute.xlu0 %3884
      %3886 = vrot.lane.b32.xlu0 %v3841, 27
      %v3887 = vpop.permute.xlu0 %3886
      %3888 = vrot.lane.b32.xlu0 %v3842, 27
      %v3889 = vpop.permute.xlu0 %3888
      %3890 = vrot.lane.b32.xlu0 %v3843, 27
      %v3891 = vpop.permute.xlu0 %3890
      %vm3892 = vcmask 195584
      %v3894 = vsel %vm3892, %v610, %v3853
      %v3896 = vsel %vm3892, %v611, %v3855
      %v3898 = vsel %vm3892, %v612, %v3857
      %v3900 = vsel %vm3892, %v613, %v3859
      %v3902 = vsel %vm3892, %v614, %v3861
      %v3904 = vsel %vm3892, %v615, %v3863
      %v3906 = vsel %vm3892, %v616, %v3865
      %v3908 = vsel %vm3892, %v617, %v3867
      %vm3909 = vcmask 220160
      %v3911 = vsel %vm3909, %v3894, %v3877
      %v3913 = vsel %vm3909, %v3896, %v3879
      %v3915 = vsel %vm3909, %v3898, %v3881
      %v3917 = vsel %vm3909, %v3900, %v3883
      %v3919 = vsel %vm3909, %v3902, %v3885
      %v3921 = vsel %vm3909, %v3904, %v3887
      %v3923 = vsel %vm3909, %v3906, %v3889
      %v3925 = vsel %vm3909, %v3908, %v3891
      %v3926 = vld [vmem:[%s11] sm:$0xf]
      %v3927 = vld [vmem:[%s11 + $0x4] sm:$0xf]
      %v3928 = vld [vmem:[%s11 + $0x8] sm:$0xf]
      %v3929 = vld [vmem:[%s11 + $0xc] sm:$0xf]
      %v3930 = vld [vmem:[%s11 + $0x10] sm:$0xf]
      %v3931 = vld [vmem:[%s11 + $0x14] sm:$0xf]
      %v3932 = vld [vmem:[%s11 + $0x18] sm:$0xf]
      %v3933 = vld [vmem:[%s11 + $0x1c] sm:$0xf]
      %v3934 = vld [vmem:[%s11 + $0x20] sm:$0xf]
      %v3935 = vld [vmem:[%s11 + $0x24] sm:$0xf]
      %v3936 = vld [vmem:[%s11 + $0x28] sm:$0xf]
      %v3937 = vld [vmem:[%s11 + $0x2c] sm:$0x3]
      %v3938 = vld [vmem:[%s12] sm:$0x1]
      %v3940 = vlaneseq
      %v3941 = vshrl.u32 %v3940, 7
      %v3942 = vsub.s32 0, %v3941
      %v3943 = vrot.slane %v3938, %v3942
      %v3957 = vunpack.c.l.b16 %v3926
      %v3958 = vunpack.c.l.b16 %v3927
      %v3959 = vunpack.c.l.b16 %v3928
      %v3960 = vunpack.c.l.b16 %v3929
      %v3961 = vunpack.c.l.b16 %v3930
      %v3962 = vunpack.c.l.b16 %v3931
      %v3963 = vunpack.c.l.b16 %v3932
      %v3964 = vunpack.c.l.b16 %v3933
      %v3965 = vunpack.c.l.b16 %v3934
      %v3966 = vunpack.c.l.b16 %v3935
      %v3967 = vunpack.c.l.b16 %v3936
      %v3968 = vunpack.c.l.b16 %v3937
      %v3969 = vpack.c.b16 %v3958, %v3957
      %v3970 = vpack.c.b16 %v3960, %v3959
      %v3971 = vpack.c.b16 %v3962, %v3961
      %v3972 = vpack.c.b16 %v3964, %v3963
      %v3973 = vpack.c.b16 %v3966, %v3965
      %v3974 = vpack.c.b16 %v3968, %v3967
      %vm3980 = vcmask 744448
      %v3981 = vsel %vm3980, %v3911, 0
      %v3983 = vsel %vm3980, %v3913, 0
      %v3985 = vsel %vm3980, %v3915, 0
      %v3987 = vsel %vm3980, %v3917, 0
      %v3989 = vsel %vm3980, %v3919, 0
      %v3991 = vsel %vm3980, %v3921, 0
      %v3993 = vsel %vm3980, %v3923, 0
      %v3995 = vsel %vm3980, %v3925, 0
      %vm3997 = vcmask 1044480
      %vm3998 = vcmask 1045504
      %v3999 = vsel %vm3997, 4294967295, 65535
      %v4000 = vsel %vm3998, %v3999, 0
      %v4002 = vand.u32 %v3974, %v4000
      %4004 = vmatprep.subr.bf16.mxu0 0
      %4005 = vmatpush1.bf16.msra.mxu0 0
      %4006 = vmatprep.subr.bf16.mxu0 0
      %4007 = vmatpush1.bf16.msra.mxu0 0
      %4008 = vmatprep.subr.bf16.mxu0 0
      %4009 = vmatpush1.bf16.msra.mxu0 %v4002
      %4010 = vmatprep.subr.bf16.mxu0 0
      %4011 = vmatpush1.bf16.msra.mxu0 %v3973
      %4012 = vmatprep.subr.bf16.mxu0 0
      %4013 = vmatpush1.bf16.msra.mxu0 %v3972
      %4014 = vmatprep.subr.bf16.mxu0 0
      %4015 = vmatpush1.bf16.msra.mxu0 %v3971
      %4016 = vmatprep.subr.bf16.mxu0 0
      %4017 = vmatpush1.bf16.msra.mxu0 %v3970
      %4018 = vmatprep.subr.bf16.mxu0 0
      %4019 = vmatpush1.bf16.msra.mxu0 %v3969
      %4020 = vmatprep.subr.bf16.mxu0 0
      %4021 = vmatpush2.bf16.msra.mxu0 0
      %4022 = vmatprep.subr.bf16.mxu0 0
      %4023 = vmatpush2.bf16.msra.mxu0 0
      %4024 = vmatprep.subr.bf16.mxu0 0
      %4025 = vmatpush2.bf16.msra.mxu0 0
      %4026 = vmatprep.subr.bf16.mxu0 0
      %4027 = vmatpush2.bf16.msra.mxu0 0
      %4028 = vmatprep.subr.bf16.mxu0 0
      %4029 = vmatpush2.bf16.msra.mxu0 0
      %4030 = vmatprep.subr.bf16.mxu0 0
      %4031 = vmatpush2.bf16.msra.mxu0 0
      %4032 = vmatprep.subr.bf16.mxu0 0
      %4033 = vmatpush2.bf16.msra.mxu0 0
      %4034 = vmatprep.subr.bf16.mxu0 0
      %4035 = vmatpush2.bf16.msra.mxu0 0
      %4036 = vmatprep.mubr.bf16.mxu0 0
      %4037 = vmatmul.mubr.bf16.gmra.mxu0 %v3981
      %v4038 = vpop.f32.mrf.mxu0
      %v4039 = vadd.f32 %v3943, %v4038
      %v4040 = vpop.f32.mrf.mxu0
      %v4041 = vpop.f32.mrf.mxu0
      %v4042 = vadd.f32 %v3943, %v4041
      %v4043 = vpop.f32.mrf.mxu0
      %4044 = vmatprep.mubr.bf16.mxu0 0
      %4045 = vmatmul.mubr.bf16.gmra.mxu0 %v3983
      %v4046 = vpop.f32.mrf.mxu0
      %v4047 = vadd.f32 %v3943, %v4046
      %v4048 = vpop.f32.mrf.mxu0
      %v4049 = vpop.f32.mrf.mxu0
      %v4050 = vadd.f32 %v3943, %v4049
      %v4051 = vpop.f32.mrf.mxu0
      %4052 = vmatprep.mubr.bf16.mxu0 0
      %4053 = vmatmul.mubr.bf16.gmra.mxu0 %v3985
      %v4054 = vpop.f32.mrf.mxu0
      %v4055 = vadd.f32 %v3943, %v4054
      %v4056 = vpop.f32.mrf.mxu0
      %v4057 = vpop.f32.mrf.mxu0
      %v4058 = vadd.f32 %v3943, %v4057
      %v4059 = vpop.f32.mrf.mxu0
      %4060 = vmatprep.mubr.bf16.mxu0 0
      %4061 = vmatmul.mubr.bf16.gmra.mxu0 %v3987
      %v4062 = vpop.f32.mrf.mxu0
      %v4063 = vadd.f32 %v3943, %v4062
      %v4064 = vpop.f32.mrf.mxu0
      %v4065 = vpop.f32.mrf.mxu0
      %v4066 = vadd.f32 %v3943, %v4065
      %v4067 = vpop.f32.mrf.mxu0
      %4068 = vmatprep.mubr.bf16.mxu0 0
      %4069 = vmatmul.mubr.bf16.gmra.mxu0 %v3989
      %v4070 = vpop.f32.mrf.mxu0
      %v4071 = vadd.f32 %v3943, %v4070
      %v4072 = vpop.f32.mrf.mxu0
      %v4073 = vpop.f32.mrf.mxu0
      %v4074 = vadd.f32 %v3943, %v4073
      %v4075 = vpop.f32.mrf.mxu0
      %4076 = vmatprep.mubr.bf16.mxu0 0
      %4077 = vmatmul.mubr.bf16.gmra.mxu0 %v3991
      %v4078 = vpop.f32.mrf.mxu0
      %v4079 = vadd.f32 %v3943, %v4078
      %v4080 = vpop.f32.mrf.mxu0
      %v4081 = vpop.f32.mrf.mxu0
      %v4082 = vadd.f32 %v3943, %v4081
      %v4083 = vpop.f32.mrf.mxu0
      %4084 = vmatprep.mubr.bf16.mxu0 0
      %4085 = vmatmul.mubr.bf16.gmra.mxu0 %v3993
      %v4086 = vpop.f32.mrf.mxu0
      %v4087 = vadd.f32 %v3943, %v4086
      %v4088 = vpop.f32.mrf.mxu0
      %v4089 = vpop.f32.mrf.mxu0
      %v4090 = vadd.f32 %v3943, %v4089
      %v4091 = vpop.f32.mrf.mxu0
      %4092 = vmatprep.mubr.bf16.mxu0 0
      %4093 = vmatmul.mubr.bf16.gmra.mxu0 %v3995
      %v4094 = vpop.f32.mrf.mxu0
      %v4095 = vadd.f32 %v3943, %v4094
      %v4096 = vpop.f32.mrf.mxu0
      %v4097 = vpop.f32.mrf.mxu0
      %v4098 = vadd.f32 %v3943, %v4097
      %v4099 = vpop.f32.mrf.mxu0
      %4100 = vdwg.mxu0
      %v4101 = vmax.f32 %v4039, 0.0
      %v4102 = vmax.f32 %v4042, 0.0
      %v4103 = vmax.f32 %v4047, 0.0
      %v4104 = vmax.f32 %v4050, 0.0
      %v4105 = vmax.f32 %v4055, 0.0
      %v4106 = vmax.f32 %v4058, 0.0
      %v4107 = vmax.f32 %v4063, 0.0
      %v4108 = vmax.f32 %v4066, 0.0
      %v4109 = vmax.f32 %v4071, 0.0
      %v4110 = vmax.f32 %v4074, 0.0
      %v4111 = vmax.f32 %v4079, 0.0
      %v4112 = vmax.f32 %v4082, 0.0
      %v4113 = vmax.f32 %v4087, 0.0
      %v4114 = vmax.f32 %v4090, 0.0
      %v4115 = vmax.f32 %v4095, 0.0
      %v4116 = vmax.f32 %v4098, 0.0
      %v4117 = vpack.c.bf16 %v4102, %v4101
      %v4118 = vpack.c.bf16 %v4104, %v4103
      %v4119 = vpack.c.bf16 %v4106, %v4105
      %v4120 = vpack.c.bf16 %v4108, %v4107
      %v4121 = vpack.c.bf16 %v4110, %v4109
      %v4122 = vpack.c.bf16 %v4112, %v4111
      %v4123 = vpack.c.bf16 %v4114, %v4113
      %v4124 = vpack.c.bf16 %v4116, %v4115
      %v4125 = vld [vmem:[%s13] sm:$0xf]
      %v4126 = vld [vmem:[%s13 + $0x4] sm:$0xf]
      %v4127 = vld [vmem:[%s13 + $0x8] sm:$0xf]
      %v4128 = vld [vmem:[%s13 + $0xc] sm:$0xf]
      %v4129 = vld [vmem:[%s13 + $0x10] sm:$0xf]
      %v4130 = vld [vmem:[%s13 + $0x14] sm:$0xf]
      %v4131 = vld [vmem:[%s13 + $0x18] sm:$0xf]
      %v4132 = vld [vmem:[%s13 + $0x1c] sm:$0xf]
      %v4133 = vld [vmem:[%s14] sm:$0x1]
      %v4135 = vlaneseq
      %v4136 = vshrl.u32 %v4135, 7
      %v4137 = vsub.s32 0, %v4136
      %v4138 = vrot.slane %v4133, %v4137
      %v4148 = vunpack.c.l.b16 %v4125
      %v4149 = vunpack.c.l.b16 %v4126
      %v4150 = vunpack.c.l.b16 %v4127
      %v4151 = vunpack.c.l.b16 %v4128
      %v4152 = vunpack.c.l.b16 %v4129
      %v4153 = vunpack.c.l.b16 %v4130
      %v4154 = vunpack.c.l.b16 %v4131
      %v4155 = vunpack.c.l.b16 %v4132
      %v4156 = vpack.c.b16 %v4149, %v4148
      %v4157 = vpack.c.b16 %v4151, %v4150
      %v4158 = vpack.c.b16 %v4153, %v4152
      %v4159 = vpack.c.b16 %v4155, %v4154
      %v4165 = vsel %vm1186, %v4117, 0
      %v4168 = vsel %vm1186, %v4118, 0
      %v4171 = vsel %vm1186, %v4119, 0
      %v4174 = vsel %vm1186, %v4120, 0
      %v4177 = vsel %vm1186, %v4121, 0
      %v4180 = vsel %vm1186, %v4122, 0
      %v4183 = vsel %vm1186, %v4123, 0
      %v4186 = vsel %vm1186, %v4124, 0
      %4188 = vmatprep.subr.bf16.mxu0 0
      %4189 = vmatpush1.bf16.msra.mxu0 0
      %4190 = vmatprep.subr.bf16.mxu0 0
      %4191 = vmatpush1.bf16.msra.mxu0 0
      %4192 = vmatprep.subr.bf16.mxu0 0
      %4193 = vmatpush1.bf16.msra.mxu0 0
      %4194 = vmatprep.subr.bf16.mxu0 0
      %4195 = vmatpush1.bf16.msra.mxu0 0
      %4196 = vmatprep.subr.bf16.mxu0 0
      %4197 = vmatpush1.bf16.msra.mxu0 %v4159
      %4198 = vmatprep.subr.bf16.mxu0 0
      %4199 = vmatpush1.bf16.msra.mxu0 %v4158
      %4200 = vmatprep.subr.bf16.mxu0 0
      %4201 = vmatpush1.bf16.msra.mxu0 %v4157
      %4202 = vmatprep.subr.bf16.mxu0 0
      %4203 = vmatpush1.bf16.msra.mxu0 %v4156
      %4204 = vmatprep.subr.bf16.mxu0 0
      %4205 = vmatpush2.bf16.msra.mxu0 0
      %4206 = vmatprep.subr.bf16.mxu0 0
      %4207 = vmatpush2.bf16.msra.mxu0 0
      %4208 = vmatprep.subr.bf16.mxu0 0
      %4209 = vmatpush2.bf16.msra.mxu0 0
      %4210 = vmatprep.subr.bf16.mxu0 0
      %4211 = vmatpush2.bf16.msra.mxu0 0
      %4212 = vmatprep.subr.bf16.mxu0 0
      %4213 = vmatpush2.bf16.msra.mxu0 0
      %4214 = vmatprep.subr.bf16.mxu0 0
      %4215 = vmatpush2.bf16.msra.mxu0 0
      %4216 = vmatprep.subr.bf16.mxu0 0
      %4217 = vmatpush2.bf16.msra.mxu0 0
      %4218 = vmatprep.subr.bf16.mxu0 0
      %4219 = vmatpush2.bf16.msra.mxu0 0
      %4220 = vmatprep.mubr.bf16.mxu0 0
      %4221 = vmatmul.mubr.bf16.gmra.mxu0 %v4165
      %v4222 = vpop.f32.mrf.mxu0
      %v4223 = vadd.f32 %v4138, %v4222
      %v4224 = vpop.f32.mrf.mxu0
      %v4225 = vpop.f32.mrf.mxu0
      %v4226 = vadd.f32 %v4138, %v4225
      %v4227 = vpop.f32.mrf.mxu0
      %4228 = vmatprep.mubr.bf16.mxu0 0
      %4229 = vmatmul.mubr.bf16.gmra.mxu0 %v4168
      %v4230 = vpop.f32.mrf.mxu0
      %v4231 = vadd.f32 %v4138, %v4230
      %v4232 = vpop.f32.mrf.mxu0
      %v4233 = vpop.f32.mrf.mxu0
      %v4234 = vadd.f32 %v4138, %v4233
      %v4235 = vpop.f32.mrf.mxu0
      %4236 = vmatprep.mubr.bf16.mxu0 0
      %4237 = vmatmul.mubr.bf16.gmra.mxu0 %v4171
      %v4238 = vpop.f32.mrf.mxu0
      %v4239 = vadd.f32 %v4138, %v4238
      %v4240 = vpop.f32.mrf.mxu0
      %v4241 = vpop.f32.mrf.mxu0
      %v4242 = vadd.f32 %v4138, %v4241
      %v4243 = vpop.f32.mrf.mxu0
      %4244 = vmatprep.mubr.bf16.mxu0 0
      %4245 = vmatmul.mubr.bf16.gmra.mxu0 %v4174
      %v4246 = vpop.f32.mrf.mxu0
      %v4247 = vadd.f32 %v4138, %v4246
      %v4248 = vpop.f32.mrf.mxu0
      %v4249 = vpop.f32.mrf.mxu0
      %v4250 = vadd.f32 %v4138, %v4249
      %v4251 = vpop.f32.mrf.mxu0
      %4252 = vmatprep.mubr.bf16.mxu0 0
      %4253 = vmatmul.mubr.bf16.gmra.mxu0 %v4177
      %v4254 = vpop.f32.mrf.mxu0
      %v4255 = vadd.f32 %v4138, %v4254
      %v4256 = vpop.f32.mrf.mxu0
      %v4257 = vpop.f32.mrf.mxu0
      %v4258 = vadd.f32 %v4138, %v4257
      %v4259 = vpop.f32.mrf.mxu0
      %4260 = vmatprep.mubr.bf16.mxu0 0
      %4261 = vmatmul.mubr.bf16.gmra.mxu0 %v4180
      %v4262 = vpop.f32.mrf.mxu0
      %v4263 = vadd.f32 %v4138, %v4262
      %v4264 = vpop.f32.mrf.mxu0
      %v4265 = vpop.f32.mrf.mxu0
      %v4266 = vadd.f32 %v4138, %v4265
      %v4267 = vpop.f32.mrf.mxu0
      %4268 = vmatprep.mubr.bf16.mxu0 0
      %4269 = vmatmul.mubr.bf16.gmra.mxu0 %v4183
      %v4270 = vpop.f32.mrf.mxu0
      %v4271 = vadd.f32 %v4138, %v4270
      %v4272 = vpop.f32.mrf.mxu0
      %v4273 = vpop.f32.mrf.mxu0
      %v4274 = vadd.f32 %v4138, %v4273
      %v4275 = vpop.f32.mrf.mxu0
      %4276 = vmatprep.mubr.bf16.mxu0 0
      %4277 = vmatmul.mubr.bf16.gmra.mxu0 %v4186
      %v4278 = vpop.f32.mrf.mxu0
      %v4279 = vadd.f32 %v4138, %v4278
      %v4280 = vpop.f32.mrf.mxu0
      %v4281 = vpop.f32.mrf.mxu0
      %v4282 = vadd.f32 %v4138, %v4281
      %v4283 = vpop.f32.mrf.mxu0
      %4284 = vdwg.mxu0
      %v4285 = vmax.f32 %v4223, 0.0
      %v4286 = vmax.f32 %v4226, 0.0
      %v4287 = vmax.f32 %v4231, 0.0
      %v4288 = vmax.f32 %v4234, 0.0
      %v4289 = vmax.f32 %v4239, 0.0
      %v4290 = vmax.f32 %v4242, 0.0
      %v4291 = vmax.f32 %v4247, 0.0
      %v4292 = vmax.f32 %v4250, 0.0
      %v4293 = vmax.f32 %v4255, 0.0
      %v4294 = vmax.f32 %v4258, 0.0
      %v4295 = vmax.f32 %v4263, 0.0
      %v4296 = vmax.f32 %v4266, 0.0
      %v4297 = vmax.f32 %v4271, 0.0
      %v4298 = vmax.f32 %v4274, 0.0
      %v4299 = vmax.f32 %v4279, 0.0
      %v4300 = vmax.f32 %v4282, 0.0
      %v4301 = vpack.c.bf16 %v4286, %v4285
      %v4302 = vpack.c.bf16 %v4288, %v4287
      %v4303 = vpack.c.bf16 %v4290, %v4289
      %v4304 = vpack.c.bf16 %v4292, %v4291
      %v4305 = vpack.c.bf16 %v4294, %v4293
      %v4306 = vpack.c.bf16 %v4296, %v4295
      %v4307 = vpack.c.bf16 %v4298, %v4297
      %v4308 = vpack.c.bf16 %v4300, %v4299
      %v4309 = vld [vmem:[%s15] sm:$0xf]
      %v4310 = vld [vmem:[%s15 + $0x4] sm:$0xf]
      %v4311 = vld [vmem:[%s15 + $0x8] sm:$0xf]
      %v4312 = vld [vmem:[%s15 + $0xc] sm:$0xf]
      %v4313 = vld [vmem:[%s15 + $0x10] sm:$0xf]
      %v4314 = vld [vmem:[%s15 + $0x14] sm:$0xf]
      %v4315 = vld [vmem:[%s15 + $0x18] sm:$0xf]
      %v4316 = vld [vmem:[%s15 + $0x1c] sm:$0xf]
      %v4317 = vld [vmem:[%s16] sm:$0x1]
      %v4319 = vlaneseq
      %v4320 = vshrl.u32 %v4319, 7
      %v4321 = vsub.s32 0, %v4320
      %v4322 = vrot.slane %v4317, %v4321
      %v4332 = vunpack.c.l.b16 %v4309
      %v4333 = vunpack.c.l.b16 %v4310
      %v4334 = vunpack.c.l.b16 %v4311
      %v4335 = vunpack.c.l.b16 %v4312
      %v4336 = vunpack.c.l.b16 %v4313
      %v4337 = vunpack.c.l.b16 %v4314
      %v4338 = vunpack.c.l.b16 %v4315
      %v4339 = vunpack.c.l.b16 %v4316
      %v4340 = vpack.c.b16 %v4333, %v4332
      %v4341 = vpack.c.b16 %v4335, %v4334
      %v4342 = vpack.c.b16 %v4337, %v4336
      %v4343 = vpack.c.b16 %v4339, %v4338
      %v4349 = vsel %vm1186, %v4301, 0
      %v4352 = vsel %vm1186, %v4302, 0
      %v4355 = vsel %vm1186, %v4303, 0
      %v4358 = vsel %vm1186, %v4304, 0
      %v4361 = vsel %vm1186, %v4305, 0
      %v4364 = vsel %vm1186, %v4306, 0
      %v4367 = vsel %vm1186, %v4307, 0
      %v4370 = vsel %vm1186, %v4308, 0
      %4372 = vmatprep.subr.bf16.mxu0 0
      %4373 = vmatpush1.bf16.msra.mxu0 0
      %4374 = vmatprep.subr.bf16.mxu0 0
      %4375 = vmatpush1.bf16.msra.mxu0 0
      %4376 = vmatprep.subr.bf16.mxu0 0
      %4377 = vmatpush1.bf16.msra.mxu0 0
      %4378 = vmatprep.subr.bf16.mxu0 0
      %4379 = vmatpush1.bf16.msra.mxu0 0
      %4380 = vmatprep.subr.bf16.mxu0 0
      %4381 = vmatpush1.bf16.msra.mxu0 %v4343
      %4382 = vmatprep.subr.bf16.mxu0 0
      %4383 = vmatpush1.bf16.msra.mxu0 %v4342
      %4384 = vmatprep.subr.bf16.mxu0 0
      %4385 = vmatpush1.bf16.msra.mxu0 %v4341
      %4386 = vmatprep.subr.bf16.mxu0 0
      %4387 = vmatpush1.bf16.msra.mxu0 %v4340
      %4388 = vmatprep.subr.bf16.mxu0 0
      %4389 = vmatpush2.bf16.msra.mxu0 0
      %4390 = vmatprep.subr.bf16.mxu0 0
      %4391 = vmatpush2.bf16.msra.mxu0 0
      %4392 = vmatprep.subr.bf16.mxu0 0
      %4393 = vmatpush2.bf16.msra.mxu0 0
      %4394 = vmatprep.subr.bf16.mxu0 0
      %4395 = vmatpush2.bf16.msra.mxu0 0
      %4396 = vmatprep.subr.bf16.mxu0 0
      %4397 = vmatpush2.bf16.msra.mxu0 0
      %4398 = vmatprep.subr.bf16.mxu0 0
      %4399 = vmatpush2.bf16.msra.mxu0 0
      %4400 = vmatprep.subr.bf16.mxu0 0
      %4401 = vmatpush2.bf16.msra.mxu0 0
      %4402 = vmatprep.subr.bf16.mxu0 0
      %4403 = vmatpush2.bf16.msra.mxu0 0
      %4404 = vmatprep.mubr.bf16.mxu0 0
      %4405 = vmatmul.mubr.bf16.gmra.mxu0 %v4349
      %v4406 = vpop.f32.mrf.mxu0
      %v4407 = vadd.f32 %v4322, %v4406
      %v4408 = vpop.f32.mrf.mxu0
      %v4409 = vpop.f32.mrf.mxu0
      %v4410 = vadd.f32 %v4322, %v4409
      %v4411 = vpop.f32.mrf.mxu0
      %4412 = vmatprep.mubr.bf16.mxu0 0
      %4413 = vmatmul.mubr.bf16.gmra.mxu0 %v4352
      %v4414 = vpop.f32.mrf.mxu0
      %v4415 = vadd.f32 %v4322, %v4414
      %v4416 = vpop.f32.mrf.mxu0
      %v4417 = vpop.f32.mrf.mxu0
      %v4418 = vadd.f32 %v4322, %v4417
      %v4419 = vpop.f32.mrf.mxu0
      %4420 = vmatprep.mubr.bf16.mxu0 0
      %4421 = vmatmul.mubr.bf16.gmra.mxu0 %v4355
      %v4422 = vpop.f32.mrf.mxu0
      %v4423 = vadd.f32 %v4322, %v4422
      %v4424 = vpop.f32.mrf.mxu0
      %v4425 = vpop.f32.mrf.mxu0
      %v4426 = vadd.f32 %v4322, %v4425
      %v4427 = vpop.f32.mrf.mxu0
      %4428 = vmatprep.mubr.bf16.mxu0 0
      %4429 = vmatmul.mubr.bf16.gmra.mxu0 %v4358
      %v4430 = vpop.f32.mrf.mxu0
      %v4431 = vadd.f32 %v4322, %v4430
      %v4432 = vpop.f32.mrf.mxu0
      %v4433 = vpop.f32.mrf.mxu0
      %v4434 = vadd.f32 %v4322, %v4433
      %v4435 = vpop.f32.mrf.mxu0
      %4436 = vmatprep.mubr.bf16.mxu0 0
      %4437 = vmatmul.mubr.bf16.gmra.mxu0 %v4361
      %v4438 = vpop.f32.mrf.mxu0
      %v4439 = vadd.f32 %v4322, %v4438
      %v4440 = vpop.f32.mrf.mxu0
      %v4441 = vpop.f32.mrf.mxu0
      %v4442 = vadd.f32 %v4322, %v4441
      %v4443 = vpop.f32.mrf.mxu0
      %4444 = vmatprep.mubr.bf16.mxu0 0
      %4445 = vmatmul.mubr.bf16.gmra.mxu0 %v4364
      %v4446 = vpop.f32.mrf.mxu0
      %v4447 = vadd.f32 %v4322, %v4446
      %v4448 = vpop.f32.mrf.mxu0
      %v4449 = vpop.f32.mrf.mxu0
      %v4450 = vadd.f32 %v4322, %v4449
      %v4451 = vpop.f32.mrf.mxu0
      %4452 = vmatprep.mubr.bf16.mxu0 0
      %4453 = vmatmul.mubr.bf16.gmra.mxu0 %v4367
      %v4454 = vpop.f32.mrf.mxu0
      %v4455 = vadd.f32 %v4322, %v4454
      %v4456 = vpop.f32.mrf.mxu0
      %v4457 = vpop.f32.mrf.mxu0
      %v4458 = vadd.f32 %v4322, %v4457
      %v4459 = vpop.f32.mrf.mxu0
      %4460 = vmatprep.mubr.bf16.mxu0 0
      %4461 = vmatmul.mubr.bf16.gmra.mxu0 %v4370
      %v4462 = vpop.f32.mrf.mxu0
      %v4463 = vadd.f32 %v4322, %v4462
      %v4464 = vpop.f32.mrf.mxu0
      %v4465 = vpop.f32.mrf.mxu0
      %v4466 = vadd.f32 %v4322, %v4465
      %v4467 = vpop.f32.mrf.mxu0
      %4468 = vdwg.mxu0
      %v4469 = vand.u32 2147483647, %v4407
      %v4470 = vand.u32 2147483647, %v4410
      %v4471 = vand.u32 2147483647, %v4415
      %v4472 = vand.u32 2147483647, %v4418
      %v4473 = vand.u32 2147483647, %v4423
      %v4474 = vand.u32 2147483647, %v4426
      %v4475 = vand.u32 2147483647, %v4431
      %v4476 = vand.u32 2147483647, %v4434
      %v4477 = vand.u32 2147483647, %v4439
      %v4478 = vand.u32 2147483647, %v4442
      %v4479 = vand.u32 2147483647, %v4447
      %v4480 = vand.u32 2147483647, %v4450
      %v4481 = vand.u32 2147483647, %v4455
      %v4482 = vand.u32 2147483647, %v4458
      %v4483 = vand.u32 2147483647, %v4463
      %v4484 = vand.u32 2147483647, %v4466
      %v4485 = vsub.f32 0.0, %v4469
      %v4486 = vsub.f32 0.0, %v4470
      %v4487 = vsub.f32 0.0, %v4471
      %v4488 = vsub.f32 0.0, %v4472
      %v4489 = vsub.f32 0.0, %v4473
      %v4490 = vsub.f32 0.0, %v4474
      %v4491 = vsub.f32 0.0, %v4475
      %v4492 = vsub.f32 0.0, %v4476
      %v4493 = vsub.f32 0.0, %v4477
      %v4494 = vsub.f32 0.0, %v4478
      %v4495 = vsub.f32 0.0, %v4479
      %v4496 = vsub.f32 0.0, %v4480
      %v4497 = vsub.f32 0.0, %v4481
      %v4498 = vsub.f32 0.0, %v4482
      %v4499 = vsub.f32 0.0, %v4483
      %v4500 = vsub.f32 0.0, %v4484
      %v4501 = vmul.f32 %v4485, 1.442695
      %v4502 = vpow.pop %v4501
      %v4503 = vmul.f32 %v4486, 1.442695
      %v4504 = vpow.pop %v4503
      %v4505 = vmul.f32 %v4487, 1.442695
      %v4506 = vpow.pop %v4505
      %v4507 = vmul.f32 %v4488, 1.442695
      %v4508 = vpow.pop %v4507
      %v4509 = vmul.f32 %v4489, 1.442695
      %v4510 = vpow.pop %v4509
      %v4511 = vmul.f32 %v4490, 1.442695
      %v4512 = vpow.pop %v4511
      %v4513 = vmul.f32 %v4491, 1.442695
      %v4514 = vpow.pop %v4513
      %v4515 = vmul.f32 %v4492, 1.442695
      %v4516 = vpow.pop %v4515
      %v4517 = vmul.f32 %v4493, 1.442695
      %v4518 = vpow.pop %v4517
      %v4519 = vmul.f32 %v4494, 1.442695
      %v4520 = vpow.pop %v4519
      %v4521 = vmul.f32 %v4495, 1.442695
      %v4522 = vpow.pop %v4521
      %v4523 = vmul.f32 %v4496, 1.442695
      %v4524 = vpow.pop %v4523
      %v4525 = vmul.f32 %v4497, 1.442695
      %v4526 = vpow.pop %v4525
      %v4527 = vmul.f32 %v4498, 1.442695
      %v4528 = vpow.pop %v4527
      %v4529 = vmul.f32 %v4499, 1.442695
      %v4530 = vpow.pop %v4529
      %v4531 = vmul.f32 %v4500, 1.442695
      %v4532 = vpow.pop %v4531
      %vm4533 = vcmp.ge.f32.partialorder %v4407, 0.0
      %vm4534 = vcmp.ge.f32.partialorder %v4410, 0.0
      %vm4535 = vcmp.ge.f32.partialorder %v4415, 0.0
      %vm4536 = vcmp.ge.f32.partialorder %v4418, 0.0
      %vm4537 = vcmp.ge.f32.partialorder %v4423, 0.0
      %vm4538 = vcmp.ge.f32.partialorder %v4426, 0.0
      %vm4539 = vcmp.ge.f32.partialorder %v4431, 0.0
      %vm4540 = vcmp.ge.f32.partialorder %v4434, 0.0
      %vm4541 = vcmp.ge.f32.partialorder %v4439, 0.0
      %vm4542 = vcmp.ge.f32.partialorder %v4442, 0.0
      %vm4543 = vcmp.ge.f32.partialorder %v4447, 0.0
      %vm4544 = vcmp.ge.f32.partialorder %v4450, 0.0
      %vm4545 = vcmp.ge.f32.partialorder %v4455, 0.0
      %vm4546 = vcmp.ge.f32.partialorder %v4458, 0.0
      %vm4547 = vcmp.ge.f32.partialorder %v4463, 0.0
      %vm4548 = vcmp.ge.f32.partialorder %v4466, 0.0
      %v4549 = vsel %vm4533, 1.0, %v4502
      %v4550 = vsel %vm4534, 1.0, %v4504
      %v4551 = vsel %vm4535, 1.0, %v4506
      %v4552 = vsel %vm4536, 1.0, %v4508
      %v4553 = vsel %vm4537, 1.0, %v4510
      %v4554 = vsel %vm4538, 1.0, %v4512
      %v4555 = vsel %vm4539, 1.0, %v4514
      %v4556 = vsel %vm4540, 1.0, %v4516
      %v4557 = vsel %vm4541, 1.0, %v4518
      %v4558 = vsel %vm4542, 1.0, %v4520
      %v4559 = vsel %vm4543, 1.0, %v4522
      %v4560 = vsel %vm4544, 1.0, %v4524
      %v4561 = vsel %vm4545, 1.0, %v4526
      %v4562 = vsel %vm4546, 1.0, %v4528
      %v4563 = vsel %vm4547, 1.0, %v4530
      %v4564 = vsel %vm4548, 1.0, %v4532
      %v4565 = vadd.f32 %v4502, 1.0
      %v4566 = vadd.f32 %v4504, 1.0
      %v4567 = vadd.f32 %v4506, 1.0
      %v4568 = vadd.f32 %v4508, 1.0
      %v4569 = vadd.f32 %v4510, 1.0
      %v4570 = vadd.f32 %v4512, 1.0
      %v4571 = vadd.f32 %v4514, 1.0
      %v4572 = vadd.f32 %v4516, 1.0
      %v4573 = vadd.f32 %v4518, 1.0
      %v4574 = vadd.f32 %v4520, 1.0
      %v4575 = vadd.f32 %v4522, 1.0
      %v4576 = vadd.f32 %v4524, 1.0
      %v4577 = vadd.f32 %v4526, 1.0
      %v4578 = vadd.f32 %v4528, 1.0
      %v4579 = vadd.f32 %v4530, 1.0
      %v4580 = vadd.f32 %v4532, 1.0
      %v4581 = vrcp.pop %v4565
      %v4582 = vrcp.pop %v4566
      %v4583 = vrcp.pop %v4567
      %v4584 = vrcp.pop %v4568
      %v4585 = vrcp.pop %v4569
      %v4586 = vrcp.pop %v4570
      %v4587 = vrcp.pop %v4571
      %v4588 = vrcp.pop %v4572
      %v4589 = vrcp.pop %v4573
      %v4590 = vrcp.pop %v4574
      %v4591 = vrcp.pop %v4575
      %v4592 = vrcp.pop %v4576
      %v4593 = vrcp.pop %v4577
      %v4594 = vrcp.pop %v4578
      %v4595 = vrcp.pop %v4579
      %v4596 = vrcp.pop %v4580
      %v4597 = vmul.f32 %v4549, %v4581
      %v4598 = vmul.f32 %v4550, %v4582
      %v4599 = vmul.f32 %v4551, %v4583
      %v4600 = vmul.f32 %v4552, %v4584
      %v4601 = vmul.f32 %v4553, %v4585
      %v4602 = vmul.f32 %v4554, %v4586
      %v4603 = vmul.f32 %v4555, %v4587
      %v4604 = vmul.f32 %v4556, %v4588
      %v4605 = vmul.f32 %v4557, %v4589
      %v4606 = vmul.f32 %v4558, %v4590
      %v4607 = vmul.f32 %v4559, %v4591
      %v4608 = vmul.f32 %v4560, %v4592
      %v4609 = vmul.f32 %v4561, %v4593
      %v4610 = vmul.f32 %v4562, %v4594
      %v4611 = vmul.f32 %v4563, %v4595
      %v4612 = vmul.f32 %v4564, %v4596
      %4629 = vrot.lane.b32.xlu0 %v3589, 61
      %v4630 = vpop.permute.xlu0 %4629
      %4631 = vrot.lane.b32.xlu0 %v3592, 61
      %v4632 = vpop.permute.xlu0 %4631
      %4633 = vrot.lane.b32.xlu0 %v3597, 61
      %v4634 = vpop.permute.xlu0 %4633
      %4635 = vrot.lane.b32.xlu0 %v3600, 61
      %v4636 = vpop.permute.xlu0 %4635
      %4637 = vrot.lane.b32.xlu0 %v3605, 61
      %v4638 = vpop.permute.xlu0 %4637
      %4639 = vrot.lane.b32.xlu0 %v3608, 61
      %v4640 = vpop.permute.xlu0 %4639
      %4641 = vrot.lane.b32.xlu0 %v3613, 61
      %v4642 = vpop.permute.xlu0 %4641
      %4643 = vrot.lane.b32.xlu0 %v3616, 61
      %v4644 = vpop.permute.xlu0 %4643
      %4645 = vrot.lane.b32.xlu0 %v3621, 61
      %v4646 = vpop.permute.xlu0 %4645
      %4647 = vrot.lane.b32.xlu0 %v3624, 61
      %v4648 = vpop.permute.xlu0 %4647
      %4649 = vrot.lane.b32.xlu0 %v3629, 61
      %v4650 = vpop.permute.xlu0 %4649
      %4651 = vrot.lane.b32.xlu0 %v3632, 61
      %v4652 = vpop.permute.xlu0 %4651
      %4653 = vrot.lane.b32.xlu0 %v3637, 61
      %v4654 = vpop.permute.xlu0 %4653
      %4655 = vrot.lane.b32.xlu0 %v3640, 61
      %v4656 = vpop.permute.xlu0 %4655
      %4657 = vrot.lane.b32.xlu0 %v3645, 61
      %v4658 = vpop.permute.xlu0 %4657
      %4659 = vrot.lane.b32.xlu0 %v3648, 61
      %v4660 = vpop.permute.xlu0 %4659
      %4677 = vrot.lane.b32.xlu0 %v3589, 65
      %v4678 = vpop.permute.xlu0 %4677
      %4679 = vrot.lane.b32.xlu0 %v3592, 65
      %v4680 = vpop.permute.xlu0 %4679
      %4681 = vrot.lane.b32.xlu0 %v3597, 65
      %v4682 = vpop.permute.xlu0 %4681
      %4683 = vrot.lane.b32.xlu0 %v3600, 65
      %v4684 = vpop.permute.xlu0 %4683
      %4685 = vrot.lane.b32.xlu0 %v3605, 65
      %v4686 = vpop.permute.xlu0 %4685
      %4687 = vrot.lane.b32.xlu0 %v3608, 65
      %v4688 = vpop.permute.xlu0 %4687
      %4689 = vrot.lane.b32.xlu0 %v3613, 65
      %v4690 = vpop.permute.xlu0 %4689
      %4691 = vrot.lane.b32.xlu0 %v3616, 65
      %v4692 = vpop.permute.xlu0 %4691
      %4693 = vrot.lane.b32.xlu0 %v3621, 65
      %v4694 = vpop.permute.xlu0 %4693
      %4695 = vrot.lane.b32.xlu0 %v3624, 65
      %v4696 = vpop.permute.xlu0 %4695
      %4697 = vrot.lane.b32.xlu0 %v3629, 65
      %v4698 = vpop.permute.xlu0 %4697
      %4699 = vrot.lane.b32.xlu0 %v3632, 65
      %v4700 = vpop.permute.xlu0 %4699
      %4701 = vrot.lane.b32.xlu0 %v3637, 65
      %v4702 = vpop.permute.xlu0 %4701
      %4703 = vrot.lane.b32.xlu0 %v3640, 65
      %v4704 = vpop.permute.xlu0 %4703
      %4705 = vrot.lane.b32.xlu0 %v3645, 65
      %v4706 = vpop.permute.xlu0 %4705
      %4707 = vrot.lane.b32.xlu0 %v3648, 65
      %v4708 = vpop.permute.xlu0 %4707
      %4741 = vrot.lane.b32.xlu0 %v4597, 4
      %v4742 = vpop.permute.xlu0 %4741
      %4743 = vrot.lane.b32.xlu0 %v4598, 4
      %v4744 = vpop.permute.xlu0 %4743
      %4745 = vrot.lane.b32.xlu0 %v4599, 4
      %v4746 = vpop.permute.xlu0 %4745
      %4747 = vrot.lane.b32.xlu0 %v4600, 4
      %v4748 = vpop.permute.xlu0 %4747
      %4749 = vrot.lane.b32.xlu0 %v4601, 4
      %v4750 = vpop.permute.xlu0 %4749
      %4751 = vrot.lane.b32.xlu0 %v4602, 4
      %v4752 = vpop.permute.xlu0 %4751
      %4753 = vrot.lane.b32.xlu0 %v4603, 4
      %v4754 = vpop.permute.xlu0 %4753
      %4755 = vrot.lane.b32.xlu0 %v4604, 4
      %v4756 = vpop.permute.xlu0 %4755
      %4757 = vrot.lane.b32.xlu0 %v4605, 4
      %v4758 = vpop.permute.xlu0 %4757
      %4759 = vrot.lane.b32.xlu0 %v4606, 4
      %v4760 = vpop.permute.xlu0 %4759
      %4761 = vrot.lane.b32.xlu0 %v4607, 4
      %v4762 = vpop.permute.xlu0 %4761
      %4763 = vrot.lane.b32.xlu0 %v4608, 4
      %v4764 = vpop.permute.xlu0 %4763
      %4765 = vrot.lane.b32.xlu0 %v4609, 4
      %v4766 = vpop.permute.xlu0 %4765
      %4767 = vrot.lane.b32.xlu0 %v4610, 4
      %v4768 = vpop.permute.xlu0 %4767
      %4769 = vrot.lane.b32.xlu0 %v4611, 4
      %v4770 = vpop.permute.xlu0 %4769
      %4771 = vrot.lane.b32.xlu0 %v4612, 4
      %v4772 = vpop.permute.xlu0 %4771
      %vm4789 = vcmask 7168
      %v4790 = vsel %vm4789, %v4630, %v4678
      %v4791 = vsel %vm4789, %v4632, %v4680
      %v4792 = vsel %vm4789, %v4634, %v4682
      %v4793 = vsel %vm4789, %v4636, %v4684
      %v4794 = vsel %vm4789, %v4638, %v4686
      %v4795 = vsel %vm4789, %v4640, %v4688
      %v4796 = vsel %vm4789, %v4642, %v4690
      %v4797 = vsel %vm4789, %v4644, %v4692
      %v4798 = vsel %vm4789, %v4646, %v4694
      %v4799 = vsel %vm4789, %v4648, %v4696
      %v4800 = vsel %vm4789, %v4650, %v4698
      %v4801 = vsel %vm4789, %v4652, %v4700
      %v4802 = vsel %vm4789, %v4654, %v4702
      %v4803 = vsel %vm4789, %v4656, %v4704
      %v4804 = vsel %vm4789, %v4658, %v4706
      %v4805 = vsel %vm4789, %v4660, %v4708
      %vm4806 = vcmask 31744
      %v4807 = vsel %vm4806, %v4790, %v4742
      %v4808 = vsel %vm4806, %v4791, %v4744
      %v4809 = vsel %vm4806, %v4792, %v4746
      %v4810 = vsel %vm4806, %v4793, %v4748
      %v4811 = vsel %vm4806, %v4794, %v4750
      %v4812 = vsel %vm4806, %v4795, %v4752
      %v4813 = vsel %vm4806, %v4796, %v4754
      %v4814 = vsel %vm4806, %v4797, %v4756
      %v4815 = vsel %vm4806, %v4798, %v4758
      %v4816 = vsel %vm4806, %v4799, %v4760
      %v4817 = vsel %vm4806, %v4800, %v4762
      %v4818 = vsel %vm4806, %v4801, %v4764
      %v4819 = vsel %vm4806, %v4802, %v4766
      %v4820 = vsel %vm4806, %v4803, %v4768
      %v4821 = vsel %vm4806, %v4804, %v4770
      %v4822 = vsel %vm4806, %v4805, %v4772
      %vm4823 = vcmask 56320
      %v4824 = vsel %vm4823, %v4807, 0.0
      %v4825 = vsel %vm4823, %v4808, 0.0
      %v4826 = vsel %vm4823, %v4809, 0.0
      %v4827 = vsel %vm4823, %v4810, 0.0
      %v4828 = vsel %vm4823, %v4811, 0.0
      %v4829 = vsel %vm4823, %v4812, 0.0
      %v4830 = vsel %vm4823, %v4813, 0.0
      %v4831 = vsel %vm4823, %v4814, 0.0
      %v4832 = vsel %vm4823, %v4815, 0.0
      %v4833 = vsel %vm4823, %v4816, 0.0
      %v4834 = vsel %vm4823, %v4817, 0.0
      %v4835 = vsel %vm4823, %v4818, 0.0
      %v4836 = vsel %vm4823, %v4819, 0.0
      %v4837 = vsel %vm4823, %v4820, 0.0
      %v4838 = vsel %vm4823, %v4821, 0.0
      %v4839 = vsel %vm4823, %v4822, 0.0
      %vm4840 = vcmask 64512
      %4841 = vst.msk [vmem:[%s550] sm:$0xff] %vm4840, %v4824
      %4842 = vst.msk [vmem:[%s550 + $0x8] sm:$0xff] %vm4840, %v4825
      %4843 = vst.msk [vmem:[%s550 + $0x10] sm:$0xff] %vm4840, %v4826
      %4844 = vst.msk [vmem:[%s550 + $0x18] sm:$0xff] %vm4840, %v4827
      %4845 = vst.msk [vmem:[%s550 + $0x20] sm:$0xff] %vm4840, %v4828
      %4846 = vst.msk [vmem:[%s550 + $0x28] sm:$0xff] %vm4840, %v4829
      %4847 = vst.msk [vmem:[%s550 + $0x30] sm:$0xff] %vm4840, %v4830
      %4848 = vst.msk [vmem:[%s550 + $0x38] sm:$0xff] %vm4840, %v4831
      %4849 = vst.msk [vmem:[%s550 + $0x40] sm:$0xff] %vm4840, %v4832
      %4850 = vst.msk [vmem:[%s550 + $0x48] sm:$0xff] %vm4840, %v4833
      %4851 = vst.msk [vmem:[%s550 + $0x50] sm:$0xff] %vm4840, %v4834
      %4852 = vst.msk [vmem:[%s550 + $0x58] sm:$0xff] %vm4840, %v4835
      %4853 = vst.msk [vmem:[%s550 + $0x60] sm:$0xff] %vm4840, %v4836
      %4854 = vst.msk [vmem:[%s550 + $0x68] sm:$0xff] %vm4840, %v4837
      %4855 = vst.msk [vmem:[%s550 + $0x70] sm:$0xff] %vm4840, %v4838
      %4856 = vst.msk [vmem:[%s550 + $0x78] sm:$0xff] %vm4840, %v4839
      %s4857 = smul.u32 16, %s28
      %p4858 = scmp.lt.s32.totalorder %s4857, 31
      %s4859 = scalar_select %p4858, %s4857, 31
      %s4860 = smul.addr %s4859, 8
      %s4861 = scalar_lea.vmem %s17, %s4860
      // Predicated region
      $region89: #{run.4} parent=87 // pred_check
        %p4862 = pneg %p408
      $region90: #{run.4} parent=87 // pred_check_branch
        %4864 = sbr.rel (%p4862) target = $region92
      $region91: #{run.4} parent=87 // pred_region
        %s4865 = smul.u32 16, %s28
      $region92: #{run.4} parent=87 // pred_fallthru
        _
    $region88: #{run.4} parent=5 // pred_fallthru
      _
    %p4866 = scmp.le.s32.totalorder 2, %s23
    // Predicated region
    $region93: #{run.4} parent=5 // pred_check
      %p4867 = pneg %p4866
    $region94: #{run.4} parent=5 // pred_check_branch
      %4869 = sbr.rel (%p4867) target = $region96
    $region95: #{run.4} parent=5 // pred_region
      %s4870 = ssub.s32 %s23, 2
      // Predicated region
      $region97: #{run.4} parent=95 // pred_check
        %p4871 = pneg %p414
      $region98: #{run.4} parent=95 // pred_check_branch
        %4873 = sbr.rel (%p4871) target = $region100
      $region99: #{run.4} parent=95 // pred_region
        %s4874 = smul.u32 16, %s29
        %p4875 = scmp.lt.s32.totalorder %s4874, 31
        %s4876 = scalar_select %p4875, %s4874, 31
        %s4877 = smul.addr %s4876, 8
        %s4878 = scalar_lea.vmem %s17, %s4877
      $region100: #{run.4} parent=95 // pred_fallthru
        _
    $region96: #{run.4} parent=5 // pred_fallthru
      _
  $region6: #{run.4} parent=0 // loop_footer
    %s27 = sadd.s32 1, %s23
  $region7: #{run.4} parent=0 // loop_footer_branch
    %22 = sbr.rel target = $region3
  $region8: #{run.4} parent=0 // loop_exit
    _

</llo_original>
